<compile_context>
chip_gen: v7x
topology: tpu7x:2x2x1
jax: 0.10.0
libtpu: 0.0.40
codegen_flags: <defaults>
</compile_context>

<pallas_src>
import math

import numpy as np
import jax
import jax.numpy as jnp
from jax.experimental import pallas as pl
from jax.experimental.pallas import tpu as pltpu


# ----------------------------------------------------------------------------
# Activations (jnp versions of the PyTorch _str_to_activation entries)
# ----------------------------------------------------------------------------
_SELU_ALPHA = 1.6732632423543772
_SELU_SCALE = 1.0507009873554805

_ACTIVATIONS = {
    "relu": lambda x: jnp.maximum(x, 0.0),
    "elu": lambda x: jnp.where(x > 0, x, jnp.exp(jnp.minimum(x, 0.0)) - 1.0),
    "tanh": jnp.tanh,
    "leaky_relu": lambda x: jnp.where(x > 0, x, 0.01 * x),
    "sigmoid": lambda x: 1.0 / (1.0 + jnp.exp(-x)),
    "selu": lambda x: _SELU_SCALE * jnp.where(
        x > 0, x, _SELU_ALPHA * (jnp.exp(jnp.minimum(x, 0.0)) - 1.0)),
    # thresholded like torch.nn.Softplus (linear branch for x > 20)
    "softplus": lambda x: jnp.where(
        x > 20.0, x, jnp.log(1.0 + jnp.exp(jnp.minimum(x, 20.0)))),
    "identity": lambda x: x,
}

_KERNELS = [5, 5, 6, 6]
_STRIDE = 2

# Scoped-VMEM budget for the pallas_calls (above the 16 MiB v5e default; below the
# 32/64 MiB v7x scoped/physical limits).  Re-tune per generation for big configs.
_VMEM_LIMIT_BYTES = 32 * 1024 * 1024


def _round_up(x, m):
    return (x + m - 1) // m * m


# ----------------------------------------------------------------------------
# Shared kernel: one MXU matmul tile + bias + activation
# ----------------------------------------------------------------------------
def _make_matmul_bias_act_kernel(act_name):
    act = _ACTIVATIONS[act_name]

    def kernel(x_ref, w_ref, b_ref, o_ref):
        # x_ref: (TM, K)  operand tile (f32 or bf16)
        # w_ref: (K, N)   grid-invariant weights (f32 or bf16)
        # b_ref: (1, N)   f32 bias row (broadcast over TM)
        # o_ref: (TM, N)  f32, lane-dense (N is a multiple of 128)
        acc = jnp.dot(x_ref[...], w_ref[...], preferred_element_type=jnp.float32)
        o_ref[...] = act(acc + b_ref[...])

    return kernel


def _tiled_matmul_bias_act(x, w, b_row, *, act_name,
                           compute_dtype=jnp.float32, tm_max=256):
    """act(x @ w + b_row) with M tiled on a 'parallel' grid axis.

    x: (M, K) f32, w: (K, N) f32, b_row: (1, N) f32.  N must be a multiple of 128.
    Operands are cast to `compute_dtype` (bf16 on v6e/v7x); accumulation and the
    bias/activation epilogue stay f32.  Returns (M, N) f32.
    """
    M, K = x.shape
    N = w.shape[1]

    # Pick TM: multiple of 8, <= tm_max, with minimal row padding.
    n_tiles = max(1, -(-M // tm_max))
    TM = _round_up(max(-(-M // n_tiles), 8), 8)
    Mp = TM * n_tiles
    if Mp != M:
        x = jnp.pad(x, ((0, Mp - M), (0, 0)))

    x = x.astype(compute_dtype)
    w = w.astype(compute_dtype)
    b_row = b_row.astype(jnp.float32)

    out = pl.pallas_call(
        _make_matmul_bias_act_kernel(act_name),
        out_shape=jax.ShapeDtypeStruct((Mp, N), jnp.float32),
        grid=(Mp // TM,),
        in_specs=[
            pl.BlockSpec((TM, K), lambda i: (i, 0)),
            pl.BlockSpec((K, N), lambda i: (0, 0)),   # grid-invariant weights
            pl.BlockSpec((1, N), lambda i: (0, 0)),   # grid-invariant bias
        ],
        out_specs=pl.BlockSpec((TM, N), lambda i: (i, 0)),
        compiler_params=pltpu.CompilerParams(
            dimension_semantics=("parallel",),
            vmem_limit_bytes=_VMEM_LIMIT_BYTES),
    )(x, w, b_row)

    return out[:M] if Mp != M else out


# ----------------------------------------------------------------------------
# Polyphase ConvTranspose2d(stride=2): weight preprocessing
# ----------------------------------------------------------------------------
def _phase_folded_banded_weights(w_pt, K, Wp, Qw, Cp):
    """Banded correlation weights with the 4 stride-2 phases folded into N.

    w_pt : (Cin, Cout, K, K) PyTorch ConvTranspose2d weight.
    Returns WBF: (3*Wp*Cin, 4*Qw*Cp) float32 with
        WBF[(a*Wp + p + bw)*Cin + ci, ((2*rh + rw)*Qw + p)*Cp + co]
            = w_pt[ci, co, 4 - 2a + rh, 4 - 2bw + rw]
    (zero where the kernel index exceeds K-1 or co >= Cout).  With the padded,
    row-flattened input x2 (rows = 2-padded input rows, cols = Wp*Cin) and
    X3[m] = concat(x2[m], x2[m+1], x2[m+2]):
        (X3 @ WBF)[m, (f*Qw + p)*Cp + co]
          = sum_{a,bw,ci} x2[m+a, (p+bw)*Cin + ci] * w_pt[ci, co, 4-2a+rh, 4-2bw+rw]
    which is ConvTranspose2d(stride=2) output row 2*q + rh, column 2*p + rw
    (m = b*Hp + q over the 2-row-padded input).
    """
    Cin, Cout = w_pt.shape[0], w_pt.shape[1]
    w_hwio = jnp.transpose(w_pt, (2, 3, 0, 1))            # (K, K, Cin, Cout)
    zero = jnp.zeros((Cin, Cout), w_pt.dtype)
    phases = []
    for rh in range(2):
        for rw in range(2):
            rows = []
            for a in range(3):
                taps = []
                for bw in range(3):
                    kh, kw = 4 - 2 * a + rh, 4 - 2 * bw + rw
                    taps.append(w_hwio[kh, kw] if (kh < K and kw < K) else zero)
                rows.append(jnp.stack(taps, 0))
            phases.append(jnp.stack(rows, 0))
    wc = jnp.stack(phases, 0)                              # (4, 3, 3, Cin, Cout)

    band = np.zeros((3, Wp, Qw), np.float32)               # band[bw, p+bw, p] = 1
    for bw in range(3):
        for p in range(Qw):
            band[bw, p + bw, p] = 1.0
    # (a, Wp, Cin, phase, Qw, Cout)
    wbf = jnp.einsum("bwp,fabio->awifpo", jnp.asarray(band), wc)
    if Cp > Cout:
        wbf = jnp.pad(wbf, ((0, 0),) * 5 + ((0, Cp - Cout),))
    return wbf.reshape(3 * Wp * Cin, 4 * Qw * Cp)


def conv_transpose2d_polyphase_pallas(x, w_pt, b, *, act_name,
                                      compute_dtype=jnp.float32):
    """ConvTranspose2d(stride=2, padding=0) + activation, NHWC, polyphase form.

    x    : (B, H, W, Cin)     float32
    w_pt : (Cin, Cout, K, K)  PyTorch ConvTranspose2d weight layout
    b    : (Cout,)
    """
    B, H, W, Cin = x.shape
    Cout, K = w_pt.shape[1], w_pt.shape[2]
    Ho = (H - 1) * _STRIDE + K
    Wo = (W - 1) * _STRIDE + K

    # Lane-dense geometry: the matmul N = 4*Qw*Cp must be a multiple of 128.
    Qw_min = W + 2                       # phase columns needed to cover Wo
    if Cout % 8 == 0:
        Cp = Cout
    else:
        Cp = 1
        while Cp < Cout:
            Cp *= 2                      # e.g. Cout=3 -> Cp=4
    Qw = _round_up(Qw_min, 32 // math.gcd(Cp, 32))
    Hp, Wp = H + 4, Qw + 2
    L_in, L_out = Wp * Cin, Qw * Cp
    M = B * Hp

    # --- glue (pure data movement): spatial pad, row-flatten, im2col row taps ----
    # Rows q = Hp-2, Hp-1 of each sample read taps from the NEXT sample's top
    # zero-padding rows (or the appended tail); those phase rows are always cropped
    # below (2*q+rh >= Ho), so no cross-sample mixing can reach the output.
    xp = jnp.pad(x, ((0, 0), (2, 2), (2, Wp - W - 2), (0, 0)))
    x2 = jnp.pad(xp.reshape(M, L_in), ((0, 2), (0, 0)))
    x3 = jnp.concatenate([x2[0:M], x2[1:M + 1], x2[2:M + 2]], axis=1)  # (M, 3*L_in)

    # --- glue (weight preprocessing): folded banded weights + tiled bias ---------
    wbf = _phase_folded_banded_weights(w_pt, K, Wp, Qw, Cp)   # (3*L_in, 4*L_out)
    b_row = jnp.tile(jnp.pad(b, (0, Cp - Cout)), 4 * Qw).reshape(1, 4 * L_out)

    ph = _tiled_matmul_bias_act(x3, wbf, b_row, act_name=act_name,
                                compute_dtype=compute_dtype)  # (M, 4*L_out) f32

    # --- glue (pure data movement): interleave the 4 phases, crop ----------------
    o = ph.reshape(B, Hp, 2, 2, Qw, Cp)                       # (b, q, rh, rw, p, c)
    o = jnp.transpose(o, (0, 1, 2, 4, 3, 5)).reshape(B, 2 * Hp, 2 * Qw, Cp)
    return o[:, :Ho, :Wo, :Cout]


# ----------------------------------------------------------------------------
# ConvDecoder: params + forward
# ----------------------------------------------------------------------------
def init_conv_decoder_params(key, stoch_size, deter_size, output_shape, depth):
    feat = stoch_size + deter_size
    dense_out = 32 * depth
    keys = jax.random.split(key, 2 + 2 * len(_KERNELS))
    params = {
        "dense_w": jax.random.normal(keys[0], (feat, dense_out), jnp.float32)
        / np.sqrt(feat),
        "dense_b": 0.01 * jax.random.normal(keys[1], (dense_out,), jnp.float32),
    }
    for i, K in enumerate(_KERNELS):
        in_ch = 32 * depth if i == 0 else depth * 2 ** (len(_KERNELS) - 1 - i)
        out_ch = (output_shape[0] if i == len(_KERNELS) - 1
                  else depth * 2 ** (len(_KERNELS) - 2 - i))
        params[f"conv{i}_w"] = (
            jax.random.normal(keys[2 + 2 * i], (in_ch, out_ch, K, K), jnp.float32)
            / np.sqrt(in_ch * K * K)
        )
        params[f"conv{i}_b"] = 0.01 * jax.random.normal(
            keys[3 + 2 * i], (out_ch,), jnp.float32
        )
    return params


def conv_decoder_forward(params, features, *, output_shape, depth, activation,
                         compute_dtype=jnp.float32):
    out_batch_shape = features.shape[:-1]
    x = jnp.reshape(features, (-1, features.shape[-1])).astype(jnp.float32)
    B = x.shape[0]

    # --- fused dense + conv0 (conv0 sees a 1x1 map, no activation in between) ----
    #   act(ConvT0(x @ Wd + bd)) == act(x @ (Wd @ W0_mat) + fused_b)
    w0 = params["conv0_w"]                                 # (32*depth, C0, K0, K0)
    Cin0, C0, K0 = w0.shape[0], w0.shape[1], w0.shape[2]
    w0_mat = jnp.transpose(w0, (0, 2, 3, 1)).reshape(Cin0, K0 * K0 * C0)
    hi = jax.lax.Precision.HIGHEST
    w_fused = jnp.dot(params["dense_w"], w0_mat, precision=hi)
    b_fused = (jnp.dot(params["dense_b"], w0_mat, precision=hi)
               + jnp.tile(params["conv0_b"], K0 * K0))
    N0 = K0 * K0 * C0
    N0p = _round_up(N0, 128)                               # lane-dense output width
    w_fused = jnp.pad(w_fused, ((0, 0), (0, N0p - N0)))
    b_row = jnp.pad(b_fused, (0, N0p - N0)).reshape(1, N0p)
    h = _tiled_matmul_bias_act(x, w_fused, b_row, act_name=activation,
                               compute_dtype=compute_dtype)
    h = h[:, :N0].reshape(B, K0, K0, C0)                   # NHWC, 5x5 spatial

    # --- remaining stride-2 transposed convs (polyphase, phases folded into N) ---
    for i in range(1, len(_KERNELS)):
        act = activation if i != len(_KERNELS) - 1 else "identity"
        h = conv_transpose2d_polyphase_pallas(
            h, params[f"conv{i}_w"], params[f"conv{i}_b"], act_name=act,
            compute_dtype=compute_dtype)

    mean = jnp.transpose(h, (0, 3, 1, 2))                  # NHWC -> NCHW
    mean = jnp.reshape(mean, out_batch_shape + tuple(output_shape))
    # TODO(synk): torch.distributions.Independent(Normal(mean, 1), len(output_shape))
    # has no Pallas equivalent; the kernel returns the distribution mean (std == 1).
    return mean


# ----------------------------------------------------------------------------
# Pure-JAX reference (lax.conv_general_dilated with lhs_dilation == ConvTranspose)
# ----------------------------------------------------------------------------
def reference_forward(params, features, *, output_shape, depth, activation):
    act = _ACTIVATIONS[activation]
    out_batch_shape = features.shape[:-1]
    x = jnp.reshape(features, (-1, features.shape[-1])).astype(jnp.float32)
    h = (jnp.dot(x, params["dense_w"], precision=jax.lax.Precision.HIGHEST)
         + params["dense_b"])
    h = jnp.reshape(h, (-1, 1, 1, 32 * depth))
    for i, K in enumerate(_KERNELS):
        w_pt = params[f"conv{i}_w"]
        w_corr = jnp.transpose(w_pt[:, :, ::-1, ::-1], (2, 3, 0, 1))
        h = jax.lax.conv_general_dilated(
            h, w_corr, window_strides=(1, 1),
            padding=[(K - 1, K - 1), (K - 1, K - 1)],
            lhs_dilation=(2, 2),
            dimension_numbers=("NHWC", "HWIO", "NHWC"),
            precision=jax.lax.Precision.HIGHEST,
        ) + params[f"conv{i}_b"]
        if i != len(_KERNELS) - 1:
            h = act(h)
    mean = jnp.transpose(h, (0, 3, 1, 2))
    return jnp.reshape(mean, out_batch_shape + tuple(output_shape))


if __name__ == "__main__":
    stoch_size, deter_size = 8, 24          # feature dim = 32
    depth = 8                               # small depth (PyTorch default is 32)
    output_shape = (3, 64, 64)              # spatial size fixed by kernels/strides
    activation = "relu"

    key = jax.random.PRNGKey(0)
    pkey, fkey = jax.random.split(key)
    params = init_conv_decoder_params(pkey, stoch_size, deter_size, output_shape, depth)
    features = jax.random.normal(fkey, (2, 3, stoch_size + deter_size), jnp.float32)

    ref = jax.block_until_ready(
        reference_forward(params, features, output_shape=output_shape,
                          depth=depth, activation=activation))

    # f32-operand MXU path: tight cross-check against the HIGHEST-precision ref.
    fwd_f32 = jax.jit(lambda p, f: conv_decoder_forward(
        p, f, output_shape=output_shape, depth=depth, activation=activation,
        compute_dtype=jnp.float32))
    mean_f32 = jax.block_until_ready(fwd_f32(params, features))
    assert mean_f32.shape == (2, 3) + output_shape, mean_f32.shape
    np.testing.assert_allclose(np.asarray(mean_f32), np.asarray(ref),
                               rtol=1e-2, atol=1e-2)

    # bf16-operand / f32-accumulate path (v6e/v7x bf16-native MXU): looser check.
    fwd_bf16 = jax.jit(lambda p, f: conv_decoder_forward(
        p, f, output_shape=output_shape, depth=depth, activation=activation,
        compute_dtype=jnp.bfloat16))
    mean_bf16 = jax.block_until_ready(fwd_bf16(params, features))
    assert mean_bf16.shape == (2, 3) + output_shape, mean_bf16.shape
    np.testing.assert_allclose(np.asarray(mean_bf16), np.asarray(ref),
                               rtol=5e-2, atol=5e-2)

    print("KERNEL_OK")
</pallas_src>

<mosaic_0001>
module attributes {stable_mosaic.version = 11 : i64} {
  func.func @kernel(%arg0: i32, %arg1: memref<8x32xf32, #tpu.memory_space<vmem>>, %arg2: memref<32x896xf32, #tpu.memory_space<vmem>>, %arg3: memref<1x896xf32, #tpu.memory_space<vmem>>, %arg4: memref<8x896xf32, #tpu.memory_space<vmem>>) attributes {dimension_semantics = [#tpu.dimension_semantics<parallel>], iteration_bounds = array<i64: 1>, scalar_prefetch = 0 : i64, scratch_operands = 0 : i64, tpu.core_type = #tpu.core_type<tc>, window_params = [{transform_indices = @transform_0, window_bounds = array<i64: 8, 32>}, {pipeline_mode = #tpu.pipeline_mode<synchronous>, transform_indices = @transform_1, window_bounds = array<i64: 32, 896>}, {pipeline_mode = #tpu.pipeline_mode<synchronous>, transform_indices = @transform_2, window_bounds = array<i64: 1, 896>}, {transform_indices = @transform_3, window_bounds = array<i64: 8, 896>}]} {
    %c0 = arith.constant 0 : index
    %c0_0 = arith.constant 0 : index
    %0 = vector.load %arg1[%c0, %c0_0] : memref<8x32xf32, #tpu.memory_space<vmem>>, vector<8x32xf32>
    %c0_1 = arith.constant 0 : index
    %c0_2 = arith.constant 0 : index
    %1 = vector.load %arg2[%c0_1, %c0_2] : memref<32x896xf32, #tpu.memory_space<vmem>>, vector<32x896xf32>
    %cst = arith.constant dense<0.000000e+00> : vector<8x896xf32>
    %2 = tpu.matmul %0, %1, %cst {dimension_numbers = #tpu.dot_dimension_numbers<[1], [0], [0], [1], [0, 0, 1, 1], [], []>} : vector<8x32xf32>, vector<32x896xf32>, vector<8x896xf32> -> vector<8x896xf32>
    %c0_3 = arith.constant 0 : index
    %c0_4 = arith.constant 0 : index
    %3 = vector.load %arg3[%c0_3, %c0_4] : memref<1x896xf32, #tpu.memory_space<vmem>>, vector<1x896xf32>
    %4 = vector.broadcast %3 : vector<1x896xf32> to vector<8x896xf32>
    %5 = arith.addf %2, %4 : vector<8x896xf32>
    %cst_5 = arith.constant 0.000000e+00 : f32
    %6 = vector.broadcast %cst_5 : f32 to vector<8x896xf32>
    %7 = arith.maximumf %5, %6 : vector<8x896xf32>
    %c0_6 = arith.constant 0 : index
    %c0_7 = arith.constant 0 : index
    %8 = vector.load %arg4[%c0_6, %c0_7] : memref<8x896xf32, #tpu.memory_space<vmem>>, vector<8x896xf32>
    tpu.vector_store %arg4[%c0_6, %c0_7], %7 {strides = array<i32>} : memref<8x896xf32, #tpu.memory_space<vmem>>, vector<8x896xf32>,
    return
  }
  func.func @transform_0(%arg0: i32) -> (i32, i32) {
    %c0_i32 = arith.constant 0 : i32
    %c0_i32_0 = arith.constant 0 : i32
    return %arg0, %c0_i32 : i32, i32
  }
  func.func @transform_1(%arg0: i32) -> (i32, i32) {
    %c0_i32 = arith.constant 0 : i32
    %c0_i32_0 = arith.constant 0 : i32
    %c0_i32_1 = arith.constant 0 : i32
    return %c0_i32, %c0_i32_0 : i32, i32
  }
  func.func @transform_2(%arg0: i32) -> (i32, i32) {
    %c0_i32 = arith.constant 0 : i32
    %c0_i32_0 = arith.constant 0 : i32
    %c0_i32_1 = arith.constant 0 : i32
    return %c0_i32, %c0_i32_0 : i32, i32
  }
  func.func @transform_3(%arg0: i32) -> (i32, i32) {
    %c0_i32 = arith.constant 0 : i32
    %c0_i32_0 = arith.constant 0 : i32
    return %arg0, %c0_i32 : i32, i32
  }
}

module attributes {stable_mosaic.version = 11 : i64} {
  func.func @kernel(%arg0: i32, %arg1: memref<56x960xf32, #tpu.memory_space<vmem>>, %arg2: memref<960x512xf32, #tpu.memory_space<vmem>>, %arg3: memref<1x512xf32, #tpu.memory_space<vmem>>, %arg4: memref<56x512xf32, #tpu.memory_space<vmem>>) attributes {dimension_semantics = [#tpu.dimension_semantics<parallel>], iteration_bounds = array<i64: 1>, scalar_prefetch = 0 : i64, scratch_operands = 0 : i64, tpu.core_type = #tpu.core_type<tc>, window_params = [{transform_indices = @transform_0, window_bounds = array<i64: 56, 960>}, {pipeline_mode = #tpu.pipeline_mode<synchronous>, transform_indices = @transform_1, window_bounds = array<i64: 960, 512>}, {pipeline_mode = #tpu.pipeline_mode<synchronous>, transform_indices = @transform_2, window_bounds = array<i64: 1, 512>}, {transform_indices = @transform_3, window_bounds = array<i64: 56, 512>}]} {
    %c0 = arith.constant 0 : index
    %c0_0 = arith.constant 0 : index
    %0 = vector.load %arg1[%c0, %c0_0] : memref<56x960xf32, #tpu.memory_space<vmem>>, vector<56x960xf32>
    %c0_1 = arith.constant 0 : index
    %c0_2 = arith.constant 0 : index
    %1 = vector.load %arg2[%c0_1, %c0_2] : memref<960x512xf32, #tpu.memory_space<vmem>>, vector<960x512xf32>
    %cst = arith.constant dense<0.000000e+00> : vector<56x512xf32>
    %2 = tpu.matmul %0, %1, %cst {dimension_numbers = #tpu.dot_dimension_numbers<[1], [0], [0], [1], [0, 0, 1, 1], [], []>} : vector<56x960xf32>, vector<960x512xf32>, vector<56x512xf32> -> vector<56x512xf32>
    %c0_3 = arith.constant 0 : index
    %c0_4 = arith.constant 0 : index
    %3 = vector.load %arg3[%c0_3, %c0_4] : memref<1x512xf32, #tpu.memory_space<vmem>>, vector<1x512xf32>
    %4 = vector.broadcast %3 : vector<1x512xf32> to vector<56x512xf32>
    %5 = arith.addf %2, %4 : vector<56x512xf32>
    %cst_5 = arith.constant 0.000000e+00 : f32
    %6 = vector.broadcast %cst_5 : f32 to vector<56x512xf32>
    %7 = arith.maximumf %5, %6 : vector<56x512xf32>
    %c0_6 = arith.constant 0 : index
    %c0_7 = arith.constant 0 : index
    %8 = vector.load %arg4[%c0_6, %c0_7] : memref<56x512xf32, #tpu.memory_space<vmem>>, vector<56x512xf32>
    tpu.vector_store %arg4[%c0_6, %c0_7], %7 {strides = array<i32>} : memref<56x512xf32, #tpu.memory_space<vmem>>, vector<56x512xf32>,
    return
  }
  func.func @transform_0(%arg0: i32) -> (i32, i32) {
    %c0_i32 = arith.constant 0 : i32
    %c0_i32_0 = arith.constant 0 : i32
    return %arg0, %c0_i32 : i32, i32
  }
  func.func @transform_1(%arg0: i32) -> (i32, i32) {
    %c0_i32 = arith.constant 0 : i32
    %c0_i32_0 = arith.constant 0 : i32
    %c0_i32_1 = arith.constant 0 : i32
    return %c0_i32, %c0_i32_0 : i32, i32
  }
  func.func @transform_2(%arg0: i32) -> (i32, i32) {
    %c0_i32 = arith.constant 0 : i32
    %c0_i32_0 = arith.constant 0 : i32
    %c0_i32_1 = arith.constant 0 : i32
    return %c0_i32, %c0_i32_0 : i32, i32
  }
  func.func @transform_3(%arg0: i32) -> (i32, i32) {
    %c0_i32 = arith.constant 0 : i32
    %c0_i32_0 = arith.constant 0 : i32
    return %arg0, %c0_i32 : i32, i32
  }
}

module attributes {stable_mosaic.version = 11 : i64} {
  func.func @kernel(%arg0: i32, %arg1: memref<104x864xf32, #tpu.memory_space<vmem>>, %arg2: memref<864x512xf32, #tpu.memory_space<vmem>>, %arg3: memref<1x512xf32, #tpu.memory_space<vmem>>, %arg4: memref<104x512xf32, #tpu.memory_space<vmem>>) attributes {dimension_semantics = [#tpu.dimension_semantics<parallel>], iteration_bounds = array<i64: 1>, scalar_prefetch = 0 : i64, scratch_operands = 0 : i64, tpu.core_type = #tpu.core_type<tc>, window_params = [{transform_indices = @transform_0, window_bounds = array<i64: 104, 864>}, {pipeline_mode = #tpu.pipeline_mode<synchronous>, transform_indices = @transform_1, window_bounds = array<i64: 864, 512>}, {pipeline_mode = #tpu.pipeline_mode<synchronous>, transform_indices = @transform_2, window_bounds = array<i64: 1, 512>}, {transform_indices = @transform_3, window_bounds = array<i64: 104, 512>}]} {
    %c0 = arith.constant 0 : index
    %c0_0 = arith.constant 0 : index
    %0 = vector.load %arg1[%c0, %c0_0] : memref<104x864xf32, #tpu.memory_space<vmem>>, vector<104x864xf32>
    %c0_1 = arith.constant 0 : index
    %c0_2 = arith.constant 0 : index
    %1 = vector.load %arg2[%c0_1, %c0_2] : memref<864x512xf32, #tpu.memory_space<vmem>>, vector<864x512xf32>
    %cst = arith.constant dense<0.000000e+00> : vector<104x512xf32>
    %2 = tpu.matmul %0, %1, %cst {dimension_numbers = #tpu.dot_dimension_numbers<[1], [0], [0], [1], [0, 0, 1, 1], [], []>} : vector<104x864xf32>, vector<864x512xf32>, vector<104x512xf32> -> vector<104x512xf32>
    %c0_3 = arith.constant 0 : index
    %c0_4 = arith.constant 0 : index
    %3 = vector.load %arg3[%c0_3, %c0_4] : memref<1x512xf32, #tpu.memory_space<vmem>>, vector<1x512xf32>
    %4 = vector.broadcast %3 : vector<1x512xf32> to vector<104x512xf32>
    %5 = arith.addf %2, %4 : vector<104x512xf32>
    %cst_5 = arith.constant 0.000000e+00 : f32
    %6 = vector.broadcast %cst_5 : f32 to vector<104x512xf32>
    %7 = arith.maximumf %5, %6 : vector<104x512xf32>
    %c0_6 = arith.constant 0 : index
    %c0_7 = arith.constant 0 : index
    %8 = vector.load %arg4[%c0_6, %c0_7] : memref<104x512xf32, #tpu.memory_space<vmem>>, vector<104x512xf32>
    tpu.vector_store %arg4[%c0_6, %c0_7], %7 {strides = array<i32>} : memref<104x512xf32, #tpu.memory_space<vmem>>, vector<104x512xf32>,
    return
  }
  func.func @transform_0(%arg0: i32) -> (i32, i32) {
    %c0_i32 = arith.constant 0 : i32
    %c0_i32_0 = arith.constant 0 : i32
    return %arg0, %c0_i32 : i32, i32
  }
  func.func @transform_1(%arg0: i32) -> (i32, i32) {
    %c0_i32 = arith.constant 0 : i32
    %c0_i32_0 = arith.constant 0 : i32
    %c0_i32_1 = arith.constant 0 : i32
    return %c0_i32, %c0_i32_0 : i32, i32
  }
  func.func @transform_2(%arg0: i32) -> (i32, i32) {
    %c0_i32 = arith.constant 0 : i32
    %c0_i32_0 = arith.constant 0 : i32
    %c0_i32_1 = arith.constant 0 : i32
    return %c0_i32, %c0_i32_0 : i32, i32
  }
  func.func @transform_3(%arg0: i32) -> (i32, i32) {
    %c0_i32 = arith.constant 0 : i32
    %c0_i32_0 = arith.constant 0 : i32
    return %arg0, %c0_i32 : i32, i32
  }
}

module attributes {stable_mosaic.version = 11 : i64} {
  func.func @kernel(%arg0: i32, %arg1: memref<208x816xf32, #tpu.memory_space<vmem>>, %arg2: memref<816x512xf32, #tpu.memory_space<vmem>>, %arg3: memref<1x512xf32, #tpu.memory_space<vmem>>, %arg4: memref<208x512xf32, #tpu.memory_space<vmem>>) attributes {dimension_semantics = [#tpu.dimension_semantics<parallel>], iteration_bounds = array<i64: 1>, scalar_prefetch = 0 : i64, scratch_operands = 0 : i64, tpu.core_type = #tpu.core_type<tc>, window_params = [{transform_indices = @transform_0, window_bounds = array<i64: 208, 816>}, {pipeline_mode = #tpu.pipeline_mode<synchronous>, transform_indices = @transform_1, window_bounds = array<i64: 816, 512>}, {pipeline_mode = #tpu.pipeline_mode<synchronous>, transform_indices = @transform_2, window_bounds = array<i64: 1, 512>}, {transform_indices = @transform_3, window_bounds = array<i64: 208, 512>}]} {
    %c0 = arith.constant 0 : index
    %c0_0 = arith.constant 0 : index
    %0 = vector.load %arg1[%c0, %c0_0] : memref<208x816xf32, #tpu.memory_space<vmem>>, vector<208x816xf32>
    %c0_1 = arith.constant 0 : index
    %c0_2 = arith.constant 0 : index
    %1 = vector.load %arg2[%c0_1, %c0_2] : memref<816x512xf32, #tpu.memory_space<vmem>>, vector<816x512xf32>
    %cst = arith.constant dense<0.000000e+00> : vector<208x512xf32>
    %2 = tpu.matmul %0, %1, %cst {dimension_numbers = #tpu.dot_dimension_numbers<[1], [0], [0], [1], [0, 0, 1, 1], [], []>} : vector<208x816xf32>, vector<816x512xf32>, vector<208x512xf32> -> vector<208x512xf32>
    %c0_3 = arith.constant 0 : index
    %c0_4 = arith.constant 0 : index
    %3 = vector.load %arg3[%c0_3, %c0_4] : memref<1x512xf32, #tpu.memory_space<vmem>>, vector<1x512xf32>
    %4 = vector.broadcast %3 : vector<1x512xf32> to vector<208x512xf32>
    %5 = arith.addf %2, %4 : vector<208x512xf32>
    %c0_5 = arith.constant 0 : index
    %c0_6 = arith.constant 0 : index
    %6 = vector.load %arg4[%c0_5, %c0_6] : memref<208x512xf32, #tpu.memory_space<vmem>>, vector<208x512xf32>
    tpu.vector_store %arg4[%c0_5, %c0_6], %5 {strides = array<i32>} : memref<208x512xf32, #tpu.memory_space<vmem>>, vector<208x512xf32>,
    return
  }
  func.func @transform_0(%arg0: i32) -> (i32, i32) {
    %c0_i32 = arith.constant 0 : i32
    %c0_i32_0 = arith.constant 0 : i32
    return %arg0, %c0_i32 : i32, i32
  }
  func.func @transform_1(%arg0: i32) -> (i32, i32) {
    %c0_i32 = arith.constant 0 : i32
    %c0_i32_0 = arith.constant 0 : i32
    %c0_i32_1 = arith.constant 0 : i32
    return %c0_i32, %c0_i32_0 : i32, i32
  }
  func.func @transform_2(%arg0: i32) -> (i32, i32) {
    %c0_i32 = arith.constant 0 : i32
    %c0_i32_0 = arith.constant 0 : i32
    %c0_i32_1 = arith.constant 0 : i32
    return %c0_i32, %c0_i32_0 : i32, i32
  }
  func.func @transform_3(%arg0: i32) -> (i32, i32) {
    %c0_i32 = arith.constant 0 : i32
    %c0_i32_0 = arith.constant 0 : i32
    return %arg0, %c0_i32 : i32, i32
  }
}

</mosaic_0001>

<llo_original>
// kernel: tile.23
$region0: #{tile.23}
  #allocation0 [shape = 's32[1]{0}', space=sflag, size = 0x4, scoped, tag = 'scoped memory for tile.23']
  %s0 = inlined_call_operand.vmem [shape: f32[32], index: 0, kind: input, shape index: {}]
  %s1 = inlined_call_operand.vmem [shape: f32[25,32], index: 1, kind: output, shape index: {}]
  // Predicated region
  $region2: #{tile.23} parent=0 // pred_check
    _
  $region3: #{tile.23} parent=0 // pred_check_branch
    %3 = sbr.rel (0) target = $region5
  $region4: #{tile.23} parent=0 // pred_region
    _
  $region5: #{tile.23} parent=0 // pred_fallthru
    _
  %v4 = vld [vmem:[%s0] ss:$0 sm:$0xff]
  %5 = vst [vmem:[%s1] sm:$0xff] %v4
  %s6 = scalar_lea.vmem %s1, 8
  %7 = vst [vmem:[%s6] sm:$0xff] %v4
  %s8 = scalar_lea.vmem %s1, 16
  %9 = vst [vmem:[%s8] sm:$0xff] %v4
  %s10 = scalar_lea.vmem %s1, 24
  %11 = vst [vmem:[%s10] sm:$0xff] %v4

// kernel: tile.24
$region0: #{tile.24}
  %s0 = inlined_call_operand.vmem [shape: f32[25,32], index: 0, kind: input, shape index: {}]
  %s1 = inlined_call_operand.vmem [shape: f32[800], index: 1, kind: output, shape index: {}]
  %v2 = vld [vmem:[%s0] ss:$4 sm:$0x7f]
  %vm3 = vcmask 261120
  %4 = vst.msk [vmem:[%s1] sm:$0x7f] %vm3, %v2
  %s5 = scalar_lea.vmem %s0, 3
  %v6 = vld [vmem:[%s5] ss:$4 sm:$0x3f]
  %7 = vrot.lane.b32.xlu0 %v6, 96
  %v8 = vpop.permute.xlu0 %7
  %vm9 = vcmask 1048320
  %10 = vst.msk [vmem:[%s1] sm:$0x3f] %vm9, %v8
  %s11 = scalar_lea.vmem %s0, 2
  %v12 = vld [vmem:[%s11] ss:$4 sm:$0x3f]
  %13 = vrot.lane.b32.xlu0 %v12, 64
  %v14 = vpop.permute.xlu0 %13
  %vm15 = vcmask 785920
  %16 = vst.msk [vmem:[%s1] sm:$0x3f] %vm15, %v14
  %s17 = scalar_lea.vmem %s0, 1
  %v18 = vld [vmem:[%s17] ss:$4 sm:$0x3f]
  %19 = vrot.lane.b32.xlu0 %v18, 32
  %v20 = vpop.permute.xlu0 %19
  %vm21 = vcmask 523520
  %22 = vst.msk [vmem:[%s1] sm:$0x3f] %vm21, %v20

// kernel: _lambda_.4
$region0: #{_lambda_.4}
  #allocation0 [shape = 'u32[]', space=smem, size = 0x4, offset = 0x4, fixed_abs, tag = 'smem constant byte address 0x4 - core index']
  #allocation1 [shape = 'u32[144,128]{1,0:T(1,128)}', space=vmem, size = 0x12000, scoped, tag = 'internal scratch']
  %s0 = inlined_call_operand.vmem [shape: f32[8,32], index: 0, kind: input, shape index: {}]
  %s1 = inlined_call_operand.vmem [shape: f32[32,896], index: 1, kind: input, shape index: {}]
  %s2 = inlined_call_operand.vmem [shape: f32[1,896], index: 2, kind: input, shape index: {}]
  %s3 = inlined_call_operand.vmem [shape: f32[8,896], index: 3, kind: output, shape index: {}]
  %s4 = sld [smem:[#allocation0]]
  $region22: #{_lambda_.4} parent=0
    _
  %s6 = ssub.s32 1, %s4
  %s7 = scalar_select 0, %s6, %s4
  // Predicated region
  $region2: #{_lambda_.4} parent=0 // pred_check
    _
  $region3: #{_lambda_.4} parent=0 // pred_check_branch
    %9 = sbr.rel (0) target = $region5
  $region4: #{_lambda_.4} parent=0 // pred_region
    _
  $region5: #{_lambda_.4} parent=0 // pred_fallthru
    _
  // Predicated region
  $region6: #{_lambda_.4} parent=0 // pred_check
    _
  $region7: #{_lambda_.4} parent=0 // pred_check_branch
    %11 = sbr.rel (0) target = $region9
  $region8: #{_lambda_.4} parent=0 // pred_region
    _
  $region9: #{_lambda_.4} parent=0 // pred_fallthru
    _
  // Predicated region
  $region10: #{_lambda_.4} parent=0 // pred_check
    _
  $region11: #{_lambda_.4} parent=0 // pred_check_branch
    %13 = sbr.rel (0) target = $region13
  $region12: #{_lambda_.4} parent=0 // pred_region
    _
  $region13: #{_lambda_.4} parent=0 // pred_fallthru
    _
  %v14 = vld [vmem:[%s0] sm:$0xff]
  %v15 = vld [vmem:[%s1] sm:$0xff]
  %v16 = vld [vmem:[%s1 + $0x8] sm:$0xff]
  %v17 = vld [vmem:[%s1 + $0x10] sm:$0xff]
  %v18 = vld [vmem:[%s1 + $0x18] sm:$0xff]
  %v19 = vld [vmem:[%s1 + $0x20] sm:$0xff]
  %v20 = vld [vmem:[%s1 + $0x28] sm:$0xff]
  %v21 = vld [vmem:[%s1 + $0x30] sm:$0xff]
  %v22 = vld [vmem:[%s1 + $0x38] sm:$0xff]
  %v23 = vld [vmem:[%s1 + $0x40] sm:$0xff]
  %v24 = vld [vmem:[%s1 + $0x48] sm:$0xff]
  %v25 = vld [vmem:[%s1 + $0x50] sm:$0xff]
  %v26 = vld [vmem:[%s1 + $0x58] sm:$0xff]
  %v27 = vld [vmem:[%s1 + $0x60] sm:$0xff]
  %v28 = vld [vmem:[%s1 + $0x68] sm:$0xff]
  %v29 = vld [vmem:[%s1 + $0x70] sm:$0xff]
  %v30 = vld [vmem:[%s1 + $0x78] sm:$0xff]
  %v31 = vld [vmem:[%s1 + $0x80] sm:$0xff]
  %v32 = vld [vmem:[%s1 + $0x88] sm:$0xff]
  %v33 = vld [vmem:[%s1 + $0x90] sm:$0xff]
  %v34 = vld [vmem:[%s1 + $0x98] sm:$0xff]
  %v35 = vld [vmem:[%s1 + $0xa0] sm:$0xff]
  %v36 = vld [vmem:[%s1 + $0xa8] sm:$0xff]
  %v37 = vld [vmem:[%s1 + $0xb0] sm:$0xff]
  %v38 = vld [vmem:[%s1 + $0xb8] sm:$0xff]
  %v39 = vld [vmem:[%s1 + $0xc0] sm:$0xff]
  %v40 = vld [vmem:[%s1 + $0xc8] sm:$0xff]
  %v41 = vld [vmem:[%s1 + $0xd0] sm:$0xff]
  %v42 = vld [vmem:[%s1 + $0xd8] sm:$0xff]
  %v43 = vld [vmem:[%s2] sm:$0xff]
  %v45 = vlaneseq
  %v46 = vshrl.u32 %v45, 7
  %v47 = vsub.s32 0, %v46
  %v48 = vrot.slane %v43, %v47
  %v49 = vlaneseq
  %v50 = vshrl.u32 %v49, 7
  %v51 = vsub.s32 1, %v50
  %v52 = vrot.slane %v43, %v51
  %v53 = vlaneseq
  %v54 = vshrl.u32 %v53, 7
  %v55 = vsub.s32 2, %v54
  %v56 = vrot.slane %v43, %v55
  %v57 = vlaneseq
  %v58 = vshrl.u32 %v57, 7
  %v59 = vsub.s32 3, %v58
  %v60 = vrot.slane %v43, %v59
  %v61 = vlaneseq
  %v62 = vshrl.u32 %v61, 7
  %v63 = vsub.s32 4, %v62
  %v64 = vrot.slane %v43, %v63
  %v65 = vlaneseq
  %v66 = vshrl.u32 %v65, 7
  %v67 = vsub.s32 5, %v66
  %v68 = vrot.slane %v43, %v67
  %v69 = vlaneseq
  %v70 = vshrl.u32 %v69, 7
  %v71 = vsub.s32 6, %v70
  %v72 = vrot.slane %v43, %v71
  %vm80 = vcmask 261120
  %v82 = vsel %vm80, %v14, 0
  %84 = vmatprep.subr.mxu0 %v16
  %85 = vmatpush1.msra.mxu0 %v15
  %86 = vmatprep.subr.mxu0 %v23
  %87 = vmatpush1.msra.mxu0 %v22
  %88 = vmatprep.subr.mxu0 %v30
  %89 = vmatpush1.msra.mxu0 %v29
  %90 = vmatprep.subr.mxu0 %v37
  %91 = vmatpush1.msra.mxu0 %v36
  %92 = vmatprep.subr.mxu0 0.0
  %93 = vmatpush1.msra.mxu0 0.0
  %94 = vmatprep.subr.mxu0 0.0
  %95 = vmatpush1.msra.mxu0 0.0
  %96 = vmatprep.subr.mxu0 0.0
  %97 = vmatpush1.msra.mxu0 0.0
  %98 = vmatprep.subr.mxu0 0.0
  %99 = vmatpush1.msra.mxu0 0.0
  %100 = vmatprep.subr.mxu0 0.0
  %101 = vmatpush1.msra.mxu0 0.0
  %102 = vmatprep.subr.mxu0 0.0
  %103 = vmatpush1.msra.mxu0 0.0
  %104 = vmatprep.subr.mxu0 0.0
  %105 = vmatpush1.msra.mxu0 0.0
  %106 = vmatprep.subr.mxu0 0.0
  %107 = vmatpush1.msra.mxu0 0.0
  %108 = vmatprep.subr.mxu0 0.0
  %109 = vmatpush1.msra.mxu0 0.0
  %110 = vmatprep.subr.mxu0 0.0
  %111 = vmatpush1.msra.mxu0 0.0
  %112 = vmatprep.subr.mxu0 0.0
  %113 = vmatpush1.msra.mxu0 0.0
  %114 = vmatprep.subr.mxu0 0.0
  %115 = vmatpush1.msra.mxu0 0.0
  %116 = vmatprep.subr.mxu0 0.0
  %117 = vmatpush1.msra.mxu0 0.0
  %118 = vmatprep.subr.mxu0 0.0
  %119 = vmatpush1.msra.mxu0 0.0
  %120 = vmatprep.subr.mxu0 0.0
  %121 = vmatpush1.msra.mxu0 0.0
  %122 = vmatprep.subr.mxu0 0.0
  %123 = vmatpush1.msra.mxu0 0.0
  %124 = vmatprep.subr.mxu0 0.0
  %125 = vmatpush1.msra.mxu0 0.0
  %126 = vmatprep.subr.mxu0 0.0
  %127 = vmatpush1.msra.mxu0 0.0
  %128 = vmatprep.subr.mxu0 0.0
  %129 = vmatpush1.msra.mxu0 0.0
  %130 = vmatprep.subr.mxu0 0.0
  %131 = vmatpush1.msra.mxu0 0.0
  %132 = vmatprep.subr.mxu0 0.0
  %133 = vmatpush1.msra.mxu0 0.0
  %134 = vmatprep.subr.mxu0 0.0
  %135 = vmatpush1.msra.mxu0 0.0
  %136 = vmatprep.subr.mxu0 0.0
  %137 = vmatpush1.msra.mxu0 0.0
  %138 = vmatprep.subr.mxu0 0.0
  %139 = vmatpush1.msra.mxu0 0.0
  %140 = vmatprep.subr.mxu0 0.0
  %141 = vmatpush1.msra.mxu0 0.0
  %142 = vmatprep.subr.mxu0 0.0
  %143 = vmatpush1.msra.mxu0 0.0
  %144 = vmatprep.subr.mxu0 0.0
  %145 = vmatpush1.msra.mxu0 0.0
  %146 = vmatprep.subr.mxu0 0.0
  %147 = vmatpush1.msra.mxu0 0.0
  %148 = vmatprep.mubr.f32.mxu0 0.0
  %149 = vmatmul.mubr.f32.gmra.mrb[0].mxu0 %v82
  %v150 = vpop.f32.mrb[0].mxu0
  %v151 = vadd.f32 %v48, %v150
  %v152 = vpop.f32.mrb[0].mxu0
  %v153 = vadd.f32 %v52, %v152
  %154 = vdwg.mxu0
  %155 = vmatprep.subr.mxu0 %v18
  %156 = vmatpush1.msra.mxu0 %v17
  %157 = vmatprep.subr.mxu0 %v25
  %158 = vmatpush1.msra.mxu0 %v24
  %159 = vmatprep.subr.mxu0 %v32
  %160 = vmatpush1.msra.mxu0 %v31
  %161 = vmatprep.subr.mxu0 %v39
  %162 = vmatpush1.msra.mxu0 %v38
  %163 = vmatprep.subr.mxu0 0.0
  %164 = vmatpush1.msra.mxu0 0.0
  %165 = vmatprep.subr.mxu0 0.0
  %166 = vmatpush1.msra.mxu0 0.0
  %167 = vmatprep.subr.mxu0 0.0
  %168 = vmatpush1.msra.mxu0 0.0
  %169 = vmatprep.subr.mxu0 0.0
  %170 = vmatpush1.msra.mxu0 0.0
  %171 = vmatprep.subr.mxu0 0.0
  %172 = vmatpush1.msra.mxu0 0.0
  %173 = vmatprep.subr.mxu0 0.0
  %174 = vmatpush1.msra.mxu0 0.0
  %175 = vmatprep.subr.mxu0 0.0
  %176 = vmatpush1.msra.mxu0 0.0
  %177 = vmatprep.subr.mxu0 0.0
  %178 = vmatpush1.msra.mxu0 0.0
  %179 = vmatprep.subr.mxu0 0.0
  %180 = vmatpush1.msra.mxu0 0.0
  %181 = vmatprep.subr.mxu0 0.0
  %182 = vmatpush1.msra.mxu0 0.0
  %183 = vmatprep.subr.mxu0 0.0
  %184 = vmatpush1.msra.mxu0 0.0
  %185 = vmatprep.subr.mxu0 0.0
  %186 = vmatpush1.msra.mxu0 0.0
  %187 = vmatprep.subr.mxu0 0.0
  %188 = vmatpush1.msra.mxu0 0.0
  %189 = vmatprep.subr.mxu0 0.0
  %190 = vmatpush1.msra.mxu0 0.0
  %191 = vmatprep.subr.mxu0 0.0
  %192 = vmatpush1.msra.mxu0 0.0
  %193 = vmatprep.subr.mxu0 0.0
  %194 = vmatpush1.msra.mxu0 0.0
  %195 = vmatprep.subr.mxu0 0.0
  %196 = vmatpush1.msra.mxu0 0.0
  %197 = vmatprep.subr.mxu0 0.0
  %198 = vmatpush1.msra.mxu0 0.0
  %199 = vmatprep.subr.mxu0 0.0
  %200 = vmatpush1.msra.mxu0 0.0
  %201 = vmatprep.subr.mxu0 0.0
  %202 = vmatpush1.msra.mxu0 0.0
  %203 = vmatprep.subr.mxu0 0.0
  %204 = vmatpush1.msra.mxu0 0.0
  %205 = vmatprep.subr.mxu0 0.0
  %206 = vmatpush1.msra.mxu0 0.0
  %207 = vmatprep.subr.mxu0 0.0
  %208 = vmatpush1.msra.mxu0 0.0
  %209 = vmatprep.subr.mxu0 0.0
  %210 = vmatpush1.msra.mxu0 0.0
  %211 = vmatprep.subr.mxu0 0.0
  %212 = vmatpush1.msra.mxu0 0.0
  %213 = vmatprep.subr.mxu0 0.0
  %214 = vmatpush1.msra.mxu0 0.0
  %215 = vmatprep.subr.mxu0 0.0
  %216 = vmatpush1.msra.mxu0 0.0
  %217 = vmatprep.subr.mxu0 0.0
  %218 = vmatpush1.msra.mxu0 0.0
  %219 = vmatprep.mubr.f32.mxu0 0.0
  %220 = vmatmul.mubr.f32.gmra.mrb[0].mxu0 %v82
  %v221 = vpop.f32.mrb[0].mxu0
  %v222 = vadd.f32 %v56, %v221
  %v223 = vpop.f32.mrb[0].mxu0
  %v224 = vadd.f32 %v60, %v223
  %225 = vdwg.mxu0
  %226 = vmatprep.subr.mxu0 %v20
  %227 = vmatpush1.msra.mxu0 %v19
  %228 = vmatprep.subr.mxu0 %v27
  %229 = vmatpush1.msra.mxu0 %v26
  %230 = vmatprep.subr.mxu0 %v34
  %231 = vmatpush1.msra.mxu0 %v33
  %232 = vmatprep.subr.mxu0 %v41
  %233 = vmatpush1.msra.mxu0 %v40
  %234 = vmatprep.subr.mxu0 0.0
  %235 = vmatpush1.msra.mxu0 0.0
  %236 = vmatprep.subr.mxu0 0.0
  %237 = vmatpush1.msra.mxu0 0.0
  %238 = vmatprep.subr.mxu0 0.0
  %239 = vmatpush1.msra.mxu0 0.0
  %240 = vmatprep.subr.mxu0 0.0
  %241 = vmatpush1.msra.mxu0 0.0
  %242 = vmatprep.subr.mxu0 0.0
  %243 = vmatpush1.msra.mxu0 0.0
  %244 = vmatprep.subr.mxu0 0.0
  %245 = vmatpush1.msra.mxu0 0.0
  %246 = vmatprep.subr.mxu0 0.0
  %247 = vmatpush1.msra.mxu0 0.0
  %248 = vmatprep.subr.mxu0 0.0
  %249 = vmatpush1.msra.mxu0 0.0
  %250 = vmatprep.subr.mxu0 0.0
  %251 = vmatpush1.msra.mxu0 0.0
  %252 = vmatprep.subr.mxu0 0.0
  %253 = vmatpush1.msra.mxu0 0.0
  %254 = vmatprep.subr.mxu0 0.0
  %255 = vmatpush1.msra.mxu0 0.0
  %256 = vmatprep.subr.mxu0 0.0
  %257 = vmatpush1.msra.mxu0 0.0
  %258 = vmatprep.subr.mxu0 0.0
  %259 = vmatpush1.msra.mxu0 0.0
  %260 = vmatprep.subr.mxu0 0.0
  %261 = vmatpush1.msra.mxu0 0.0
  %262 = vmatprep.subr.mxu0 0.0
  %263 = vmatpush1.msra.mxu0 0.0
  %264 = vmatprep.subr.mxu0 0.0
  %265 = vmatpush1.msra.mxu0 0.0
  %266 = vmatprep.subr.mxu0 0.0
  %267 = vmatpush1.msra.mxu0 0.0
  %268 = vmatprep.subr.mxu0 0.0
  %269 = vmatpush1.msra.mxu0 0.0
  %270 = vmatprep.subr.mxu0 0.0
  %271 = vmatpush1.msra.mxu0 0.0
  %272 = vmatprep.subr.mxu0 0.0
  %273 = vmatpush1.msra.mxu0 0.0
  %274 = vmatprep.subr.mxu0 0.0
  %275 = vmatpush1.msra.mxu0 0.0
  %276 = vmatprep.subr.mxu0 0.0
  %277 = vmatpush1.msra.mxu0 0.0
  %278 = vmatprep.subr.mxu0 0.0
  %279 = vmatpush1.msra.mxu0 0.0
  %280 = vmatprep.subr.mxu0 0.0
  %281 = vmatpush1.msra.mxu0 0.0
  %282 = vmatprep.subr.mxu0 0.0
  %283 = vmatpush1.msra.mxu0 0.0
  %284 = vmatprep.subr.mxu0 0.0
  %285 = vmatpush1.msra.mxu0 0.0
  %286 = vmatprep.subr.mxu0 0.0
  %287 = vmatpush1.msra.mxu0 0.0
  %288 = vmatprep.subr.mxu0 0.0
  %289 = vmatpush1.msra.mxu0 0.0
  %290 = vmatprep.mubr.f32.mxu0 0.0
  %291 = vmatmul.mubr.f32.gmra.mrb[0].mxu0 %v82
  %v292 = vpop.f32.mrb[0].mxu0
  %v293 = vadd.f32 %v64, %v292
  %v294 = vpop.f32.mrb[0].mxu0
  %v295 = vadd.f32 %v68, %v294
  %296 = vdwg.mxu0
  %297 = vmatprep.subr.mxu0 0.0
  %298 = vmatpush1.msra.mxu0 %v21
  %299 = vmatprep.subr.mxu0 0.0
  %300 = vmatpush1.msra.mxu0 %v28
  %301 = vmatprep.subr.mxu0 0.0
  %302 = vmatpush1.msra.mxu0 %v35
  %303 = vmatprep.subr.mxu0 0.0
  %304 = vmatpush1.msra.mxu0 %v42
  %305 = vmatprep.subr.mxu0 0.0
  %306 = vmatpush1.msra.mxu0 0.0
  %307 = vmatprep.subr.mxu0 0.0
  %308 = vmatpush1.msra.mxu0 0.0
  %309 = vmatprep.subr.mxu0 0.0
  %310 = vmatpush1.msra.mxu0 0.0
  %311 = vmatprep.subr.mxu0 0.0
  %312 = vmatpush1.msra.mxu0 0.0
  %313 = vmatprep.subr.mxu0 0.0
  %314 = vmatpush1.msra.mxu0 0.0
  %315 = vmatprep.subr.mxu0 0.0
  %316 = vmatpush1.msra.mxu0 0.0
  %317 = vmatprep.subr.mxu0 0.0
  %318 = vmatpush1.msra.mxu0 0.0
  %319 = vmatprep.subr.mxu0 0.0
  %320 = vmatpush1.msra.mxu0 0.0
  %321 = vmatprep.subr.mxu0 0.0
  %322 = vmatpush1.msra.mxu0 0.0
  %323 = vmatprep.subr.mxu0 0.0
  %324 = vmatpush1.msra.mxu0 0.0
  %325 = vmatprep.subr.mxu0 0.0
  %326 = vmatpush1.msra.mxu0 0.0
  %327 = vmatprep.subr.mxu0 0.0
  %328 = vmatpush1.msra.mxu0 0.0
  %329 = vmatprep.subr.mxu0 0.0
  %330 = vmatpush1.msra.mxu0 0.0
  %331 = vmatprep.subr.mxu0 0.0
  %332 = vmatpush1.msra.mxu0 0.0
  %333 = vmatprep.subr.mxu0 0.0
  %334 = vmatpush1.msra.mxu0 0.0
  %335 = vmatprep.subr.mxu0 0.0
  %336 = vmatpush1.msra.mxu0 0.0
  %337 = vmatprep.subr.mxu0 0.0
  %338 = vmatpush1.msra.mxu0 0.0
  %339 = vmatprep.subr.mxu0 0.0
  %340 = vmatpush1.msra.mxu0 0.0
  %341 = vmatprep.subr.mxu0 0.0
  %342 = vmatpush1.msra.mxu0 0.0
  %343 = vmatprep.subr.mxu0 0.0
  %344 = vmatpush1.msra.mxu0 0.0
  %345 = vmatprep.subr.mxu0 0.0
  %346 = vmatpush1.msra.mxu0 0.0
  %347 = vmatprep.subr.mxu0 0.0
  %348 = vmatpush1.msra.mxu0 0.0
  %349 = vmatprep.subr.mxu0 0.0
  %350 = vmatpush1.msra.mxu0 0.0
  %351 = vmatprep.subr.mxu0 0.0
  %352 = vmatpush1.msra.mxu0 0.0
  %353 = vmatprep.subr.mxu0 0.0
  %354 = vmatpush1.msra.mxu0 0.0
  %355 = vmatprep.subr.mxu0 0.0
  %356 = vmatpush1.msra.mxu0 0.0
  %357 = vmatprep.subr.mxu0 0.0
  %358 = vmatpush1.msra.mxu0 0.0
  %359 = vmatprep.subr.mxu0 0.0
  %360 = vmatpush1.msra.mxu0 0.0
  %361 = vmatprep.mubr.f32.mxu0 0.0
  %362 = vmatmul.mubr.f32.gmra.mrb[0].mxu0 %v82
  %v363 = vpop.f32.mrb[0].mxu0
  %v364 = vadd.f32 %v72, %v363
  %v365 = vpop.f32.mrb[0].mxu0
  %366 = vdwg.mxu0
  %v367 = vmax.f32 %v151, 0.0
  %v368 = vmax.f32 %v153, 0.0
  %v369 = vmax.f32 %v222, 0.0
  %v370 = vmax.f32 %v224, 0.0
  %v371 = vmax.f32 %v293, 0.0
  %v372 = vmax.f32 %v295, 0.0
  %v373 = vmax.f32 %v364, 0.0
  %374 = vst [vmem:[%s3] sm:$0xff] %v367
  %375 = vst [vmem:[%s3 + $0x8] sm:$0xff] %v368
  %376 = vst [vmem:[%s3 + $0x10] sm:$0xff] %v369
  %377 = vst [vmem:[%s3 + $0x18] sm:$0xff] %v370
  %378 = vst [vmem:[%s3 + $0x20] sm:$0xff] %v371
  %379 = vst [vmem:[%s3 + $0x28] sm:$0xff] %v372
  %380 = vst [vmem:[%s3 + $0x30] sm:$0xff] %v373
  // Predicated region
  $region14: #{_lambda_.4} parent=0 // pred_check
    _
  $region15: #{_lambda_.4} parent=0 // pred_check_branch
    %382 = sbr.rel (0) target = $region17
  $region16: #{_lambda_.4} parent=0 // pred_region
    _
  $region17: #{_lambda_.4} parent=0 // pred_fallthru
    _
  // Predicated region
  $region18: #{_lambda_.4} parent=0 // pred_check
    _
  $region19: #{_lambda_.4} parent=0 // pred_check_branch
    %384 = sbr.rel (0) target = $region21
  $region20: #{_lambda_.4} parent=0 // pred_region
    _
  $region21: #{_lambda_.4} parent=0 // pred_fallthru
    _

// kernel: tile.28
$region0: #{tile.28}
  #allocation0 [shape = 's32[1]{0}', space=sflag, size = 0x4, scoped, tag = 'scoped memory for tile.28']
  %s0 = inlined_call_operand.vmem [shape: f32[16], index: 0, kind: input, shape index: {}]
  %s1 = inlined_call_operand.vmem [shape: f32[32,16], index: 1, kind: output, shape index: {}]
  // Predicated region
  $region2: #{tile.28} parent=0 // pred_check
    _
  $region3: #{tile.28} parent=0 // pred_check_branch
    %3 = sbr.rel (0) target = $region5
  $region4: #{tile.28} parent=0 // pred_region
    _
  $region5: #{tile.28} parent=0 // pred_fallthru
    _
  %v4 = vld [vmem:[%s0] ss:$0 sm:$0xff]
  %5 = vst [vmem:[%s1] sm:$0xff] %v4
  %s6 = scalar_lea.vmem %s1, 8
  %7 = vst [vmem:[%s6] sm:$0xff] %v4
  %s8 = scalar_lea.vmem %s1, 16
  %9 = vst [vmem:[%s8] sm:$0xff] %v4
  %s10 = scalar_lea.vmem %s1, 24
  %11 = vst [vmem:[%s10] sm:$0xff] %v4

// kernel: tile.29
$region0: #{tile.29}
  %s0 = inlined_call_operand.vmem [shape: f32[32,16], index: 0, kind: input, shape index: {}]
  %s1 = inlined_call_operand.vmem [shape: f32[1,512], index: 1, kind: output, shape index: {}]
  $region1: #{tile.29} parent=0
    #allocation0 [shape = 'u8[16384]{0}', space=vmem, size = 0x4000, scoped, tag = 'scoped mem for output reshape']
    %v2 = vld [vmem:[%s0] ss:$8 sm:$0xf]
    %vm3 = vcmask 130048
    %4 = vst.msk [vmem:[#allocation0] ss:$8 sm:$0xf] %vm3, %v2
    %s5 = scalar_lea.vmem %s0, 7
    %v6 = vld [vmem:[%s5] ss:$8 sm:$0xf]
    %7 = vrot.lane.b32.xlu0 %v6, 112
    %v8 = vpop.permute.xlu0 %7
    %vm9 = vcmask 1048448
    %10 = vst.msk [vmem:[#allocation0] ss:$8 sm:$0xf] %vm9, %v8
    %s11 = scalar_lea.vmem %s0, 6
    %v12 = vld [vmem:[%s11] ss:$8 sm:$0xf]
    %13 = vrot.lane.b32.xlu0 %v12, 96
    %v14 = vpop.permute.xlu0 %13
    %vm15 = vcmask 917248
    %16 = vst.msk [vmem:[#allocation0] ss:$8 sm:$0xf] %vm15, %v14
    %s17 = scalar_lea.vmem %s0, 5
    %v18 = vld [vmem:[%s17] ss:$8 sm:$0xf]
    %19 = vrot.lane.b32.xlu0 %v18, 80
    %v20 = vpop.permute.xlu0 %19
    %vm21 = vcmask 786048
    %22 = vst.msk [vmem:[#allocation0] ss:$8 sm:$0xf] %vm21, %v20
    %s23 = scalar_lea.vmem %s0, 4
    %v24 = vld [vmem:[%s23] ss:$8 sm:$0xf]
    %25 = vrot.lane.b32.xlu0 %v24, 64
    %v26 = vpop.permute.xlu0 %25
    %vm27 = vcmask 654848
    %28 = vst.msk [vmem:[#allocation0] ss:$8 sm:$0xf] %vm27, %v26
    %s29 = scalar_lea.vmem %s0, 3
    %v30 = vld [vmem:[%s29] ss:$8 sm:$0xf]
    %31 = vrot.lane.b32.xlu0 %v30, 48
    %v32 = vpop.permute.xlu0 %31
    %vm33 = vcmask 523648
    %34 = vst.msk [vmem:[#allocation0] ss:$8 sm:$0xf] %vm33, %v32
    %s35 = scalar_lea.vmem %s0, 2
    %v36 = vld [vmem:[%s35] ss:$8 sm:$0xf]
    %37 = vrot.lane.b32.xlu0 %v36, 32
    %v38 = vpop.permute.xlu0 %37
    %vm39 = vcmask 392448
    %40 = vst.msk [vmem:[#allocation0] ss:$8 sm:$0xf] %vm39, %v38
    %s41 = scalar_lea.vmem %s0, 1
    %v42 = vld [vmem:[%s41] ss:$8 sm:$0xf]
    %43 = vrot.lane.b32.xlu0 %v42, 16
    %v44 = vpop.permute.xlu0 %43
    %vm45 = vcmask 261248
    %46 = vst.msk [vmem:[#allocation0] ss:$8 sm:$0xf] %vm45, %v44
    %s48 = sshllo.u32 0, 1
    %v50 = vld [vmem:[#allocation0] sm:%s48]
    %s51 = sshllo.u32 0, 1
    %52 = vst [vmem:[%s1] sm:%s51] %v50
    %s53 = scalar_lea.vmem [#allocation0], 8
    %v54 = vld [vmem:[%s53] sm:%s48]
    %s55 = sshllo.u32 0, 1
    %s56 = scalar_lea.vmem %s1, 1
    %57 = vst [vmem:[%s56] sm:%s55] %v54
    %s58 = scalar_lea.vmem [#allocation0], 16
    %v59 = vld [vmem:[%s58] sm:%s48]
    %s60 = sshllo.u32 0, 1
    %s61 = smul.addr 1, 2
    %s62 = scalar_lea.vmem %s1, %s61
    %63 = vst [vmem:[%s62] sm:%s60] %v59
    %s64 = scalar_lea.vmem [#allocation0], 24
    %v65 = vld [vmem:[%s64] sm:%s48]
    %s66 = sshllo.u32 0, 1
    %s67 = smul.addr 1, 3
    %s68 = scalar_lea.vmem %s1, %s67
    %69 = vst [vmem:[%s68] sm:%s66] %v65

// kernel: _lambda_.5
$region0: #{_lambda_.5}
  #allocation0 [shape = 'u32[]', space=smem, size = 0x4, offset = 0x4, fixed_abs, tag = 'smem constant byte address 0x4 - core index']
  #allocation1 [shape = 'u32[144,128]{1,0:T(1,128)}', space=vmem, size = 0x12000, scoped, tag = 'internal scratch']
  %s0 = inlined_call_operand.vmem [shape: f32[56,960], index: 0, kind: input, shape index: {}]
  %s1 = inlined_call_operand.vmem [shape: f32[960,512], index: 1, kind: input, shape index: {}]
  %s2 = inlined_call_operand.vmem [shape: f32[1,512], index: 2, kind: input, shape index: {}]
  %s3 = inlined_call_operand.vmem [shape: f32[56,512], index: 3, kind: output, shape index: {}]
  %s4 = sld [smem:[#allocation0]]
  $region22: #{_lambda_.5} parent=0
    _
  %s6 = ssub.s32 1, %s4
  %s7 = scalar_select 0, %s6, %s4
  // Predicated region
  $region2: #{_lambda_.5} parent=0 // pred_check
    _
  $region3: #{_lambda_.5} parent=0 // pred_check_branch
    %9 = sbr.rel (0) target = $region5
  $region4: #{_lambda_.5} parent=0 // pred_region
    _
  $region5: #{_lambda_.5} parent=0 // pred_fallthru
    _
  // Predicated region
  $region6: #{_lambda_.5} parent=0 // pred_check
    _
  $region7: #{_lambda_.5} parent=0 // pred_check_branch
    %11 = sbr.rel (0) target = $region9
  $region8: #{_lambda_.5} parent=0 // pred_region
    _
  $region9: #{_lambda_.5} parent=0 // pred_fallthru
    _
  // Predicated region
  $region10: #{_lambda_.5} parent=0 // pred_check
    _
  $region11: #{_lambda_.5} parent=0 // pred_check_branch
    %13 = sbr.rel (0) target = $region13
  $region12: #{_lambda_.5} parent=0 // pred_region
    _
  $region13: #{_lambda_.5} parent=0 // pred_fallthru
    _
  %v14 = vld [vmem:[%s0] sm:$0xff]
  %v15 = vld [vmem:[%s0 + $0x8] sm:$0xff]
  %v16 = vld [vmem:[%s0 + $0x10] sm:$0xff]
  %v17 = vld [vmem:[%s0 + $0x18] sm:$0xff]
  %v18 = vld [vmem:[%s0 + $0x20] sm:$0xff]
  %v19 = vld [vmem:[%s0 + $0x28] sm:$0xff]
  %v20 = vld [vmem:[%s0 + $0x30] sm:$0xff]
  %v21 = vld [vmem:[%s0 + $0x38] sm:$0xff]
  %v22 = vld [vmem:[%s0 + $0x40] sm:$0xff]
  %v23 = vld [vmem:[%s0 + $0x48] sm:$0xff]
  %v24 = vld [vmem:[%s0 + $0x50] sm:$0xff]
  %v25 = vld [vmem:[%s0 + $0x58] sm:$0xff]
  %v26 = vld [vmem:[%s0 + $0x60] sm:$0xff]
  %v27 = vld [vmem:[%s0 + $0x68] sm:$0xff]
  %v28 = vld [vmem:[%s0 + $0x70] sm:$0xff]
  %v29 = vld [vmem:[%s0 + $0x78] sm:$0xff]
  %v30 = vld [vmem:[%s0 + $0x80] sm:$0xff]
  %v31 = vld [vmem:[%s0 + $0x88] sm:$0xff]
  %v32 = vld [vmem:[%s0 + $0x90] sm:$0xff]
  %v33 = vld [vmem:[%s0 + $0x98] sm:$0xff]
  %v34 = vld [vmem:[%s0 + $0xa0] sm:$0xff]
  %v35 = vld [vmem:[%s0 + $0xa8] sm:$0xff]
  %v36 = vld [vmem:[%s0 + $0xb0] sm:$0xff]
  %v37 = vld [vmem:[%s0 + $0xb8] sm:$0xff]
  %v38 = vld [vmem:[%s0 + $0xc0] sm:$0xff]
  %v39 = vld [vmem:[%s0 + $0xc8] sm:$0xff]
  %v40 = vld [vmem:[%s0 + $0xd0] sm:$0xff]
  %v41 = vld [vmem:[%s0 + $0xd8] sm:$0xff]
  %v42 = vld [vmem:[%s0 + $0xe0] sm:$0xff]
  %v43 = vld [vmem:[%s0 + $0xe8] sm:$0xff]
  %v44 = vld [vmem:[%s0 + $0xf0] sm:$0xff]
  %v45 = vld [vmem:[%s0 + $0xf8] sm:$0xff]
  %v46 = vld [vmem:[%s0 + $0x100] sm:$0xff]
  %v47 = vld [vmem:[%s0 + $0x108] sm:$0xff]
  %v48 = vld [vmem:[%s0 + $0x110] sm:$0xff]
  %v49 = vld [vmem:[%s0 + $0x118] sm:$0xff]
  %v50 = vld [vmem:[%s0 + $0x120] sm:$0xff]
  %v51 = vld [vmem:[%s0 + $0x128] sm:$0xff]
  %v52 = vld [vmem:[%s0 + $0x130] sm:$0xff]
  %v53 = vld [vmem:[%s0 + $0x138] sm:$0xff]
  %v54 = vld [vmem:[%s0 + $0x140] sm:$0xff]
  %v55 = vld [vmem:[%s0 + $0x148] sm:$0xff]
  %v56 = vld [vmem:[%s0 + $0x150] sm:$0xff]
  %v57 = vld [vmem:[%s0 + $0x158] sm:$0xff]
  %v58 = vld [vmem:[%s0 + $0x160] sm:$0xff]
  %v59 = vld [vmem:[%s0 + $0x168] sm:$0xff]
  %v60 = vld [vmem:[%s0 + $0x170] sm:$0xff]
  %v61 = vld [vmem:[%s0 + $0x178] sm:$0xff]
  %v62 = vld [vmem:[%s0 + $0x180] sm:$0xff]
  %v63 = vld [vmem:[%s0 + $0x188] sm:$0xff]
  %v64 = vld [vmem:[%s0 + $0x190] sm:$0xff]
  %v65 = vld [vmem:[%s0 + $0x198] sm:$0xff]
  %v66 = vld [vmem:[%s0 + $0x1a0] sm:$0xff]
  %v67 = vld [vmem:[%s0 + $0x1a8] sm:$0xff]
  %v68 = vld [vmem:[%s0 + $0x1b0] sm:$0xff]
  %v69 = vld [vmem:[%s0 + $0x1b8] sm:$0xff]
  %v70 = vld [vmem:[%s1] sm:$0xff]
  %v71 = vld [vmem:[%s1 + $0x8] sm:$0xff]
  %v72 = vld [vmem:[%s1 + $0x10] sm:$0xff]
  %v73 = vld [vmem:[%s1 + $0x18] sm:$0xff]
  %v74 = vld [vmem:[%s1 + $0x20] sm:$0xff]
  %v75 = vld [vmem:[%s1 + $0x28] sm:$0xff]
  %v76 = vld [vmem:[%s1 + $0x30] sm:$0xff]
  %v77 = vld [vmem:[%s1 + $0x38] sm:$0xff]
  %v78 = vld [vmem:[%s1 + $0x40] sm:$0xff]
  %v79 = vld [vmem:[%s1 + $0x48] sm:$0xff]
  %v80 = vld [vmem:[%s1 + $0x50] sm:$0xff]
  %v81 = vld [vmem:[%s1 + $0x58] sm:$0xff]
  %v82 = vld [vmem:[%s1 + $0x60] sm:$0xff]
  %v83 = vld [vmem:[%s1 + $0x68] sm:$0xff]
  %v84 = vld [vmem:[%s1 + $0x70] sm:$0xff]
  %v85 = vld [vmem:[%s1 + $0x78] sm:$0xff]
  %v86 = vld [vmem:[%s1 + $0x80] sm:$0xff]
  %v87 = vld [vmem:[%s1 + $0x88] sm:$0xff]
  %v88 = vld [vmem:[%s1 + $0x90] sm:$0xff]
  %v89 = vld [vmem:[%s1 + $0x98] sm:$0xff]
  %v90 = vld [vmem:[%s1 + $0xa0] sm:$0xff]
  %v91 = vld [vmem:[%s1 + $0xa8] sm:$0xff]
  %v92 = vld [vmem:[%s1 + $0xb0] sm:$0xff]
  %v93 = vld [vmem:[%s1 + $0xb8] sm:$0xff]
  %v94 = vld [vmem:[%s1 + $0xc0] sm:$0xff]
  %v95 = vld [vmem:[%s1 + $0xc8] sm:$0xff]
  %v96 = vld [vmem:[%s1 + $0xd0] sm:$0xff]
  %v97 = vld [vmem:[%s1 + $0xd8] sm:$0xff]
  %v98 = vld [vmem:[%s1 + $0xe0] sm:$0xff]
  %v99 = vld [vmem:[%s1 + $0xe8] sm:$0xff]
  %v100 = vld [vmem:[%s1 + $0xf0] sm:$0xff]
  %v101 = vld [vmem:[%s1 + $0xf8] sm:$0xff]
  %v102 = vld [vmem:[%s1 + $0x100] sm:$0xff]
  %v103 = vld [vmem:[%s1 + $0x108] sm:$0xff]
  %v104 = vld [vmem:[%s1 + $0x110] sm:$0xff]
  %v105 = vld [vmem:[%s1 + $0x118] sm:$0xff]
  %v106 = vld [vmem:[%s1 + $0x120] sm:$0xff]
  %v107 = vld [vmem:[%s1 + $0x128] sm:$0xff]
  %v108 = vld [vmem:[%s1 + $0x130] sm:$0xff]
  %v109 = vld [vmem:[%s1 + $0x138] sm:$0xff]
  %v110 = vld [vmem:[%s1 + $0x140] sm:$0xff]
  %v111 = vld [vmem:[%s1 + $0x148] sm:$0xff]
  %v112 = vld [vmem:[%s1 + $0x150] sm:$0xff]
  %v113 = vld [vmem:[%s1 + $0x158] sm:$0xff]
  %v114 = vld [vmem:[%s1 + $0x160] sm:$0xff]
  %v115 = vld [vmem:[%s1 + $0x168] sm:$0xff]
  %v116 = vld [vmem:[%s1 + $0x170] sm:$0xff]
  %v117 = vld [vmem:[%s1 + $0x178] sm:$0xff]
  %v118 = vld [vmem:[%s1 + $0x180] sm:$0xff]
  %v119 = vld [vmem:[%s1 + $0x188] sm:$0xff]
  %v120 = vld [vmem:[%s1 + $0x190] sm:$0xff]
  %v121 = vld [vmem:[%s1 + $0x198] sm:$0xff]
  %v122 = vld [vmem:[%s1 + $0x1a0] sm:$0xff]
  %v123 = vld [vmem:[%s1 + $0x1a8] sm:$0xff]
  %v124 = vld [vmem:[%s1 + $0x1b0] sm:$0xff]
  %v125 = vld [vmem:[%s1 + $0x1b8] sm:$0xff]
  %v126 = vld [vmem:[%s1 + $0x1c0] sm:$0xff]
  %v127 = vld [vmem:[%s1 + $0x1c8] sm:$0xff]
  %v128 = vld [vmem:[%s1 + $0x1d0] sm:$0xff]
  %v129 = vld [vmem:[%s1 + $0x1d8] sm:$0xff]
  %v130 = vld [vmem:[%s1 + $0x1e0] sm:$0xff]
  %v131 = vld [vmem:[%s1 + $0x1e8] sm:$0xff]
  %v132 = vld [vmem:[%s1 + $0x1f0] sm:$0xff]
  %v133 = vld [vmem:[%s1 + $0x1f8] sm:$0xff]
  %v134 = vld [vmem:[%s1 + $0x200] sm:$0xff]
  %v135 = vld [vmem:[%s1 + $0x208] sm:$0xff]
  %v136 = vld [vmem:[%s1 + $0x210] sm:$0xff]
  %v137 = vld [vmem:[%s1 + $0x218] sm:$0xff]
  %v138 = vld [vmem:[%s1 + $0x220] sm:$0xff]
  %v139 = vld [vmem:[%s1 + $0x228] sm:$0xff]
  %v140 = vld [vmem:[%s1 + $0x230] sm:$0xff]
  %v141 = vld [vmem:[%s1 + $0x238] sm:$0xff]
  %v142 = vld [vmem:[%s1 + $0x240] sm:$0xff]
  %v143 = vld [vmem:[%s1 + $0x248] sm:$0xff]
  %v144 = vld [vmem:[%s1 + $0x250] sm:$0xff]
  %v145 = vld [vmem:[%s1 + $0x258] sm:$0xff]
  %v146 = vld [vmem:[%s1 + $0x260] sm:$0xff]
  %v147 = vld [vmem:[%s1 + $0x268] sm:$0xff]
  %v148 = vld [vmem:[%s1 + $0x270] sm:$0xff]
  %v149 = vld [vmem:[%s1 + $0x278] sm:$0xff]
  %v150 = vld [vmem:[%s1 + $0x280] sm:$0xff]
  %v151 = vld [vmem:[%s1 + $0x288] sm:$0xff]
  %v152 = vld [vmem:[%s1 + $0x290] sm:$0xff]
  %v153 = vld [vmem:[%s1 + $0x298] sm:$0xff]
  %v154 = vld [vmem:[%s1 + $0x2a0] sm:$0xff]
  %v155 = vld [vmem:[%s1 + $0x2a8] sm:$0xff]
  %v156 = vld [vmem:[%s1 + $0x2b0] sm:$0xff]
  %v157 = vld [vmem:[%s1 + $0x2b8] sm:$0xff]
  %v158 = vld [vmem:[%s1 + $0x2c0] sm:$0xff]
  %v159 = vld [vmem:[%s1 + $0x2c8] sm:$0xff]
  %v160 = vld [vmem:[%s1 + $0x2d0] sm:$0xff]
  %v161 = vld [vmem:[%s1 + $0x2d8] sm:$0xff]
  %v162 = vld [vmem:[%s1 + $0x2e0] sm:$0xff]
  %v163 = vld [vmem:[%s1 + $0x2e8] sm:$0xff]
  %v164 = vld [vmem:[%s1 + $0x2f0] sm:$0xff]
  %v165 = vld [vmem:[%s1 + $0x2f8] sm:$0xff]
  %v166 = vld [vmem:[%s1 + $0x300] sm:$0xff]
  %v167 = vld [vmem:[%s1 + $0x308] sm:$0xff]
  %v168 = vld [vmem:[%s1 + $0x310] sm:$0xff]
  %v169 = vld [vmem:[%s1 + $0x318] sm:$0xff]
  %v170 = vld [vmem:[%s1 + $0x320] sm:$0xff]
  %v171 = vld [vmem:[%s1 + $0x328] sm:$0xff]
  %v172 = vld [vmem:[%s1 + $0x330] sm:$0xff]
  %v173 = vld [vmem:[%s1 + $0x338] sm:$0xff]
  %v174 = vld [vmem:[%s1 + $0x340] sm:$0xff]
  %v175 = vld [vmem:[%s1 + $0x348] sm:$0xff]
  %v176 = vld [vmem:[%s1 + $0x350] sm:$0xff]
  %v177 = vld [vmem:[%s1 + $0x358] sm:$0xff]
  %v178 = vld [vmem:[%s1 + $0x360] sm:$0xff]
  %v179 = vld [vmem:[%s1 + $0x368] sm:$0xff]
  %v180 = vld [vmem:[%s1 + $0x370] sm:$0xff]
  %v181 = vld [vmem:[%s1 + $0x378] sm:$0xff]
  %v182 = vld [vmem:[%s1 + $0x380] sm:$0xff]
  %v183 = vld [vmem:[%s1 + $0x388] sm:$0xff]
  %v184 = vld [vmem:[%s1 + $0x390] sm:$0xff]
  %v185 = vld [vmem:[%s1 + $0x398] sm:$0xff]
  %v186 = vld [vmem:[%s1 + $0x3a0] sm:$0xff]
  %v187 = vld [vmem:[%s1 + $0x3a8] sm:$0xff]
  %v188 = vld [vmem:[%s1 + $0x3b0] sm:$0xff]
  %v189 = vld [vmem:[%s1 + $0x3b8] sm:$0xff]
  %v190 = vld [vmem:[%s1 + $0x3c0] sm:$0xff]
  %v191 = vld [vmem:[%s1 + $0x3c8] sm:$0xff]
  %v192 = vld [vmem:[%s1 + $0x3d0] sm:$0xff]
  %v193 = vld [vmem:[%s1 + $0x3d8] sm:$0xff]
  %v194 = vld [vmem:[%s1 + $0x3e0] sm:$0xff]
  %v195 = vld [vmem:[%s1 + $0x3e8] sm:$0xff]
  %v196 = vld [vmem:[%s1 + $0x3f0] sm:$0xff]
  %v197 = vld [vmem:[%s1 + $0x3f8] sm:$0xff]
  %v198 = vld [vmem:[%s1 + $0x400] sm:$0xff]
  %v199 = vld [vmem:[%s1 + $0x408] sm:$0xff]
  %v200 = vld [vmem:[%s1 + $0x410] sm:$0xff]
  %v201 = vld [vmem:[%s1 + $0x418] sm:$0xff]
  %v202 = vld [vmem:[%s1 + $0x420] sm:$0xff]
  %v203 = vld [vmem:[%s1 + $0x428] sm:$0xff]
  %v204 = vld [vmem:[%s1 + $0x430] sm:$0xff]
  %v205 = vld [vmem:[%s1 + $0x438] sm:$0xff]
  %v206 = vld [vmem:[%s1 + $0x440] sm:$0xff]
  %v207 = vld [vmem:[%s1 + $0x448] sm:$0xff]
  %v208 = vld [vmem:[%s1 + $0x450] sm:$0xff]
  %v209 = vld [vmem:[%s1 + $0x458] sm:$0xff]
  %v210 = vld [vmem:[%s1 + $0x460] sm:$0xff]
  %v211 = vld [vmem:[%s1 + $0x468] sm:$0xff]
  %v212 = vld [vmem:[%s1 + $0x470] sm:$0xff]
  %v213 = vld [vmem:[%s1 + $0x478] sm:$0xff]
  %v214 = vld [vmem:[%s1 + $0x480] sm:$0xff]
  %v215 = vld [vmem:[%s1 + $0x488] sm:$0xff]
  %v216 = vld [vmem:[%s1 + $0x490] sm:$0xff]
  %v217 = vld [vmem:[%s1 + $0x498] sm:$0xff]
  %v218 = vld [vmem:[%s1 + $0x4a0] sm:$0xff]
  %v219 = vld [vmem:[%s1 + $0x4a8] sm:$0xff]
  %v220 = vld [vmem:[%s1 + $0x4b0] sm:$0xff]
  %v221 = vld [vmem:[%s1 + $0x4b8] sm:$0xff]
  %v222 = vld [vmem:[%s1 + $0x4c0] sm:$0xff]
  %v223 = vld [vmem:[%s1 + $0x4c8] sm:$0xff]
  %v224 = vld [vmem:[%s1 + $0x4d0] sm:$0xff]
  %v225 = vld [vmem:[%s1 + $0x4d8] sm:$0xff]
  %v226 = vld [vmem:[%s1 + $0x4e0] sm:$0xff]
  %v227 = vld [vmem:[%s1 + $0x4e8] sm:$0xff]
  %v228 = vld [vmem:[%s1 + $0x4f0] sm:$0xff]
  %v229 = vld [vmem:[%s1 + $0x4f8] sm:$0xff]
  %v230 = vld [vmem:[%s1 + $0x500] sm:$0xff]
  %v231 = vld [vmem:[%s1 + $0x508] sm:$0xff]
  %v232 = vld [vmem:[%s1 + $0x510] sm:$0xff]
  %v233 = vld [vmem:[%s1 + $0x518] sm:$0xff]
  %v234 = vld [vmem:[%s1 + $0x520] sm:$0xff]
  %v235 = vld [vmem:[%s1 + $0x528] sm:$0xff]
  %v236 = vld [vmem:[%s1 + $0x530] sm:$0xff]
  %v237 = vld [vmem:[%s1 + $0x538] sm:$0xff]
  %v238 = vld [vmem:[%s1 + $0x540] sm:$0xff]
  %v239 = vld [vmem:[%s1 + $0x548] sm:$0xff]
  %v240 = vld [vmem:[%s1 + $0x550] sm:$0xff]
  %v241 = vld [vmem:[%s1 + $0x558] sm:$0xff]
  %v242 = vld [vmem:[%s1 + $0x560] sm:$0xff]
  %v243 = vld [vmem:[%s1 + $0x568] sm:$0xff]
  %v244 = vld [vmem:[%s1 + $0x570] sm:$0xff]
  %v245 = vld [vmem:[%s1 + $0x578] sm:$0xff]
  %v246 = vld [vmem:[%s1 + $0x580] sm:$0xff]
  %v247 = vld [vmem:[%s1 + $0x588] sm:$0xff]
  %v248 = vld [vmem:[%s1 + $0x590] sm:$0xff]
  %v249 = vld [vmem:[%s1 + $0x598] sm:$0xff]
  %v250 = vld [vmem:[%s1 + $0x5a0] sm:$0xff]
  %v251 = vld [vmem:[%s1 + $0x5a8] sm:$0xff]
  %v252 = vld [vmem:[%s1 + $0x5b0] sm:$0xff]
  %v253 = vld [vmem:[%s1 + $0x5b8] sm:$0xff]
  %v254 = vld [vmem:[%s1 + $0x5c0] sm:$0xff]
  %v255 = vld [vmem:[%s1 + $0x5c8] sm:$0xff]
  %v256 = vld [vmem:[%s1 + $0x5d0] sm:$0xff]
  %v257 = vld [vmem:[%s1 + $0x5d8] sm:$0xff]
  %v258 = vld [vmem:[%s1 + $0x5e0] sm:$0xff]
  %v259 = vld [vmem:[%s1 + $0x5e8] sm:$0xff]
  %v260 = vld [vmem:[%s1 + $0x5f0] sm:$0xff]
  %v261 = vld [vmem:[%s1 + $0x5f8] sm:$0xff]
  %v262 = vld [vmem:[%s1 + $0x600] sm:$0xff]
  %v263 = vld [vmem:[%s1 + $0x608] sm:$0xff]
  %v264 = vld [vmem:[%s1 + $0x610] sm:$0xff]
  %v265 = vld [vmem:[%s1 + $0x618] sm:$0xff]
  %v266 = vld [vmem:[%s1 + $0x620] sm:$0xff]
  %v267 = vld [vmem:[%s1 + $0x628] sm:$0xff]
  %v268 = vld [vmem:[%s1 + $0x630] sm:$0xff]
  %v269 = vld [vmem:[%s1 + $0x638] sm:$0xff]
  %v270 = vld [vmem:[%s1 + $0x640] sm:$0xff]
  %v271 = vld [vmem:[%s1 + $0x648] sm:$0xff]
  %v272 = vld [vmem:[%s1 + $0x650] sm:$0xff]
  %v273 = vld [vmem:[%s1 + $0x658] sm:$0xff]
  %v274 = vld [vmem:[%s1 + $0x660] sm:$0xff]
  %v275 = vld [vmem:[%s1 + $0x668] sm:$0xff]
  %v276 = vld [vmem:[%s1 + $0x670] sm:$0xff]
  %v277 = vld [vmem:[%s1 + $0x678] sm:$0xff]
  %v278 = vld [vmem:[%s1 + $0x680] sm:$0xff]
  %v279 = vld [vmem:[%s1 + $0x688] sm:$0xff]
  %v280 = vld [vmem:[%s1 + $0x690] sm:$0xff]
  %v281 = vld [vmem:[%s1 + $0x698] sm:$0xff]
  %v282 = vld [vmem:[%s1 + $0x6a0] sm:$0xff]
  %v283 = vld [vmem:[%s1 + $0x6a8] sm:$0xff]
  %v284 = vld [vmem:[%s1 + $0x6b0] sm:$0xff]
  %v285 = vld [vmem:[%s1 + $0x6b8] sm:$0xff]
  %v286 = vld [vmem:[%s1 + $0x6c0] sm:$0xff]
  %v287 = vld [vmem:[%s1 + $0x6c8] sm:$0xff]
  %v288 = vld [vmem:[%s1 + $0x6d0] sm:$0xff]
  %v289 = vld [vmem:[%s1 + $0x6d8] sm:$0xff]
  %v290 = vld [vmem:[%s1 + $0x6e0] sm:$0xff]
  %v291 = vld [vmem:[%s1 + $0x6e8] sm:$0xff]
  %v292 = vld [vmem:[%s1 + $0x6f0] sm:$0xff]
  %v293 = vld [vmem:[%s1 + $0x6f8] sm:$0xff]
  %v294 = vld [vmem:[%s1 + $0x700] sm:$0xff]
  %v295 = vld [vmem:[%s1 + $0x708] sm:$0xff]
  %v296 = vld [vmem:[%s1 + $0x710] sm:$0xff]
  %v297 = vld [vmem:[%s1 + $0x718] sm:$0xff]
  %v298 = vld [vmem:[%s1 + $0x720] sm:$0xff]
  %v299 = vld [vmem:[%s1 + $0x728] sm:$0xff]
  %v300 = vld [vmem:[%s1 + $0x730] sm:$0xff]
  %v301 = vld [vmem:[%s1 + $0x738] sm:$0xff]
  %v302 = vld [vmem:[%s1 + $0x740] sm:$0xff]
  %v303 = vld [vmem:[%s1 + $0x748] sm:$0xff]
  %v304 = vld [vmem:[%s1 + $0x750] sm:$0xff]
  %v305 = vld [vmem:[%s1 + $0x758] sm:$0xff]
  %v306 = vld [vmem:[%s1 + $0x760] sm:$0xff]
  %v307 = vld [vmem:[%s1 + $0x768] sm:$0xff]
  %v308 = vld [vmem:[%s1 + $0x770] sm:$0xff]
  %v309 = vld [vmem:[%s1 + $0x778] sm:$0xff]
  %v310 = vld [vmem:[%s1 + $0x780] sm:$0xff]
  %v311 = vld [vmem:[%s1 + $0x788] sm:$0xff]
  %v312 = vld [vmem:[%s1 + $0x790] sm:$0xff]
  %v313 = vld [vmem:[%s1 + $0x798] sm:$0xff]
  %v314 = vld [vmem:[%s1 + $0x7a0] sm:$0xff]
  %v315 = vld [vmem:[%s1 + $0x7a8] sm:$0xff]
  %v316 = vld [vmem:[%s1 + $0x7b0] sm:$0xff]
  %v317 = vld [vmem:[%s1 + $0x7b8] sm:$0xff]
  %v318 = vld [vmem:[%s1 + $0x7c0] sm:$0xff]
  %v319 = vld [vmem:[%s1 + $0x7c8] sm:$0xff]
  %v320 = vld [vmem:[%s1 + $0x7d0] sm:$0xff]
  %v321 = vld [vmem:[%s1 + $0x7d8] sm:$0xff]
  %v322 = vld [vmem:[%s1 + $0x7e0] sm:$0xff]
  %v323 = vld [vmem:[%s1 + $0x7e8] sm:$0xff]
  %v324 = vld [vmem:[%s1 + $0x7f0] sm:$0xff]
  %v325 = vld [vmem:[%s1 + $0x7f8] sm:$0xff]
  %v326 = vld [vmem:[%s1 + $0x800] sm:$0xff]
  %v327 = vld [vmem:[%s1 + $0x808] sm:$0xff]
  %v328 = vld [vmem:[%s1 + $0x810] sm:$0xff]
  %v329 = vld [vmem:[%s1 + $0x818] sm:$0xff]
  %v330 = vld [vmem:[%s1 + $0x820] sm:$0xff]
  %v331 = vld [vmem:[%s1 + $0x828] sm:$0xff]
  %v332 = vld [vmem:[%s1 + $0x830] sm:$0xff]
  %v333 = vld [vmem:[%s1 + $0x838] sm:$0xff]
  %v334 = vld [vmem:[%s1 + $0x840] sm:$0xff]
  %v335 = vld [vmem:[%s1 + $0x848] sm:$0xff]
  %v336 = vld [vmem:[%s1 + $0x850] sm:$0xff]
  %v337 = vld [vmem:[%s1 + $0x858] sm:$0xff]
  %v338 = vld [vmem:[%s1 + $0x860] sm:$0xff]
  %v339 = vld [vmem:[%s1 + $0x868] sm:$0xff]
  %v340 = vld [vmem:[%s1 + $0x870] sm:$0xff]
  %v341 = vld [vmem:[%s1 + $0x878] sm:$0xff]
  %v342 = vld [vmem:[%s1 + $0x880] sm:$0xff]
  %v343 = vld [vmem:[%s1 + $0x888] sm:$0xff]
  %v344 = vld [vmem:[%s1 + $0x890] sm:$0xff]
  %v345 = vld [vmem:[%s1 + $0x898] sm:$0xff]
  %v346 = vld [vmem:[%s1 + $0x8a0] sm:$0xff]
  %v347 = vld [vmem:[%s1 + $0x8a8] sm:$0xff]
  %v348 = vld [vmem:[%s1 + $0x8b0] sm:$0xff]
  %v349 = vld [vmem:[%s1 + $0x8b8] sm:$0xff]
  %v350 = vld [vmem:[%s1 + $0x8c0] sm:$0xff]
  %v351 = vld [vmem:[%s1 + $0x8c8] sm:$0xff]
  %v352 = vld [vmem:[%s1 + $0x8d0] sm:$0xff]
  %v353 = vld [vmem:[%s1 + $0x8d8] sm:$0xff]
  %v354 = vld [vmem:[%s1 + $0x8e0] sm:$0xff]
  %v355 = vld [vmem:[%s1 + $0x8e8] sm:$0xff]
  %v356 = vld [vmem:[%s1 + $0x8f0] sm:$0xff]
  %v357 = vld [vmem:[%s1 + $0x8f8] sm:$0xff]
  %v358 = vld [vmem:[%s1 + $0x900] sm:$0xff]
  %v359 = vld [vmem:[%s1 + $0x908] sm:$0xff]
  %v360 = vld [vmem:[%s1 + $0x910] sm:$0xff]
  %v361 = vld [vmem:[%s1 + $0x918] sm:$0xff]
  %v362 = vld [vmem:[%s1 + $0x920] sm:$0xff]
  %v363 = vld [vmem:[%s1 + $0x928] sm:$0xff]
  %v364 = vld [vmem:[%s1 + $0x930] sm:$0xff]
  %v365 = vld [vmem:[%s1 + $0x938] sm:$0xff]
  %v366 = vld [vmem:[%s1 + $0x940] sm:$0xff]
  %v367 = vld [vmem:[%s1 + $0x948] sm:$0xff]
  %v368 = vld [vmem:[%s1 + $0x950] sm:$0xff]
  %v369 = vld [vmem:[%s1 + $0x958] sm:$0xff]
  %v370 = vld [vmem:[%s1 + $0x960] sm:$0xff]
  %v371 = vld [vmem:[%s1 + $0x968] sm:$0xff]
  %v372 = vld [vmem:[%s1 + $0x970] sm:$0xff]
  %v373 = vld [vmem:[%s1 + $0x978] sm:$0xff]
  %v374 = vld [vmem:[%s1 + $0x980] sm:$0xff]
  %v375 = vld [vmem:[%s1 + $0x988] sm:$0xff]
  %v376 = vld [vmem:[%s1 + $0x990] sm:$0xff]
  %v377 = vld [vmem:[%s1 + $0x998] sm:$0xff]
  %v378 = vld [vmem:[%s1 + $0x9a0] sm:$0xff]
  %v379 = vld [vmem:[%s1 + $0x9a8] sm:$0xff]
  %v380 = vld [vmem:[%s1 + $0x9b0] sm:$0xff]
  %v381 = vld [vmem:[%s1 + $0x9b8] sm:$0xff]
  %v382 = vld [vmem:[%s1 + $0x9c0] sm:$0xff]
  %v383 = vld [vmem:[%s1 + $0x9c8] sm:$0xff]
  %v384 = vld [vmem:[%s1 + $0x9d0] sm:$0xff]
  %v385 = vld [vmem:[%s1 + $0x9d8] sm:$0xff]
  %v386 = vld [vmem:[%s1 + $0x9e0] sm:$0xff]
  %v387 = vld [vmem:[%s1 + $0x9e8] sm:$0xff]
  %v388 = vld [vmem:[%s1 + $0x9f0] sm:$0xff]
  %v389 = vld [vmem:[%s1 + $0x9f8] sm:$0xff]
  %v390 = vld [vmem:[%s1 + $0xa00] sm:$0xff]
  %v391 = vld [vmem:[%s1 + $0xa08] sm:$0xff]
  %v392 = vld [vmem:[%s1 + $0xa10] sm:$0xff]
  %v393 = vld [vmem:[%s1 + $0xa18] sm:$0xff]
  %v394 = vld [vmem:[%s1 + $0xa20] sm:$0xff]
  %v395 = vld [vmem:[%s1 + $0xa28] sm:$0xff]
  %v396 = vld [vmem:[%s1 + $0xa30] sm:$0xff]
  %v397 = vld [vmem:[%s1 + $0xa38] sm:$0xff]
  %v398 = vld [vmem:[%s1 + $0xa40] sm:$0xff]
  %v399 = vld [vmem:[%s1 + $0xa48] sm:$0xff]
  %v400 = vld [vmem:[%s1 + $0xa50] sm:$0xff]
  %v401 = vld [vmem:[%s1 + $0xa58] sm:$0xff]
  %v402 = vld [vmem:[%s1 + $0xa60] sm:$0xff]
  %v403 = vld [vmem:[%s1 + $0xa68] sm:$0xff]
  %v404 = vld [vmem:[%s1 + $0xa70] sm:$0xff]
  %v405 = vld [vmem:[%s1 + $0xa78] sm:$0xff]
  %v406 = vld [vmem:[%s1 + $0xa80] sm:$0xff]
  %v407 = vld [vmem:[%s1 + $0xa88] sm:$0xff]
  %v408 = vld [vmem:[%s1 + $0xa90] sm:$0xff]
  %v409 = vld [vmem:[%s1 + $0xa98] sm:$0xff]
  %v410 = vld [vmem:[%s1 + $0xaa0] sm:$0xff]
  %v411 = vld [vmem:[%s1 + $0xaa8] sm:$0xff]
  %v412 = vld [vmem:[%s1 + $0xab0] sm:$0xff]
  %v413 = vld [vmem:[%s1 + $0xab8] sm:$0xff]
  %v414 = vld [vmem:[%s1 + $0xac0] sm:$0xff]
  %v415 = vld [vmem:[%s1 + $0xac8] sm:$0xff]
  %v416 = vld [vmem:[%s1 + $0xad0] sm:$0xff]
  %v417 = vld [vmem:[%s1 + $0xad8] sm:$0xff]
  %v418 = vld [vmem:[%s1 + $0xae0] sm:$0xff]
  %v419 = vld [vmem:[%s1 + $0xae8] sm:$0xff]
  %v420 = vld [vmem:[%s1 + $0xaf0] sm:$0xff]
  %v421 = vld [vmem:[%s1 + $0xaf8] sm:$0xff]
  %v422 = vld [vmem:[%s1 + $0xb00] sm:$0xff]
  %v423 = vld [vmem:[%s1 + $0xb08] sm:$0xff]
  %v424 = vld [vmem:[%s1 + $0xb10] sm:$0xff]
  %v425 = vld [vmem:[%s1 + $0xb18] sm:$0xff]
  %v426 = vld [vmem:[%s1 + $0xb20] sm:$0xff]
  %v427 = vld [vmem:[%s1 + $0xb28] sm:$0xff]
  %v428 = vld [vmem:[%s1 + $0xb30] sm:$0xff]
  %v429 = vld [vmem:[%s1 + $0xb38] sm:$0xff]
  %v430 = vld [vmem:[%s1 + $0xb40] sm:$0xff]
  %v431 = vld [vmem:[%s1 + $0xb48] sm:$0xff]
  %v432 = vld [vmem:[%s1 + $0xb50] sm:$0xff]
  %v433 = vld [vmem:[%s1 + $0xb58] sm:$0xff]
  %v434 = vld [vmem:[%s1 + $0xb60] sm:$0xff]
  %v435 = vld [vmem:[%s1 + $0xb68] sm:$0xff]
  %v436 = vld [vmem:[%s1 + $0xb70] sm:$0xff]
  %v437 = vld [vmem:[%s1 + $0xb78] sm:$0xff]
  %v438 = vld [vmem:[%s1 + $0xb80] sm:$0xff]
  %v439 = vld [vmem:[%s1 + $0xb88] sm:$0xff]
  %v440 = vld [vmem:[%s1 + $0xb90] sm:$0xff]
  %v441 = vld [vmem:[%s1 + $0xb98] sm:$0xff]
  %v442 = vld [vmem:[%s1 + $0xba0] sm:$0xff]
  %v443 = vld [vmem:[%s1 + $0xba8] sm:$0xff]
  %v444 = vld [vmem:[%s1 + $0xbb0] sm:$0xff]
  %v445 = vld [vmem:[%s1 + $0xbb8] sm:$0xff]
  %v446 = vld [vmem:[%s1 + $0xbc0] sm:$0xff]
  %v447 = vld [vmem:[%s1 + $0xbc8] sm:$0xff]
  %v448 = vld [vmem:[%s1 + $0xbd0] sm:$0xff]
  %v449 = vld [vmem:[%s1 + $0xbd8] sm:$0xff]
  %v450 = vld [vmem:[%s1 + $0xbe0] sm:$0xff]
  %v451 = vld [vmem:[%s1 + $0xbe8] sm:$0xff]
  %v452 = vld [vmem:[%s1 + $0xbf0] sm:$0xff]
  %v453 = vld [vmem:[%s1 + $0xbf8] sm:$0xff]
  %v454 = vld [vmem:[%s1 + $0xc00] sm:$0xff]
  %v455 = vld [vmem:[%s1 + $0xc08] sm:$0xff]
  %v456 = vld [vmem:[%s1 + $0xc10] sm:$0xff]
  %v457 = vld [vmem:[%s1 + $0xc18] sm:$0xff]
  %v458 = vld [vmem:[%s1 + $0xc20] sm:$0xff]
  %v459 = vld [vmem:[%s1 + $0xc28] sm:$0xff]
  %v460 = vld [vmem:[%s1 + $0xc30] sm:$0xff]
  %v461 = vld [vmem:[%s1 + $0xc38] sm:$0xff]
  %v462 = vld [vmem:[%s1 + $0xc40] sm:$0xff]
  %v463 = vld [vmem:[%s1 + $0xc48] sm:$0xff]
  %v464 = vld [vmem:[%s1 + $0xc50] sm:$0xff]
  %v465 = vld [vmem:[%s1 + $0xc58] sm:$0xff]
  %v466 = vld [vmem:[%s1 + $0xc60] sm:$0xff]
  %v467 = vld [vmem:[%s1 + $0xc68] sm:$0xff]
  %v468 = vld [vmem:[%s1 + $0xc70] sm:$0xff]
  %v469 = vld [vmem:[%s1 + $0xc78] sm:$0xff]
  %v470 = vld [vmem:[%s1 + $0xc80] sm:$0xff]
  %v471 = vld [vmem:[%s1 + $0xc88] sm:$0xff]
  %v472 = vld [vmem:[%s1 + $0xc90] sm:$0xff]
  %v473 = vld [vmem:[%s1 + $0xc98] sm:$0xff]
  %v474 = vld [vmem:[%s1 + $0xca0] sm:$0xff]
  %v475 = vld [vmem:[%s1 + $0xca8] sm:$0xff]
  %v476 = vld [vmem:[%s1 + $0xcb0] sm:$0xff]
  %v477 = vld [vmem:[%s1 + $0xcb8] sm:$0xff]
  %v478 = vld [vmem:[%s1 + $0xcc0] sm:$0xff]
  %v479 = vld [vmem:[%s1 + $0xcc8] sm:$0xff]
  %v480 = vld [vmem:[%s1 + $0xcd0] sm:$0xff]
  %v481 = vld [vmem:[%s1 + $0xcd8] sm:$0xff]
  %v482 = vld [vmem:[%s1 + $0xce0] sm:$0xff]
  %v483 = vld [vmem:[%s1 + $0xce8] sm:$0xff]
  %v484 = vld [vmem:[%s1 + $0xcf0] sm:$0xff]
  %v485 = vld [vmem:[%s1 + $0xcf8] sm:$0xff]
  %v486 = vld [vmem:[%s1 + $0xd00] sm:$0xff]
  %v487 = vld [vmem:[%s1 + $0xd08] sm:$0xff]
  %v488 = vld [vmem:[%s1 + $0xd10] sm:$0xff]
  %v489 = vld [vmem:[%s1 + $0xd18] sm:$0xff]
  %v490 = vld [vmem:[%s1 + $0xd20] sm:$0xff]
  %v491 = vld [vmem:[%s1 + $0xd28] sm:$0xff]
  %v492 = vld [vmem:[%s1 + $0xd30] sm:$0xff]
  %v493 = vld [vmem:[%s1 + $0xd38] sm:$0xff]
  %v494 = vld [vmem:[%s1 + $0xd40] sm:$0xff]
  %v495 = vld [vmem:[%s1 + $0xd48] sm:$0xff]
  %v496 = vld [vmem:[%s1 + $0xd50] sm:$0xff]
  %v497 = vld [vmem:[%s1 + $0xd58] sm:$0xff]
  %v498 = vld [vmem:[%s1 + $0xd60] sm:$0xff]
  %v499 = vld [vmem:[%s1 + $0xd68] sm:$0xff]
  %v500 = vld [vmem:[%s1 + $0xd70] sm:$0xff]
  %v501 = vld [vmem:[%s1 + $0xd78] sm:$0xff]
  %v502 = vld [vmem:[%s1 + $0xd80] sm:$0xff]
  %v503 = vld [vmem:[%s1 + $0xd88] sm:$0xff]
  %v504 = vld [vmem:[%s1 + $0xd90] sm:$0xff]
  %v505 = vld [vmem:[%s1 + $0xd98] sm:$0xff]
  %v506 = vld [vmem:[%s1 + $0xda0] sm:$0xff]
  %v507 = vld [vmem:[%s1 + $0xda8] sm:$0xff]
  %v508 = vld [vmem:[%s1 + $0xdb0] sm:$0xff]
  %v509 = vld [vmem:[%s1 + $0xdb8] sm:$0xff]
  %v510 = vld [vmem:[%s1 + $0xdc0] sm:$0xff]
  %v511 = vld [vmem:[%s1 + $0xdc8] sm:$0xff]
  %v512 = vld [vmem:[%s1 + $0xdd0] sm:$0xff]
  %v513 = vld [vmem:[%s1 + $0xdd8] sm:$0xff]
  %v514 = vld [vmem:[%s1 + $0xde0] sm:$0xff]
  %v515 = vld [vmem:[%s1 + $0xde8] sm:$0xff]
  %v516 = vld [vmem:[%s1 + $0xdf0] sm:$0xff]
  %v517 = vld [vmem:[%s1 + $0xdf8] sm:$0xff]
  %v518 = vld [vmem:[%s1 + $0xe00] sm:$0xff]
  %v519 = vld [vmem:[%s1 + $0xe08] sm:$0xff]
  %v520 = vld [vmem:[%s1 + $0xe10] sm:$0xff]
  %v521 = vld [vmem:[%s1 + $0xe18] sm:$0xff]
  %v522 = vld [vmem:[%s1 + $0xe20] sm:$0xff]
  %v523 = vld [vmem:[%s1 + $0xe28] sm:$0xff]
  %v524 = vld [vmem:[%s1 + $0xe30] sm:$0xff]
  %v525 = vld [vmem:[%s1 + $0xe38] sm:$0xff]
  %v526 = vld [vmem:[%s1 + $0xe40] sm:$0xff]
  %v527 = vld [vmem:[%s1 + $0xe48] sm:$0xff]
  %v528 = vld [vmem:[%s1 + $0xe50] sm:$0xff]
  %v529 = vld [vmem:[%s1 + $0xe58] sm:$0xff]
  %v530 = vld [vmem:[%s1 + $0xe60] sm:$0xff]
  %v531 = vld [vmem:[%s1 + $0xe68] sm:$0xff]
  %v532 = vld [vmem:[%s1 + $0xe70] sm:$0xff]
  %v533 = vld [vmem:[%s1 + $0xe78] sm:$0xff]
  %v534 = vld [vmem:[%s1 + $0xe80] sm:$0xff]
  %v535 = vld [vmem:[%s1 + $0xe88] sm:$0xff]
  %v536 = vld [vmem:[%s1 + $0xe90] sm:$0xff]
  %v537 = vld [vmem:[%s1 + $0xe98] sm:$0xff]
  %v538 = vld [vmem:[%s1 + $0xea0] sm:$0xff]
  %v539 = vld [vmem:[%s1 + $0xea8] sm:$0xff]
  %v540 = vld [vmem:[%s1 + $0xeb0] sm:$0xff]
  %v541 = vld [vmem:[%s1 + $0xeb8] sm:$0xff]
  %v542 = vld [vmem:[%s1 + $0xec0] sm:$0xff]
  %v543 = vld [vmem:[%s1 + $0xec8] sm:$0xff]
  %v544 = vld [vmem:[%s1 + $0xed0] sm:$0xff]
  %v545 = vld [vmem:[%s1 + $0xed8] sm:$0xff]
  %v546 = vld [vmem:[%s1 + $0xee0] sm:$0xff]
  %v547 = vld [vmem:[%s1 + $0xee8] sm:$0xff]
  %v548 = vld [vmem:[%s1 + $0xef0] sm:$0xff]
  %v549 = vld [vmem:[%s1 + $0xef8] sm:$0xff]
  %v550 = vld [vmem:[%s2] sm:$0xf]
  %v552 = vlaneseq
  %v553 = vshrl.u32 %v552, 7
  %v554 = vsub.s32 0, %v553
  %v555 = vrot.slane %v550, %v554
  %v556 = vlaneseq
  %v557 = vshrl.u32 %v556, 7
  %v558 = vsub.s32 1, %v557
  %v559 = vrot.slane %v550, %v558
  %v560 = vlaneseq
  %v561 = vshrl.u32 %v560, 7
  %v562 = vsub.s32 2, %v561
  %v563 = vrot.slane %v550, %v562
  %v564 = vlaneseq
  %v565 = vshrl.u32 %v564, 7
  %v566 = vsub.s32 3, %v565
  %v567 = vrot.slane %v550, %v566
  %vm572 = vcmask 523264
  %v574 = vsel %vm572, %v21, 0
  %v577 = vsel %vm572, %v29, 0
  %v580 = vsel %vm572, %v37, 0
  %v583 = vsel %vm572, %v45, 0
  %v586 = vsel %vm572, %v53, 0
  %v589 = vsel %vm572, %v61, 0
  %v592 = vsel %vm572, %v69, 0
  %594 = vmatprep.subr.mxu0 %v71
  %595 = vmatpush1.msra.mxu0 %v70
  %596 = vmatprep.subr.mxu0 %v75
  %597 = vmatpush1.msra.mxu0 %v74
  %598 = vmatprep.subr.mxu0 %v79
  %599 = vmatpush1.msra.mxu0 %v78
  %600 = vmatprep.subr.mxu0 %v83
  %601 = vmatpush1.msra.mxu0 %v82
  %602 = vmatprep.subr.mxu0 %v87
  %603 = vmatpush1.msra.mxu0 %v86
  %604 = vmatprep.subr.mxu0 %v91
  %605 = vmatpush1.msra.mxu0 %v90
  %606 = vmatprep.subr.mxu0 %v95
  %607 = vmatpush1.msra.mxu0 %v94
  %608 = vmatprep.subr.mxu0 %v99
  %609 = vmatpush1.msra.mxu0 %v98
  %610 = vmatprep.subr.mxu0 %v103
  %611 = vmatpush1.msra.mxu0 %v102
  %612 = vmatprep.subr.mxu0 %v107
  %613 = vmatpush1.msra.mxu0 %v106
  %614 = vmatprep.subr.mxu0 %v111
  %615 = vmatpush1.msra.mxu0 %v110
  %616 = vmatprep.subr.mxu0 %v115
  %617 = vmatpush1.msra.mxu0 %v114
  %618 = vmatprep.subr.mxu0 %v119
  %619 = vmatpush1.msra.mxu0 %v118
  %620 = vmatprep.subr.mxu0 %v123
  %621 = vmatpush1.msra.mxu0 %v122
  %622 = vmatprep.subr.mxu0 %v127
  %623 = vmatpush1.msra.mxu0 %v126
  %624 = vmatprep.subr.mxu0 %v131
  %625 = vmatpush1.msra.mxu0 %v130
  %626 = vmatprep.subr.mxu0 %v135
  %627 = vmatpush1.msra.mxu0 %v134
  %628 = vmatprep.subr.mxu0 %v139
  %629 = vmatpush1.msra.mxu0 %v138
  %630 = vmatprep.subr.mxu0 %v143
  %631 = vmatpush1.msra.mxu0 %v142
  %632 = vmatprep.subr.mxu0 %v147
  %633 = vmatpush1.msra.mxu0 %v146
  %634 = vmatprep.subr.mxu0 %v151
  %635 = vmatpush1.msra.mxu0 %v150
  %636 = vmatprep.subr.mxu0 %v155
  %637 = vmatpush1.msra.mxu0 %v154
  %638 = vmatprep.subr.mxu0 %v159
  %639 = vmatpush1.msra.mxu0 %v158
  %640 = vmatprep.subr.mxu0 %v163
  %641 = vmatpush1.msra.mxu0 %v162
  %642 = vmatprep.subr.mxu0 %v167
  %643 = vmatpush1.msra.mxu0 %v166
  %644 = vmatprep.subr.mxu0 %v171
  %645 = vmatpush1.msra.mxu0 %v170
  %646 = vmatprep.subr.mxu0 %v175
  %647 = vmatpush1.msra.mxu0 %v174
  %648 = vmatprep.subr.mxu0 %v179
  %649 = vmatpush1.msra.mxu0 %v178
  %650 = vmatprep.subr.mxu0 %v183
  %651 = vmatpush1.msra.mxu0 %v182
  %652 = vmatprep.subr.mxu0 %v187
  %653 = vmatpush1.msra.mxu0 %v186
  %654 = vmatprep.subr.mxu0 %v191
  %655 = vmatpush1.msra.mxu0 %v190
  %656 = vmatprep.subr.mxu0 %v195
  %657 = vmatpush1.msra.mxu0 %v194
  %658 = vmatprep.mubr.f32.mxu0 %v15
  %659 = vmatmul.mubr.f32.gmra.mrb[0].mxu0 %v14
  %v660 = vpop.f32.mrb[0].mxu0
  %v661 = vadd.f32 %v555, %v660
  %v662 = vpop.f32.mrb[0].mxu0
  %v663 = vadd.f32 %v559, %v662
  %664 = vmatprep.mubr.f32.mxu0 %v23
  %665 = vmatmul.mubr.f32.gmra.mrb[0].mxu0 %v22
  %v666 = vpop.f32.mrb[0].mxu0
  %v667 = vadd.f32 %v555, %v666
  %v668 = vpop.f32.mrb[0].mxu0
  %v669 = vadd.f32 %v559, %v668
  %670 = vmatprep.mubr.f32.mxu0 %v31
  %671 = vmatmul.mubr.f32.gmra.mrb[0].mxu0 %v30
  %v672 = vpop.f32.mrb[0].mxu0
  %v673 = vadd.f32 %v555, %v672
  %v674 = vpop.f32.mrb[0].mxu0
  %v675 = vadd.f32 %v559, %v674
  %676 = vmatprep.mubr.f32.mxu0 %v39
  %677 = vmatmul.mubr.f32.gmra.mrb[0].mxu0 %v38
  %v678 = vpop.f32.mrb[0].mxu0
  %v679 = vadd.f32 %v555, %v678
  %v680 = vpop.f32.mrb[0].mxu0
  %v681 = vadd.f32 %v559, %v680
  %682 = vmatprep.mubr.f32.mxu0 %v47
  %683 = vmatmul.mubr.f32.gmra.mrb[0].mxu0 %v46
  %v684 = vpop.f32.mrb[0].mxu0
  %v685 = vadd.f32 %v555, %v684
  %v686 = vpop.f32.mrb[0].mxu0
  %v687 = vadd.f32 %v559, %v686
  %688 = vmatprep.mubr.f32.mxu0 %v55
  %689 = vmatmul.mubr.f32.gmra.mrb[0].mxu0 %v54
  %v690 = vpop.f32.mrb[0].mxu0
  %v691 = vadd.f32 %v555, %v690
  %v692 = vpop.f32.mrb[0].mxu0
  %v693 = vadd.f32 %v559, %v692
  %694 = vmatprep.mubr.f32.mxu0 %v63
  %695 = vmatmul.mubr.f32.gmra.mrb[0].mxu0 %v62
  %v696 = vpop.f32.mrb[0].mxu0
  %v697 = vadd.f32 %v555, %v696
  %v698 = vpop.f32.mrb[0].mxu0
  %v699 = vadd.f32 %v559, %v698
  %700 = vdwg.mxu0
  %701 = vmatprep.subr.mxu0 %v199
  %702 = vmatpush1.msra.mxu0 %v198
  %703 = vmatprep.subr.mxu0 %v203
  %704 = vmatpush1.msra.mxu0 %v202
  %705 = vmatprep.subr.mxu0 %v207
  %706 = vmatpush1.msra.mxu0 %v206
  %707 = vmatprep.subr.mxu0 %v211
  %708 = vmatpush1.msra.mxu0 %v210
  %709 = vmatprep.subr.mxu0 %v215
  %710 = vmatpush1.msra.mxu0 %v214
  %711 = vmatprep.subr.mxu0 %v219
  %712 = vmatpush1.msra.mxu0 %v218
  %713 = vmatprep.subr.mxu0 %v223
  %714 = vmatpush1.msra.mxu0 %v222
  %715 = vmatprep.subr.mxu0 %v227
  %716 = vmatpush1.msra.mxu0 %v226
  %717 = vmatprep.subr.mxu0 %v231
  %718 = vmatpush1.msra.mxu0 %v230
  %719 = vmatprep.subr.mxu0 %v235
  %720 = vmatpush1.msra.mxu0 %v234
  %721 = vmatprep.subr.mxu0 %v239
  %722 = vmatpush1.msra.mxu0 %v238
  %723 = vmatprep.subr.mxu0 %v243
  %724 = vmatpush1.msra.mxu0 %v242
  %725 = vmatprep.subr.mxu0 %v247
  %726 = vmatpush1.msra.mxu0 %v246
  %727 = vmatprep.subr.mxu0 %v251
  %728 = vmatpush1.msra.mxu0 %v250
  %729 = vmatprep.subr.mxu0 %v255
  %730 = vmatpush1.msra.mxu0 %v254
  %731 = vmatprep.subr.mxu0 %v259
  %732 = vmatpush1.msra.mxu0 %v258
  %733 = vmatprep.subr.mxu0 %v263
  %734 = vmatpush1.msra.mxu0 %v262
  %735 = vmatprep.subr.mxu0 %v267
  %736 = vmatpush1.msra.mxu0 %v266
  %737 = vmatprep.subr.mxu0 %v271
  %738 = vmatpush1.msra.mxu0 %v270
  %739 = vmatprep.subr.mxu0 %v275
  %740 = vmatpush1.msra.mxu0 %v274
  %741 = vmatprep.subr.mxu0 %v279
  %742 = vmatpush1.msra.mxu0 %v278
  %743 = vmatprep.subr.mxu0 %v283
  %744 = vmatpush1.msra.mxu0 %v282
  %745 = vmatprep.subr.mxu0 %v287
  %746 = vmatpush1.msra.mxu0 %v286
  %747 = vmatprep.subr.mxu0 %v291
  %748 = vmatpush1.msra.mxu0 %v290
  %749 = vmatprep.subr.mxu0 %v295
  %750 = vmatpush1.msra.mxu0 %v294
  %751 = vmatprep.subr.mxu0 %v299
  %752 = vmatpush1.msra.mxu0 %v298
  %753 = vmatprep.subr.mxu0 %v303
  %754 = vmatpush1.msra.mxu0 %v302
  %755 = vmatprep.subr.mxu0 %v307
  %756 = vmatpush1.msra.mxu0 %v306
  %757 = vmatprep.subr.mxu0 %v311
  %758 = vmatpush1.msra.mxu0 %v310
  %759 = vmatprep.subr.mxu0 %v315
  %760 = vmatpush1.msra.mxu0 %v314
  %761 = vmatprep.subr.mxu0 %v319
  %762 = vmatpush1.msra.mxu0 %v318
  %763 = vmatprep.subr.mxu0 %v323
  %764 = vmatpush1.msra.mxu0 %v322
  %765 = vmatprep.mubr.f32.mxu0 %v17
  %766 = vmatmul.mubr.f32.gmra.mrb[0].mxu0 %v16
  %v767 = vpop.f32.mrb[0].mxu0
  %v768 = vadd.f32 %v661, %v767
  %v769 = vpop.f32.mrb[0].mxu0
  %v770 = vadd.f32 %v663, %v769
  %771 = vmatprep.mubr.f32.mxu0 %v25
  %772 = vmatmul.mubr.f32.gmra.mrb[0].mxu0 %v24
  %v773 = vpop.f32.mrb[0].mxu0
  %v774 = vadd.f32 %v667, %v773
  %v775 = vpop.f32.mrb[0].mxu0
  %v776 = vadd.f32 %v669, %v775
  %777 = vmatprep.mubr.f32.mxu0 %v33
  %778 = vmatmul.mubr.f32.gmra.mrb[0].mxu0 %v32
  %v779 = vpop.f32.mrb[0].mxu0
  %v780 = vadd.f32 %v673, %v779
  %v781 = vpop.f32.mrb[0].mxu0
  %v782 = vadd.f32 %v675, %v781
  %783 = vmatprep.mubr.f32.mxu0 %v41
  %784 = vmatmul.mubr.f32.gmra.mrb[0].mxu0 %v40
  %v785 = vpop.f32.mrb[0].mxu0
  %v786 = vadd.f32 %v679, %v785
  %v787 = vpop.f32.mrb[0].mxu0
  %v788 = vadd.f32 %v681, %v787
  %789 = vmatprep.mubr.f32.mxu0 %v49
  %790 = vmatmul.mubr.f32.gmra.mrb[0].mxu0 %v48
  %v791 = vpop.f32.mrb[0].mxu0
  %v792 = vadd.f32 %v685, %v791
  %v793 = vpop.f32.mrb[0].mxu0
  %v794 = vadd.f32 %v687, %v793
  %795 = vmatprep.mubr.f32.mxu0 %v57
  %796 = vmatmul.mubr.f32.gmra.mrb[0].mxu0 %v56
  %v797 = vpop.f32.mrb[0].mxu0
  %v798 = vadd.f32 %v691, %v797
  %v799 = vpop.f32.mrb[0].mxu0
  %v800 = vadd.f32 %v693, %v799
  %801 = vmatprep.mubr.f32.mxu0 %v65
  %802 = vmatmul.mubr.f32.gmra.mrb[0].mxu0 %v64
  %v803 = vpop.f32.mrb[0].mxu0
  %v804 = vadd.f32 %v697, %v803
  %v805 = vpop.f32.mrb[0].mxu0
  %v806 = vadd.f32 %v699, %v805
  %807 = vdwg.mxu0
  %808 = vmatprep.subr.mxu0 %v327
  %809 = vmatpush1.msra.mxu0 %v326
  %810 = vmatprep.subr.mxu0 %v331
  %811 = vmatpush1.msra.mxu0 %v330
  %812 = vmatprep.subr.mxu0 %v335
  %813 = vmatpush1.msra.mxu0 %v334
  %814 = vmatprep.subr.mxu0 %v339
  %815 = vmatpush1.msra.mxu0 %v338
  %816 = vmatprep.subr.mxu0 %v343
  %817 = vmatpush1.msra.mxu0 %v342
  %818 = vmatprep.subr.mxu0 %v347
  %819 = vmatpush1.msra.mxu0 %v346
  %820 = vmatprep.subr.mxu0 %v351
  %821 = vmatpush1.msra.mxu0 %v350
  %822 = vmatprep.subr.mxu0 %v355
  %823 = vmatpush1.msra.mxu0 %v354
  %824 = vmatprep.subr.mxu0 %v359
  %825 = vmatpush1.msra.mxu0 %v358
  %826 = vmatprep.subr.mxu0 %v363
  %827 = vmatpush1.msra.mxu0 %v362
  %828 = vmatprep.subr.mxu0 %v367
  %829 = vmatpush1.msra.mxu0 %v366
  %830 = vmatprep.subr.mxu0 %v371
  %831 = vmatpush1.msra.mxu0 %v370
  %832 = vmatprep.subr.mxu0 %v375
  %833 = vmatpush1.msra.mxu0 %v374
  %834 = vmatprep.subr.mxu0 %v379
  %835 = vmatpush1.msra.mxu0 %v378
  %836 = vmatprep.subr.mxu0 %v383
  %837 = vmatpush1.msra.mxu0 %v382
  %838 = vmatprep.subr.mxu0 %v387
  %839 = vmatpush1.msra.mxu0 %v386
  %840 = vmatprep.subr.mxu0 %v391
  %841 = vmatpush1.msra.mxu0 %v390
  %842 = vmatprep.subr.mxu0 %v395
  %843 = vmatpush1.msra.mxu0 %v394
  %844 = vmatprep.subr.mxu0 %v399
  %845 = vmatpush1.msra.mxu0 %v398
  %846 = vmatprep.subr.mxu0 %v403
  %847 = vmatpush1.msra.mxu0 %v402
  %848 = vmatprep.subr.mxu0 %v407
  %849 = vmatpush1.msra.mxu0 %v406
  %850 = vmatprep.subr.mxu0 %v411
  %851 = vmatpush1.msra.mxu0 %v410
  %852 = vmatprep.subr.mxu0 %v415
  %853 = vmatpush1.msra.mxu0 %v414
  %854 = vmatprep.subr.mxu0 %v419
  %855 = vmatpush1.msra.mxu0 %v418
  %856 = vmatprep.subr.mxu0 %v423
  %857 = vmatpush1.msra.mxu0 %v422
  %858 = vmatprep.subr.mxu0 %v427
  %859 = vmatpush1.msra.mxu0 %v426
  %860 = vmatprep.subr.mxu0 %v431
  %861 = vmatpush1.msra.mxu0 %v430
  %862 = vmatprep.subr.mxu0 %v435
  %863 = vmatpush1.msra.mxu0 %v434
  %864 = vmatprep.subr.mxu0 %v439
  %865 = vmatpush1.msra.mxu0 %v438
  %866 = vmatprep.subr.mxu0 %v443
  %867 = vmatpush1.msra.mxu0 %v442
  %868 = vmatprep.subr.mxu0 %v447
  %869 = vmatpush1.msra.mxu0 %v446
  %870 = vmatprep.subr.mxu0 %v451
  %871 = vmatpush1.msra.mxu0 %v450
  %872 = vmatprep.mubr.f32.mxu0 %v19
  %873 = vmatmul.mubr.f32.gmra.mrb[0].mxu0 %v18
  %v874 = vpop.f32.mrb[0].mxu0
  %v875 = vadd.f32 %v768, %v874
  %v876 = vpop.f32.mrb[0].mxu0
  %v877 = vadd.f32 %v770, %v876
  %878 = vmatprep.mubr.f32.mxu0 %v27
  %879 = vmatmul.mubr.f32.gmra.mrb[0].mxu0 %v26
  %v880 = vpop.f32.mrb[0].mxu0
  %v881 = vadd.f32 %v774, %v880
  %v882 = vpop.f32.mrb[0].mxu0
  %v883 = vadd.f32 %v776, %v882
  %884 = vmatprep.mubr.f32.mxu0 %v35
  %885 = vmatmul.mubr.f32.gmra.mrb[0].mxu0 %v34
  %v886 = vpop.f32.mrb[0].mxu0
  %v887 = vadd.f32 %v780, %v886
  %v888 = vpop.f32.mrb[0].mxu0
  %v889 = vadd.f32 %v782, %v888
  %890 = vmatprep.mubr.f32.mxu0 %v43
  %891 = vmatmul.mubr.f32.gmra.mrb[0].mxu0 %v42
  %v892 = vpop.f32.mrb[0].mxu0
  %v893 = vadd.f32 %v786, %v892
  %v894 = vpop.f32.mrb[0].mxu0
  %v895 = vadd.f32 %v788, %v894
  %896 = vmatprep.mubr.f32.mxu0 %v51
  %897 = vmatmul.mubr.f32.gmra.mrb[0].mxu0 %v50
  %v898 = vpop.f32.mrb[0].mxu0
  %v899 = vadd.f32 %v792, %v898
  %v900 = vpop.f32.mrb[0].mxu0
  %v901 = vadd.f32 %v794, %v900
  %902 = vmatprep.mubr.f32.mxu0 %v59
  %903 = vmatmul.mubr.f32.gmra.mrb[0].mxu0 %v58
  %v904 = vpop.f32.mrb[0].mxu0
  %v905 = vadd.f32 %v798, %v904
  %v906 = vpop.f32.mrb[0].mxu0
  %v907 = vadd.f32 %v800, %v906
  %908 = vmatprep.mubr.f32.mxu0 %v67
  %909 = vmatmul.mubr.f32.gmra.mrb[0].mxu0 %v66
  %v910 = vpop.f32.mrb[0].mxu0
  %v911 = vadd.f32 %v804, %v910
  %v912 = vpop.f32.mrb[0].mxu0
  %v913 = vadd.f32 %v806, %v912
  %914 = vdwg.mxu0
  %915 = vmatprep.subr.mxu0 %v455
  %916 = vmatpush1.msra.mxu0 %v454
  %917 = vmatprep.subr.mxu0 %v459
  %918 = vmatpush1.msra.mxu0 %v458
  %919 = vmatprep.subr.mxu0 %v463
  %920 = vmatpush1.msra.mxu0 %v462
  %921 = vmatprep.subr.mxu0 %v467
  %922 = vmatpush1.msra.mxu0 %v466
  %923 = vmatprep.subr.mxu0 %v471
  %924 = vmatpush1.msra.mxu0 %v470
  %925 = vmatprep.subr.mxu0 %v475
  %926 = vmatpush1.msra.mxu0 %v474
  %927 = vmatprep.subr.mxu0 %v479
  %928 = vmatpush1.msra.mxu0 %v478
  %929 = vmatprep.subr.mxu0 %v483
  %930 = vmatpush1.msra.mxu0 %v482
  %931 = vmatprep.subr.mxu0 %v487
  %932 = vmatpush1.msra.mxu0 %v486
  %933 = vmatprep.subr.mxu0 %v491
  %934 = vmatpush1.msra.mxu0 %v490
  %935 = vmatprep.subr.mxu0 %v495
  %936 = vmatpush1.msra.mxu0 %v494
  %937 = vmatprep.subr.mxu0 %v499
  %938 = vmatpush1.msra.mxu0 %v498
  %939 = vmatprep.subr.mxu0 %v503
  %940 = vmatpush1.msra.mxu0 %v502
  %941 = vmatprep.subr.mxu0 %v507
  %942 = vmatpush1.msra.mxu0 %v506
  %943 = vmatprep.subr.mxu0 %v511
  %944 = vmatpush1.msra.mxu0 %v510
  %945 = vmatprep.subr.mxu0 %v515
  %946 = vmatpush1.msra.mxu0 %v514
  %947 = vmatprep.subr.mxu0 %v519
  %948 = vmatpush1.msra.mxu0 %v518
  %949 = vmatprep.subr.mxu0 %v523
  %950 = vmatpush1.msra.mxu0 %v522
  %951 = vmatprep.subr.mxu0 %v527
  %952 = vmatpush1.msra.mxu0 %v526
  %953 = vmatprep.subr.mxu0 %v531
  %954 = vmatpush1.msra.mxu0 %v530
  %955 = vmatprep.subr.mxu0 %v535
  %956 = vmatpush1.msra.mxu0 %v534
  %957 = vmatprep.subr.mxu0 %v539
  %958 = vmatpush1.msra.mxu0 %v538
  %959 = vmatprep.subr.mxu0 %v543
  %960 = vmatpush1.msra.mxu0 %v542
  %961 = vmatprep.subr.mxu0 %v547
  %962 = vmatpush1.msra.mxu0 %v546
  %963 = vmatprep.subr.mxu0 0.0
  %964 = vmatpush1.msra.mxu0 0.0
  %965 = vmatprep.subr.mxu0 0.0
  %966 = vmatpush1.msra.mxu0 0.0
  %967 = vmatprep.subr.mxu0 0.0
  %968 = vmatpush1.msra.mxu0 0.0
  %969 = vmatprep.subr.mxu0 0.0
  %970 = vmatpush1.msra.mxu0 0.0
  %971 = vmatprep.subr.mxu0 0.0
  %972 = vmatpush1.msra.mxu0 0.0
  %973 = vmatprep.subr.mxu0 0.0
  %974 = vmatpush1.msra.mxu0 0.0
  %975 = vmatprep.subr.mxu0 0.0
  %976 = vmatpush1.msra.mxu0 0.0
  %977 = vmatprep.subr.mxu0 0.0
  %978 = vmatpush1.msra.mxu0 0.0
  %979 = vmatprep.mubr.f32.mxu0 %v574
  %980 = vmatmul.mubr.f32.gmra.mrb[0].mxu0 %v20
  %v981 = vpop.f32.mrb[0].mxu0
  %v982 = vadd.f32 %v875, %v981
  %v983 = vpop.f32.mrb[0].mxu0
  %v984 = vadd.f32 %v877, %v983
  %985 = vmatprep.mubr.f32.mxu0 %v577
  %986 = vmatmul.mubr.f32.gmra.mrb[0].mxu0 %v28
  %v987 = vpop.f32.mrb[0].mxu0
  %v988 = vadd.f32 %v881, %v987
  %v989 = vpop.f32.mrb[0].mxu0
  %v990 = vadd.f32 %v883, %v989
  %991 = vmatprep.mubr.f32.mxu0 %v580
  %992 = vmatmul.mubr.f32.gmra.mrb[0].mxu0 %v36
  %v993 = vpop.f32.mrb[0].mxu0
  %v994 = vadd.f32 %v887, %v993
  %v995 = vpop.f32.mrb[0].mxu0
  %v996 = vadd.f32 %v889, %v995
  %997 = vmatprep.mubr.f32.mxu0 %v583
  %998 = vmatmul.mubr.f32.gmra.mrb[0].mxu0 %v44
  %v999 = vpop.f32.mrb[0].mxu0
  %v1000 = vadd.f32 %v893, %v999
  %v1001 = vpop.f32.mrb[0].mxu0
  %v1002 = vadd.f32 %v895, %v1001
  %1003 = vmatprep.mubr.f32.mxu0 %v586
  %1004 = vmatmul.mubr.f32.gmra.mrb[0].mxu0 %v52
  %v1005 = vpop.f32.mrb[0].mxu0
  %v1006 = vadd.f32 %v899, %v1005
  %v1007 = vpop.f32.mrb[0].mxu0
  %v1008 = vadd.f32 %v901, %v1007
  %1009 = vmatprep.mubr.f32.mxu0 %v589
  %1010 = vmatmul.mubr.f32.gmra.mrb[0].mxu0 %v60
  %v1011 = vpop.f32.mrb[0].mxu0
  %v1012 = vadd.f32 %v905, %v1011
  %v1013 = vpop.f32.mrb[0].mxu0
  %v1014 = vadd.f32 %v907, %v1013
  %1015 = vmatprep.mubr.f32.mxu0 %v592
  %1016 = vmatmul.mubr.f32.gmra.mrb[0].mxu0 %v68
  %v1017 = vpop.f32.mrb[0].mxu0
  %v1018 = vadd.f32 %v911, %v1017
  %v1019 = vpop.f32.mrb[0].mxu0
  %v1020 = vadd.f32 %v913, %v1019
  %1021 = vdwg.mxu0
  %1022 = vmatprep.subr.mxu0 %v73
  %1023 = vmatpush1.msra.mxu0 %v72
  %1024 = vmatprep.subr.mxu0 %v77
  %1025 = vmatpush1.msra.mxu0 %v76
  %1026 = vmatprep.subr.mxu0 %v81
  %1027 = vmatpush1.msra.mxu0 %v80
  %1028 = vmatprep.subr.mxu0 %v85
  %1029 = vmatpush1.msra.mxu0 %v84
  %1030 = vmatprep.subr.mxu0 %v89
  %1031 = vmatpush1.msra.mxu0 %v88
  %1032 = vmatprep.subr.mxu0 %v93
  %1033 = vmatpush1.msra.mxu0 %v92
  %1034 = vmatprep.subr.mxu0 %v97
  %1035 = vmatpush1.msra.mxu0 %v96
  %1036 = vmatprep.subr.mxu0 %v101
  %1037 = vmatpush1.msra.mxu0 %v100
  %1038 = vmatprep.subr.mxu0 %v105
  %1039 = vmatpush1.msra.mxu0 %v104
  %1040 = vmatprep.subr.mxu0 %v109
  %1041 = vmatpush1.msra.mxu0 %v108
  %1042 = vmatprep.subr.mxu0 %v113
  %1043 = vmatpush1.msra.mxu0 %v112
  %1044 = vmatprep.subr.mxu0 %v117
  %1045 = vmatpush1.msra.mxu0 %v116
  %1046 = vmatprep.subr.mxu0 %v121
  %1047 = vmatpush1.msra.mxu0 %v120
  %1048 = vmatprep.subr.mxu0 %v125
  %1049 = vmatpush1.msra.mxu0 %v124
  %1050 = vmatprep.subr.mxu0 %v129
  %1051 = vmatpush1.msra.mxu0 %v128
  %1052 = vmatprep.subr.mxu0 %v133
  %1053 = vmatpush1.msra.mxu0 %v132
  %1054 = vmatprep.subr.mxu0 %v137
  %1055 = vmatpush1.msra.mxu0 %v136
  %1056 = vmatprep.subr.mxu0 %v141
  %1057 = vmatpush1.msra.mxu0 %v140
  %1058 = vmatprep.subr.mxu0 %v145
  %1059 = vmatpush1.msra.mxu0 %v144
  %1060 = vmatprep.subr.mxu0 %v149
  %1061 = vmatpush1.msra.mxu0 %v148
  %1062 = vmatprep.subr.mxu0 %v153
  %1063 = vmatpush1.msra.mxu0 %v152
  %1064 = vmatprep.subr.mxu0 %v157
  %1065 = vmatpush1.msra.mxu0 %v156
  %1066 = vmatprep.subr.mxu0 %v161
  %1067 = vmatpush1.msra.mxu0 %v160
  %1068 = vmatprep.subr.mxu0 %v165
  %1069 = vmatpush1.msra.mxu0 %v164
  %1070 = vmatprep.subr.mxu0 %v169
  %1071 = vmatpush1.msra.mxu0 %v168
  %1072 = vmatprep.subr.mxu0 %v173
  %1073 = vmatpush1.msra.mxu0 %v172
  %1074 = vmatprep.subr.mxu0 %v177
  %1075 = vmatpush1.msra.mxu0 %v176
  %1076 = vmatprep.subr.mxu0 %v181
  %1077 = vmatpush1.msra.mxu0 %v180
  %1078 = vmatprep.subr.mxu0 %v185
  %1079 = vmatpush1.msra.mxu0 %v184
  %1080 = vmatprep.subr.mxu0 %v189
  %1081 = vmatpush1.msra.mxu0 %v188
  %1082 = vmatprep.subr.mxu0 %v193
  %1083 = vmatpush1.msra.mxu0 %v192
  %1084 = vmatprep.subr.mxu0 %v197
  %1085 = vmatpush1.msra.mxu0 %v196
  %1086 = vmatprep.mubr.f32.mxu0 %v15
  %1087 = vmatmul.mubr.f32.gmra.mrb[0].mxu0 %v14
  %v1088 = vpop.f32.mrb[0].mxu0
  %v1089 = vadd.f32 %v563, %v1088
  %v1090 = vpop.f32.mrb[0].mxu0
  %v1091 = vadd.f32 %v567, %v1090
  %1092 = vmatprep.mubr.f32.mxu0 %v23
  %1093 = vmatmul.mubr.f32.gmra.mrb[0].mxu0 %v22
  %v1094 = vpop.f32.mrb[0].mxu0
  %v1095 = vadd.f32 %v563, %v1094
  %v1096 = vpop.f32.mrb[0].mxu0
  %v1097 = vadd.f32 %v567, %v1096
  %1098 = vmatprep.mubr.f32.mxu0 %v31
  %1099 = vmatmul.mubr.f32.gmra.mrb[0].mxu0 %v30
  %v1100 = vpop.f32.mrb[0].mxu0
  %v1101 = vadd.f32 %v563, %v1100
  %v1102 = vpop.f32.mrb[0].mxu0
  %v1103 = vadd.f32 %v567, %v1102
  %1104 = vmatprep.mubr.f32.mxu0 %v39
  %1105 = vmatmul.mubr.f32.gmra.mrb[0].mxu0 %v38
  %v1106 = vpop.f32.mrb[0].mxu0
  %v1107 = vadd.f32 %v563, %v1106
  %v1108 = vpop.f32.mrb[0].mxu0
  %v1109 = vadd.f32 %v567, %v1108
  %1110 = vmatprep.mubr.f32.mxu0 %v47
  %1111 = vmatmul.mubr.f32.gmra.mrb[0].mxu0 %v46
  %v1112 = vpop.f32.mrb[0].mxu0
  %v1113 = vadd.f32 %v563, %v1112
  %v1114 = vpop.f32.mrb[0].mxu0
  %v1115 = vadd.f32 %v567, %v1114
  %1116 = vmatprep.mubr.f32.mxu0 %v55
  %1117 = vmatmul.mubr.f32.gmra.mrb[0].mxu0 %v54
  %v1118 = vpop.f32.mrb[0].mxu0
  %v1119 = vadd.f32 %v563, %v1118
  %v1120 = vpop.f32.mrb[0].mxu0
  %v1121 = vadd.f32 %v567, %v1120
  %1122 = vmatprep.mubr.f32.mxu0 %v63
  %1123 = vmatmul.mubr.f32.gmra.mrb[0].mxu0 %v62
  %v1124 = vpop.f32.mrb[0].mxu0
  %v1125 = vadd.f32 %v563, %v1124
  %v1126 = vpop.f32.mrb[0].mxu0
  %v1127 = vadd.f32 %v567, %v1126
  %1128 = vdwg.mxu0
  %1129 = vmatprep.subr.mxu0 %v201
  %1130 = vmatpush1.msra.mxu0 %v200
  %1131 = vmatprep.subr.mxu0 %v205
  %1132 = vmatpush1.msra.mxu0 %v204
  %1133 = vmatprep.subr.mxu0 %v209
  %1134 = vmatpush1.msra.mxu0 %v208
  %1135 = vmatprep.subr.mxu0 %v213
  %1136 = vmatpush1.msra.mxu0 %v212
  %1137 = vmatprep.subr.mxu0 %v217
  %1138 = vmatpush1.msra.mxu0 %v216
  %1139 = vmatprep.subr.mxu0 %v221
  %1140 = vmatpush1.msra.mxu0 %v220
  %1141 = vmatprep.subr.mxu0 %v225
  %1142 = vmatpush1.msra.mxu0 %v224
  %1143 = vmatprep.subr.mxu0 %v229
  %1144 = vmatpush1.msra.mxu0 %v228
  %1145 = vmatprep.subr.mxu0 %v233
  %1146 = vmatpush1.msra.mxu0 %v232
  %1147 = vmatprep.subr.mxu0 %v237
  %1148 = vmatpush1.msra.mxu0 %v236
  %1149 = vmatprep.subr.mxu0 %v241
  %1150 = vmatpush1.msra.mxu0 %v240
  %1151 = vmatprep.subr.mxu0 %v245
  %1152 = vmatpush1.msra.mxu0 %v244
  %1153 = vmatprep.subr.mxu0 %v249
  %1154 = vmatpush1.msra.mxu0 %v248
  %1155 = vmatprep.subr.mxu0 %v253
  %1156 = vmatpush1.msra.mxu0 %v252
  %1157 = vmatprep.subr.mxu0 %v257
  %1158 = vmatpush1.msra.mxu0 %v256
  %1159 = vmatprep.subr.mxu0 %v261
  %1160 = vmatpush1.msra.mxu0 %v260
  %1161 = vmatprep.subr.mxu0 %v265
  %1162 = vmatpush1.msra.mxu0 %v264
  %1163 = vmatprep.subr.mxu0 %v269
  %1164 = vmatpush1.msra.mxu0 %v268
  %1165 = vmatprep.subr.mxu0 %v273
  %1166 = vmatpush1.msra.mxu0 %v272
  %1167 = vmatprep.subr.mxu0 %v277
  %1168 = vmatpush1.msra.mxu0 %v276
  %1169 = vmatprep.subr.mxu0 %v281
  %1170 = vmatpush1.msra.mxu0 %v280
  %1171 = vmatprep.subr.mxu0 %v285
  %1172 = vmatpush1.msra.mxu0 %v284
  %1173 = vmatprep.subr.mxu0 %v289
  %1174 = vmatpush1.msra.mxu0 %v288
  %1175 = vmatprep.subr.mxu0 %v293
  %1176 = vmatpush1.msra.mxu0 %v292
  %1177 = vmatprep.subr.mxu0 %v297
  %1178 = vmatpush1.msra.mxu0 %v296
  %1179 = vmatprep.subr.mxu0 %v301
  %1180 = vmatpush1.msra.mxu0 %v300
  %1181 = vmatprep.subr.mxu0 %v305
  %1182 = vmatpush1.msra.mxu0 %v304
  %1183 = vmatprep.subr.mxu0 %v309
  %1184 = vmatpush1.msra.mxu0 %v308
  %1185 = vmatprep.subr.mxu0 %v313
  %1186 = vmatpush1.msra.mxu0 %v312
  %1187 = vmatprep.subr.mxu0 %v317
  %1188 = vmatpush1.msra.mxu0 %v316
  %1189 = vmatprep.subr.mxu0 %v321
  %1190 = vmatpush1.msra.mxu0 %v320
  %1191 = vmatprep.subr.mxu0 %v325
  %1192 = vmatpush1.msra.mxu0 %v324
  %1193 = vmatprep.mubr.f32.mxu0 %v17
  %1194 = vmatmul.mubr.f32.gmra.mrb[0].mxu0 %v16
  %v1195 = vpop.f32.mrb[0].mxu0
  %v1196 = vadd.f32 %v1089, %v1195
  %v1197 = vpop.f32.mrb[0].mxu0
  %v1198 = vadd.f32 %v1091, %v1197
  %1199 = vmatprep.mubr.f32.mxu0 %v25
  %1200 = vmatmul.mubr.f32.gmra.mrb[0].mxu0 %v24
  %v1201 = vpop.f32.mrb[0].mxu0
  %v1202 = vadd.f32 %v1095, %v1201
  %v1203 = vpop.f32.mrb[0].mxu0
  %v1204 = vadd.f32 %v1097, %v1203
  %1205 = vmatprep.mubr.f32.mxu0 %v33
  %1206 = vmatmul.mubr.f32.gmra.mrb[0].mxu0 %v32
  %v1207 = vpop.f32.mrb[0].mxu0
  %v1208 = vadd.f32 %v1101, %v1207
  %v1209 = vpop.f32.mrb[0].mxu0
  %v1210 = vadd.f32 %v1103, %v1209
  %1211 = vmatprep.mubr.f32.mxu0 %v41
  %1212 = vmatmul.mubr.f32.gmra.mrb[0].mxu0 %v40
  %v1213 = vpop.f32.mrb[0].mxu0
  %v1214 = vadd.f32 %v1107, %v1213
  %v1215 = vpop.f32.mrb[0].mxu0
  %v1216 = vadd.f32 %v1109, %v1215
  %1217 = vmatprep.mubr.f32.mxu0 %v49
  %1218 = vmatmul.mubr.f32.gmra.mrb[0].mxu0 %v48
  %v1219 = vpop.f32.mrb[0].mxu0
  %v1220 = vadd.f32 %v1113, %v1219
  %v1221 = vpop.f32.mrb[0].mxu0
  %v1222 = vadd.f32 %v1115, %v1221
  %1223 = vmatprep.mubr.f32.mxu0 %v57
  %1224 = vmatmul.mubr.f32.gmra.mrb[0].mxu0 %v56
  %v1225 = vpop.f32.mrb[0].mxu0
  %v1226 = vadd.f32 %v1119, %v1225
  %v1227 = vpop.f32.mrb[0].mxu0
  %v1228 = vadd.f32 %v1121, %v1227
  %1229 = vmatprep.mubr.f32.mxu0 %v65
  %1230 = vmatmul.mubr.f32.gmra.mrb[0].mxu0 %v64
  %v1231 = vpop.f32.mrb[0].mxu0
  %v1232 = vadd.f32 %v1125, %v1231
  %v1233 = vpop.f32.mrb[0].mxu0
  %v1234 = vadd.f32 %v1127, %v1233
  %1235 = vdwg.mxu0
  %1236 = vmatprep.subr.mxu0 %v329
  %1237 = vmatpush1.msra.mxu0 %v328
  %1238 = vmatprep.subr.mxu0 %v333
  %1239 = vmatpush1.msra.mxu0 %v332
  %1240 = vmatprep.subr.mxu0 %v337
  %1241 = vmatpush1.msra.mxu0 %v336
  %1242 = vmatprep.subr.mxu0 %v341
  %1243 = vmatpush1.msra.mxu0 %v340
  %1244 = vmatprep.subr.mxu0 %v345
  %1245 = vmatpush1.msra.mxu0 %v344
  %1246 = vmatprep.subr.mxu0 %v349
  %1247 = vmatpush1.msra.mxu0 %v348
  %1248 = vmatprep.subr.mxu0 %v353
  %1249 = vmatpush1.msra.mxu0 %v352
  %1250 = vmatprep.subr.mxu0 %v357
  %1251 = vmatpush1.msra.mxu0 %v356
  %1252 = vmatprep.subr.mxu0 %v361
  %1253 = vmatpush1.msra.mxu0 %v360
  %1254 = vmatprep.subr.mxu0 %v365
  %1255 = vmatpush1.msra.mxu0 %v364
  %1256 = vmatprep.subr.mxu0 %v369
  %1257 = vmatpush1.msra.mxu0 %v368
  %1258 = vmatprep.subr.mxu0 %v373
  %1259 = vmatpush1.msra.mxu0 %v372
  %1260 = vmatprep.subr.mxu0 %v377
  %1261 = vmatpush1.msra.mxu0 %v376
  %1262 = vmatprep.subr.mxu0 %v381
  %1263 = vmatpush1.msra.mxu0 %v380
  %1264 = vmatprep.subr.mxu0 %v385
  %1265 = vmatpush1.msra.mxu0 %v384
  %1266 = vmatprep.subr.mxu0 %v389
  %1267 = vmatpush1.msra.mxu0 %v388
  %1268 = vmatprep.subr.mxu0 %v393
  %1269 = vmatpush1.msra.mxu0 %v392
  %1270 = vmatprep.subr.mxu0 %v397
  %1271 = vmatpush1.msra.mxu0 %v396
  %1272 = vmatprep.subr.mxu0 %v401
  %1273 = vmatpush1.msra.mxu0 %v400
  %1274 = vmatprep.subr.mxu0 %v405
  %1275 = vmatpush1.msra.mxu0 %v404
  %1276 = vmatprep.subr.mxu0 %v409
  %1277 = vmatpush1.msra.mxu0 %v408
  %1278 = vmatprep.subr.mxu0 %v413
  %1279 = vmatpush1.msra.mxu0 %v412
  %1280 = vmatprep.subr.mxu0 %v417
  %1281 = vmatpush1.msra.mxu0 %v416
  %1282 = vmatprep.subr.mxu0 %v421
  %1283 = vmatpush1.msra.mxu0 %v420
  %1284 = vmatprep.subr.mxu0 %v425
  %1285 = vmatpush1.msra.mxu0 %v424
  %1286 = vmatprep.subr.mxu0 %v429
  %1287 = vmatpush1.msra.mxu0 %v428
  %1288 = vmatprep.subr.mxu0 %v433
  %1289 = vmatpush1.msra.mxu0 %v432
  %1290 = vmatprep.subr.mxu0 %v437
  %1291 = vmatpush1.msra.mxu0 %v436
  %1292 = vmatprep.subr.mxu0 %v441
  %1293 = vmatpush1.msra.mxu0 %v440
  %1294 = vmatprep.subr.mxu0 %v445
  %1295 = vmatpush1.msra.mxu0 %v444
  %1296 = vmatprep.subr.mxu0 %v449
  %1297 = vmatpush1.msra.mxu0 %v448
  %1298 = vmatprep.subr.mxu0 %v453
  %1299 = vmatpush1.msra.mxu0 %v452
  %1300 = vmatprep.mubr.f32.mxu0 %v19
  %1301 = vmatmul.mubr.f32.gmra.mrb[0].mxu0 %v18
  %v1302 = vpop.f32.mrb[0].mxu0
  %v1303 = vadd.f32 %v1196, %v1302
  %v1304 = vpop.f32.mrb[0].mxu0
  %v1305 = vadd.f32 %v1198, %v1304
  %1306 = vmatprep.mubr.f32.mxu0 %v27
  %1307 = vmatmul.mubr.f32.gmra.mrb[0].mxu0 %v26
  %v1308 = vpop.f32.mrb[0].mxu0
  %v1309 = vadd.f32 %v1202, %v1308
  %v1310 = vpop.f32.mrb[0].mxu0
  %v1311 = vadd.f32 %v1204, %v1310
  %1312 = vmatprep.mubr.f32.mxu0 %v35
  %1313 = vmatmul.mubr.f32.gmra.mrb[0].mxu0 %v34
  %v1314 = vpop.f32.mrb[0].mxu0
  %v1315 = vadd.f32 %v1208, %v1314
  %v1316 = vpop.f32.mrb[0].mxu0
  %v1317 = vadd.f32 %v1210, %v1316
  %1318 = vmatprep.mubr.f32.mxu0 %v43
  %1319 = vmatmul.mubr.f32.gmra.mrb[0].mxu0 %v42
  %v1320 = vpop.f32.mrb[0].mxu0
  %v1321 = vadd.f32 %v1214, %v1320
  %v1322 = vpop.f32.mrb[0].mxu0
  %v1323 = vadd.f32 %v1216, %v1322
  %1324 = vmatprep.mubr.f32.mxu0 %v51
  %1325 = vmatmul.mubr.f32.gmra.mrb[0].mxu0 %v50
  %v1326 = vpop.f32.mrb[0].mxu0
  %v1327 = vadd.f32 %v1220, %v1326
  %v1328 = vpop.f32.mrb[0].mxu0
  %v1329 = vadd.f32 %v1222, %v1328
  %1330 = vmatprep.mubr.f32.mxu0 %v59
  %1331 = vmatmul.mubr.f32.gmra.mrb[0].mxu0 %v58
  %v1332 = vpop.f32.mrb[0].mxu0
  %v1333 = vadd.f32 %v1226, %v1332
  %v1334 = vpop.f32.mrb[0].mxu0
  %v1335 = vadd.f32 %v1228, %v1334
  %1336 = vmatprep.mubr.f32.mxu0 %v67
  %1337 = vmatmul.mubr.f32.gmra.mrb[0].mxu0 %v66
  %v1338 = vpop.f32.mrb[0].mxu0
  %v1339 = vadd.f32 %v1232, %v1338
  %v1340 = vpop.f32.mrb[0].mxu0
  %v1341 = vadd.f32 %v1234, %v1340
  %1342 = vdwg.mxu0
  %1343 = vmatprep.subr.mxu0 %v457
  %1344 = vmatpush1.msra.mxu0 %v456
  %1345 = vmatprep.subr.mxu0 %v461
  %1346 = vmatpush1.msra.mxu0 %v460
  %1347 = vmatprep.subr.mxu0 %v465
  %1348 = vmatpush1.msra.mxu0 %v464
  %1349 = vmatprep.subr.mxu0 %v469
  %1350 = vmatpush1.msra.mxu0 %v468
  %1351 = vmatprep.subr.mxu0 %v473
  %1352 = vmatpush1.msra.mxu0 %v472
  %1353 = vmatprep.subr.mxu0 %v477
  %1354 = vmatpush1.msra.mxu0 %v476
  %1355 = vmatprep.subr.mxu0 %v481
  %1356 = vmatpush1.msra.mxu0 %v480
  %1357 = vmatprep.subr.mxu0 %v485
  %1358 = vmatpush1.msra.mxu0 %v484
  %1359 = vmatprep.subr.mxu0 %v489
  %1360 = vmatpush1.msra.mxu0 %v488
  %1361 = vmatprep.subr.mxu0 %v493
  %1362 = vmatpush1.msra.mxu0 %v492
  %1363 = vmatprep.subr.mxu0 %v497
  %1364 = vmatpush1.msra.mxu0 %v496
  %1365 = vmatprep.subr.mxu0 %v501
  %1366 = vmatpush1.msra.mxu0 %v500
  %1367 = vmatprep.subr.mxu0 %v505
  %1368 = vmatpush1.msra.mxu0 %v504
  %1369 = vmatprep.subr.mxu0 %v509
  %1370 = vmatpush1.msra.mxu0 %v508
  %1371 = vmatprep.subr.mxu0 %v513
  %1372 = vmatpush1.msra.mxu0 %v512
  %1373 = vmatprep.subr.mxu0 %v517
  %1374 = vmatpush1.msra.mxu0 %v516
  %1375 = vmatprep.subr.mxu0 %v521
  %1376 = vmatpush1.msra.mxu0 %v520
  %1377 = vmatprep.subr.mxu0 %v525
  %1378 = vmatpush1.msra.mxu0 %v524
  %1379 = vmatprep.subr.mxu0 %v529
  %1380 = vmatpush1.msra.mxu0 %v528
  %1381 = vmatprep.subr.mxu0 %v533
  %1382 = vmatpush1.msra.mxu0 %v532
  %1383 = vmatprep.subr.mxu0 %v537
  %1384 = vmatpush1.msra.mxu0 %v536
  %1385 = vmatprep.subr.mxu0 %v541
  %1386 = vmatpush1.msra.mxu0 %v540
  %1387 = vmatprep.subr.mxu0 %v545
  %1388 = vmatpush1.msra.mxu0 %v544
  %1389 = vmatprep.subr.mxu0 %v549
  %1390 = vmatpush1.msra.mxu0 %v548
  %1391 = vmatprep.subr.mxu0 0.0
  %1392 = vmatpush1.msra.mxu0 0.0
  %1393 = vmatprep.subr.mxu0 0.0
  %1394 = vmatpush1.msra.mxu0 0.0
  %1395 = vmatprep.subr.mxu0 0.0
  %1396 = vmatpush1.msra.mxu0 0.0
  %1397 = vmatprep.subr.mxu0 0.0
  %1398 = vmatpush1.msra.mxu0 0.0
  %1399 = vmatprep.subr.mxu0 0.0
  %1400 = vmatpush1.msra.mxu0 0.0
  %1401 = vmatprep.subr.mxu0 0.0
  %1402 = vmatpush1.msra.mxu0 0.0
  %1403 = vmatprep.subr.mxu0 0.0
  %1404 = vmatpush1.msra.mxu0 0.0
  %1405 = vmatprep.subr.mxu0 0.0
  %1406 = vmatpush1.msra.mxu0 0.0
  %1407 = vmatprep.mubr.f32.mxu0 %v574
  %1408 = vmatmul.mubr.f32.gmra.mrb[0].mxu0 %v20
  %v1409 = vpop.f32.mrb[0].mxu0
  %v1410 = vadd.f32 %v1303, %v1409
  %v1411 = vpop.f32.mrb[0].mxu0
  %v1412 = vadd.f32 %v1305, %v1411
  %1413 = vmatprep.mubr.f32.mxu0 %v577
  %1414 = vmatmul.mubr.f32.gmra.mrb[0].mxu0 %v28
  %v1415 = vpop.f32.mrb[0].mxu0
  %v1416 = vadd.f32 %v1309, %v1415
  %v1417 = vpop.f32.mrb[0].mxu0
  %v1418 = vadd.f32 %v1311, %v1417
  %1419 = vmatprep.mubr.f32.mxu0 %v580
  %1420 = vmatmul.mubr.f32.gmra.mrb[0].mxu0 %v36
  %v1421 = vpop.f32.mrb[0].mxu0
  %v1422 = vadd.f32 %v1315, %v1421
  %v1423 = vpop.f32.mrb[0].mxu0
  %v1424 = vadd.f32 %v1317, %v1423
  %1425 = vmatprep.mubr.f32.mxu0 %v583
  %1426 = vmatmul.mubr.f32.gmra.mrb[0].mxu0 %v44
  %v1427 = vpop.f32.mrb[0].mxu0
  %v1428 = vadd.f32 %v1321, %v1427
  %v1429 = vpop.f32.mrb[0].mxu0
  %v1430 = vadd.f32 %v1323, %v1429
  %1431 = vmatprep.mubr.f32.mxu0 %v586
  %1432 = vmatmul.mubr.f32.gmra.mrb[0].mxu0 %v52
  %v1433 = vpop.f32.mrb[0].mxu0
  %v1434 = vadd.f32 %v1327, %v1433
  %v1435 = vpop.f32.mrb[0].mxu0
  %v1436 = vadd.f32 %v1329, %v1435
  %1437 = vmatprep.mubr.f32.mxu0 %v589
  %1438 = vmatmul.mubr.f32.gmra.mrb[0].mxu0 %v60
  %v1439 = vpop.f32.mrb[0].mxu0
  %v1440 = vadd.f32 %v1333, %v1439
  %v1441 = vpop.f32.mrb[0].mxu0
  %v1442 = vadd.f32 %v1335, %v1441
  %1443 = vmatprep.mubr.f32.mxu0 %v592
  %1444 = vmatmul.mubr.f32.gmra.mrb[0].mxu0 %v68
  %v1445 = vpop.f32.mrb[0].mxu0
  %v1446 = vadd.f32 %v1339, %v1445
  %v1447 = vpop.f32.mrb[0].mxu0
  %v1448 = vadd.f32 %v1341, %v1447
  %1449 = vdwg.mxu0
  %v1450 = vmax.f32 %v982, 0.0
  %v1451 = vmax.f32 %v984, 0.0
  %v1452 = vmax.f32 %v1410, 0.0
  %v1453 = vmax.f32 %v1412, 0.0
  %v1454 = vmax.f32 %v988, 0.0
  %v1455 = vmax.f32 %v990, 0.0
  %v1456 = vmax.f32 %v1416, 0.0
  %v1457 = vmax.f32 %v1418, 0.0
  %v1458 = vmax.f32 %v994, 0.0
  %v1459 = vmax.f32 %v996, 0.0
  %v1460 = vmax.f32 %v1422, 0.0
  %v1461 = vmax.f32 %v1424, 0.0
  %v1462 = vmax.f32 %v1000, 0.0
  %v1463 = vmax.f32 %v1002, 0.0
  %v1464 = vmax.f32 %v1428, 0.0
  %v1465 = vmax.f32 %v1430, 0.0
  %v1466 = vmax.f32 %v1006, 0.0
  %v1467 = vmax.f32 %v1008, 0.0
  %v1468 = vmax.f32 %v1434, 0.0
  %v1469 = vmax.f32 %v1436, 0.0
  %v1470 = vmax.f32 %v1012, 0.0
  %v1471 = vmax.f32 %v1014, 0.0
  %v1472 = vmax.f32 %v1440, 0.0
  %v1473 = vmax.f32 %v1442, 0.0
  %v1474 = vmax.f32 %v1018, 0.0
  %v1475 = vmax.f32 %v1020, 0.0
  %v1476 = vmax.f32 %v1446, 0.0
  %v1477 = vmax.f32 %v1448, 0.0
  %1478 = vst [vmem:[%s3] sm:$0xff] %v1450
  %1479 = vst [vmem:[%s3 + $0x8] sm:$0xff] %v1451
  %1480 = vst [vmem:[%s3 + $0x10] sm:$0xff] %v1452
  %1481 = vst [vmem:[%s3 + $0x18] sm:$0xff] %v1453
  %1482 = vst [vmem:[%s3 + $0x20] sm:$0xff] %v1454
  %1483 = vst [vmem:[%s3 + $0x28] sm:$0xff] %v1455
  %1484 = vst [vmem:[%s3 + $0x30] sm:$0xff] %v1456
  %1485 = vst [vmem:[%s3 + $0x38] sm:$0xff] %v1457
  %1486 = vst [vmem:[%s3 + $0x40] sm:$0xff] %v1458
  %1487 = vst [vmem:[%s3 + $0x48] sm:$0xff] %v1459
  %1488 = vst [vmem:[%s3 + $0x50] sm:$0xff] %v1460
  %1489 = vst [vmem:[%s3 + $0x58] sm:$0xff] %v1461
  %1490 = vst [vmem:[%s3 + $0x60] sm:$0xff] %v1462
  %1491 = vst [vmem:[%s3 + $0x68] sm:$0xff] %v1463
  %1492 = vst [vmem:[%s3 + $0x70] sm:$0xff] %v1464
  %1493 = vst [vmem:[%s3 + $0x78] sm:$0xff] %v1465
  %1494 = vst [vmem:[%s3 + $0x80] sm:$0xff] %v1466
  %1495 = vst [vmem:[%s3 + $0x88] sm:$0xff] %v1467
  %1496 = vst [vmem:[%s3 + $0x90] sm:$0xff] %v1468
  %1497 = vst [vmem:[%s3 + $0x98] sm:$0xff] %v1469
  %1498 = vst [vmem:[%s3 + $0xa0] sm:$0xff] %v1470
  %1499 = vst [vmem:[%s3 + $0xa8] sm:$0xff] %v1471
  %1500 = vst [vmem:[%s3 + $0xb0] sm:$0xff] %v1472
  %1501 = vst [vmem:[%s3 + $0xb8] sm:$0xff] %v1473
  %1502 = vst [vmem:[%s3 + $0xc0] sm:$0xff] %v1474
  %1503 = vst [vmem:[%s3 + $0xc8] sm:$0xff] %v1475
  %1504 = vst [vmem:[%s3 + $0xd0] sm:$0xff] %v1476
  %1505 = vst [vmem:[%s3 + $0xd8] sm:$0xff] %v1477
  // Predicated region
  $region14: #{_lambda_.5} parent=0 // pred_check
    _
  $region15: #{_lambda_.5} parent=0 // pred_check_branch
    %1507 = sbr.rel (0) target = $region17
  $region16: #{_lambda_.5} parent=0 // pred_region
    _
  $region17: #{_lambda_.5} parent=0 // pred_fallthru
    _
  // Predicated region
  $region18: #{_lambda_.5} parent=0 // pred_check
    _
  $region19: #{_lambda_.5} parent=0 // pred_check_branch
    %1509 = sbr.rel (0) target = $region21
  $region20: #{_lambda_.5} parent=0 // pred_region
    _
  $region21: #{_lambda_.5} parent=0 // pred_fallthru
    _

// kernel: tile.33
$region0: #{tile.33}
  #allocation0 [shape = 's32[1]{0}', space=sflag, size = 0x4, scoped, tag = 'scoped memory for tile.33']
  %s0 = inlined_call_operand.vmem [shape: f32[8], index: 0, kind: input, shape index: {}]
  %s1 = inlined_call_operand.vmem [shape: f32[64,8], index: 1, kind: output, shape index: {}]
  // Predicated region
  $region2: #{tile.33} parent=0 // pred_check
    _
  $region3: #{tile.33} parent=0 // pred_check_branch
    %3 = sbr.rel (0) target = $region5
  $region4: #{tile.33} parent=0 // pred_region
    _
  $region5: #{tile.33} parent=0 // pred_fallthru
    _
  %v4 = vld [vmem:[%s0] ss:$0 sm:$0xff]
  %5 = vst [vmem:[%s1] sm:$0xff] %v4
  %s6 = scalar_lea.vmem %s1, 8
  %7 = vst [vmem:[%s6] sm:$0xff] %v4
  %s8 = scalar_lea.vmem %s1, 16
  %9 = vst [vmem:[%s8] sm:$0xff] %v4
  %s10 = scalar_lea.vmem %s1, 24
  %11 = vst [vmem:[%s10] sm:$0xff] %v4
  %s12 = scalar_lea.vmem %s1, 32
  %13 = vst [vmem:[%s12] sm:$0xff] %v4
  %s14 = scalar_lea.vmem %s1, 40
  %15 = vst [vmem:[%s14] sm:$0xff] %v4
  %s16 = scalar_lea.vmem %s1, 48
  %17 = vst [vmem:[%s16] sm:$0xff] %v4
  %s18 = scalar_lea.vmem %s1, 56
  %19 = vst [vmem:[%s18] sm:$0xff] %v4

// kernel: tile.34
$region0: #{tile.34}
  %s0 = inlined_call_operand.vmem [shape: f32[64,8], index: 0, kind: input, shape index: {}]
  %s1 = inlined_call_operand.vmem [shape: f32[1,512], index: 1, kind: output, shape index: {}]
  $region1: #{tile.34} parent=0
    #allocation0 [shape = 'u8[16384]{0}', space=vmem, size = 0x4000, scoped, tag = 'scoped mem for output reshape']
    %s2 = smov 3
    %v3 = vld [vmem:[%s0] ss:$16 sm:%s2]
    %s4 = smov 12
    %v5 = vld [vmem:[%s0] ss:$16 sm:%s4]
    %vm6 = vcmask 1043458
    %v7 = vsel %vm6, %v5, %v3
    %vm8 = vcmask 64512
    %9 = vst.msk [vmem:[#allocation0] ss:$8 sm:$0xf] %vm8, %v7
    %s10 = scalar_lea.vmem %s0, 15
    %s11 = smov 3
    %v12 = vld [vmem:[%s10] ss:$16 sm:%s11]
    %s13 = scalar_lea.vmem %s0, 15
    %s14 = smov 12
    %v15 = vld [vmem:[%s13] ss:$16 sm:%s14]
    %vm16 = vcmask 1043458
    %v17 = vsel %vm16, %v15, %v12
    %18 = vrot.lane.b32.xlu0 %v17, 120
    %v19 = vpop.permute.xlu0 %18
    %vm20 = vcmask 1048512
    %21 = vst.msk [vmem:[#allocation0] ss:$8 sm:$0xf] %vm20, %v19
    %s22 = scalar_lea.vmem %s0, 14
    %s23 = smov 3
    %v24 = vld [vmem:[%s22] ss:$16 sm:%s23]
    %s25 = scalar_lea.vmem %s0, 14
    %s26 = smov 12
    %v27 = vld [vmem:[%s25] ss:$16 sm:%s26]
    %vm28 = vcmask 1043458
    %v29 = vsel %vm28, %v27, %v24
    %30 = vrot.lane.b32.xlu0 %v29, 112
    %v31 = vpop.permute.xlu0 %30
    %vm32 = vcmask 982912
    %33 = vst.msk [vmem:[#allocation0] ss:$8 sm:$0xf] %vm32, %v31
    %s34 = scalar_lea.vmem %s0, 13
    %s35 = smov 3
    %v36 = vld [vmem:[%s34] ss:$16 sm:%s35]
    %s37 = scalar_lea.vmem %s0, 13
    %s38 = smov 12
    %v39 = vld [vmem:[%s37] ss:$16 sm:%s38]
    %vm40 = vcmask 1043458
    %v41 = vsel %vm40, %v39, %v36
    %42 = vrot.lane.b32.xlu0 %v41, 104
    %v43 = vpop.permute.xlu0 %42
    %vm44 = vcmask 917312
    %45 = vst.msk [vmem:[#allocation0] ss:$8 sm:$0xf] %vm44, %v43
    %s46 = scalar_lea.vmem %s0, 12
    %s47 = smov 3
    %v48 = vld [vmem:[%s46] ss:$16 sm:%s47]
    %s49 = scalar_lea.vmem %s0, 12
    %s50 = smov 12
    %v51 = vld [vmem:[%s49] ss:$16 sm:%s50]
    %vm52 = vcmask 1043458
    %v53 = vsel %vm52, %v51, %v48
    %54 = vrot.lane.b32.xlu0 %v53, 96
    %v55 = vpop.permute.xlu0 %54
    %vm56 = vcmask 851712
    %57 = vst.msk [vmem:[#allocation0] ss:$8 sm:$0xf] %vm56, %v55
    %s58 = scalar_lea.vmem %s0, 11
    %s59 = smov 3
    %v60 = vld [vmem:[%s58] ss:$16 sm:%s59]
    %s61 = scalar_lea.vmem %s0, 11
    %s62 = smov 12
    %v63 = vld [vmem:[%s61] ss:$16 sm:%s62]
    %vm64 = vcmask 1043458
    %v65 = vsel %vm64, %v63, %v60
    %66 = vrot.lane.b32.xlu0 %v65, 88
    %v67 = vpop.permute.xlu0 %66
    %vm68 = vcmask 786112
    %69 = vst.msk [vmem:[#allocation0] ss:$8 sm:$0xf] %vm68, %v67
    %s70 = scalar_lea.vmem %s0, 10
    %s71 = smov 3
    %v72 = vld [vmem:[%s70] ss:$16 sm:%s71]
    %s73 = scalar_lea.vmem %s0, 10
    %s74 = smov 12
    %v75 = vld [vmem:[%s73] ss:$16 sm:%s74]
    %vm76 = vcmask 1043458
    %v77 = vsel %vm76, %v75, %v72
    %78 = vrot.lane.b32.xlu0 %v77, 80
    %v79 = vpop.permute.xlu0 %78
    %vm80 = vcmask 720512
    %81 = vst.msk [vmem:[#allocation0] ss:$8 sm:$0xf] %vm80, %v79
    %s82 = scalar_lea.vmem %s0, 9
    %s83 = smov 3
    %v84 = vld [vmem:[%s82] ss:$16 sm:%s83]
    %s85 = scalar_lea.vmem %s0, 9
    %s86 = smov 12
    %v87 = vld [vmem:[%s85] ss:$16 sm:%s86]
    %vm88 = vcmask 1043458
    %v89 = vsel %vm88, %v87, %v84
    %90 = vrot.lane.b32.xlu0 %v89, 72
    %v91 = vpop.permute.xlu0 %90
    %vm92 = vcmask 654912
    %93 = vst.msk [vmem:[#allocation0] ss:$8 sm:$0xf] %vm92, %v91
    %s94 = scalar_lea.vmem %s0, 8
    %s95 = smov 3
    %v96 = vld [vmem:[%s94] ss:$16 sm:%s95]
    %s97 = scalar_lea.vmem %s0, 8
    %s98 = smov 12
    %v99 = vld [vmem:[%s97] ss:$16 sm:%s98]
    %vm100 = vcmask 1043458
    %v101 = vsel %vm100, %v99, %v96
    %102 = vrot.lane.b32.xlu0 %v101, 64
    %v103 = vpop.permute.xlu0 %102
    %vm104 = vcmask 589312
    %105 = vst.msk [vmem:[#allocation0] ss:$8 sm:$0xf] %vm104, %v103
    %s106 = scalar_lea.vmem %s0, 7
    %s107 = smov 3
    %v108 = vld [vmem:[%s106] ss:$16 sm:%s107]
    %s109 = scalar_lea.vmem %s0, 7
    %s110 = smov 12
    %v111 = vld [vmem:[%s109] ss:$16 sm:%s110]
    %vm112 = vcmask 1043458
    %v113 = vsel %vm112, %v111, %v108
    %114 = vrot.lane.b32.xlu0 %v113, 56
    %v115 = vpop.permute.xlu0 %114
    %vm116 = vcmask 523712
    %117 = vst.msk [vmem:[#allocation0] ss:$8 sm:$0xf] %vm116, %v115
    %s118 = scalar_lea.vmem %s0, 6
    %s119 = smov 3
    %v120 = vld [vmem:[%s118] ss:$16 sm:%s119]
    %s121 = scalar_lea.vmem %s0, 6
    %s122 = smov 12
    %v123 = vld [vmem:[%s121] ss:$16 sm:%s122]
    %vm124 = vcmask 1043458
    %v125 = vsel %vm124, %v123, %v120
    %126 = vrot.lane.b32.xlu0 %v125, 48
    %v127 = vpop.permute.xlu0 %126
    %vm128 = vcmask 458112
    %129 = vst.msk [vmem:[#allocation0] ss:$8 sm:$0xf] %vm128, %v127
    %s130 = scalar_lea.vmem %s0, 5
    %s131 = smov 3
    %v132 = vld [vmem:[%s130] ss:$16 sm:%s131]
    %s133 = scalar_lea.vmem %s0, 5
    %s134 = smov 12
    %v135 = vld [vmem:[%s133] ss:$16 sm:%s134]
    %vm136 = vcmask 1043458
    %v137 = vsel %vm136, %v135, %v132
    %138 = vrot.lane.b32.xlu0 %v137, 40
    %v139 = vpop.permute.xlu0 %138
    %vm140 = vcmask 392512
    %141 = vst.msk [vmem:[#allocation0] ss:$8 sm:$0xf] %vm140, %v139
    %s142 = scalar_lea.vmem %s0, 4
    %s143 = smov 3
    %v144 = vld [vmem:[%s142] ss:$16 sm:%s143]
    %s145 = scalar_lea.vmem %s0, 4
    %s146 = smov 12
    %v147 = vld [vmem:[%s145] ss:$16 sm:%s146]
    %vm148 = vcmask 1043458
    %v149 = vsel %vm148, %v147, %v144
    %150 = vrot.lane.b32.xlu0 %v149, 32
    %v151 = vpop.permute.xlu0 %150
    %vm152 = vcmask 326912
    %153 = vst.msk [vmem:[#allocation0] ss:$8 sm:$0xf] %vm152, %v151
    %s154 = scalar_lea.vmem %s0, 3
    %s155 = smov 3
    %v156 = vld [vmem:[%s154] ss:$16 sm:%s155]
    %s157 = scalar_lea.vmem %s0, 3
    %s158 = smov 12
    %v159 = vld [vmem:[%s157] ss:$16 sm:%s158]
    %vm160 = vcmask 1043458
    %v161 = vsel %vm160, %v159, %v156
    %162 = vrot.lane.b32.xlu0 %v161, 24
    %v163 = vpop.permute.xlu0 %162
    %vm164 = vcmask 261312
    %165 = vst.msk [vmem:[#allocation0] ss:$8 sm:$0xf] %vm164, %v163
    %s166 = scalar_lea.vmem %s0, 2
    %s167 = smov 3
    %v168 = vld [vmem:[%s166] ss:$16 sm:%s167]
    %s169 = scalar_lea.vmem %s0, 2
    %s170 = smov 12
    %v171 = vld [vmem:[%s169] ss:$16 sm:%s170]
    %vm172 = vcmask 1043458
    %v173 = vsel %vm172, %v171, %v168
    %174 = vrot.lane.b32.xlu0 %v173, 16
    %v175 = vpop.permute.xlu0 %174
    %vm176 = vcmask 195712
    %177 = vst.msk [vmem:[#allocation0] ss:$8 sm:$0xf] %vm176, %v175
    %s178 = scalar_lea.vmem %s0, 1
    %s179 = smov 3
    %v180 = vld [vmem:[%s178] ss:$16 sm:%s179]
    %s181 = scalar_lea.vmem %s0, 1
    %s182 = smov 12
    %v183 = vld [vmem:[%s181] ss:$16 sm:%s182]
    %vm184 = vcmask 1043458
    %v185 = vsel %vm184, %v183, %v180
    %186 = vrot.lane.b32.xlu0 %v185, 8
    %v187 = vpop.permute.xlu0 %186
    %vm188 = vcmask 130112
    %189 = vst.msk [vmem:[#allocation0] ss:$8 sm:$0xf] %vm188, %v187
    %s191 = sshllo.u32 0, 1
    %v193 = vld [vmem:[#allocation0] sm:%s191]
    %s194 = sshllo.u32 0, 1
    %195 = vst [vmem:[%s1] sm:%s194] %v193
    %s196 = scalar_lea.vmem [#allocation0], 8
    %v197 = vld [vmem:[%s196] sm:%s191]
    %s198 = sshllo.u32 0, 1
    %s199 = scalar_lea.vmem %s1, 1
    %200 = vst [vmem:[%s199] sm:%s198] %v197
    %s201 = scalar_lea.vmem [#allocation0], 16
    %v202 = vld [vmem:[%s201] sm:%s191]
    %s203 = sshllo.u32 0, 1
    %s204 = smul.addr 1, 2
    %s205 = scalar_lea.vmem %s1, %s204
    %206 = vst [vmem:[%s205] sm:%s203] %v202
    %s207 = scalar_lea.vmem [#allocation0], 24
    %v208 = vld [vmem:[%s207] sm:%s191]
    %s209 = sshllo.u32 0, 1
    %s210 = smul.addr 1, 3
    %s211 = scalar_lea.vmem %s1, %s210
    %212 = vst [vmem:[%s211] sm:%s209] %v208

// kernel: _lambda_.6
$region0: #{_lambda_.6}
  #allocation0 [shape = 'u32[]', space=smem, size = 0x4, offset = 0x4, fixed_abs, tag = 'smem constant byte address 0x4 - core index']
  #allocation1 [shape = 'u32[144,128]{1,0:T(1,128)}', space=vmem, size = 0x12000, scoped, tag = 'internal scratch']
  %s0 = inlined_call_operand.vmem [shape: f32[104,864], index: 0, kind: input, shape index: {}]
  %s1 = inlined_call_operand.vmem [shape: f32[864,512], index: 1, kind: input, shape index: {}]
  %s2 = inlined_call_operand.vmem [shape: f32[1,512], index: 2, kind: input, shape index: {}]
  %s3 = inlined_call_operand.vmem [shape: f32[104,512], index: 3, kind: output, shape index: {}]
  %s4 = sld [smem:[#allocation0]]
  $region22: #{_lambda_.6} parent=0
    _
  %s6 = ssub.s32 1, %s4
  %s7 = scalar_select 0, %s6, %s4
  // Predicated region
  $region2: #{_lambda_.6} parent=0 // pred_check
    _
  $region3: #{_lambda_.6} parent=0 // pred_check_branch
    %9 = sbr.rel (0) target = $region5
  $region4: #{_lambda_.6} parent=0 // pred_region
    _
  $region5: #{_lambda_.6} parent=0 // pred_fallthru
    _
  // Predicated region
  $region6: #{_lambda_.6} parent=0 // pred_check
    _
  $region7: #{_lambda_.6} parent=0 // pred_check_branch
    %11 = sbr.rel (0) target = $region9
  $region8: #{_lambda_.6} parent=0 // pred_region
    _
  $region9: #{_lambda_.6} parent=0 // pred_fallthru
    _
  // Predicated region
  $region10: #{_lambda_.6} parent=0 // pred_check
    _
  $region11: #{_lambda_.6} parent=0 // pred_check_branch
    %13 = sbr.rel (0) target = $region13
  $region12: #{_lambda_.6} parent=0 // pred_region
    _
  $region13: #{_lambda_.6} parent=0 // pred_fallthru
    _
  %v14 = vld [vmem:[%s0] sm:$0xff]
  %v15 = vld [vmem:[%s0 + $0x8] sm:$0xff]
  %v16 = vld [vmem:[%s0 + $0x10] sm:$0xff]
  %v17 = vld [vmem:[%s0 + $0x18] sm:$0xff]
  %v18 = vld [vmem:[%s0 + $0x20] sm:$0xff]
  %v19 = vld [vmem:[%s0 + $0x28] sm:$0xff]
  %v20 = vld [vmem:[%s0 + $0x30] sm:$0xff]
  %v21 = vld [vmem:[%s0 + $0x38] sm:$0xff]
  %v22 = vld [vmem:[%s0 + $0x40] sm:$0xff]
  %v23 = vld [vmem:[%s0 + $0x48] sm:$0xff]
  %v24 = vld [vmem:[%s0 + $0x50] sm:$0xff]
  %v25 = vld [vmem:[%s0 + $0x58] sm:$0xff]
  %v26 = vld [vmem:[%s0 + $0x60] sm:$0xff]
  %v27 = vld [vmem:[%s0 + $0x68] sm:$0xff]
  %v28 = vld [vmem:[%s0 + $0x70] sm:$0xff]
  %v29 = vld [vmem:[%s0 + $0x78] sm:$0xff]
  %v30 = vld [vmem:[%s0 + $0x80] sm:$0xff]
  %v31 = vld [vmem:[%s0 + $0x88] sm:$0xff]
  %v32 = vld [vmem:[%s0 + $0x90] sm:$0xff]
  %v33 = vld [vmem:[%s0 + $0x98] sm:$0xff]
  %v34 = vld [vmem:[%s0 + $0xa0] sm:$0xff]
  %v35 = vld [vmem:[%s0 + $0xa8] sm:$0xff]
  %v36 = vld [vmem:[%s0 + $0xb0] sm:$0xff]
  %v37 = vld [vmem:[%s0 + $0xb8] sm:$0xff]
  %v38 = vld [vmem:[%s0 + $0xc0] sm:$0xff]
  %v39 = vld [vmem:[%s0 + $0xc8] sm:$0xff]
  %v40 = vld [vmem:[%s0 + $0xd0] sm:$0xff]
  %v41 = vld [vmem:[%s0 + $0xd8] sm:$0xff]
  %v42 = vld [vmem:[%s0 + $0xe0] sm:$0xff]
  %v43 = vld [vmem:[%s0 + $0xe8] sm:$0xff]
  %v44 = vld [vmem:[%s0 + $0xf0] sm:$0xff]
  %v45 = vld [vmem:[%s0 + $0xf8] sm:$0xff]
  %v46 = vld [vmem:[%s0 + $0x100] sm:$0xff]
  %v47 = vld [vmem:[%s0 + $0x108] sm:$0xff]
  %v48 = vld [vmem:[%s0 + $0x110] sm:$0xff]
  %v49 = vld [vmem:[%s0 + $0x118] sm:$0xff]
  %v50 = vld [vmem:[%s0 + $0x120] sm:$0xff]
  %v51 = vld [vmem:[%s0 + $0x128] sm:$0xff]
  %v52 = vld [vmem:[%s0 + $0x130] sm:$0xff]
  %v53 = vld [vmem:[%s0 + $0x138] sm:$0xff]
  %v54 = vld [vmem:[%s0 + $0x140] sm:$0xff]
  %v55 = vld [vmem:[%s0 + $0x148] sm:$0xff]
  %v56 = vld [vmem:[%s0 + $0x150] sm:$0xff]
  %v57 = vld [vmem:[%s0 + $0x158] sm:$0xff]
  %v58 = vld [vmem:[%s0 + $0x160] sm:$0xff]
  %v59 = vld [vmem:[%s0 + $0x168] sm:$0xff]
  %v60 = vld [vmem:[%s0 + $0x170] sm:$0xff]
  %v61 = vld [vmem:[%s0 + $0x178] sm:$0xff]
  %v62 = vld [vmem:[%s0 + $0x180] sm:$0xff]
  %v63 = vld [vmem:[%s0 + $0x188] sm:$0xff]
  %v64 = vld [vmem:[%s0 + $0x190] sm:$0xff]
  %v65 = vld [vmem:[%s0 + $0x198] sm:$0xff]
  %v66 = vld [vmem:[%s0 + $0x1a0] sm:$0xff]
  %v67 = vld [vmem:[%s0 + $0x1a8] sm:$0xff]
  %v68 = vld [vmem:[%s0 + $0x1b0] sm:$0xff]
  %v69 = vld [vmem:[%s0 + $0x1b8] sm:$0xff]
  %v70 = vld [vmem:[%s0 + $0x1c0] sm:$0xff]
  %v71 = vld [vmem:[%s0 + $0x1c8] sm:$0xff]
  %v72 = vld [vmem:[%s0 + $0x1d0] sm:$0xff]
  %v73 = vld [vmem:[%s0 + $0x1d8] sm:$0xff]
  %v74 = vld [vmem:[%s0 + $0x1e0] sm:$0xff]
  %v75 = vld [vmem:[%s0 + $0x1e8] sm:$0xff]
  %v76 = vld [vmem:[%s0 + $0x1f0] sm:$0xff]
  %v77 = vld [vmem:[%s0 + $0x1f8] sm:$0xff]
  %v78 = vld [vmem:[%s0 + $0x200] sm:$0xff]
  %v79 = vld [vmem:[%s0 + $0x208] sm:$0xff]
  %v80 = vld [vmem:[%s0 + $0x210] sm:$0xff]
  %v81 = vld [vmem:[%s0 + $0x218] sm:$0xff]
  %v82 = vld [vmem:[%s0 + $0x220] sm:$0xff]
  %v83 = vld [vmem:[%s0 + $0x228] sm:$0xff]
  %v84 = vld [vmem:[%s0 + $0x230] sm:$0xff]
  %v85 = vld [vmem:[%s0 + $0x238] sm:$0xff]
  %v86 = vld [vmem:[%s0 + $0x240] sm:$0xff]
  %v87 = vld [vmem:[%s0 + $0x248] sm:$0xff]
  %v88 = vld [vmem:[%s0 + $0x250] sm:$0xff]
  %v89 = vld [vmem:[%s0 + $0x258] sm:$0xff]
  %v90 = vld [vmem:[%s0 + $0x260] sm:$0xff]
  %v91 = vld [vmem:[%s0 + $0x268] sm:$0xff]
  %v92 = vld [vmem:[%s0 + $0x270] sm:$0xff]
  %v93 = vld [vmem:[%s0 + $0x278] sm:$0xff]
  %v94 = vld [vmem:[%s0 + $0x280] sm:$0xff]
  %v95 = vld [vmem:[%s0 + $0x288] sm:$0xff]
  %v96 = vld [vmem:[%s0 + $0x290] sm:$0xff]
  %v97 = vld [vmem:[%s0 + $0x298] sm:$0xff]
  %v98 = vld [vmem:[%s0 + $0x2a0] sm:$0xff]
  %v99 = vld [vmem:[%s0 + $0x2a8] sm:$0xff]
  %v100 = vld [vmem:[%s0 + $0x2b0] sm:$0xff]
  %v101 = vld [vmem:[%s0 + $0x2b8] sm:$0xff]
  %v102 = vld [vmem:[%s0 + $0x2c0] sm:$0xff]
  %v103 = vld [vmem:[%s0 + $0x2c8] sm:$0xff]
  %v104 = vld [vmem:[%s0 + $0x2d0] sm:$0xff]
  %v105 = vld [vmem:[%s1] sm:$0xff]
  %v106 = vld [vmem:[%s1 + $0x8] sm:$0xff]
  %v107 = vld [vmem:[%s1 + $0x10] sm:$0xff]
  %v108 = vld [vmem:[%s1 + $0x18] sm:$0xff]
  %v109 = vld [vmem:[%s1 + $0x20] sm:$0xff]
  %v110 = vld [vmem:[%s1 + $0x28] sm:$0xff]
  %v111 = vld [vmem:[%s1 + $0x30] sm:$0xff]
  %v112 = vld [vmem:[%s1 + $0x38] sm:$0xff]
  %v113 = vld [vmem:[%s1 + $0x40] sm:$0xff]
  %v114 = vld [vmem:[%s1 + $0x48] sm:$0xff]
  %v115 = vld [vmem:[%s1 + $0x50] sm:$0xff]
  %v116 = vld [vmem:[%s1 + $0x58] sm:$0xff]
  %v117 = vld [vmem:[%s1 + $0x60] sm:$0xff]
  %v118 = vld [vmem:[%s1 + $0x68] sm:$0xff]
  %v119 = vld [vmem:[%s1 + $0x70] sm:$0xff]
  %v120 = vld [vmem:[%s1 + $0x78] sm:$0xff]
  %v121 = vld [vmem:[%s1 + $0x80] sm:$0xff]
  %v122 = vld [vmem:[%s1 + $0x88] sm:$0xff]
  %v123 = vld [vmem:[%s1 + $0x90] sm:$0xff]
  %v124 = vld [vmem:[%s1 + $0x98] sm:$0xff]
  %v125 = vld [vmem:[%s1 + $0xa0] sm:$0xff]
  %v126 = vld [vmem:[%s1 + $0xa8] sm:$0xff]
  %v127 = vld [vmem:[%s1 + $0xb0] sm:$0xff]
  %v128 = vld [vmem:[%s1 + $0xb8] sm:$0xff]
  %v129 = vld [vmem:[%s1 + $0xc0] sm:$0xff]
  %v130 = vld [vmem:[%s1 + $0xc8] sm:$0xff]
  %v131 = vld [vmem:[%s1 + $0xd0] sm:$0xff]
  %v132 = vld [vmem:[%s1 + $0xd8] sm:$0xff]
  %v133 = vld [vmem:[%s1 + $0xe0] sm:$0xff]
  %v134 = vld [vmem:[%s1 + $0xe8] sm:$0xff]
  %v135 = vld [vmem:[%s1 + $0xf0] sm:$0xff]
  %v136 = vld [vmem:[%s1 + $0xf8] sm:$0xff]
  %v137 = vld [vmem:[%s1 + $0x100] sm:$0xff]
  %v138 = vld [vmem:[%s1 + $0x108] sm:$0xff]
  %v139 = vld [vmem:[%s1 + $0x110] sm:$0xff]
  %v140 = vld [vmem:[%s1 + $0x118] sm:$0xff]
  %v141 = vld [vmem:[%s1 + $0x120] sm:$0xff]
  %v142 = vld [vmem:[%s1 + $0x128] sm:$0xff]
  %v143 = vld [vmem:[%s1 + $0x130] sm:$0xff]
  %v144 = vld [vmem:[%s1 + $0x138] sm:$0xff]
  %v145 = vld [vmem:[%s1 + $0x140] sm:$0xff]
  %v146 = vld [vmem:[%s1 + $0x148] sm:$0xff]
  %v147 = vld [vmem:[%s1 + $0x150] sm:$0xff]
  %v148 = vld [vmem:[%s1 + $0x158] sm:$0xff]
  %v149 = vld [vmem:[%s1 + $0x160] sm:$0xff]
  %v150 = vld [vmem:[%s1 + $0x168] sm:$0xff]
  %v151 = vld [vmem:[%s1 + $0x170] sm:$0xff]
  %v152 = vld [vmem:[%s1 + $0x178] sm:$0xff]
  %v153 = vld [vmem:[%s1 + $0x180] sm:$0xff]
  %v154 = vld [vmem:[%s1 + $0x188] sm:$0xff]
  %v155 = vld [vmem:[%s1 + $0x190] sm:$0xff]
  %v156 = vld [vmem:[%s1 + $0x198] sm:$0xff]
  %v157 = vld [vmem:[%s1 + $0x1a0] sm:$0xff]
  %v158 = vld [vmem:[%s1 + $0x1a8] sm:$0xff]
  %v159 = vld [vmem:[%s1 + $0x1b0] sm:$0xff]
  %v160 = vld [vmem:[%s1 + $0x1b8] sm:$0xff]
  %v161 = vld [vmem:[%s1 + $0x1c0] sm:$0xff]
  %v162 = vld [vmem:[%s1 + $0x1c8] sm:$0xff]
  %v163 = vld [vmem:[%s1 + $0x1d0] sm:$0xff]
  %v164 = vld [vmem:[%s1 + $0x1d8] sm:$0xff]
  %v165 = vld [vmem:[%s1 + $0x1e0] sm:$0xff]
  %v166 = vld [vmem:[%s1 + $0x1e8] sm:$0xff]
  %v167 = vld [vmem:[%s1 + $0x1f0] sm:$0xff]
  %v168 = vld [vmem:[%s1 + $0x1f8] sm:$0xff]
  %v169 = vld [vmem:[%s1 + $0x200] sm:$0xff]
  %v170 = vld [vmem:[%s1 + $0x208] sm:$0xff]
  %v171 = vld [vmem:[%s1 + $0x210] sm:$0xff]
  %v172 = vld [vmem:[%s1 + $0x218] sm:$0xff]
  %v173 = vld [vmem:[%s1 + $0x220] sm:$0xff]
  %v174 = vld [vmem:[%s1 + $0x228] sm:$0xff]
  %v175 = vld [vmem:[%s1 + $0x230] sm:$0xff]
  %v176 = vld [vmem:[%s1 + $0x238] sm:$0xff]
  %v177 = vld [vmem:[%s1 + $0x240] sm:$0xff]
  %v178 = vld [vmem:[%s1 + $0x248] sm:$0xff]
  %v179 = vld [vmem:[%s1 + $0x250] sm:$0xff]
  %v180 = vld [vmem:[%s1 + $0x258] sm:$0xff]
  %v181 = vld [vmem:[%s1 + $0x260] sm:$0xff]
  %v182 = vld [vmem:[%s1 + $0x268] sm:$0xff]
  %v183 = vld [vmem:[%s1 + $0x270] sm:$0xff]
  %v184 = vld [vmem:[%s1 + $0x278] sm:$0xff]
  %v185 = vld [vmem:[%s1 + $0x280] sm:$0xff]
  %v186 = vld [vmem:[%s1 + $0x288] sm:$0xff]
  %v187 = vld [vmem:[%s1 + $0x290] sm:$0xff]
  %v188 = vld [vmem:[%s1 + $0x298] sm:$0xff]
  %v189 = vld [vmem:[%s1 + $0x2a0] sm:$0xff]
  %v190 = vld [vmem:[%s1 + $0x2a8] sm:$0xff]
  %v191 = vld [vmem:[%s1 + $0x2b0] sm:$0xff]
  %v192 = vld [vmem:[%s1 + $0x2b8] sm:$0xff]
  %v193 = vld [vmem:[%s1 + $0x2c0] sm:$0xff]
  %v194 = vld [vmem:[%s1 + $0x2c8] sm:$0xff]
  %v195 = vld [vmem:[%s1 + $0x2d0] sm:$0xff]
  %v196 = vld [vmem:[%s1 + $0x2d8] sm:$0xff]
  %v197 = vld [vmem:[%s1 + $0x2e0] sm:$0xff]
  %v198 = vld [vmem:[%s1 + $0x2e8] sm:$0xff]
  %v199 = vld [vmem:[%s1 + $0x2f0] sm:$0xff]
  %v200 = vld [vmem:[%s1 + $0x2f8] sm:$0xff]
  %v201 = vld [vmem:[%s1 + $0x300] sm:$0xff]
  %v202 = vld [vmem:[%s1 + $0x308] sm:$0xff]
  %v203 = vld [vmem:[%s1 + $0x310] sm:$0xff]
  %v204 = vld [vmem:[%s1 + $0x318] sm:$0xff]
  %v205 = vld [vmem:[%s1 + $0x320] sm:$0xff]
  %v206 = vld [vmem:[%s1 + $0x328] sm:$0xff]
  %v207 = vld [vmem:[%s1 + $0x330] sm:$0xff]
  %v208 = vld [vmem:[%s1 + $0x338] sm:$0xff]
  %v209 = vld [vmem:[%s1 + $0x340] sm:$0xff]
  %v210 = vld [vmem:[%s1 + $0x348] sm:$0xff]
  %v211 = vld [vmem:[%s1 + $0x350] sm:$0xff]
  %v212 = vld [vmem:[%s1 + $0x358] sm:$0xff]
  %v213 = vld [vmem:[%s1 + $0x360] sm:$0xff]
  %v214 = vld [vmem:[%s1 + $0x368] sm:$0xff]
  %v215 = vld [vmem:[%s1 + $0x370] sm:$0xff]
  %v216 = vld [vmem:[%s1 + $0x378] sm:$0xff]
  %v217 = vld [vmem:[%s1 + $0x380] sm:$0xff]
  %v218 = vld [vmem:[%s1 + $0x388] sm:$0xff]
  %v219 = vld [vmem:[%s1 + $0x390] sm:$0xff]
  %v220 = vld [vmem:[%s1 + $0x398] sm:$0xff]
  %v221 = vld [vmem:[%s1 + $0x3a0] sm:$0xff]
  %v222 = vld [vmem:[%s1 + $0x3a8] sm:$0xff]
  %v223 = vld [vmem:[%s1 + $0x3b0] sm:$0xff]
  %v224 = vld [vmem:[%s1 + $0x3b8] sm:$0xff]
  %v225 = vld [vmem:[%s1 + $0x3c0] sm:$0xff]
  %v226 = vld [vmem:[%s1 + $0x3c8] sm:$0xff]
  %v227 = vld [vmem:[%s1 + $0x3d0] sm:$0xff]
  %v228 = vld [vmem:[%s1 + $0x3d8] sm:$0xff]
  %v229 = vld [vmem:[%s1 + $0x3e0] sm:$0xff]
  %v230 = vld [vmem:[%s1 + $0x3e8] sm:$0xff]
  %v231 = vld [vmem:[%s1 + $0x3f0] sm:$0xff]
  %v232 = vld [vmem:[%s1 + $0x3f8] sm:$0xff]
  %v233 = vld [vmem:[%s1 + $0x400] sm:$0xff]
  %v234 = vld [vmem:[%s1 + $0x408] sm:$0xff]
  %v235 = vld [vmem:[%s1 + $0x410] sm:$0xff]
  %v236 = vld [vmem:[%s1 + $0x418] sm:$0xff]
  %v237 = vld [vmem:[%s1 + $0x420] sm:$0xff]
  %v238 = vld [vmem:[%s1 + $0x428] sm:$0xff]
  %v239 = vld [vmem:[%s1 + $0x430] sm:$0xff]
  %v240 = vld [vmem:[%s1 + $0x438] sm:$0xff]
  %v241 = vld [vmem:[%s1 + $0x440] sm:$0xff]
  %v242 = vld [vmem:[%s1 + $0x448] sm:$0xff]
  %v243 = vld [vmem:[%s1 + $0x450] sm:$0xff]
  %v244 = vld [vmem:[%s1 + $0x458] sm:$0xff]
  %v245 = vld [vmem:[%s1 + $0x460] sm:$0xff]
  %v246 = vld [vmem:[%s1 + $0x468] sm:$0xff]
  %v247 = vld [vmem:[%s1 + $0x470] sm:$0xff]
  %v248 = vld [vmem:[%s1 + $0x478] sm:$0xff]
  %v249 = vld [vmem:[%s1 + $0x480] sm:$0xff]
  %v250 = vld [vmem:[%s1 + $0x488] sm:$0xff]
  %v251 = vld [vmem:[%s1 + $0x490] sm:$0xff]
  %v252 = vld [vmem:[%s1 + $0x498] sm:$0xff]
  %v253 = vld [vmem:[%s1 + $0x4a0] sm:$0xff]
  %v254 = vld [vmem:[%s1 + $0x4a8] sm:$0xff]
  %v255 = vld [vmem:[%s1 + $0x4b0] sm:$0xff]
  %v256 = vld [vmem:[%s1 + $0x4b8] sm:$0xff]
  %v257 = vld [vmem:[%s1 + $0x4c0] sm:$0xff]
  %v258 = vld [vmem:[%s1 + $0x4c8] sm:$0xff]
  %v259 = vld [vmem:[%s1 + $0x4d0] sm:$0xff]
  %v260 = vld [vmem:[%s1 + $0x4d8] sm:$0xff]
  %v261 = vld [vmem:[%s1 + $0x4e0] sm:$0xff]
  %v262 = vld [vmem:[%s1 + $0x4e8] sm:$0xff]
  %v263 = vld [vmem:[%s1 + $0x4f0] sm:$0xff]
  %v264 = vld [vmem:[%s1 + $0x4f8] sm:$0xff]
  %v265 = vld [vmem:[%s1 + $0x500] sm:$0xff]
  %v266 = vld [vmem:[%s1 + $0x508] sm:$0xff]
  %v267 = vld [vmem:[%s1 + $0x510] sm:$0xff]
  %v268 = vld [vmem:[%s1 + $0x518] sm:$0xff]
  %v269 = vld [vmem:[%s1 + $0x520] sm:$0xff]
  %v270 = vld [vmem:[%s1 + $0x528] sm:$0xff]
  %v271 = vld [vmem:[%s1 + $0x530] sm:$0xff]
  %v272 = vld [vmem:[%s1 + $0x538] sm:$0xff]
  %v273 = vld [vmem:[%s1 + $0x540] sm:$0xff]
  %v274 = vld [vmem:[%s1 + $0x548] sm:$0xff]
  %v275 = vld [vmem:[%s1 + $0x550] sm:$0xff]
  %v276 = vld [vmem:[%s1 + $0x558] sm:$0xff]
  %v277 = vld [vmem:[%s1 + $0x560] sm:$0xff]
  %v278 = vld [vmem:[%s1 + $0x568] sm:$0xff]
  %v279 = vld [vmem:[%s1 + $0x570] sm:$0xff]
  %v280 = vld [vmem:[%s1 + $0x578] sm:$0xff]
  %v281 = vld [vmem:[%s1 + $0x580] sm:$0xff]
  %v282 = vld [vmem:[%s1 + $0x588] sm:$0xff]
  %v283 = vld [vmem:[%s1 + $0x590] sm:$0xff]
  %v284 = vld [vmem:[%s1 + $0x598] sm:$0xff]
  %v285 = vld [vmem:[%s1 + $0x5a0] sm:$0xff]
  %v286 = vld [vmem:[%s1 + $0x5a8] sm:$0xff]
  %v287 = vld [vmem:[%s1 + $0x5b0] sm:$0xff]
  %v288 = vld [vmem:[%s1 + $0x5b8] sm:$0xff]
  %v289 = vld [vmem:[%s1 + $0x5c0] sm:$0xff]
  %v290 = vld [vmem:[%s1 + $0x5c8] sm:$0xff]
  %v291 = vld [vmem:[%s1 + $0x5d0] sm:$0xff]
  %v292 = vld [vmem:[%s1 + $0x5d8] sm:$0xff]
  %v293 = vld [vmem:[%s1 + $0x5e0] sm:$0xff]
  %v294 = vld [vmem:[%s1 + $0x5e8] sm:$0xff]
  %v295 = vld [vmem:[%s1 + $0x5f0] sm:$0xff]
  %v296 = vld [vmem:[%s1 + $0x5f8] sm:$0xff]
  %v297 = vld [vmem:[%s1 + $0x600] sm:$0xff]
  %v298 = vld [vmem:[%s1 + $0x608] sm:$0xff]
  %v299 = vld [vmem:[%s1 + $0x610] sm:$0xff]
  %v300 = vld [vmem:[%s1 + $0x618] sm:$0xff]
  %v301 = vld [vmem:[%s1 + $0x620] sm:$0xff]
  %v302 = vld [vmem:[%s1 + $0x628] sm:$0xff]
  %v303 = vld [vmem:[%s1 + $0x630] sm:$0xff]
  %v304 = vld [vmem:[%s1 + $0x638] sm:$0xff]
  %v305 = vld [vmem:[%s1 + $0x640] sm:$0xff]
  %v306 = vld [vmem:[%s1 + $0x648] sm:$0xff]
  %v307 = vld [vmem:[%s1 + $0x650] sm:$0xff]
  %v308 = vld [vmem:[%s1 + $0x658] sm:$0xff]
  %v309 = vld [vmem:[%s1 + $0x660] sm:$0xff]
  %v310 = vld [vmem:[%s1 + $0x668] sm:$0xff]
  %v311 = vld [vmem:[%s1 + $0x670] sm:$0xff]
  %v312 = vld [vmem:[%s1 + $0x678] sm:$0xff]
  %v313 = vld [vmem:[%s1 + $0x680] sm:$0xff]
  %v314 = vld [vmem:[%s1 + $0x688] sm:$0xff]
  %v315 = vld [vmem:[%s1 + $0x690] sm:$0xff]
  %v316 = vld [vmem:[%s1 + $0x698] sm:$0xff]
  %v317 = vld [vmem:[%s1 + $0x6a0] sm:$0xff]
  %v318 = vld [vmem:[%s1 + $0x6a8] sm:$0xff]
  %v319 = vld [vmem:[%s1 + $0x6b0] sm:$0xff]
  %v320 = vld [vmem:[%s1 + $0x6b8] sm:$0xff]
  %v321 = vld [vmem:[%s1 + $0x6c0] sm:$0xff]
  %v322 = vld [vmem:[%s1 + $0x6c8] sm:$0xff]
  %v323 = vld [vmem:[%s1 + $0x6d0] sm:$0xff]
  %v324 = vld [vmem:[%s1 + $0x6d8] sm:$0xff]
  %v325 = vld [vmem:[%s1 + $0x6e0] sm:$0xff]
  %v326 = vld [vmem:[%s1 + $0x6e8] sm:$0xff]
  %v327 = vld [vmem:[%s1 + $0x6f0] sm:$0xff]
  %v328 = vld [vmem:[%s1 + $0x6f8] sm:$0xff]
  %v329 = vld [vmem:[%s1 + $0x700] sm:$0xff]
  %v330 = vld [vmem:[%s1 + $0x708] sm:$0xff]
  %v331 = vld [vmem:[%s1 + $0x710] sm:$0xff]
  %v332 = vld [vmem:[%s1 + $0x718] sm:$0xff]
  %v333 = vld [vmem:[%s1 + $0x720] sm:$0xff]
  %v334 = vld [vmem:[%s1 + $0x728] sm:$0xff]
  %v335 = vld [vmem:[%s1 + $0x730] sm:$0xff]
  %v336 = vld [vmem:[%s1 + $0x738] sm:$0xff]
  %v337 = vld [vmem:[%s1 + $0x740] sm:$0xff]
  %v338 = vld [vmem:[%s1 + $0x748] sm:$0xff]
  %v339 = vld [vmem:[%s1 + $0x750] sm:$0xff]
  %v340 = vld [vmem:[%s1 + $0x758] sm:$0xff]
  %v341 = vld [vmem:[%s1 + $0x760] sm:$0xff]
  %v342 = vld [vmem:[%s1 + $0x768] sm:$0xff]
  %v343 = vld [vmem:[%s1 + $0x770] sm:$0xff]
  %v344 = vld [vmem:[%s1 + $0x778] sm:$0xff]
  %v345 = vld [vmem:[%s1 + $0x780] sm:$0xff]
  %v346 = vld [vmem:[%s1 + $0x788] sm:$0xff]
  %v347 = vld [vmem:[%s1 + $0x790] sm:$0xff]
  %v348 = vld [vmem:[%s1 + $0x798] sm:$0xff]
  %v349 = vld [vmem:[%s1 + $0x7a0] sm:$0xff]
  %v350 = vld [vmem:[%s1 + $0x7a8] sm:$0xff]
  %v351 = vld [vmem:[%s1 + $0x7b0] sm:$0xff]
  %v352 = vld [vmem:[%s1 + $0x7b8] sm:$0xff]
  %v353 = vld [vmem:[%s1 + $0x7c0] sm:$0xff]
  %v354 = vld [vmem:[%s1 + $0x7c8] sm:$0xff]
  %v355 = vld [vmem:[%s1 + $0x7d0] sm:$0xff]
  %v356 = vld [vmem:[%s1 + $0x7d8] sm:$0xff]
  %v357 = vld [vmem:[%s1 + $0x7e0] sm:$0xff]
  %v358 = vld [vmem:[%s1 + $0x7e8] sm:$0xff]
  %v359 = vld [vmem:[%s1 + $0x7f0] sm:$0xff]
  %v360 = vld [vmem:[%s1 + $0x7f8] sm:$0xff]
  %v361 = vld [vmem:[%s1 + $0x800] sm:$0xff]
  %v362 = vld [vmem:[%s1 + $0x808] sm:$0xff]
  %v363 = vld [vmem:[%s1 + $0x810] sm:$0xff]
  %v364 = vld [vmem:[%s1 + $0x818] sm:$0xff]
  %v365 = vld [vmem:[%s1 + $0x820] sm:$0xff]
  %v366 = vld [vmem:[%s1 + $0x828] sm:$0xff]
  %v367 = vld [vmem:[%s1 + $0x830] sm:$0xff]
  %v368 = vld [vmem:[%s1 + $0x838] sm:$0xff]
  %v369 = vld [vmem:[%s1 + $0x840] sm:$0xff]
  %v370 = vld [vmem:[%s1 + $0x848] sm:$0xff]
  %v371 = vld [vmem:[%s1 + $0x850] sm:$0xff]
  %v372 = vld [vmem:[%s1 + $0x858] sm:$0xff]
  %v373 = vld [vmem:[%s1 + $0x860] sm:$0xff]
  %v374 = vld [vmem:[%s1 + $0x868] sm:$0xff]
  %v375 = vld [vmem:[%s1 + $0x870] sm:$0xff]
  %v376 = vld [vmem:[%s1 + $0x878] sm:$0xff]
  %v377 = vld [vmem:[%s1 + $0x880] sm:$0xff]
  %v378 = vld [vmem:[%s1 + $0x888] sm:$0xff]
  %v379 = vld [vmem:[%s1 + $0x890] sm:$0xff]
  %v380 = vld [vmem:[%s1 + $0x898] sm:$0xff]
  %v381 = vld [vmem:[%s1 + $0x8a0] sm:$0xff]
  %v382 = vld [vmem:[%s1 + $0x8a8] sm:$0xff]
  %v383 = vld [vmem:[%s1 + $0x8b0] sm:$0xff]
  %v384 = vld [vmem:[%s1 + $0x8b8] sm:$0xff]
  %v385 = vld [vmem:[%s1 + $0x8c0] sm:$0xff]
  %v386 = vld [vmem:[%s1 + $0x8c8] sm:$0xff]
  %v387 = vld [vmem:[%s1 + $0x8d0] sm:$0xff]
  %v388 = vld [vmem:[%s1 + $0x8d8] sm:$0xff]
  %v389 = vld [vmem:[%s1 + $0x8e0] sm:$0xff]
  %v390 = vld [vmem:[%s1 + $0x8e8] sm:$0xff]
  %v391 = vld [vmem:[%s1 + $0x8f0] sm:$0xff]
  %v392 = vld [vmem:[%s1 + $0x8f8] sm:$0xff]
  %v393 = vld [vmem:[%s1 + $0x900] sm:$0xff]
  %v394 = vld [vmem:[%s1 + $0x908] sm:$0xff]
  %v395 = vld [vmem:[%s1 + $0x910] sm:$0xff]
  %v396 = vld [vmem:[%s1 + $0x918] sm:$0xff]
  %v397 = vld [vmem:[%s1 + $0x920] sm:$0xff]
  %v398 = vld [vmem:[%s1 + $0x928] sm:$0xff]
  %v399 = vld [vmem:[%s1 + $0x930] sm:$0xff]
  %v400 = vld [vmem:[%s1 + $0x938] sm:$0xff]
  %v401 = vld [vmem:[%s1 + $0x940] sm:$0xff]
  %v402 = vld [vmem:[%s1 + $0x948] sm:$0xff]
  %v403 = vld [vmem:[%s1 + $0x950] sm:$0xff]
  %v404 = vld [vmem:[%s1 + $0x958] sm:$0xff]
  %v405 = vld [vmem:[%s1 + $0x960] sm:$0xff]
  %v406 = vld [vmem:[%s1 + $0x968] sm:$0xff]
  %v407 = vld [vmem:[%s1 + $0x970] sm:$0xff]
  %v408 = vld [vmem:[%s1 + $0x978] sm:$0xff]
  %v409 = vld [vmem:[%s1 + $0x980] sm:$0xff]
  %v410 = vld [vmem:[%s1 + $0x988] sm:$0xff]
  %v411 = vld [vmem:[%s1 + $0x990] sm:$0xff]
  %v412 = vld [vmem:[%s1 + $0x998] sm:$0xff]
  %v413 = vld [vmem:[%s1 + $0x9a0] sm:$0xff]
  %v414 = vld [vmem:[%s1 + $0x9a8] sm:$0xff]
  %v415 = vld [vmem:[%s1 + $0x9b0] sm:$0xff]
  %v416 = vld [vmem:[%s1 + $0x9b8] sm:$0xff]
  %v417 = vld [vmem:[%s1 + $0x9c0] sm:$0xff]
  %v418 = vld [vmem:[%s1 + $0x9c8] sm:$0xff]
  %v419 = vld [vmem:[%s1 + $0x9d0] sm:$0xff]
  %v420 = vld [vmem:[%s1 + $0x9d8] sm:$0xff]
  %v421 = vld [vmem:[%s1 + $0x9e0] sm:$0xff]
  %v422 = vld [vmem:[%s1 + $0x9e8] sm:$0xff]
  %v423 = vld [vmem:[%s1 + $0x9f0] sm:$0xff]
  %v424 = vld [vmem:[%s1 + $0x9f8] sm:$0xff]
  %v425 = vld [vmem:[%s1 + $0xa00] sm:$0xff]
  %v426 = vld [vmem:[%s1 + $0xa08] sm:$0xff]
  %v427 = vld [vmem:[%s1 + $0xa10] sm:$0xff]
  %v428 = vld [vmem:[%s1 + $0xa18] sm:$0xff]
  %v429 = vld [vmem:[%s1 + $0xa20] sm:$0xff]
  %v430 = vld [vmem:[%s1 + $0xa28] sm:$0xff]
  %v431 = vld [vmem:[%s1 + $0xa30] sm:$0xff]
  %v432 = vld [vmem:[%s1 + $0xa38] sm:$0xff]
  %v433 = vld [vmem:[%s1 + $0xa40] sm:$0xff]
  %v434 = vld [vmem:[%s1 + $0xa48] sm:$0xff]
  %v435 = vld [vmem:[%s1 + $0xa50] sm:$0xff]
  %v436 = vld [vmem:[%s1 + $0xa58] sm:$0xff]
  %v437 = vld [vmem:[%s1 + $0xa60] sm:$0xff]
  %v438 = vld [vmem:[%s1 + $0xa68] sm:$0xff]
  %v439 = vld [vmem:[%s1 + $0xa70] sm:$0xff]
  %v440 = vld [vmem:[%s1 + $0xa78] sm:$0xff]
  %v441 = vld [vmem:[%s1 + $0xa80] sm:$0xff]
  %v442 = vld [vmem:[%s1 + $0xa88] sm:$0xff]
  %v443 = vld [vmem:[%s1 + $0xa90] sm:$0xff]
  %v444 = vld [vmem:[%s1 + $0xa98] sm:$0xff]
  %v445 = vld [vmem:[%s1 + $0xaa0] sm:$0xff]
  %v446 = vld [vmem:[%s1 + $0xaa8] sm:$0xff]
  %v447 = vld [vmem:[%s1 + $0xab0] sm:$0xff]
  %v448 = vld [vmem:[%s1 + $0xab8] sm:$0xff]
  %v449 = vld [vmem:[%s1 + $0xac0] sm:$0xff]
  %v450 = vld [vmem:[%s1 + $0xac8] sm:$0xff]
  %v451 = vld [vmem:[%s1 + $0xad0] sm:$0xff]
  %v452 = vld [vmem:[%s1 + $0xad8] sm:$0xff]
  %v453 = vld [vmem:[%s1 + $0xae0] sm:$0xff]
  %v454 = vld [vmem:[%s1 + $0xae8] sm:$0xff]
  %v455 = vld [vmem:[%s1 + $0xaf0] sm:$0xff]
  %v456 = vld [vmem:[%s1 + $0xaf8] sm:$0xff]
  %v457 = vld [vmem:[%s1 + $0xb00] sm:$0xff]
  %v458 = vld [vmem:[%s1 + $0xb08] sm:$0xff]
  %v459 = vld [vmem:[%s1 + $0xb10] sm:$0xff]
  %v460 = vld [vmem:[%s1 + $0xb18] sm:$0xff]
  %v461 = vld [vmem:[%s1 + $0xb20] sm:$0xff]
  %v462 = vld [vmem:[%s1 + $0xb28] sm:$0xff]
  %v463 = vld [vmem:[%s1 + $0xb30] sm:$0xff]
  %v464 = vld [vmem:[%s1 + $0xb38] sm:$0xff]
  %v465 = vld [vmem:[%s1 + $0xb40] sm:$0xff]
  %v466 = vld [vmem:[%s1 + $0xb48] sm:$0xff]
  %v467 = vld [vmem:[%s1 + $0xb50] sm:$0xff]
  %v468 = vld [vmem:[%s1 + $0xb58] sm:$0xff]
  %v469 = vld [vmem:[%s1 + $0xb60] sm:$0xff]
  %v470 = vld [vmem:[%s1 + $0xb68] sm:$0xff]
  %v471 = vld [vmem:[%s1 + $0xb70] sm:$0xff]
  %v472 = vld [vmem:[%s1 + $0xb78] sm:$0xff]
  %v473 = vld [vmem:[%s1 + $0xb80] sm:$0xff]
  %v474 = vld [vmem:[%s1 + $0xb88] sm:$0xff]
  %v475 = vld [vmem:[%s1 + $0xb90] sm:$0xff]
  %v476 = vld [vmem:[%s1 + $0xb98] sm:$0xff]
  %v477 = vld [vmem:[%s1 + $0xba0] sm:$0xff]
  %v478 = vld [vmem:[%s1 + $0xba8] sm:$0xff]
  %v479 = vld [vmem:[%s1 + $0xbb0] sm:$0xff]
  %v480 = vld [vmem:[%s1 + $0xbb8] sm:$0xff]
  %v481 = vld [vmem:[%s1 + $0xbc0] sm:$0xff]
  %v482 = vld [vmem:[%s1 + $0xbc8] sm:$0xff]
  %v483 = vld [vmem:[%s1 + $0xbd0] sm:$0xff]
  %v484 = vld [vmem:[%s1 + $0xbd8] sm:$0xff]
  %v485 = vld [vmem:[%s1 + $0xbe0] sm:$0xff]
  %v486 = vld [vmem:[%s1 + $0xbe8] sm:$0xff]
  %v487 = vld [vmem:[%s1 + $0xbf0] sm:$0xff]
  %v488 = vld [vmem:[%s1 + $0xbf8] sm:$0xff]
  %v489 = vld [vmem:[%s1 + $0xc00] sm:$0xff]
  %v490 = vld [vmem:[%s1 + $0xc08] sm:$0xff]
  %v491 = vld [vmem:[%s1 + $0xc10] sm:$0xff]
  %v492 = vld [vmem:[%s1 + $0xc18] sm:$0xff]
  %v493 = vld [vmem:[%s1 + $0xc20] sm:$0xff]
  %v494 = vld [vmem:[%s1 + $0xc28] sm:$0xff]
  %v495 = vld [vmem:[%s1 + $0xc30] sm:$0xff]
  %v496 = vld [vmem:[%s1 + $0xc38] sm:$0xff]
  %v497 = vld [vmem:[%s1 + $0xc40] sm:$0xff]
  %v498 = vld [vmem:[%s1 + $0xc48] sm:$0xff]
  %v499 = vld [vmem:[%s1 + $0xc50] sm:$0xff]
  %v500 = vld [vmem:[%s1 + $0xc58] sm:$0xff]
  %v501 = vld [vmem:[%s1 + $0xc60] sm:$0xff]
  %v502 = vld [vmem:[%s1 + $0xc68] sm:$0xff]
  %v503 = vld [vmem:[%s1 + $0xc70] sm:$0xff]
  %v504 = vld [vmem:[%s1 + $0xc78] sm:$0xff]
  %v505 = vld [vmem:[%s1 + $0xc80] sm:$0xff]
  %v506 = vld [vmem:[%s1 + $0xc88] sm:$0xff]
  %v507 = vld [vmem:[%s1 + $0xc90] sm:$0xff]
  %v508 = vld [vmem:[%s1 + $0xc98] sm:$0xff]
  %v509 = vld [vmem:[%s1 + $0xca0] sm:$0xff]
  %v510 = vld [vmem:[%s1 + $0xca8] sm:$0xff]
  %v511 = vld [vmem:[%s1 + $0xcb0] sm:$0xff]
  %v512 = vld [vmem:[%s1 + $0xcb8] sm:$0xff]
  %v513 = vld [vmem:[%s1 + $0xcc0] sm:$0xff]
  %v514 = vld [vmem:[%s1 + $0xcc8] sm:$0xff]
  %v515 = vld [vmem:[%s1 + $0xcd0] sm:$0xff]
  %v516 = vld [vmem:[%s1 + $0xcd8] sm:$0xff]
  %v517 = vld [vmem:[%s1 + $0xce0] sm:$0xff]
  %v518 = vld [vmem:[%s1 + $0xce8] sm:$0xff]
  %v519 = vld [vmem:[%s1 + $0xcf0] sm:$0xff]
  %v520 = vld [vmem:[%s1 + $0xcf8] sm:$0xff]
  %v521 = vld [vmem:[%s1 + $0xd00] sm:$0xff]
  %v522 = vld [vmem:[%s1 + $0xd08] sm:$0xff]
  %v523 = vld [vmem:[%s1 + $0xd10] sm:$0xff]
  %v524 = vld [vmem:[%s1 + $0xd18] sm:$0xff]
  %v525 = vld [vmem:[%s1 + $0xd20] sm:$0xff]
  %v526 = vld [vmem:[%s1 + $0xd28] sm:$0xff]
  %v527 = vld [vmem:[%s1 + $0xd30] sm:$0xff]
  %v528 = vld [vmem:[%s1 + $0xd38] sm:$0xff]
  %v529 = vld [vmem:[%s1 + $0xd40] sm:$0xff]
  %v530 = vld [vmem:[%s1 + $0xd48] sm:$0xff]
  %v531 = vld [vmem:[%s1 + $0xd50] sm:$0xff]
  %v532 = vld [vmem:[%s1 + $0xd58] sm:$0xff]
  %v533 = vld [vmem:[%s1 + $0xd60] sm:$0xff]
  %v534 = vld [vmem:[%s1 + $0xd68] sm:$0xff]
  %v535 = vld [vmem:[%s1 + $0xd70] sm:$0xff]
  %v536 = vld [vmem:[%s1 + $0xd78] sm:$0xff]
  %v537 = vld [vmem:[%s2] sm:$0xf]
  %v539 = vlaneseq
  %v540 = vshrl.u32 %v539, 7
  %v541 = vsub.s32 0, %v540
  %v542 = vrot.slane %v537, %v541
  %v543 = vlaneseq
  %v544 = vshrl.u32 %v543, 7
  %v545 = vsub.s32 1, %v544
  %v546 = vrot.slane %v537, %v545
  %v547 = vlaneseq
  %v548 = vshrl.u32 %v547, 7
  %v549 = vsub.s32 2, %v548
  %v550 = vrot.slane %v537, %v549
  %v551 = vlaneseq
  %v552 = vshrl.u32 %v551, 7
  %v553 = vsub.s32 3, %v552
  %v554 = vrot.slane %v537, %v553
  %vm559 = vcmask 785408
  %v561 = vsel %vm559, %v20, 0
  %v564 = vsel %vm559, %v27, 0
  %v567 = vsel %vm559, %v34, 0
  %v570 = vsel %vm559, %v41, 0
  %v573 = vsel %vm559, %v48, 0
  %v576 = vsel %vm559, %v55, 0
  %v579 = vsel %vm559, %v62, 0
  %v582 = vsel %vm559, %v69, 0
  %v585 = vsel %vm559, %v76, 0
  %v588 = vsel %vm559, %v83, 0
  %v591 = vsel %vm559, %v90, 0
  %v594 = vsel %vm559, %v97, 0
  %v597 = vsel %vm559, %v104, 0
  %599 = vmatprep.subr.mxu0 %v106
  %600 = vmatpush1.msra.mxu0 %v105
  %601 = vmatprep.subr.mxu0 %v110
  %602 = vmatpush1.msra.mxu0 %v109
  %603 = vmatprep.subr.mxu0 %v114
  %604 = vmatpush1.msra.mxu0 %v113
  %605 = vmatprep.subr.mxu0 %v118
  %606 = vmatpush1.msra.mxu0 %v117
  %607 = vmatprep.subr.mxu0 %v122
  %608 = vmatpush1.msra.mxu0 %v121
  %609 = vmatprep.subr.mxu0 %v126
  %610 = vmatpush1.msra.mxu0 %v125
  %611 = vmatprep.subr.mxu0 %v130
  %612 = vmatpush1.msra.mxu0 %v129
  %613 = vmatprep.subr.mxu0 %v134
  %614 = vmatpush1.msra.mxu0 %v133
  %615 = vmatprep.subr.mxu0 %v138
  %616 = vmatpush1.msra.mxu0 %v137
  %617 = vmatprep.subr.mxu0 %v142
  %618 = vmatpush1.msra.mxu0 %v141
  %619 = vmatprep.subr.mxu0 %v146
  %620 = vmatpush1.msra.mxu0 %v145
  %621 = vmatprep.subr.mxu0 %v150
  %622 = vmatpush1.msra.mxu0 %v149
  %623 = vmatprep.subr.mxu0 %v154
  %624 = vmatpush1.msra.mxu0 %v153
  %625 = vmatprep.subr.mxu0 %v158
  %626 = vmatpush1.msra.mxu0 %v157
  %627 = vmatprep.subr.mxu0 %v162
  %628 = vmatpush1.msra.mxu0 %v161
  %629 = vmatprep.subr.mxu0 %v166
  %630 = vmatpush1.msra.mxu0 %v165
  %631 = vmatprep.subr.mxu0 %v170
  %632 = vmatpush1.msra.mxu0 %v169
  %633 = vmatprep.subr.mxu0 %v174
  %634 = vmatpush1.msra.mxu0 %v173
  %635 = vmatprep.subr.mxu0 %v178
  %636 = vmatpush1.msra.mxu0 %v177
  %637 = vmatprep.subr.mxu0 %v182
  %638 = vmatpush1.msra.mxu0 %v181
  %639 = vmatprep.subr.mxu0 %v186
  %640 = vmatpush1.msra.mxu0 %v185
  %641 = vmatprep.subr.mxu0 %v190
  %642 = vmatpush1.msra.mxu0 %v189
  %643 = vmatprep.subr.mxu0 %v194
  %644 = vmatpush1.msra.mxu0 %v193
  %645 = vmatprep.subr.mxu0 %v198
  %646 = vmatpush1.msra.mxu0 %v197
  %647 = vmatprep.subr.mxu0 %v202
  %648 = vmatpush1.msra.mxu0 %v201
  %649 = vmatprep.subr.mxu0 %v206
  %650 = vmatpush1.msra.mxu0 %v205
  %651 = vmatprep.subr.mxu0 %v210
  %652 = vmatpush1.msra.mxu0 %v209
  %653 = vmatprep.subr.mxu0 %v214
  %654 = vmatpush1.msra.mxu0 %v213
  %655 = vmatprep.subr.mxu0 %v218
  %656 = vmatpush1.msra.mxu0 %v217
  %657 = vmatprep.subr.mxu0 %v222
  %658 = vmatpush1.msra.mxu0 %v221
  %659 = vmatprep.subr.mxu0 %v226
  %660 = vmatpush1.msra.mxu0 %v225
  %661 = vmatprep.subr.mxu0 %v230
  %662 = vmatpush1.msra.mxu0 %v229
  %663 = vmatprep.mubr.f32.mxu0 %v15
  %664 = vmatmul.mubr.f32.gmra.mrb[0].mxu0 %v14
  %v665 = vpop.f32.mrb[0].mxu0
  %v666 = vadd.f32 %v542, %v665
  %v667 = vpop.f32.mrb[0].mxu0
  %v668 = vadd.f32 %v546, %v667
  %669 = vmatprep.mubr.f32.mxu0 %v22
  %670 = vmatmul.mubr.f32.gmra.mrb[0].mxu0 %v21
  %v671 = vpop.f32.mrb[0].mxu0
  %v672 = vadd.f32 %v542, %v671
  %v673 = vpop.f32.mrb[0].mxu0
  %v674 = vadd.f32 %v546, %v673
  %675 = vmatprep.mubr.f32.mxu0 %v29
  %676 = vmatmul.mubr.f32.gmra.mrb[0].mxu0 %v28
  %v677 = vpop.f32.mrb[0].mxu0
  %v678 = vadd.f32 %v542, %v677
  %v679 = vpop.f32.mrb[0].mxu0
  %v680 = vadd.f32 %v546, %v679
  %681 = vmatprep.mubr.f32.mxu0 %v36
  %682 = vmatmul.mubr.f32.gmra.mrb[0].mxu0 %v35
  %v683 = vpop.f32.mrb[0].mxu0
  %v684 = vadd.f32 %v542, %v683
  %v685 = vpop.f32.mrb[0].mxu0
  %v686 = vadd.f32 %v546, %v685
  %687 = vmatprep.mubr.f32.mxu0 %v43
  %688 = vmatmul.mubr.f32.gmra.mrb[0].mxu0 %v42
  %v689 = vpop.f32.mrb[0].mxu0
  %v690 = vadd.f32 %v542, %v689
  %v691 = vpop.f32.mrb[0].mxu0
  %v692 = vadd.f32 %v546, %v691
  %693 = vmatprep.mubr.f32.mxu0 %v50
  %694 = vmatmul.mubr.f32.gmra.mrb[0].mxu0 %v49
  %v695 = vpop.f32.mrb[0].mxu0
  %v696 = vadd.f32 %v542, %v695
  %v697 = vpop.f32.mrb[0].mxu0
  %v698 = vadd.f32 %v546, %v697
  %699 = vmatprep.mubr.f32.mxu0 %v57
  %700 = vmatmul.mubr.f32.gmra.mrb[0].mxu0 %v56
  %v701 = vpop.f32.mrb[0].mxu0
  %v702 = vadd.f32 %v542, %v701
  %v703 = vpop.f32.mrb[0].mxu0
  %v704 = vadd.f32 %v546, %v703
  %705 = vmatprep.mubr.f32.mxu0 %v64
  %706 = vmatmul.mubr.f32.gmra.mrb[0].mxu0 %v63
  %v707 = vpop.f32.mrb[0].mxu0
  %v708 = vadd.f32 %v542, %v707
  %v709 = vpop.f32.mrb[0].mxu0
  %v710 = vadd.f32 %v546, %v709
  %711 = vmatprep.mubr.f32.mxu0 %v71
  %712 = vmatmul.mubr.f32.gmra.mrb[0].mxu0 %v70
  %v713 = vpop.f32.mrb[0].mxu0
  %v714 = vadd.f32 %v542, %v713
  %v715 = vpop.f32.mrb[0].mxu0
  %v716 = vadd.f32 %v546, %v715
  %717 = vmatprep.mubr.f32.mxu0 %v78
  %718 = vmatmul.mubr.f32.gmra.mrb[0].mxu0 %v77
  %v719 = vpop.f32.mrb[0].mxu0
  %v720 = vadd.f32 %v542, %v719
  %v721 = vpop.f32.mrb[0].mxu0
  %v722 = vadd.f32 %v546, %v721
  %723 = vmatprep.mubr.f32.mxu0 %v85
  %724 = vmatmul.mubr.f32.gmra.mrb[0].mxu0 %v84
  %v725 = vpop.f32.mrb[0].mxu0
  %v726 = vadd.f32 %v542, %v725
  %v727 = vpop.f32.mrb[0].mxu0
  %v728 = vadd.f32 %v546, %v727
  %729 = vmatprep.mubr.f32.mxu0 %v92
  %730 = vmatmul.mubr.f32.gmra.mrb[0].mxu0 %v91
  %v731 = vpop.f32.mrb[0].mxu0
  %v732 = vadd.f32 %v542, %v731
  %v733 = vpop.f32.mrb[0].mxu0
  %v734 = vadd.f32 %v546, %v733
  %735 = vmatprep.mubr.f32.mxu0 %v99
  %736 = vmatmul.mubr.f32.gmra.mrb[0].mxu0 %v98
  %v737 = vpop.f32.mrb[0].mxu0
  %v738 = vadd.f32 %v542, %v737
  %v739 = vpop.f32.mrb[0].mxu0
  %v740 = vadd.f32 %v546, %v739
  %741 = vdwg.mxu0
  %742 = vmatprep.subr.mxu0 %v234
  %743 = vmatpush1.msra.mxu0 %v233
  %744 = vmatprep.subr.mxu0 %v238
  %745 = vmatpush1.msra.mxu0 %v237
  %746 = vmatprep.subr.mxu0 %v242
  %747 = vmatpush1.msra.mxu0 %v241
  %748 = vmatprep.subr.mxu0 %v246
  %749 = vmatpush1.msra.mxu0 %v245
  %750 = vmatprep.subr.mxu0 %v250
  %751 = vmatpush1.msra.mxu0 %v249
  %752 = vmatprep.subr.mxu0 %v254
  %753 = vmatpush1.msra.mxu0 %v253
  %754 = vmatprep.subr.mxu0 %v258
  %755 = vmatpush1.msra.mxu0 %v257
  %756 = vmatprep.subr.mxu0 %v262
  %757 = vmatpush1.msra.mxu0 %v261
  %758 = vmatprep.subr.mxu0 %v266
  %759 = vmatpush1.msra.mxu0 %v265
  %760 = vmatprep.subr.mxu0 %v270
  %761 = vmatpush1.msra.mxu0 %v269
  %762 = vmatprep.subr.mxu0 %v274
  %763 = vmatpush1.msra.mxu0 %v273
  %764 = vmatprep.subr.mxu0 %v278
  %765 = vmatpush1.msra.mxu0 %v277
  %766 = vmatprep.subr.mxu0 %v282
  %767 = vmatpush1.msra.mxu0 %v281
  %768 = vmatprep.subr.mxu0 %v286
  %769 = vmatpush1.msra.mxu0 %v285
  %770 = vmatprep.subr.mxu0 %v290
  %771 = vmatpush1.msra.mxu0 %v289
  %772 = vmatprep.subr.mxu0 %v294
  %773 = vmatpush1.msra.mxu0 %v293
  %774 = vmatprep.subr.mxu0 %v298
  %775 = vmatpush1.msra.mxu0 %v297
  %776 = vmatprep.subr.mxu0 %v302
  %777 = vmatpush1.msra.mxu0 %v301
  %778 = vmatprep.subr.mxu0 %v306
  %779 = vmatpush1.msra.mxu0 %v305
  %780 = vmatprep.subr.mxu0 %v310
  %781 = vmatpush1.msra.mxu0 %v309
  %782 = vmatprep.subr.mxu0 %v314
  %783 = vmatpush1.msra.mxu0 %v313
  %784 = vmatprep.subr.mxu0 %v318
  %785 = vmatpush1.msra.mxu0 %v317
  %786 = vmatprep.subr.mxu0 %v322
  %787 = vmatpush1.msra.mxu0 %v321
  %788 = vmatprep.subr.mxu0 %v326
  %789 = vmatpush1.msra.mxu0 %v325
  %790 = vmatprep.subr.mxu0 %v330
  %791 = vmatpush1.msra.mxu0 %v329
  %792 = vmatprep.subr.mxu0 %v334
  %793 = vmatpush1.msra.mxu0 %v333
  %794 = vmatprep.subr.mxu0 %v338
  %795 = vmatpush1.msra.mxu0 %v337
  %796 = vmatprep.subr.mxu0 %v342
  %797 = vmatpush1.msra.mxu0 %v341
  %798 = vmatprep.subr.mxu0 %v346
  %799 = vmatpush1.msra.mxu0 %v345
  %800 = vmatprep.subr.mxu0 %v350
  %801 = vmatpush1.msra.mxu0 %v349
  %802 = vmatprep.subr.mxu0 %v354
  %803 = vmatpush1.msra.mxu0 %v353
  %804 = vmatprep.subr.mxu0 %v358
  %805 = vmatpush1.msra.mxu0 %v357
  %806 = vmatprep.mubr.f32.mxu0 %v17
  %807 = vmatmul.mubr.f32.gmra.mrb[0].mxu0 %v16
  %v808 = vpop.f32.mrb[0].mxu0
  %v809 = vadd.f32 %v666, %v808
  %v810 = vpop.f32.mrb[0].mxu0
  %v811 = vadd.f32 %v668, %v810
  %812 = vmatprep.mubr.f32.mxu0 %v24
  %813 = vmatmul.mubr.f32.gmra.mrb[0].mxu0 %v23
  %v814 = vpop.f32.mrb[0].mxu0
  %v815 = vadd.f32 %v672, %v814
  %v816 = vpop.f32.mrb[0].mxu0
  %v817 = vadd.f32 %v674, %v816
  %818 = vmatprep.mubr.f32.mxu0 %v31
  %819 = vmatmul.mubr.f32.gmra.mrb[0].mxu0 %v30
  %v820 = vpop.f32.mrb[0].mxu0
  %v821 = vadd.f32 %v678, %v820
  %v822 = vpop.f32.mrb[0].mxu0
  %v823 = vadd.f32 %v680, %v822
  %824 = vmatprep.mubr.f32.mxu0 %v38
  %825 = vmatmul.mubr.f32.gmra.mrb[0].mxu0 %v37
  %v826 = vpop.f32.mrb[0].mxu0
  %v827 = vadd.f32 %v684, %v826
  %v828 = vpop.f32.mrb[0].mxu0
  %v829 = vadd.f32 %v686, %v828
  %830 = vmatprep.mubr.f32.mxu0 %v45
  %831 = vmatmul.mubr.f32.gmra.mrb[0].mxu0 %v44
  %v832 = vpop.f32.mrb[0].mxu0
  %v833 = vadd.f32 %v690, %v832
  %v834 = vpop.f32.mrb[0].mxu0
  %v835 = vadd.f32 %v692, %v834
  %836 = vmatprep.mubr.f32.mxu0 %v52
  %837 = vmatmul.mubr.f32.gmra.mrb[0].mxu0 %v51
  %v838 = vpop.f32.mrb[0].mxu0
  %v839 = vadd.f32 %v696, %v838
  %v840 = vpop.f32.mrb[0].mxu0
  %v841 = vadd.f32 %v698, %v840
  %842 = vmatprep.mubr.f32.mxu0 %v59
  %843 = vmatmul.mubr.f32.gmra.mrb[0].mxu0 %v58
  %v844 = vpop.f32.mrb[0].mxu0
  %v845 = vadd.f32 %v702, %v844
  %v846 = vpop.f32.mrb[0].mxu0
  %v847 = vadd.f32 %v704, %v846
  %848 = vmatprep.mubr.f32.mxu0 %v66
  %849 = vmatmul.mubr.f32.gmra.mrb[0].mxu0 %v65
  %v850 = vpop.f32.mrb[0].mxu0
  %v851 = vadd.f32 %v708, %v850
  %v852 = vpop.f32.mrb[0].mxu0
  %v853 = vadd.f32 %v710, %v852
  %854 = vmatprep.mubr.f32.mxu0 %v73
  %855 = vmatmul.mubr.f32.gmra.mrb[0].mxu0 %v72
  %v856 = vpop.f32.mrb[0].mxu0
  %v857 = vadd.f32 %v714, %v856
  %v858 = vpop.f32.mrb[0].mxu0
  %v859 = vadd.f32 %v716, %v858
  %860 = vmatprep.mubr.f32.mxu0 %v80
  %861 = vmatmul.mubr.f32.gmra.mrb[0].mxu0 %v79
  %v862 = vpop.f32.mrb[0].mxu0
  %v863 = vadd.f32 %v720, %v862
  %v864 = vpop.f32.mrb[0].mxu0
  %v865 = vadd.f32 %v722, %v864
  %866 = vmatprep.mubr.f32.mxu0 %v87
  %867 = vmatmul.mubr.f32.gmra.mrb[0].mxu0 %v86
  %v868 = vpop.f32.mrb[0].mxu0
  %v869 = vadd.f32 %v726, %v868
  %v870 = vpop.f32.mrb[0].mxu0
  %v871 = vadd.f32 %v728, %v870
  %872 = vmatprep.mubr.f32.mxu0 %v94
  %873 = vmatmul.mubr.f32.gmra.mrb[0].mxu0 %v93
  %v874 = vpop.f32.mrb[0].mxu0
  %v875 = vadd.f32 %v732, %v874
  %v876 = vpop.f32.mrb[0].mxu0
  %v877 = vadd.f32 %v734, %v876
  %878 = vmatprep.mubr.f32.mxu0 %v101
  %879 = vmatmul.mubr.f32.gmra.mrb[0].mxu0 %v100
  %v880 = vpop.f32.mrb[0].mxu0
  %v881 = vadd.f32 %v738, %v880
  %v882 = vpop.f32.mrb[0].mxu0
  %v883 = vadd.f32 %v740, %v882
  %884 = vdwg.mxu0
  %885 = vmatprep.subr.mxu0 %v362
  %886 = vmatpush1.msra.mxu0 %v361
  %887 = vmatprep.subr.mxu0 %v366
  %888 = vmatpush1.msra.mxu0 %v365
  %889 = vmatprep.subr.mxu0 %v370
  %890 = vmatpush1.msra.mxu0 %v369
  %891 = vmatprep.subr.mxu0 %v374
  %892 = vmatpush1.msra.mxu0 %v373
  %893 = vmatprep.subr.mxu0 %v378
  %894 = vmatpush1.msra.mxu0 %v377
  %895 = vmatprep.subr.mxu0 %v382
  %896 = vmatpush1.msra.mxu0 %v381
  %897 = vmatprep.subr.mxu0 %v386
  %898 = vmatpush1.msra.mxu0 %v385
  %899 = vmatprep.subr.mxu0 %v390
  %900 = vmatpush1.msra.mxu0 %v389
  %901 = vmatprep.subr.mxu0 %v394
  %902 = vmatpush1.msra.mxu0 %v393
  %903 = vmatprep.subr.mxu0 %v398
  %904 = vmatpush1.msra.mxu0 %v397
  %905 = vmatprep.subr.mxu0 %v402
  %906 = vmatpush1.msra.mxu0 %v401
  %907 = vmatprep.subr.mxu0 %v406
  %908 = vmatpush1.msra.mxu0 %v405
  %909 = vmatprep.subr.mxu0 %v410
  %910 = vmatpush1.msra.mxu0 %v409
  %911 = vmatprep.subr.mxu0 %v414
  %912 = vmatpush1.msra.mxu0 %v413
  %913 = vmatprep.subr.mxu0 %v418
  %914 = vmatpush1.msra.mxu0 %v417
  %915 = vmatprep.subr.mxu0 %v422
  %916 = vmatpush1.msra.mxu0 %v421
  %917 = vmatprep.subr.mxu0 %v426
  %918 = vmatpush1.msra.mxu0 %v425
  %919 = vmatprep.subr.mxu0 %v430
  %920 = vmatpush1.msra.mxu0 %v429
  %921 = vmatprep.subr.mxu0 %v434
  %922 = vmatpush1.msra.mxu0 %v433
  %923 = vmatprep.subr.mxu0 %v438
  %924 = vmatpush1.msra.mxu0 %v437
  %925 = vmatprep.subr.mxu0 %v442
  %926 = vmatpush1.msra.mxu0 %v441
  %927 = vmatprep.subr.mxu0 %v446
  %928 = vmatpush1.msra.mxu0 %v445
  %929 = vmatprep.subr.mxu0 %v450
  %930 = vmatpush1.msra.mxu0 %v449
  %931 = vmatprep.subr.mxu0 %v454
  %932 = vmatpush1.msra.mxu0 %v453
  %933 = vmatprep.subr.mxu0 %v458
  %934 = vmatpush1.msra.mxu0 %v457
  %935 = vmatprep.subr.mxu0 %v462
  %936 = vmatpush1.msra.mxu0 %v461
  %937 = vmatprep.subr.mxu0 %v466
  %938 = vmatpush1.msra.mxu0 %v465
  %939 = vmatprep.subr.mxu0 %v470
  %940 = vmatpush1.msra.mxu0 %v469
  %941 = vmatprep.subr.mxu0 %v474
  %942 = vmatpush1.msra.mxu0 %v473
  %943 = vmatprep.subr.mxu0 %v478
  %944 = vmatpush1.msra.mxu0 %v477
  %945 = vmatprep.subr.mxu0 %v482
  %946 = vmatpush1.msra.mxu0 %v481
  %947 = vmatprep.subr.mxu0 %v486
  %948 = vmatpush1.msra.mxu0 %v485
  %949 = vmatprep.mubr.f32.mxu0 %v19
  %950 = vmatmul.mubr.f32.gmra.mrb[0].mxu0 %v18
  %v951 = vpop.f32.mrb[0].mxu0
  %v952 = vadd.f32 %v809, %v951
  %v953 = vpop.f32.mrb[0].mxu0
  %v954 = vadd.f32 %v811, %v953
  %955 = vmatprep.mubr.f32.mxu0 %v26
  %956 = vmatmul.mubr.f32.gmra.mrb[0].mxu0 %v25
  %v957 = vpop.f32.mrb[0].mxu0
  %v958 = vadd.f32 %v815, %v957
  %v959 = vpop.f32.mrb[0].mxu0
  %v960 = vadd.f32 %v817, %v959
  %961 = vmatprep.mubr.f32.mxu0 %v33
  %962 = vmatmul.mubr.f32.gmra.mrb[0].mxu0 %v32
  %v963 = vpop.f32.mrb[0].mxu0
  %v964 = vadd.f32 %v821, %v963
  %v965 = vpop.f32.mrb[0].mxu0
  %v966 = vadd.f32 %v823, %v965
  %967 = vmatprep.mubr.f32.mxu0 %v40
  %968 = vmatmul.mubr.f32.gmra.mrb[0].mxu0 %v39
  %v969 = vpop.f32.mrb[0].mxu0
  %v970 = vadd.f32 %v827, %v969
  %v971 = vpop.f32.mrb[0].mxu0
  %v972 = vadd.f32 %v829, %v971
  %973 = vmatprep.mubr.f32.mxu0 %v47
  %974 = vmatmul.mubr.f32.gmra.mrb[0].mxu0 %v46
  %v975 = vpop.f32.mrb[0].mxu0
  %v976 = vadd.f32 %v833, %v975
  %v977 = vpop.f32.mrb[0].mxu0
  %v978 = vadd.f32 %v835, %v977
  %979 = vmatprep.mubr.f32.mxu0 %v54
  %980 = vmatmul.mubr.f32.gmra.mrb[0].mxu0 %v53
  %v981 = vpop.f32.mrb[0].mxu0
  %v982 = vadd.f32 %v839, %v981
  %v983 = vpop.f32.mrb[0].mxu0
  %v984 = vadd.f32 %v841, %v983
  %985 = vmatprep.mubr.f32.mxu0 %v61
  %986 = vmatmul.mubr.f32.gmra.mrb[0].mxu0 %v60
  %v987 = vpop.f32.mrb[0].mxu0
  %v988 = vadd.f32 %v845, %v987
  %v989 = vpop.f32.mrb[0].mxu0
  %v990 = vadd.f32 %v847, %v989
  %991 = vmatprep.mubr.f32.mxu0 %v68
  %992 = vmatmul.mubr.f32.gmra.mrb[0].mxu0 %v67
  %v993 = vpop.f32.mrb[0].mxu0
  %v994 = vadd.f32 %v851, %v993
  %v995 = vpop.f32.mrb[0].mxu0
  %v996 = vadd.f32 %v853, %v995
  %997 = vmatprep.mubr.f32.mxu0 %v75
  %998 = vmatmul.mubr.f32.gmra.mrb[0].mxu0 %v74
  %v999 = vpop.f32.mrb[0].mxu0
  %v1000 = vadd.f32 %v857, %v999
  %v1001 = vpop.f32.mrb[0].mxu0
  %v1002 = vadd.f32 %v859, %v1001
  %1003 = vmatprep.mubr.f32.mxu0 %v82
  %1004 = vmatmul.mubr.f32.gmra.mrb[0].mxu0 %v81
  %v1005 = vpop.f32.mrb[0].mxu0
  %v1006 = vadd.f32 %v863, %v1005
  %v1007 = vpop.f32.mrb[0].mxu0
  %v1008 = vadd.f32 %v865, %v1007
  %1009 = vmatprep.mubr.f32.mxu0 %v89
  %1010 = vmatmul.mubr.f32.gmra.mrb[0].mxu0 %v88
  %v1011 = vpop.f32.mrb[0].mxu0
  %v1012 = vadd.f32 %v869, %v1011
  %v1013 = vpop.f32.mrb[0].mxu0
  %v1014 = vadd.f32 %v871, %v1013
  %1015 = vmatprep.mubr.f32.mxu0 %v96
  %1016 = vmatmul.mubr.f32.gmra.mrb[0].mxu0 %v95
  %v1017 = vpop.f32.mrb[0].mxu0
  %v1018 = vadd.f32 %v875, %v1017
  %v1019 = vpop.f32.mrb[0].mxu0
  %v1020 = vadd.f32 %v877, %v1019
  %1021 = vmatprep.mubr.f32.mxu0 %v103
  %1022 = vmatmul.mubr.f32.gmra.mrb[0].mxu0 %v102
  %v1023 = vpop.f32.mrb[0].mxu0
  %v1024 = vadd.f32 %v881, %v1023
  %v1025 = vpop.f32.mrb[0].mxu0
  %v1026 = vadd.f32 %v883, %v1025
  %1027 = vdwg.mxu0
  %1028 = vmatprep.subr.mxu0 %v490
  %1029 = vmatpush1.msra.mxu0 %v489
  %1030 = vmatprep.subr.mxu0 %v494
  %1031 = vmatpush1.msra.mxu0 %v493
  %1032 = vmatprep.subr.mxu0 %v498
  %1033 = vmatpush1.msra.mxu0 %v497
  %1034 = vmatprep.subr.mxu0 %v502
  %1035 = vmatpush1.msra.mxu0 %v501
  %1036 = vmatprep.subr.mxu0 %v506
  %1037 = vmatpush1.msra.mxu0 %v505
  %1038 = vmatprep.subr.mxu0 %v510
  %1039 = vmatpush1.msra.mxu0 %v509
  %1040 = vmatprep.subr.mxu0 %v514
  %1041 = vmatpush1.msra.mxu0 %v513
  %1042 = vmatprep.subr.mxu0 %v518
  %1043 = vmatpush1.msra.mxu0 %v517
  %1044 = vmatprep.subr.mxu0 %v522
  %1045 = vmatpush1.msra.mxu0 %v521
  %1046 = vmatprep.subr.mxu0 %v526
  %1047 = vmatpush1.msra.mxu0 %v525
  %1048 = vmatprep.subr.mxu0 %v530
  %1049 = vmatpush1.msra.mxu0 %v529
  %1050 = vmatprep.subr.mxu0 %v534
  %1051 = vmatpush1.msra.mxu0 %v533
  %1052 = vmatprep.subr.mxu0 0.0
  %1053 = vmatpush1.msra.mxu0 0.0
  %1054 = vmatprep.subr.mxu0 0.0
  %1055 = vmatpush1.msra.mxu0 0.0
  %1056 = vmatprep.subr.mxu0 0.0
  %1057 = vmatpush1.msra.mxu0 0.0
  %1058 = vmatprep.subr.mxu0 0.0
  %1059 = vmatpush1.msra.mxu0 0.0
  %1060 = vmatprep.subr.mxu0 0.0
  %1061 = vmatpush1.msra.mxu0 0.0
  %1062 = vmatprep.subr.mxu0 0.0
  %1063 = vmatpush1.msra.mxu0 0.0
  %1064 = vmatprep.subr.mxu0 0.0
  %1065 = vmatpush1.msra.mxu0 0.0
  %1066 = vmatprep.subr.mxu0 0.0
  %1067 = vmatpush1.msra.mxu0 0.0
  %1068 = vmatprep.subr.mxu0 0.0
  %1069 = vmatpush1.msra.mxu0 0.0
  %1070 = vmatprep.subr.mxu0 0.0
  %1071 = vmatpush1.msra.mxu0 0.0
  %1072 = vmatprep.subr.mxu0 0.0
  %1073 = vmatpush1.msra.mxu0 0.0
  %1074 = vmatprep.subr.mxu0 0.0
  %1075 = vmatpush1.msra.mxu0 0.0
  %1076 = vmatprep.subr.mxu0 0.0
  %1077 = vmatpush1.msra.mxu0 0.0
  %1078 = vmatprep.subr.mxu0 0.0
  %1079 = vmatpush1.msra.mxu0 0.0
  %1080 = vmatprep.subr.mxu0 0.0
  %1081 = vmatpush1.msra.mxu0 0.0
  %1082 = vmatprep.subr.mxu0 0.0
  %1083 = vmatpush1.msra.mxu0 0.0
  %1084 = vmatprep.subr.mxu0 0.0
  %1085 = vmatpush1.msra.mxu0 0.0
  %1086 = vmatprep.subr.mxu0 0.0
  %1087 = vmatpush1.msra.mxu0 0.0
  %1088 = vmatprep.subr.mxu0 0.0
  %1089 = vmatpush1.msra.mxu0 0.0
  %1090 = vmatprep.subr.mxu0 0.0
  %1091 = vmatpush1.msra.mxu0 0.0
  %1092 = vmatprep.mubr.f32.mxu0 0.0
  %1093 = vmatmul.mubr.f32.gmra.mrb[0].mxu0 %v561
  %v1094 = vpop.f32.mrb[0].mxu0
  %v1095 = vadd.f32 %v952, %v1094
  %v1096 = vpop.f32.mrb[0].mxu0
  %v1097 = vadd.f32 %v954, %v1096
  %1098 = vmatprep.mubr.f32.mxu0 0.0
  %1099 = vmatmul.mubr.f32.gmra.mrb[0].mxu0 %v564
  %v1100 = vpop.f32.mrb[0].mxu0
  %v1101 = vadd.f32 %v958, %v1100
  %v1102 = vpop.f32.mrb[0].mxu0
  %v1103 = vadd.f32 %v960, %v1102
  %1104 = vmatprep.mubr.f32.mxu0 0.0
  %1105 = vmatmul.mubr.f32.gmra.mrb[0].mxu0 %v567
  %v1106 = vpop.f32.mrb[0].mxu0
  %v1107 = vadd.f32 %v964, %v1106
  %v1108 = vpop.f32.mrb[0].mxu0
  %v1109 = vadd.f32 %v966, %v1108
  %1110 = vmatprep.mubr.f32.mxu0 0.0
  %1111 = vmatmul.mubr.f32.gmra.mrb[0].mxu0 %v570
  %v1112 = vpop.f32.mrb[0].mxu0
  %v1113 = vadd.f32 %v970, %v1112
  %v1114 = vpop.f32.mrb[0].mxu0
  %v1115 = vadd.f32 %v972, %v1114
  %1116 = vmatprep.mubr.f32.mxu0 0.0
  %1117 = vmatmul.mubr.f32.gmra.mrb[0].mxu0 %v573
  %v1118 = vpop.f32.mrb[0].mxu0
  %v1119 = vadd.f32 %v976, %v1118
  %v1120 = vpop.f32.mrb[0].mxu0
  %v1121 = vadd.f32 %v978, %v1120
  %1122 = vmatprep.mubr.f32.mxu0 0.0
  %1123 = vmatmul.mubr.f32.gmra.mrb[0].mxu0 %v576
  %v1124 = vpop.f32.mrb[0].mxu0
  %v1125 = vadd.f32 %v982, %v1124
  %v1126 = vpop.f32.mrb[0].mxu0
  %v1127 = vadd.f32 %v984, %v1126
  %1128 = vmatprep.mubr.f32.mxu0 0.0
  %1129 = vmatmul.mubr.f32.gmra.mrb[0].mxu0 %v579
  %v1130 = vpop.f32.mrb[0].mxu0
  %v1131 = vadd.f32 %v988, %v1130
  %v1132 = vpop.f32.mrb[0].mxu0
  %v1133 = vadd.f32 %v990, %v1132
  %1134 = vmatprep.mubr.f32.mxu0 0.0
  %1135 = vmatmul.mubr.f32.gmra.mrb[0].mxu0 %v582
  %v1136 = vpop.f32.mrb[0].mxu0
  %v1137 = vadd.f32 %v994, %v1136
  %v1138 = vpop.f32.mrb[0].mxu0
  %v1139 = vadd.f32 %v996, %v1138
  %1140 = vmatprep.mubr.f32.mxu0 0.0
  %1141 = vmatmul.mubr.f32.gmra.mrb[0].mxu0 %v585
  %v1142 = vpop.f32.mrb[0].mxu0
  %v1143 = vadd.f32 %v1000, %v1142
  %v1144 = vpop.f32.mrb[0].mxu0
  %v1145 = vadd.f32 %v1002, %v1144
  %1146 = vmatprep.mubr.f32.mxu0 0.0
  %1147 = vmatmul.mubr.f32.gmra.mrb[0].mxu0 %v588
  %v1148 = vpop.f32.mrb[0].mxu0
  %v1149 = vadd.f32 %v1006, %v1148
  %v1150 = vpop.f32.mrb[0].mxu0
  %v1151 = vadd.f32 %v1008, %v1150
  %1152 = vmatprep.mubr.f32.mxu0 0.0
  %1153 = vmatmul.mubr.f32.gmra.mrb[0].mxu0 %v591
  %v1154 = vpop.f32.mrb[0].mxu0
  %v1155 = vadd.f32 %v1012, %v1154
  %v1156 = vpop.f32.mrb[0].mxu0
  %v1157 = vadd.f32 %v1014, %v1156
  %1158 = vmatprep.mubr.f32.mxu0 0.0
  %1159 = vmatmul.mubr.f32.gmra.mrb[0].mxu0 %v594
  %v1160 = vpop.f32.mrb[0].mxu0
  %v1161 = vadd.f32 %v1018, %v1160
  %v1162 = vpop.f32.mrb[0].mxu0
  %v1163 = vadd.f32 %v1020, %v1162
  %1164 = vmatprep.mubr.f32.mxu0 0.0
  %1165 = vmatmul.mubr.f32.gmra.mrb[0].mxu0 %v597
  %v1166 = vpop.f32.mrb[0].mxu0
  %v1167 = vadd.f32 %v1024, %v1166
  %v1168 = vpop.f32.mrb[0].mxu0
  %v1169 = vadd.f32 %v1026, %v1168
  %1170 = vdwg.mxu0
  %1171 = vmatprep.subr.mxu0 %v108
  %1172 = vmatpush1.msra.mxu0 %v107
  %1173 = vmatprep.subr.mxu0 %v112
  %1174 = vmatpush1.msra.mxu0 %v111
  %1175 = vmatprep.subr.mxu0 %v116
  %1176 = vmatpush1.msra.mxu0 %v115
  %1177 = vmatprep.subr.mxu0 %v120
  %1178 = vmatpush1.msra.mxu0 %v119
  %1179 = vmatprep.subr.mxu0 %v124
  %1180 = vmatpush1.msra.mxu0 %v123
  %1181 = vmatprep.subr.mxu0 %v128
  %1182 = vmatpush1.msra.mxu0 %v127
  %1183 = vmatprep.subr.mxu0 %v132
  %1184 = vmatpush1.msra.mxu0 %v131
  %1185 = vmatprep.subr.mxu0 %v136
  %1186 = vmatpush1.msra.mxu0 %v135
  %1187 = vmatprep.subr.mxu0 %v140
  %1188 = vmatpush1.msra.mxu0 %v139
  %1189 = vmatprep.subr.mxu0 %v144
  %1190 = vmatpush1.msra.mxu0 %v143
  %1191 = vmatprep.subr.mxu0 %v148
  %1192 = vmatpush1.msra.mxu0 %v147
  %1193 = vmatprep.subr.mxu0 %v152
  %1194 = vmatpush1.msra.mxu0 %v151
  %1195 = vmatprep.subr.mxu0 %v156
  %1196 = vmatpush1.msra.mxu0 %v155
  %1197 = vmatprep.subr.mxu0 %v160
  %1198 = vmatpush1.msra.mxu0 %v159
  %1199 = vmatprep.subr.mxu0 %v164
  %1200 = vmatpush1.msra.mxu0 %v163
  %1201 = vmatprep.subr.mxu0 %v168
  %1202 = vmatpush1.msra.mxu0 %v167
  %1203 = vmatprep.subr.mxu0 %v172
  %1204 = vmatpush1.msra.mxu0 %v171
  %1205 = vmatprep.subr.mxu0 %v176
  %1206 = vmatpush1.msra.mxu0 %v175
  %1207 = vmatprep.subr.mxu0 %v180
  %1208 = vmatpush1.msra.mxu0 %v179
  %1209 = vmatprep.subr.mxu0 %v184
  %1210 = vmatpush1.msra.mxu0 %v183
  %1211 = vmatprep.subr.mxu0 %v188
  %1212 = vmatpush1.msra.mxu0 %v187
  %1213 = vmatprep.subr.mxu0 %v192
  %1214 = vmatpush1.msra.mxu0 %v191
  %1215 = vmatprep.subr.mxu0 %v196
  %1216 = vmatpush1.msra.mxu0 %v195
  %1217 = vmatprep.subr.mxu0 %v200
  %1218 = vmatpush1.msra.mxu0 %v199
  %1219 = vmatprep.subr.mxu0 %v204
  %1220 = vmatpush1.msra.mxu0 %v203
  %1221 = vmatprep.subr.mxu0 %v208
  %1222 = vmatpush1.msra.mxu0 %v207
  %1223 = vmatprep.subr.mxu0 %v212
  %1224 = vmatpush1.msra.mxu0 %v211
  %1225 = vmatprep.subr.mxu0 %v216
  %1226 = vmatpush1.msra.mxu0 %v215
  %1227 = vmatprep.subr.mxu0 %v220
  %1228 = vmatpush1.msra.mxu0 %v219
  %1229 = vmatprep.subr.mxu0 %v224
  %1230 = vmatpush1.msra.mxu0 %v223
  %1231 = vmatprep.subr.mxu0 %v228
  %1232 = vmatpush1.msra.mxu0 %v227
  %1233 = vmatprep.subr.mxu0 %v232
  %1234 = vmatpush1.msra.mxu0 %v231
  %1235 = vmatprep.mubr.f32.mxu0 %v15
  %1236 = vmatmul.mubr.f32.gmra.mrb[0].mxu0 %v14
  %v1237 = vpop.f32.mrb[0].mxu0
  %v1238 = vadd.f32 %v550, %v1237
  %v1239 = vpop.f32.mrb[0].mxu0
  %v1240 = vadd.f32 %v554, %v1239
  %1241 = vmatprep.mubr.f32.mxu0 %v22
  %1242 = vmatmul.mubr.f32.gmra.mrb[0].mxu0 %v21
  %v1243 = vpop.f32.mrb[0].mxu0
  %v1244 = vadd.f32 %v550, %v1243
  %v1245 = vpop.f32.mrb[0].mxu0
  %v1246 = vadd.f32 %v554, %v1245
  %1247 = vmatprep.mubr.f32.mxu0 %v29
  %1248 = vmatmul.mubr.f32.gmra.mrb[0].mxu0 %v28
  %v1249 = vpop.f32.mrb[0].mxu0
  %v1250 = vadd.f32 %v550, %v1249
  %v1251 = vpop.f32.mrb[0].mxu0
  %v1252 = vadd.f32 %v554, %v1251
  %1253 = vmatprep.mubr.f32.mxu0 %v36
  %1254 = vmatmul.mubr.f32.gmra.mrb[0].mxu0 %v35
  %v1255 = vpop.f32.mrb[0].mxu0
  %v1256 = vadd.f32 %v550, %v1255
  %v1257 = vpop.f32.mrb[0].mxu0
  %v1258 = vadd.f32 %v554, %v1257
  %1259 = vmatprep.mubr.f32.mxu0 %v43
  %1260 = vmatmul.mubr.f32.gmra.mrb[0].mxu0 %v42
  %v1261 = vpop.f32.mrb[0].mxu0
  %v1262 = vadd.f32 %v550, %v1261
  %v1263 = vpop.f32.mrb[0].mxu0
  %v1264 = vadd.f32 %v554, %v1263
  %1265 = vmatprep.mubr.f32.mxu0 %v50
  %1266 = vmatmul.mubr.f32.gmra.mrb[0].mxu0 %v49
  %v1267 = vpop.f32.mrb[0].mxu0
  %v1268 = vadd.f32 %v550, %v1267
  %v1269 = vpop.f32.mrb[0].mxu0
  %v1270 = vadd.f32 %v554, %v1269
  %1271 = vmatprep.mubr.f32.mxu0 %v57
  %1272 = vmatmul.mubr.f32.gmra.mrb[0].mxu0 %v56
  %v1273 = vpop.f32.mrb[0].mxu0
  %v1274 = vadd.f32 %v550, %v1273
  %v1275 = vpop.f32.mrb[0].mxu0
  %v1276 = vadd.f32 %v554, %v1275
  %1277 = vmatprep.mubr.f32.mxu0 %v64
  %1278 = vmatmul.mubr.f32.gmra.mrb[0].mxu0 %v63
  %v1279 = vpop.f32.mrb[0].mxu0
  %v1280 = vadd.f32 %v550, %v1279
  %v1281 = vpop.f32.mrb[0].mxu0
  %v1282 = vadd.f32 %v554, %v1281
  %1283 = vmatprep.mubr.f32.mxu0 %v71
  %1284 = vmatmul.mubr.f32.gmra.mrb[0].mxu0 %v70
  %v1285 = vpop.f32.mrb[0].mxu0
  %v1286 = vadd.f32 %v550, %v1285
  %v1287 = vpop.f32.mrb[0].mxu0
  %v1288 = vadd.f32 %v554, %v1287
  %1289 = vmatprep.mubr.f32.mxu0 %v78
  %1290 = vmatmul.mubr.f32.gmra.mrb[0].mxu0 %v77
  %v1291 = vpop.f32.mrb[0].mxu0
  %v1292 = vadd.f32 %v550, %v1291
  %v1293 = vpop.f32.mrb[0].mxu0
  %v1294 = vadd.f32 %v554, %v1293
  %1295 = vmatprep.mubr.f32.mxu0 %v85
  %1296 = vmatmul.mubr.f32.gmra.mrb[0].mxu0 %v84
  %v1297 = vpop.f32.mrb[0].mxu0
  %v1298 = vadd.f32 %v550, %v1297
  %v1299 = vpop.f32.mrb[0].mxu0
  %v1300 = vadd.f32 %v554, %v1299
  %1301 = vmatprep.mubr.f32.mxu0 %v92
  %1302 = vmatmul.mubr.f32.gmra.mrb[0].mxu0 %v91
  %v1303 = vpop.f32.mrb[0].mxu0
  %v1304 = vadd.f32 %v550, %v1303
  %v1305 = vpop.f32.mrb[0].mxu0
  %v1306 = vadd.f32 %v554, %v1305
  %1307 = vmatprep.mubr.f32.mxu0 %v99
  %1308 = vmatmul.mubr.f32.gmra.mrb[0].mxu0 %v98
  %v1309 = vpop.f32.mrb[0].mxu0
  %v1310 = vadd.f32 %v550, %v1309
  %v1311 = vpop.f32.mrb[0].mxu0
  %v1312 = vadd.f32 %v554, %v1311
  %1313 = vdwg.mxu0
  %1314 = vmatprep.subr.mxu0 %v236
  %1315 = vmatpush1.msra.mxu0 %v235
  %1316 = vmatprep.subr.mxu0 %v240
  %1317 = vmatpush1.msra.mxu0 %v239
  %1318 = vmatprep.subr.mxu0 %v244
  %1319 = vmatpush1.msra.mxu0 %v243
  %1320 = vmatprep.subr.mxu0 %v248
  %1321 = vmatpush1.msra.mxu0 %v247
  %1322 = vmatprep.subr.mxu0 %v252
  %1323 = vmatpush1.msra.mxu0 %v251
  %1324 = vmatprep.subr.mxu0 %v256
  %1325 = vmatpush1.msra.mxu0 %v255
  %1326 = vmatprep.subr.mxu0 %v260
  %1327 = vmatpush1.msra.mxu0 %v259
  %1328 = vmatprep.subr.mxu0 %v264
  %1329 = vmatpush1.msra.mxu0 %v263
  %1330 = vmatprep.subr.mxu0 %v268
  %1331 = vmatpush1.msra.mxu0 %v267
  %1332 = vmatprep.subr.mxu0 %v272
  %1333 = vmatpush1.msra.mxu0 %v271
  %1334 = vmatprep.subr.mxu0 %v276
  %1335 = vmatpush1.msra.mxu0 %v275
  %1336 = vmatprep.subr.mxu0 %v280
  %1337 = vmatpush1.msra.mxu0 %v279
  %1338 = vmatprep.subr.mxu0 %v284
  %1339 = vmatpush1.msra.mxu0 %v283
  %1340 = vmatprep.subr.mxu0 %v288
  %1341 = vmatpush1.msra.mxu0 %v287
  %1342 = vmatprep.subr.mxu0 %v292
  %1343 = vmatpush1.msra.mxu0 %v291
  %1344 = vmatprep.subr.mxu0 %v296
  %1345 = vmatpush1.msra.mxu0 %v295
  %1346 = vmatprep.subr.mxu0 %v300
  %1347 = vmatpush1.msra.mxu0 %v299
  %1348 = vmatprep.subr.mxu0 %v304
  %1349 = vmatpush1.msra.mxu0 %v303
  %1350 = vmatprep.subr.mxu0 %v308
  %1351 = vmatpush1.msra.mxu0 %v307
  %1352 = vmatprep.subr.mxu0 %v312
  %1353 = vmatpush1.msra.mxu0 %v311
  %1354 = vmatprep.subr.mxu0 %v316
  %1355 = vmatpush1.msra.mxu0 %v315
  %1356 = vmatprep.subr.mxu0 %v320
  %1357 = vmatpush1.msra.mxu0 %v319
  %1358 = vmatprep.subr.mxu0 %v324
  %1359 = vmatpush1.msra.mxu0 %v323
  %1360 = vmatprep.subr.mxu0 %v328
  %1361 = vmatpush1.msra.mxu0 %v327
  %1362 = vmatprep.subr.mxu0 %v332
  %1363 = vmatpush1.msra.mxu0 %v331
  %1364 = vmatprep.subr.mxu0 %v336
  %1365 = vmatpush1.msra.mxu0 %v335
  %1366 = vmatprep.subr.mxu0 %v340
  %1367 = vmatpush1.msra.mxu0 %v339
  %1368 = vmatprep.subr.mxu0 %v344
  %1369 = vmatpush1.msra.mxu0 %v343
  %1370 = vmatprep.subr.mxu0 %v348
  %1371 = vmatpush1.msra.mxu0 %v347
  %1372 = vmatprep.subr.mxu0 %v352
  %1373 = vmatpush1.msra.mxu0 %v351
  %1374 = vmatprep.subr.mxu0 %v356
  %1375 = vmatpush1.msra.mxu0 %v355
  %1376 = vmatprep.subr.mxu0 %v360
  %1377 = vmatpush1.msra.mxu0 %v359
  %1378 = vmatprep.mubr.f32.mxu0 %v17
  %1379 = vmatmul.mubr.f32.gmra.mrb[0].mxu0 %v16
  %v1380 = vpop.f32.mrb[0].mxu0
  %v1381 = vadd.f32 %v1238, %v1380
  %v1382 = vpop.f32.mrb[0].mxu0
  %v1383 = vadd.f32 %v1240, %v1382
  %1384 = vmatprep.mubr.f32.mxu0 %v24
  %1385 = vmatmul.mubr.f32.gmra.mrb[0].mxu0 %v23
  %v1386 = vpop.f32.mrb[0].mxu0
  %v1387 = vadd.f32 %v1244, %v1386
  %v1388 = vpop.f32.mrb[0].mxu0
  %v1389 = vadd.f32 %v1246, %v1388
  %1390 = vmatprep.mubr.f32.mxu0 %v31
  %1391 = vmatmul.mubr.f32.gmra.mrb[0].mxu0 %v30
  %v1392 = vpop.f32.mrb[0].mxu0
  %v1393 = vadd.f32 %v1250, %v1392
  %v1394 = vpop.f32.mrb[0].mxu0
  %v1395 = vadd.f32 %v1252, %v1394
  %1396 = vmatprep.mubr.f32.mxu0 %v38
  %1397 = vmatmul.mubr.f32.gmra.mrb[0].mxu0 %v37
  %v1398 = vpop.f32.mrb[0].mxu0
  %v1399 = vadd.f32 %v1256, %v1398
  %v1400 = vpop.f32.mrb[0].mxu0
  %v1401 = vadd.f32 %v1258, %v1400
  %1402 = vmatprep.mubr.f32.mxu0 %v45
  %1403 = vmatmul.mubr.f32.gmra.mrb[0].mxu0 %v44
  %v1404 = vpop.f32.mrb[0].mxu0
  %v1405 = vadd.f32 %v1262, %v1404
  %v1406 = vpop.f32.mrb[0].mxu0
  %v1407 = vadd.f32 %v1264, %v1406
  %1408 = vmatprep.mubr.f32.mxu0 %v52
  %1409 = vmatmul.mubr.f32.gmra.mrb[0].mxu0 %v51
  %v1410 = vpop.f32.mrb[0].mxu0
  %v1411 = vadd.f32 %v1268, %v1410
  %v1412 = vpop.f32.mrb[0].mxu0
  %v1413 = vadd.f32 %v1270, %v1412
  %1414 = vmatprep.mubr.f32.mxu0 %v59
  %1415 = vmatmul.mubr.f32.gmra.mrb[0].mxu0 %v58
  %v1416 = vpop.f32.mrb[0].mxu0
  %v1417 = vadd.f32 %v1274, %v1416
  %v1418 = vpop.f32.mrb[0].mxu0
  %v1419 = vadd.f32 %v1276, %v1418
  %1420 = vmatprep.mubr.f32.mxu0 %v66
  %1421 = vmatmul.mubr.f32.gmra.mrb[0].mxu0 %v65
  %v1422 = vpop.f32.mrb[0].mxu0
  %v1423 = vadd.f32 %v1280, %v1422
  %v1424 = vpop.f32.mrb[0].mxu0
  %v1425 = vadd.f32 %v1282, %v1424
  %1426 = vmatprep.mubr.f32.mxu0 %v73
  %1427 = vmatmul.mubr.f32.gmra.mrb[0].mxu0 %v72
  %v1428 = vpop.f32.mrb[0].mxu0
  %v1429 = vadd.f32 %v1286, %v1428
  %v1430 = vpop.f32.mrb[0].mxu0
  %v1431 = vadd.f32 %v1288, %v1430
  %1432 = vmatprep.mubr.f32.mxu0 %v80
  %1433 = vmatmul.mubr.f32.gmra.mrb[0].mxu0 %v79
  %v1434 = vpop.f32.mrb[0].mxu0
  %v1435 = vadd.f32 %v1292, %v1434
  %v1436 = vpop.f32.mrb[0].mxu0
  %v1437 = vadd.f32 %v1294, %v1436
  %1438 = vmatprep.mubr.f32.mxu0 %v87
  %1439 = vmatmul.mubr.f32.gmra.mrb[0].mxu0 %v86
  %v1440 = vpop.f32.mrb[0].mxu0
  %v1441 = vadd.f32 %v1298, %v1440
  %v1442 = vpop.f32.mrb[0].mxu0
  %v1443 = vadd.f32 %v1300, %v1442
  %1444 = vmatprep.mubr.f32.mxu0 %v94
  %1445 = vmatmul.mubr.f32.gmra.mrb[0].mxu0 %v93
  %v1446 = vpop.f32.mrb[0].mxu0
  %v1447 = vadd.f32 %v1304, %v1446
  %v1448 = vpop.f32.mrb[0].mxu0
  %v1449 = vadd.f32 %v1306, %v1448
  %1450 = vmatprep.mubr.f32.mxu0 %v101
  %1451 = vmatmul.mubr.f32.gmra.mrb[0].mxu0 %v100
  %v1452 = vpop.f32.mrb[0].mxu0
  %v1453 = vadd.f32 %v1310, %v1452
  %v1454 = vpop.f32.mrb[0].mxu0
  %v1455 = vadd.f32 %v1312, %v1454
  %1456 = vdwg.mxu0
  %1457 = vmatprep.subr.mxu0 %v364
  %1458 = vmatpush1.msra.mxu0 %v363
  %1459 = vmatprep.subr.mxu0 %v368
  %1460 = vmatpush1.msra.mxu0 %v367
  %1461 = vmatprep.subr.mxu0 %v372
  %1462 = vmatpush1.msra.mxu0 %v371
  %1463 = vmatprep.subr.mxu0 %v376
  %1464 = vmatpush1.msra.mxu0 %v375
  %1465 = vmatprep.subr.mxu0 %v380
  %1466 = vmatpush1.msra.mxu0 %v379
  %1467 = vmatprep.subr.mxu0 %v384
  %1468 = vmatpush1.msra.mxu0 %v383
  %1469 = vmatprep.subr.mxu0 %v388
  %1470 = vmatpush1.msra.mxu0 %v387
  %1471 = vmatprep.subr.mxu0 %v392
  %1472 = vmatpush1.msra.mxu0 %v391
  %1473 = vmatprep.subr.mxu0 %v396
  %1474 = vmatpush1.msra.mxu0 %v395
  %1475 = vmatprep.subr.mxu0 %v400
  %1476 = vmatpush1.msra.mxu0 %v399
  %1477 = vmatprep.subr.mxu0 %v404
  %1478 = vmatpush1.msra.mxu0 %v403
  %1479 = vmatprep.subr.mxu0 %v408
  %1480 = vmatpush1.msra.mxu0 %v407
  %1481 = vmatprep.subr.mxu0 %v412
  %1482 = vmatpush1.msra.mxu0 %v411
  %1483 = vmatprep.subr.mxu0 %v416
  %1484 = vmatpush1.msra.mxu0 %v415
  %1485 = vmatprep.subr.mxu0 %v420
  %1486 = vmatpush1.msra.mxu0 %v419
  %1487 = vmatprep.subr.mxu0 %v424
  %1488 = vmatpush1.msra.mxu0 %v423
  %1489 = vmatprep.subr.mxu0 %v428
  %1490 = vmatpush1.msra.mxu0 %v427
  %1491 = vmatprep.subr.mxu0 %v432
  %1492 = vmatpush1.msra.mxu0 %v431
  %1493 = vmatprep.subr.mxu0 %v436
  %1494 = vmatpush1.msra.mxu0 %v435
  %1495 = vmatprep.subr.mxu0 %v440
  %1496 = vmatpush1.msra.mxu0 %v439
  %1497 = vmatprep.subr.mxu0 %v444
  %1498 = vmatpush1.msra.mxu0 %v443
  %1499 = vmatprep.subr.mxu0 %v448
  %1500 = vmatpush1.msra.mxu0 %v447
  %1501 = vmatprep.subr.mxu0 %v452
  %1502 = vmatpush1.msra.mxu0 %v451
  %1503 = vmatprep.subr.mxu0 %v456
  %1504 = vmatpush1.msra.mxu0 %v455
  %1505 = vmatprep.subr.mxu0 %v460
  %1506 = vmatpush1.msra.mxu0 %v459
  %1507 = vmatprep.subr.mxu0 %v464
  %1508 = vmatpush1.msra.mxu0 %v463
  %1509 = vmatprep.subr.mxu0 %v468
  %1510 = vmatpush1.msra.mxu0 %v467
  %1511 = vmatprep.subr.mxu0 %v472
  %1512 = vmatpush1.msra.mxu0 %v471
  %1513 = vmatprep.subr.mxu0 %v476
  %1514 = vmatpush1.msra.mxu0 %v475
  %1515 = vmatprep.subr.mxu0 %v480
  %1516 = vmatpush1.msra.mxu0 %v479
  %1517 = vmatprep.subr.mxu0 %v484
  %1518 = vmatpush1.msra.mxu0 %v483
  %1519 = vmatprep.subr.mxu0 %v488
  %1520 = vmatpush1.msra.mxu0 %v487
  %1521 = vmatprep.mubr.f32.mxu0 %v19
  %1522 = vmatmul.mubr.f32.gmra.mrb[0].mxu0 %v18
  %v1523 = vpop.f32.mrb[0].mxu0
  %v1524 = vadd.f32 %v1381, %v1523
  %v1525 = vpop.f32.mrb[0].mxu0
  %v1526 = vadd.f32 %v1383, %v1525
  %1527 = vmatprep.mubr.f32.mxu0 %v26
  %1528 = vmatmul.mubr.f32.gmra.mrb[0].mxu0 %v25
  %v1529 = vpop.f32.mrb[0].mxu0
  %v1530 = vadd.f32 %v1387, %v1529
  %v1531 = vpop.f32.mrb[0].mxu0
  %v1532 = vadd.f32 %v1389, %v1531
  %1533 = vmatprep.mubr.f32.mxu0 %v33
  %1534 = vmatmul.mubr.f32.gmra.mrb[0].mxu0 %v32
  %v1535 = vpop.f32.mrb[0].mxu0
  %v1536 = vadd.f32 %v1393, %v1535
  %v1537 = vpop.f32.mrb[0].mxu0
  %v1538 = vadd.f32 %v1395, %v1537
  %1539 = vmatprep.mubr.f32.mxu0 %v40
  %1540 = vmatmul.mubr.f32.gmra.mrb[0].mxu0 %v39
  %v1541 = vpop.f32.mrb[0].mxu0
  %v1542 = vadd.f32 %v1399, %v1541
  %v1543 = vpop.f32.mrb[0].mxu0
  %v1544 = vadd.f32 %v1401, %v1543
  %1545 = vmatprep.mubr.f32.mxu0 %v47
  %1546 = vmatmul.mubr.f32.gmra.mrb[0].mxu0 %v46
  %v1547 = vpop.f32.mrb[0].mxu0
  %v1548 = vadd.f32 %v1405, %v1547
  %v1549 = vpop.f32.mrb[0].mxu0
  %v1550 = vadd.f32 %v1407, %v1549
  %1551 = vmatprep.mubr.f32.mxu0 %v54
  %1552 = vmatmul.mubr.f32.gmra.mrb[0].mxu0 %v53
  %v1553 = vpop.f32.mrb[0].mxu0
  %v1554 = vadd.f32 %v1411, %v1553
  %v1555 = vpop.f32.mrb[0].mxu0
  %v1556 = vadd.f32 %v1413, %v1555
  %1557 = vmatprep.mubr.f32.mxu0 %v61
  %1558 = vmatmul.mubr.f32.gmra.mrb[0].mxu0 %v60
  %v1559 = vpop.f32.mrb[0].mxu0
  %v1560 = vadd.f32 %v1417, %v1559
  %v1561 = vpop.f32.mrb[0].mxu0
  %v1562 = vadd.f32 %v1419, %v1561
  %1563 = vmatprep.mubr.f32.mxu0 %v68
  %1564 = vmatmul.mubr.f32.gmra.mrb[0].mxu0 %v67
  %v1565 = vpop.f32.mrb[0].mxu0
  %v1566 = vadd.f32 %v1423, %v1565
  %v1567 = vpop.f32.mrb[0].mxu0
  %v1568 = vadd.f32 %v1425, %v1567
  %1569 = vmatprep.mubr.f32.mxu0 %v75
  %1570 = vmatmul.mubr.f32.gmra.mrb[0].mxu0 %v74
  %v1571 = vpop.f32.mrb[0].mxu0
  %v1572 = vadd.f32 %v1429, %v1571
  %v1573 = vpop.f32.mrb[0].mxu0
  %v1574 = vadd.f32 %v1431, %v1573
  %1575 = vmatprep.mubr.f32.mxu0 %v82
  %1576 = vmatmul.mubr.f32.gmra.mrb[0].mxu0 %v81
  %v1577 = vpop.f32.mrb[0].mxu0
  %v1578 = vadd.f32 %v1435, %v1577
  %v1579 = vpop.f32.mrb[0].mxu0
  %v1580 = vadd.f32 %v1437, %v1579
  %1581 = vmatprep.mubr.f32.mxu0 %v89
  %1582 = vmatmul.mubr.f32.gmra.mrb[0].mxu0 %v88
  %v1583 = vpop.f32.mrb[0].mxu0
  %v1584 = vadd.f32 %v1441, %v1583
  %v1585 = vpop.f32.mrb[0].mxu0
  %v1586 = vadd.f32 %v1443, %v1585
  %1587 = vmatprep.mubr.f32.mxu0 %v96
  %1588 = vmatmul.mubr.f32.gmra.mrb[0].mxu0 %v95
  %v1589 = vpop.f32.mrb[0].mxu0
  %v1590 = vadd.f32 %v1447, %v1589
  %v1591 = vpop.f32.mrb[0].mxu0
  %v1592 = vadd.f32 %v1449, %v1591
  %1593 = vmatprep.mubr.f32.mxu0 %v103
  %1594 = vmatmul.mubr.f32.gmra.mrb[0].mxu0 %v102
  %v1595 = vpop.f32.mrb[0].mxu0
  %v1596 = vadd.f32 %v1453, %v1595
  %v1597 = vpop.f32.mrb[0].mxu0
  %v1598 = vadd.f32 %v1455, %v1597
  %1599 = vdwg.mxu0
  %1600 = vmatprep.subr.mxu0 %v492
  %1601 = vmatpush1.msra.mxu0 %v491
  %1602 = vmatprep.subr.mxu0 %v496
  %1603 = vmatpush1.msra.mxu0 %v495
  %1604 = vmatprep.subr.mxu0 %v500
  %1605 = vmatpush1.msra.mxu0 %v499
  %1606 = vmatprep.subr.mxu0 %v504
  %1607 = vmatpush1.msra.mxu0 %v503
  %1608 = vmatprep.subr.mxu0 %v508
  %1609 = vmatpush1.msra.mxu0 %v507
  %1610 = vmatprep.subr.mxu0 %v512
  %1611 = vmatpush1.msra.mxu0 %v511
  %1612 = vmatprep.subr.mxu0 %v516
  %1613 = vmatpush1.msra.mxu0 %v515
  %1614 = vmatprep.subr.mxu0 %v520
  %1615 = vmatpush1.msra.mxu0 %v519
  %1616 = vmatprep.subr.mxu0 %v524
  %1617 = vmatpush1.msra.mxu0 %v523
  %1618 = vmatprep.subr.mxu0 %v528
  %1619 = vmatpush1.msra.mxu0 %v527
  %1620 = vmatprep.subr.mxu0 %v532
  %1621 = vmatpush1.msra.mxu0 %v531
  %1622 = vmatprep.subr.mxu0 %v536
  %1623 = vmatpush1.msra.mxu0 %v535
  %1624 = vmatprep.subr.mxu0 0.0
  %1625 = vmatpush1.msra.mxu0 0.0
  %1626 = vmatprep.subr.mxu0 0.0
  %1627 = vmatpush1.msra.mxu0 0.0
  %1628 = vmatprep.subr.mxu0 0.0
  %1629 = vmatpush1.msra.mxu0 0.0
  %1630 = vmatprep.subr.mxu0 0.0
  %1631 = vmatpush1.msra.mxu0 0.0
  %1632 = vmatprep.subr.mxu0 0.0
  %1633 = vmatpush1.msra.mxu0 0.0
  %1634 = vmatprep.subr.mxu0 0.0
  %1635 = vmatpush1.msra.mxu0 0.0
  %1636 = vmatprep.subr.mxu0 0.0
  %1637 = vmatpush1.msra.mxu0 0.0
  %1638 = vmatprep.subr.mxu0 0.0
  %1639 = vmatpush1.msra.mxu0 0.0
  %1640 = vmatprep.subr.mxu0 0.0
  %1641 = vmatpush1.msra.mxu0 0.0
  %1642 = vmatprep.subr.mxu0 0.0
  %1643 = vmatpush1.msra.mxu0 0.0
  %1644 = vmatprep.subr.mxu0 0.0
  %1645 = vmatpush1.msra.mxu0 0.0
  %1646 = vmatprep.subr.mxu0 0.0
  %1647 = vmatpush1.msra.mxu0 0.0
  %1648 = vmatprep.subr.mxu0 0.0
  %1649 = vmatpush1.msra.mxu0 0.0
  %1650 = vmatprep.subr.mxu0 0.0
  %1651 = vmatpush1.msra.mxu0 0.0
  %1652 = vmatprep.subr.mxu0 0.0
  %1653 = vmatpush1.msra.mxu0 0.0
  %1654 = vmatprep.subr.mxu0 0.0
  %1655 = vmatpush1.msra.mxu0 0.0
  %1656 = vmatprep.subr.mxu0 0.0
  %1657 = vmatpush1.msra.mxu0 0.0
  %1658 = vmatprep.subr.mxu0 0.0
  %1659 = vmatpush1.msra.mxu0 0.0
  %1660 = vmatprep.subr.mxu0 0.0
  %1661 = vmatpush1.msra.mxu0 0.0
  %1662 = vmatprep.subr.mxu0 0.0
  %1663 = vmatpush1.msra.mxu0 0.0
  %1664 = vmatprep.mubr.f32.mxu0 0.0
  %1665 = vmatmul.mubr.f32.gmra.mrb[0].mxu0 %v561
  %v1666 = vpop.f32.mrb[0].mxu0
  %v1667 = vadd.f32 %v1524, %v1666
  %v1668 = vpop.f32.mrb[0].mxu0
  %v1669 = vadd.f32 %v1526, %v1668
  %1670 = vmatprep.mubr.f32.mxu0 0.0
  %1671 = vmatmul.mubr.f32.gmra.mrb[0].mxu0 %v564
  %v1672 = vpop.f32.mrb[0].mxu0
  %v1673 = vadd.f32 %v1530, %v1672
  %v1674 = vpop.f32.mrb[0].mxu0
  %v1675 = vadd.f32 %v1532, %v1674
  %1676 = vmatprep.mubr.f32.mxu0 0.0
  %1677 = vmatmul.mubr.f32.gmra.mrb[0].mxu0 %v567
  %v1678 = vpop.f32.mrb[0].mxu0
  %v1679 = vadd.f32 %v1536, %v1678
  %v1680 = vpop.f32.mrb[0].mxu0
  %v1681 = vadd.f32 %v1538, %v1680
  %1682 = vmatprep.mubr.f32.mxu0 0.0
  %1683 = vmatmul.mubr.f32.gmra.mrb[0].mxu0 %v570
  %v1684 = vpop.f32.mrb[0].mxu0
  %v1685 = vadd.f32 %v1542, %v1684
  %v1686 = vpop.f32.mrb[0].mxu0
  %v1687 = vadd.f32 %v1544, %v1686
  %1688 = vmatprep.mubr.f32.mxu0 0.0
  %1689 = vmatmul.mubr.f32.gmra.mrb[0].mxu0 %v573
  %v1690 = vpop.f32.mrb[0].mxu0
  %v1691 = vadd.f32 %v1548, %v1690
  %v1692 = vpop.f32.mrb[0].mxu0
  %v1693 = vadd.f32 %v1550, %v1692
  %1694 = vmatprep.mubr.f32.mxu0 0.0
  %1695 = vmatmul.mubr.f32.gmra.mrb[0].mxu0 %v576
  %v1696 = vpop.f32.mrb[0].mxu0
  %v1697 = vadd.f32 %v1554, %v1696
  %v1698 = vpop.f32.mrb[0].mxu0
  %v1699 = vadd.f32 %v1556, %v1698
  %1700 = vmatprep.mubr.f32.mxu0 0.0
  %1701 = vmatmul.mubr.f32.gmra.mrb[0].mxu0 %v579
  %v1702 = vpop.f32.mrb[0].mxu0
  %v1703 = vadd.f32 %v1560, %v1702
  %v1704 = vpop.f32.mrb[0].mxu0
  %v1705 = vadd.f32 %v1562, %v1704
  %1706 = vmatprep.mubr.f32.mxu0 0.0
  %1707 = vmatmul.mubr.f32.gmra.mrb[0].mxu0 %v582
  %v1708 = vpop.f32.mrb[0].mxu0
  %v1709 = vadd.f32 %v1566, %v1708
  %v1710 = vpop.f32.mrb[0].mxu0
  %v1711 = vadd.f32 %v1568, %v1710
  %1712 = vmatprep.mubr.f32.mxu0 0.0
  %1713 = vmatmul.mubr.f32.gmra.mrb[0].mxu0 %v585
  %v1714 = vpop.f32.mrb[0].mxu0
  %v1715 = vadd.f32 %v1572, %v1714
  %v1716 = vpop.f32.mrb[0].mxu0
  %v1717 = vadd.f32 %v1574, %v1716
  %1718 = vmatprep.mubr.f32.mxu0 0.0
  %1719 = vmatmul.mubr.f32.gmra.mrb[0].mxu0 %v588
  %v1720 = vpop.f32.mrb[0].mxu0
  %v1721 = vadd.f32 %v1578, %v1720
  %v1722 = vpop.f32.mrb[0].mxu0
  %v1723 = vadd.f32 %v1580, %v1722
  %1724 = vmatprep.mubr.f32.mxu0 0.0
  %1725 = vmatmul.mubr.f32.gmra.mrb[0].mxu0 %v591
  %v1726 = vpop.f32.mrb[0].mxu0
  %v1727 = vadd.f32 %v1584, %v1726
  %v1728 = vpop.f32.mrb[0].mxu0
  %v1729 = vadd.f32 %v1586, %v1728
  %1730 = vmatprep.mubr.f32.mxu0 0.0
  %1731 = vmatmul.mubr.f32.gmra.mrb[0].mxu0 %v594
  %v1732 = vpop.f32.mrb[0].mxu0
  %v1733 = vadd.f32 %v1590, %v1732
  %v1734 = vpop.f32.mrb[0].mxu0
  %v1735 = vadd.f32 %v1592, %v1734
  %1736 = vmatprep.mubr.f32.mxu0 0.0
  %1737 = vmatmul.mubr.f32.gmra.mrb[0].mxu0 %v597
  %v1738 = vpop.f32.mrb[0].mxu0
  %v1739 = vadd.f32 %v1596, %v1738
  %v1740 = vpop.f32.mrb[0].mxu0
  %v1741 = vadd.f32 %v1598, %v1740
  %1742 = vdwg.mxu0
  %v1743 = vmax.f32 %v1095, 0.0
  %v1744 = vmax.f32 %v1097, 0.0
  %v1745 = vmax.f32 %v1667, 0.0
  %v1746 = vmax.f32 %v1669, 0.0
  %v1747 = vmax.f32 %v1101, 0.0
  %v1748 = vmax.f32 %v1103, 0.0
  %v1749 = vmax.f32 %v1673, 0.0
  %v1750 = vmax.f32 %v1675, 0.0
  %v1751 = vmax.f32 %v1107, 0.0
  %v1752 = vmax.f32 %v1109, 0.0
  %v1753 = vmax.f32 %v1679, 0.0
  %v1754 = vmax.f32 %v1681, 0.0
  %v1755 = vmax.f32 %v1113, 0.0
  %v1756 = vmax.f32 %v1115, 0.0
  %v1757 = vmax.f32 %v1685, 0.0
  %v1758 = vmax.f32 %v1687, 0.0
  %v1759 = vmax.f32 %v1119, 0.0
  %v1760 = vmax.f32 %v1121, 0.0
  %v1761 = vmax.f32 %v1691, 0.0
  %v1762 = vmax.f32 %v1693, 0.0
  %v1763 = vmax.f32 %v1125, 0.0
  %v1764 = vmax.f32 %v1127, 0.0
  %v1765 = vmax.f32 %v1697, 0.0
  %v1766 = vmax.f32 %v1699, 0.0
  %v1767 = vmax.f32 %v1131, 0.0
  %v1768 = vmax.f32 %v1133, 0.0
  %v1769 = vmax.f32 %v1703, 0.0
  %v1770 = vmax.f32 %v1705, 0.0
  %v1771 = vmax.f32 %v1137, 0.0
  %v1772 = vmax.f32 %v1139, 0.0
  %v1773 = vmax.f32 %v1709, 0.0
  %v1774 = vmax.f32 %v1711, 0.0
  %v1775 = vmax.f32 %v1143, 0.0
  %v1776 = vmax.f32 %v1145, 0.0
  %v1777 = vmax.f32 %v1715, 0.0
  %v1778 = vmax.f32 %v1717, 0.0
  %v1779 = vmax.f32 %v1149, 0.0
  %v1780 = vmax.f32 %v1151, 0.0
  %v1781 = vmax.f32 %v1721, 0.0
  %v1782 = vmax.f32 %v1723, 0.0
  %v1783 = vmax.f32 %v1155, 0.0
  %v1784 = vmax.f32 %v1157, 0.0
  %v1785 = vmax.f32 %v1727, 0.0
  %v1786 = vmax.f32 %v1729, 0.0
  %v1787 = vmax.f32 %v1161, 0.0
  %v1788 = vmax.f32 %v1163, 0.0
  %v1789 = vmax.f32 %v1733, 0.0
  %v1790 = vmax.f32 %v1735, 0.0
  %v1791 = vmax.f32 %v1167, 0.0
  %v1792 = vmax.f32 %v1169, 0.0
  %v1793 = vmax.f32 %v1739, 0.0
  %v1794 = vmax.f32 %v1741, 0.0
  %1795 = vst [vmem:[%s3] sm:$0xff] %v1743
  %1796 = vst [vmem:[%s3 + $0x8] sm:$0xff] %v1744
  %1797 = vst [vmem:[%s3 + $0x10] sm:$0xff] %v1745
  %1798 = vst [vmem:[%s3 + $0x18] sm:$0xff] %v1746
  %1799 = vst [vmem:[%s3 + $0x20] sm:$0xff] %v1747
  %1800 = vst [vmem:[%s3 + $0x28] sm:$0xff] %v1748
  %1801 = vst [vmem:[%s3 + $0x30] sm:$0xff] %v1749
  %1802 = vst [vmem:[%s3 + $0x38] sm:$0xff] %v1750
  %1803 = vst [vmem:[%s3 + $0x40] sm:$0xff] %v1751
  %1804 = vst [vmem:[%s3 + $0x48] sm:$0xff] %v1752
  %1805 = vst [vmem:[%s3 + $0x50] sm:$0xff] %v1753
  %1806 = vst [vmem:[%s3 + $0x58] sm:$0xff] %v1754
  %1807 = vst [vmem:[%s3 + $0x60] sm:$0xff] %v1755
  %1808 = vst [vmem:[%s3 + $0x68] sm:$0xff] %v1756
  %1809 = vst [vmem:[%s3 + $0x70] sm:$0xff] %v1757
  %1810 = vst [vmem:[%s3 + $0x78] sm:$0xff] %v1758
  %1811 = vst [vmem:[%s3 + $0x80] sm:$0xff] %v1759
  %1812 = vst [vmem:[%s3 + $0x88] sm:$0xff] %v1760
  %1813 = vst [vmem:[%s3 + $0x90] sm:$0xff] %v1761
  %1814 = vst [vmem:[%s3 + $0x98] sm:$0xff] %v1762
  %1815 = vst [vmem:[%s3 + $0xa0] sm:$0xff] %v1763
  %1816 = vst [vmem:[%s3 + $0xa8] sm:$0xff] %v1764
  %1817 = vst [vmem:[%s3 + $0xb0] sm:$0xff] %v1765
  %1818 = vst [vmem:[%s3 + $0xb8] sm:$0xff] %v1766
  %1819 = vst [vmem:[%s3 + $0xc0] sm:$0xff] %v1767
  %1820 = vst [vmem:[%s3 + $0xc8] sm:$0xff] %v1768
  %1821 = vst [vmem:[%s3 + $0xd0] sm:$0xff] %v1769
  %1822 = vst [vmem:[%s3 + $0xd8] sm:$0xff] %v1770
  %1823 = vst [vmem:[%s3 + $0xe0] sm:$0xff] %v1771
  %1824 = vst [vmem:[%s3 + $0xe8] sm:$0xff] %v1772
  %1825 = vst [vmem:[%s3 + $0xf0] sm:$0xff] %v1773
  %1826 = vst [vmem:[%s3 + $0xf8] sm:$0xff] %v1774
  %1827 = vst [vmem:[%s3 + $0x100] sm:$0xff] %v1775
  %1828 = vst [vmem:[%s3 + $0x108] sm:$0xff] %v1776
  %1829 = vst [vmem:[%s3 + $0x110] sm:$0xff] %v1777
  %1830 = vst [vmem:[%s3 + $0x118] sm:$0xff] %v1778
  %1831 = vst [vmem:[%s3 + $0x120] sm:$0xff] %v1779
  %1832 = vst [vmem:[%s3 + $0x128] sm:$0xff] %v1780
  %1833 = vst [vmem:[%s3 + $0x130] sm:$0xff] %v1781
  %1834 = vst [vmem:[%s3 + $0x138] sm:$0xff] %v1782
  %1835 = vst [vmem:[%s3 + $0x140] sm:$0xff] %v1783
  %1836 = vst [vmem:[%s3 + $0x148] sm:$0xff] %v1784
  %1837 = vst [vmem:[%s3 + $0x150] sm:$0xff] %v1785
  %1838 = vst [vmem:[%s3 + $0x158] sm:$0xff] %v1786
  %1839 = vst [vmem:[%s3 + $0x160] sm:$0xff] %v1787
  %1840 = vst [vmem:[%s3 + $0x168] sm:$0xff] %v1788
  %1841 = vst [vmem:[%s3 + $0x170] sm:$0xff] %v1789
  %1842 = vst [vmem:[%s3 + $0x178] sm:$0xff] %v1790
  %1843 = vst [vmem:[%s3 + $0x180] sm:$0xff] %v1791
  %1844 = vst [vmem:[%s3 + $0x188] sm:$0xff] %v1792
  %1845 = vst [vmem:[%s3 + $0x190] sm:$0xff] %v1793
  %1846 = vst [vmem:[%s3 + $0x198] sm:$0xff] %v1794
  // Predicated region
  $region14: #{_lambda_.6} parent=0 // pred_check
    _
  $region15: #{_lambda_.6} parent=0 // pred_check_branch
    %1848 = sbr.rel (0) target = $region17
  $region16: #{_lambda_.6} parent=0 // pred_region
    _
  $region17: #{_lambda_.6} parent=0 // pred_fallthru
    _
  // Predicated region
  $region18: #{_lambda_.6} parent=0 // pred_check
    _
  $region19: #{_lambda_.6} parent=0 // pred_check_branch
    %1850 = sbr.rel (0) target = $region21
  $region20: #{_lambda_.6} parent=0 // pred_region
    _
  $region21: #{_lambda_.6} parent=0 // pred_fallthru
    _

// kernel: squeeze.176
$region0: #{squeeze.176}
  #allocation0 [shape = 's32[1]{0}', space=sflag, size = 0x4, scoped, tag = 'scoped memory for squeeze.176']
  %s0 = inlined_call_operand.vmem [shape: bf16[8,3], index: 0, kind: input, shape index: {}]
  %s1 = inlined_call_operand.vmem [shape: bf16[1,8,3], index: 1, kind: output, shape index: {}]
  // Predicated region
  $region2: #{squeeze.176} parent=0 // pred_check
    _
  $region3: #{squeeze.176} parent=0 // pred_check_branch
    %3 = sbr.rel (0) target = $region5
  $region4: #{squeeze.176} parent=0 // pred_region
    _
  $region5: #{squeeze.176} parent=0 // pred_fallthru
    _
  %v4 = vld [vmem:[%s0] ss:$0 sm:$0xff]
  %v5 = vunpack.i.l.bf16 %v4
  %v7 = vunpack.i.h.bf16 %v4
  %v9 = vpack.c.bf16 0.0, %v5
  %10 = vst [vmem:[%s1] sm:$0x1] %v9
  %v11 = vld [vmem:[%s0] ss:$0 sm:$0xff]
  %v12 = vunpack.i.l.bf16 %v11
  %v14 = vunpack.i.h.bf16 %v11
  %s16 = scalar_lea.vmem %s1, 1
  %v17 = vpack.c.bf16 0.0, %v14
  %18 = vst [vmem:[%s16] sm:$0x1] %v17
  %s19 = scalar_lea.vmem %s0, 1
  %v20 = vld [vmem:[%s19] ss:$0 sm:$0xff]
  %v21 = vunpack.i.l.bf16 %v20
  %v23 = vunpack.i.h.bf16 %v20
  %s25 = scalar_lea.vmem %s1, 2
  %v26 = vpack.c.bf16 0.0, %v21
  %27 = vst [vmem:[%s25] sm:$0x1] %v26

// kernel: tile.38
$region0: #{tile.38}
  #allocation0 [shape = 's32[1]{0}', space=sflag, size = 0x4, scoped, tag = 'scoped memory for tile.38']
  %s0 = inlined_call_operand.vmem [shape: f32[4], index: 0, kind: input, shape index: {}]
  %s1 = inlined_call_operand.vmem [shape: f32[128,4], index: 1, kind: output, shape index: {}]
  // Predicated region
  $region2: #{tile.38} parent=0 // pred_check
    _
  $region3: #{tile.38} parent=0 // pred_check_branch
    %3 = sbr.rel (0) target = $region5
  $region4: #{tile.38} parent=0 // pred_region
    _
  $region5: #{tile.38} parent=0 // pred_fallthru
    _
  %v4 = vld [vmem:[%s0] ss:$0 sm:$0xff]
  %5 = vst [vmem:[%s1] sm:$0xff] %v4
  %s6 = scalar_lea.vmem %s1, 8
  %7 = vst [vmem:[%s6] sm:$0xff] %v4
  %s8 = scalar_lea.vmem %s1, 16
  %9 = vst [vmem:[%s8] sm:$0xff] %v4
  %s10 = scalar_lea.vmem %s1, 24
  %11 = vst [vmem:[%s10] sm:$0xff] %v4
  %s12 = scalar_lea.vmem %s1, 32
  %13 = vst [vmem:[%s12] sm:$0xff] %v4
  %s14 = scalar_lea.vmem %s1, 40
  %15 = vst [vmem:[%s14] sm:$0xff] %v4
  %s16 = scalar_lea.vmem %s1, 48
  %17 = vst [vmem:[%s16] sm:$0xff] %v4
  %s18 = scalar_lea.vmem %s1, 56
  %19 = vst [vmem:[%s18] sm:$0xff] %v4
  %s20 = scalar_lea.vmem %s1, 64
  %21 = vst [vmem:[%s20] sm:$0xff] %v4
  %s22 = scalar_lea.vmem %s1, 72
  %23 = vst [vmem:[%s22] sm:$0xff] %v4
  %s24 = scalar_lea.vmem %s1, 80
  %25 = vst [vmem:[%s24] sm:$0xff] %v4
  %s26 = scalar_lea.vmem %s1, 88
  %27 = vst [vmem:[%s26] sm:$0xff] %v4
  %s28 = scalar_lea.vmem %s1, 96
  %29 = vst [vmem:[%s28] sm:$0xff] %v4
  %s30 = scalar_lea.vmem %s1, 104
  %31 = vst [vmem:[%s30] sm:$0xff] %v4
  %s32 = scalar_lea.vmem %s1, 112
  %33 = vst [vmem:[%s32] sm:$0xff] %v4
  %s34 = scalar_lea.vmem %s1, 120
  %35 = vst [vmem:[%s34] sm:$0xff] %v4

// kernel: tile.39
$region0: #{tile.39}
  %s0 = inlined_call_operand.vmem [shape: f32[128,4], index: 0, kind: input, shape index: {}]
  %s1 = inlined_call_operand.vmem [shape: f32[1,512], index: 1, kind: output, shape index: {}]
  $region1: #{tile.39} parent=0
    #allocation0 [shape = 'u8[16384]{0}', space=vmem, size = 0x4000, scoped, tag = 'scoped mem for output reshape']
    %v2 = vld [vmem:[%s0] sm:$0x1]
    %s3 = scalar_lea.vmem %s0, 31
    %v4 = vld [vmem:[%s3] sm:$0x2]
    %vm5 = vcmask 1041409
    %v6 = vsel %vm5, %v4, %v2
    %s7 = scalar_lea.vmem %s0, 62
    %v8 = vld [vmem:[%s7] sm:$0x4]
    %vm9 = vcmask 1042434
    %v10 = vsel %vm9, %v8, %v6
    %s11 = scalar_lea.vmem %s0, 93
    %v12 = vld [vmem:[%s11] sm:$0x8]
    %vm13 = vcmask 1043459
    %v14 = vsel %vm13, %v12, %v10
    %vm15 = vcmask 31744
    %16 = vst.msk [vmem:[#allocation0] ss:$8 sm:$0xf] %vm15, %v14
    %s17 = scalar_lea.vmem %s0, 31
    %v18 = vld [vmem:[%s17] sm:$0x1]
    %s19 = scalar_lea.vmem %s0, 62
    %v20 = vld [vmem:[%s19] sm:$0x2]
    %vm21 = vcmask 1041409
    %v22 = vsel %vm21, %v20, %v18
    %s23 = scalar_lea.vmem %s0, 93
    %v24 = vld [vmem:[%s23] sm:$0x4]
    %vm25 = vcmask 1042434
    %v26 = vsel %vm25, %v24, %v22
    %s27 = scalar_lea.vmem %s0, 124
    %v28 = vld [vmem:[%s27] sm:$0x8]
    %vm29 = vcmask 1043459
    %v30 = vsel %vm29, %v28, %v26
    %31 = vrot.lane.b32.xlu0 %v30, 124
    %v32 = vpop.permute.xlu0 %31
    %vm33 = vcmask 1048544
    %34 = vst.msk [vmem:[#allocation0] ss:$8 sm:$0xf] %vm33, %v32
    %s35 = scalar_lea.vmem %s0, 30
    %v36 = vld [vmem:[%s35] sm:$0x1]
    %s37 = scalar_lea.vmem %s0, 61
    %v38 = vld [vmem:[%s37] sm:$0x2]
    %vm39 = vcmask 1041409
    %v40 = vsel %vm39, %v38, %v36
    %s41 = scalar_lea.vmem %s0, 92
    %v42 = vld [vmem:[%s41] sm:$0x4]
    %vm43 = vcmask 1042434
    %v44 = vsel %vm43, %v42, %v40
    %s45 = scalar_lea.vmem %s0, 123
    %v46 = vld [vmem:[%s45] sm:$0x8]
    %vm47 = vcmask 1043459
    %v48 = vsel %vm47, %v46, %v44
    %49 = vrot.lane.b32.xlu0 %v48, 120
    %v50 = vpop.permute.xlu0 %49
    %vm51 = vcmask 1015744
    %52 = vst.msk [vmem:[#allocation0] ss:$8 sm:$0xf] %vm51, %v50
    %s53 = scalar_lea.vmem %s0, 29
    %v54 = vld [vmem:[%s53] sm:$0x1]
    %s55 = scalar_lea.vmem %s0, 60
    %v56 = vld [vmem:[%s55] sm:$0x2]
    %vm57 = vcmask 1041409
    %v58 = vsel %vm57, %v56, %v54
    %s59 = scalar_lea.vmem %s0, 91
    %v60 = vld [vmem:[%s59] sm:$0x4]
    %vm61 = vcmask 1042434
    %v62 = vsel %vm61, %v60, %v58
    %s63 = scalar_lea.vmem %s0, 122
    %v64 = vld [vmem:[%s63] sm:$0x8]
    %vm65 = vcmask 1043459
    %v66 = vsel %vm65, %v64, %v62
    %67 = vrot.lane.b32.xlu0 %v66, 116
    %v68 = vpop.permute.xlu0 %67
    %vm69 = vcmask 982944
    %70 = vst.msk [vmem:[#allocation0] ss:$8 sm:$0xf] %vm69, %v68
    %s71 = scalar_lea.vmem %s0, 28
    %v72 = vld [vmem:[%s71] sm:$0x1]
    %s73 = scalar_lea.vmem %s0, 59
    %v74 = vld [vmem:[%s73] sm:$0x2]
    %vm75 = vcmask 1041409
    %v76 = vsel %vm75, %v74, %v72
    %s77 = scalar_lea.vmem %s0, 90
    %v78 = vld [vmem:[%s77] sm:$0x4]
    %vm79 = vcmask 1042434
    %v80 = vsel %vm79, %v78, %v76
    %s81 = scalar_lea.vmem %s0, 121
    %v82 = vld [vmem:[%s81] sm:$0x8]
    %vm83 = vcmask 1043459
    %v84 = vsel %vm83, %v82, %v80
    %85 = vrot.lane.b32.xlu0 %v84, 112
    %v86 = vpop.permute.xlu0 %85
    %vm87 = vcmask 950144
    %88 = vst.msk [vmem:[#allocation0] ss:$8 sm:$0xf] %vm87, %v86
    %s89 = scalar_lea.vmem %s0, 27
    %v90 = vld [vmem:[%s89] sm:$0x1]
    %s91 = scalar_lea.vmem %s0, 58
    %v92 = vld [vmem:[%s91] sm:$0x2]
    %vm93 = vcmask 1041409
    %v94 = vsel %vm93, %v92, %v90
    %s95 = scalar_lea.vmem %s0, 89
    %v96 = vld [vmem:[%s95] sm:$0x4]
    %vm97 = vcmask 1042434
    %v98 = vsel %vm97, %v96, %v94
    %s99 = scalar_lea.vmem %s0, 120
    %v100 = vld [vmem:[%s99] sm:$0x8]
    %vm101 = vcmask 1043459
    %v102 = vsel %vm101, %v100, %v98
    %103 = vrot.lane.b32.xlu0 %v102, 108
    %v104 = vpop.permute.xlu0 %103
    %vm105 = vcmask 917344
    %106 = vst.msk [vmem:[#allocation0] ss:$8 sm:$0xf] %vm105, %v104
    %s107 = scalar_lea.vmem %s0, 26
    %v108 = vld [vmem:[%s107] sm:$0x1]
    %s109 = scalar_lea.vmem %s0, 57
    %v110 = vld [vmem:[%s109] sm:$0x2]
    %vm111 = vcmask 1041409
    %v112 = vsel %vm111, %v110, %v108
    %s113 = scalar_lea.vmem %s0, 88
    %v114 = vld [vmem:[%s113] sm:$0x4]
    %vm115 = vcmask 1042434
    %v116 = vsel %vm115, %v114, %v112
    %s117 = scalar_lea.vmem %s0, 119
    %v118 = vld [vmem:[%s117] sm:$0x8]
    %vm119 = vcmask 1043459
    %v120 = vsel %vm119, %v118, %v116
    %121 = vrot.lane.b32.xlu0 %v120, 104
    %v122 = vpop.permute.xlu0 %121
    %vm123 = vcmask 884544
    %124 = vst.msk [vmem:[#allocation0] ss:$8 sm:$0xf] %vm123, %v122
    %s125 = scalar_lea.vmem %s0, 25
    %v126 = vld [vmem:[%s125] sm:$0x1]
    %s127 = scalar_lea.vmem %s0, 56
    %v128 = vld [vmem:[%s127] sm:$0x2]
    %vm129 = vcmask 1041409
    %v130 = vsel %vm129, %v128, %v126
    %s131 = scalar_lea.vmem %s0, 87
    %v132 = vld [vmem:[%s131] sm:$0x4]
    %vm133 = vcmask 1042434
    %v134 = vsel %vm133, %v132, %v130
    %s135 = scalar_lea.vmem %s0, 118
    %v136 = vld [vmem:[%s135] sm:$0x8]
    %vm137 = vcmask 1043459
    %v138 = vsel %vm137, %v136, %v134
    %139 = vrot.lane.b32.xlu0 %v138, 100
    %v140 = vpop.permute.xlu0 %139
    %vm141 = vcmask 851744
    %142 = vst.msk [vmem:[#allocation0] ss:$8 sm:$0xf] %vm141, %v140
    %s143 = scalar_lea.vmem %s0, 24
    %v144 = vld [vmem:[%s143] sm:$0x1]
    %s145 = scalar_lea.vmem %s0, 55
    %v146 = vld [vmem:[%s145] sm:$0x2]
    %vm147 = vcmask 1041409
    %v148 = vsel %vm147, %v146, %v144
    %s149 = scalar_lea.vmem %s0, 86
    %v150 = vld [vmem:[%s149] sm:$0x4]
    %vm151 = vcmask 1042434
    %v152 = vsel %vm151, %v150, %v148
    %s153 = scalar_lea.vmem %s0, 117
    %v154 = vld [vmem:[%s153] sm:$0x8]
    %vm155 = vcmask 1043459
    %v156 = vsel %vm155, %v154, %v152
    %157 = vrot.lane.b32.xlu0 %v156, 96
    %v158 = vpop.permute.xlu0 %157
    %vm159 = vcmask 818944
    %160 = vst.msk [vmem:[#allocation0] ss:$8 sm:$0xf] %vm159, %v158
    %s161 = scalar_lea.vmem %s0, 23
    %v162 = vld [vmem:[%s161] sm:$0x1]
    %s163 = scalar_lea.vmem %s0, 54
    %v164 = vld [vmem:[%s163] sm:$0x2]
    %vm165 = vcmask 1041409
    %v166 = vsel %vm165, %v164, %v162
    %s167 = scalar_lea.vmem %s0, 85
    %v168 = vld [vmem:[%s167] sm:$0x4]
    %vm169 = vcmask 1042434
    %v170 = vsel %vm169, %v168, %v166
    %s171 = scalar_lea.vmem %s0, 116
    %v172 = vld [vmem:[%s171] sm:$0x8]
    %vm173 = vcmask 1043459
    %v174 = vsel %vm173, %v172, %v170
    %175 = vrot.lane.b32.xlu0 %v174, 92
    %v176 = vpop.permute.xlu0 %175
    %vm177 = vcmask 786144
    %178 = vst.msk [vmem:[#allocation0] ss:$8 sm:$0xf] %vm177, %v176
    %s179 = scalar_lea.vmem %s0, 22
    %v180 = vld [vmem:[%s179] sm:$0x1]
    %s181 = scalar_lea.vmem %s0, 53
    %v182 = vld [vmem:[%s181] sm:$0x2]
    %vm183 = vcmask 1041409
    %v184 = vsel %vm183, %v182, %v180
    %s185 = scalar_lea.vmem %s0, 84
    %v186 = vld [vmem:[%s185] sm:$0x4]
    %vm187 = vcmask 1042434
    %v188 = vsel %vm187, %v186, %v184
    %s189 = scalar_lea.vmem %s0, 115
    %v190 = vld [vmem:[%s189] sm:$0x8]
    %vm191 = vcmask 1043459
    %v192 = vsel %vm191, %v190, %v188
    %193 = vrot.lane.b32.xlu0 %v192, 88
    %v194 = vpop.permute.xlu0 %193
    %vm195 = vcmask 753344
    %196 = vst.msk [vmem:[#allocation0] ss:$8 sm:$0xf] %vm195, %v194
    %s197 = scalar_lea.vmem %s0, 21
    %v198 = vld [vmem:[%s197] sm:$0x1]
    %s199 = scalar_lea.vmem %s0, 52
    %v200 = vld [vmem:[%s199] sm:$0x2]
    %vm201 = vcmask 1041409
    %v202 = vsel %vm201, %v200, %v198
    %s203 = scalar_lea.vmem %s0, 83
    %v204 = vld [vmem:[%s203] sm:$0x4]
    %vm205 = vcmask 1042434
    %v206 = vsel %vm205, %v204, %v202
    %s207 = scalar_lea.vmem %s0, 114
    %v208 = vld [vmem:[%s207] sm:$0x8]
    %vm209 = vcmask 1043459
    %v210 = vsel %vm209, %v208, %v206
    %211 = vrot.lane.b32.xlu0 %v210, 84
    %v212 = vpop.permute.xlu0 %211
    %vm213 = vcmask 720544
    %214 = vst.msk [vmem:[#allocation0] ss:$8 sm:$0xf] %vm213, %v212
    %s215 = scalar_lea.vmem %s0, 20
    %v216 = vld [vmem:[%s215] sm:$0x1]
    %s217 = scalar_lea.vmem %s0, 51
    %v218 = vld [vmem:[%s217] sm:$0x2]
    %vm219 = vcmask 1041409
    %v220 = vsel %vm219, %v218, %v216
    %s221 = scalar_lea.vmem %s0, 82
    %v222 = vld [vmem:[%s221] sm:$0x4]
    %vm223 = vcmask 1042434
    %v224 = vsel %vm223, %v222, %v220
    %s225 = scalar_lea.vmem %s0, 113
    %v226 = vld [vmem:[%s225] sm:$0x8]
    %vm227 = vcmask 1043459
    %v228 = vsel %vm227, %v226, %v224
    %229 = vrot.lane.b32.xlu0 %v228, 80
    %v230 = vpop.permute.xlu0 %229
    %vm231 = vcmask 687744
    %232 = vst.msk [vmem:[#allocation0] ss:$8 sm:$0xf] %vm231, %v230
    %s233 = scalar_lea.vmem %s0, 19
    %v234 = vld [vmem:[%s233] sm:$0x1]
    %s235 = scalar_lea.vmem %s0, 50
    %v236 = vld [vmem:[%s235] sm:$0x2]
    %vm237 = vcmask 1041409
    %v238 = vsel %vm237, %v236, %v234
    %s239 = scalar_lea.vmem %s0, 81
    %v240 = vld [vmem:[%s239] sm:$0x4]
    %vm241 = vcmask 1042434
    %v242 = vsel %vm241, %v240, %v238
    %s243 = scalar_lea.vmem %s0, 112
    %v244 = vld [vmem:[%s243] sm:$0x8]
    %vm245 = vcmask 1043459
    %v246 = vsel %vm245, %v244, %v242
    %247 = vrot.lane.b32.xlu0 %v246, 76
    %v248 = vpop.permute.xlu0 %247
    %vm249 = vcmask 654944
    %250 = vst.msk [vmem:[#allocation0] ss:$8 sm:$0xf] %vm249, %v248
    %s251 = scalar_lea.vmem %s0, 18
    %v252 = vld [vmem:[%s251] sm:$0x1]
    %s253 = scalar_lea.vmem %s0, 49
    %v254 = vld [vmem:[%s253] sm:$0x2]
    %vm255 = vcmask 1041409
    %v256 = vsel %vm255, %v254, %v252
    %s257 = scalar_lea.vmem %s0, 80
    %v258 = vld [vmem:[%s257] sm:$0x4]
    %vm259 = vcmask 1042434
    %v260 = vsel %vm259, %v258, %v256
    %s261 = scalar_lea.vmem %s0, 111
    %v262 = vld [vmem:[%s261] sm:$0x8]
    %vm263 = vcmask 1043459
    %v264 = vsel %vm263, %v262, %v260
    %265 = vrot.lane.b32.xlu0 %v264, 72
    %v266 = vpop.permute.xlu0 %265
    %vm267 = vcmask 622144
    %268 = vst.msk [vmem:[#allocation0] ss:$8 sm:$0xf] %vm267, %v266
    %s269 = scalar_lea.vmem %s0, 17
    %v270 = vld [vmem:[%s269] sm:$0x1]
    %s271 = scalar_lea.vmem %s0, 48
    %v272 = vld [vmem:[%s271] sm:$0x2]
    %vm273 = vcmask 1041409
    %v274 = vsel %vm273, %v272, %v270
    %s275 = scalar_lea.vmem %s0, 79
    %v276 = vld [vmem:[%s275] sm:$0x4]
    %vm277 = vcmask 1042434
    %v278 = vsel %vm277, %v276, %v274
    %s279 = scalar_lea.vmem %s0, 110
    %v280 = vld [vmem:[%s279] sm:$0x8]
    %vm281 = vcmask 1043459
    %v282 = vsel %vm281, %v280, %v278
    %283 = vrot.lane.b32.xlu0 %v282, 68
    %v284 = vpop.permute.xlu0 %283
    %vm285 = vcmask 589344
    %286 = vst.msk [vmem:[#allocation0] ss:$8 sm:$0xf] %vm285, %v284
    %s287 = scalar_lea.vmem %s0, 16
    %v288 = vld [vmem:[%s287] sm:$0x1]
    %s289 = scalar_lea.vmem %s0, 47
    %v290 = vld [vmem:[%s289] sm:$0x2]
    %vm291 = vcmask 1041409
    %v292 = vsel %vm291, %v290, %v288
    %s293 = scalar_lea.vmem %s0, 78
    %v294 = vld [vmem:[%s293] sm:$0x4]
    %vm295 = vcmask 1042434
    %v296 = vsel %vm295, %v294, %v292
    %s297 = scalar_lea.vmem %s0, 109
    %v298 = vld [vmem:[%s297] sm:$0x8]
    %vm299 = vcmask 1043459
    %v300 = vsel %vm299, %v298, %v296
    %301 = vrot.lane.b32.xlu0 %v300, 64
    %v302 = vpop.permute.xlu0 %301
    %vm303 = vcmask 556544
    %304 = vst.msk [vmem:[#allocation0] ss:$8 sm:$0xf] %vm303, %v302
    %s305 = scalar_lea.vmem %s0, 15
    %v306 = vld [vmem:[%s305] sm:$0x1]
    %s307 = scalar_lea.vmem %s0, 46
    %v308 = vld [vmem:[%s307] sm:$0x2]
    %vm309 = vcmask 1041409
    %v310 = vsel %vm309, %v308, %v306
    %s311 = scalar_lea.vmem %s0, 77
    %v312 = vld [vmem:[%s311] sm:$0x4]
    %vm313 = vcmask 1042434
    %v314 = vsel %vm313, %v312, %v310
    %s315 = scalar_lea.vmem %s0, 108
    %v316 = vld [vmem:[%s315] sm:$0x8]
    %vm317 = vcmask 1043459
    %v318 = vsel %vm317, %v316, %v314
    %319 = vrot.lane.b32.xlu0 %v318, 60
    %v320 = vpop.permute.xlu0 %319
    %vm321 = vcmask 523744
    %322 = vst.msk [vmem:[#allocation0] ss:$8 sm:$0xf] %vm321, %v320
    %s323 = scalar_lea.vmem %s0, 14
    %v324 = vld [vmem:[%s323] sm:$0x1]
    %s325 = scalar_lea.vmem %s0, 45
    %v326 = vld [vmem:[%s325] sm:$0x2]
    %vm327 = vcmask 1041409
    %v328 = vsel %vm327, %v326, %v324
    %s329 = scalar_lea.vmem %s0, 76
    %v330 = vld [vmem:[%s329] sm:$0x4]
    %vm331 = vcmask 1042434
    %v332 = vsel %vm331, %v330, %v328
    %s333 = scalar_lea.vmem %s0, 107
    %v334 = vld [vmem:[%s333] sm:$0x8]
    %vm335 = vcmask 1043459
    %v336 = vsel %vm335, %v334, %v332
    %337 = vrot.lane.b32.xlu0 %v336, 56
    %v338 = vpop.permute.xlu0 %337
    %vm339 = vcmask 490944
    %340 = vst.msk [vmem:[#allocation0] ss:$8 sm:$0xf] %vm339, %v338
    %s341 = scalar_lea.vmem %s0, 13
    %v342 = vld [vmem:[%s341] sm:$0x1]
    %s343 = scalar_lea.vmem %s0, 44
    %v344 = vld [vmem:[%s343] sm:$0x2]
    %vm345 = vcmask 1041409
    %v346 = vsel %vm345, %v344, %v342
    %s347 = scalar_lea.vmem %s0, 75
    %v348 = vld [vmem:[%s347] sm:$0x4]
    %vm349 = vcmask 1042434
    %v350 = vsel %vm349, %v348, %v346
    %s351 = scalar_lea.vmem %s0, 106
    %v352 = vld [vmem:[%s351] sm:$0x8]
    %vm353 = vcmask 1043459
    %v354 = vsel %vm353, %v352, %v350
    %355 = vrot.lane.b32.xlu0 %v354, 52
    %v356 = vpop.permute.xlu0 %355
    %vm357 = vcmask 458144
    %358 = vst.msk [vmem:[#allocation0] ss:$8 sm:$0xf] %vm357, %v356
    %s359 = scalar_lea.vmem %s0, 12
    %v360 = vld [vmem:[%s359] sm:$0x1]
    %s361 = scalar_lea.vmem %s0, 43
    %v362 = vld [vmem:[%s361] sm:$0x2]
    %vm363 = vcmask 1041409
    %v364 = vsel %vm363, %v362, %v360
    %s365 = scalar_lea.vmem %s0, 74
    %v366 = vld [vmem:[%s365] sm:$0x4]
    %vm367 = vcmask 1042434
    %v368 = vsel %vm367, %v366, %v364
    %s369 = scalar_lea.vmem %s0, 105
    %v370 = vld [vmem:[%s369] sm:$0x8]
    %vm371 = vcmask 1043459
    %v372 = vsel %vm371, %v370, %v368
    %373 = vrot.lane.b32.xlu0 %v372, 48
    %v374 = vpop.permute.xlu0 %373
    %vm375 = vcmask 425344
    %376 = vst.msk [vmem:[#allocation0] ss:$8 sm:$0xf] %vm375, %v374
    %s377 = scalar_lea.vmem %s0, 11
    %v378 = vld [vmem:[%s377] sm:$0x1]
    %s379 = scalar_lea.vmem %s0, 42
    %v380 = vld [vmem:[%s379] sm:$0x2]
    %vm381 = vcmask 1041409
    %v382 = vsel %vm381, %v380, %v378
    %s383 = scalar_lea.vmem %s0, 73
    %v384 = vld [vmem:[%s383] sm:$0x4]
    %vm385 = vcmask 1042434
    %v386 = vsel %vm385, %v384, %v382
    %s387 = scalar_lea.vmem %s0, 104
    %v388 = vld [vmem:[%s387] sm:$0x8]
    %vm389 = vcmask 1043459
    %v390 = vsel %vm389, %v388, %v386
    %391 = vrot.lane.b32.xlu0 %v390, 44
    %v392 = vpop.permute.xlu0 %391
    %vm393 = vcmask 392544
    %394 = vst.msk [vmem:[#allocation0] ss:$8 sm:$0xf] %vm393, %v392
    %s395 = scalar_lea.vmem %s0, 10
    %v396 = vld [vmem:[%s395] sm:$0x1]
    %s397 = scalar_lea.vmem %s0, 41
    %v398 = vld [vmem:[%s397] sm:$0x2]
    %vm399 = vcmask 1041409
    %v400 = vsel %vm399, %v398, %v396
    %s401 = scalar_lea.vmem %s0, 72
    %v402 = vld [vmem:[%s401] sm:$0x4]
    %vm403 = vcmask 1042434
    %v404 = vsel %vm403, %v402, %v400
    %s405 = scalar_lea.vmem %s0, 103
    %v406 = vld [vmem:[%s405] sm:$0x8]
    %vm407 = vcmask 1043459
    %v408 = vsel %vm407, %v406, %v404
    %409 = vrot.lane.b32.xlu0 %v408, 40
    %v410 = vpop.permute.xlu0 %409
    %vm411 = vcmask 359744
    %412 = vst.msk [vmem:[#allocation0] ss:$8 sm:$0xf] %vm411, %v410
    %s413 = scalar_lea.vmem %s0, 9
    %v414 = vld [vmem:[%s413] sm:$0x1]
    %s415 = scalar_lea.vmem %s0, 40
    %v416 = vld [vmem:[%s415] sm:$0x2]
    %vm417 = vcmask 1041409
    %v418 = vsel %vm417, %v416, %v414
    %s419 = scalar_lea.vmem %s0, 71
    %v420 = vld [vmem:[%s419] sm:$0x4]
    %vm421 = vcmask 1042434
    %v422 = vsel %vm421, %v420, %v418
    %s423 = scalar_lea.vmem %s0, 102
    %v424 = vld [vmem:[%s423] sm:$0x8]
    %vm425 = vcmask 1043459
    %v426 = vsel %vm425, %v424, %v422
    %427 = vrot.lane.b32.xlu0 %v426, 36
    %v428 = vpop.permute.xlu0 %427
    %vm429 = vcmask 326944
    %430 = vst.msk [vmem:[#allocation0] ss:$8 sm:$0xf] %vm429, %v428
    %s431 = scalar_lea.vmem %s0, 8
    %v432 = vld [vmem:[%s431] sm:$0x1]
    %s433 = scalar_lea.vmem %s0, 39
    %v434 = vld [vmem:[%s433] sm:$0x2]
    %vm435 = vcmask 1041409
    %v436 = vsel %vm435, %v434, %v432
    %s437 = scalar_lea.vmem %s0, 70
    %v438 = vld [vmem:[%s437] sm:$0x4]
    %vm439 = vcmask 1042434
    %v440 = vsel %vm439, %v438, %v436
    %s441 = scalar_lea.vmem %s0, 101
    %v442 = vld [vmem:[%s441] sm:$0x8]
    %vm443 = vcmask 1043459
    %v444 = vsel %vm443, %v442, %v440
    %445 = vrot.lane.b32.xlu0 %v444, 32
    %v446 = vpop.permute.xlu0 %445
    %vm447 = vcmask 294144
    %448 = vst.msk [vmem:[#allocation0] ss:$8 sm:$0xf] %vm447, %v446
    %s449 = scalar_lea.vmem %s0, 7
    %v450 = vld [vmem:[%s449] sm:$0x1]
    %s451 = scalar_lea.vmem %s0, 38
    %v452 = vld [vmem:[%s451] sm:$0x2]
    %vm453 = vcmask 1041409
    %v454 = vsel %vm453, %v452, %v450
    %s455 = scalar_lea.vmem %s0, 69
    %v456 = vld [vmem:[%s455] sm:$0x4]
    %vm457 = vcmask 1042434
    %v458 = vsel %vm457, %v456, %v454
    %s459 = scalar_lea.vmem %s0, 100
    %v460 = vld [vmem:[%s459] sm:$0x8]
    %vm461 = vcmask 1043459
    %v462 = vsel %vm461, %v460, %v458
    %463 = vrot.lane.b32.xlu0 %v462, 28
    %v464 = vpop.permute.xlu0 %463
    %vm465 = vcmask 261344
    %466 = vst.msk [vmem:[#allocation0] ss:$8 sm:$0xf] %vm465, %v464
    %s467 = scalar_lea.vmem %s0, 6
    %v468 = vld [vmem:[%s467] sm:$0x1]
    %s469 = scalar_lea.vmem %s0, 37
    %v470 = vld [vmem:[%s469] sm:$0x2]
    %vm471 = vcmask 1041409
    %v472 = vsel %vm471, %v470, %v468
    %s473 = scalar_lea.vmem %s0, 68
    %v474 = vld [vmem:[%s473] sm:$0x4]
    %vm475 = vcmask 1042434
    %v476 = vsel %vm475, %v474, %v472
    %s477 = scalar_lea.vmem %s0, 99
    %v478 = vld [vmem:[%s477] sm:$0x8]
    %vm479 = vcmask 1043459
    %v480 = vsel %vm479, %v478, %v476
    %481 = vrot.lane.b32.xlu0 %v480, 24
    %v482 = vpop.permute.xlu0 %481
    %vm483 = vcmask 228544
    %484 = vst.msk [vmem:[#allocation0] ss:$8 sm:$0xf] %vm483, %v482
    %s485 = scalar_lea.vmem %s0, 5
    %v486 = vld [vmem:[%s485] sm:$0x1]
    %s487 = scalar_lea.vmem %s0, 36
    %v488 = vld [vmem:[%s487] sm:$0x2]
    %vm489 = vcmask 1041409
    %v490 = vsel %vm489, %v488, %v486
    %s491 = scalar_lea.vmem %s0, 67
    %v492 = vld [vmem:[%s491] sm:$0x4]
    %vm493 = vcmask 1042434
    %v494 = vsel %vm493, %v492, %v490
    %s495 = scalar_lea.vmem %s0, 98
    %v496 = vld [vmem:[%s495] sm:$0x8]
    %vm497 = vcmask 1043459
    %v498 = vsel %vm497, %v496, %v494
    %499 = vrot.lane.b32.xlu0 %v498, 20
    %v500 = vpop.permute.xlu0 %499
    %vm501 = vcmask 195744
    %502 = vst.msk [vmem:[#allocation0] ss:$8 sm:$0xf] %vm501, %v500
    %s503 = scalar_lea.vmem %s0, 4
    %v504 = vld [vmem:[%s503] sm:$0x1]
    %s505 = scalar_lea.vmem %s0, 35
    %v506 = vld [vmem:[%s505] sm:$0x2]
    %vm507 = vcmask 1041409
    %v508 = vsel %vm507, %v506, %v504
    %s509 = scalar_lea.vmem %s0, 66
    %v510 = vld [vmem:[%s509] sm:$0x4]
    %vm511 = vcmask 1042434
    %v512 = vsel %vm511, %v510, %v508
    %s513 = scalar_lea.vmem %s0, 97
    %v514 = vld [vmem:[%s513] sm:$0x8]
    %vm515 = vcmask 1043459
    %v516 = vsel %vm515, %v514, %v512
    %517 = vrot.lane.b32.xlu0 %v516, 16
    %v518 = vpop.permute.xlu0 %517
    %vm519 = vcmask 162944
    %520 = vst.msk [vmem:[#allocation0] ss:$8 sm:$0xf] %vm519, %v518
    %s521 = scalar_lea.vmem %s0, 3
    %v522 = vld [vmem:[%s521] sm:$0x1]
    %s523 = scalar_lea.vmem %s0, 34
    %v524 = vld [vmem:[%s523] sm:$0x2]
    %vm525 = vcmask 1041409
    %v526 = vsel %vm525, %v524, %v522
    %s527 = scalar_lea.vmem %s0, 65
    %v528 = vld [vmem:[%s527] sm:$0x4]
    %vm529 = vcmask 1042434
    %v530 = vsel %vm529, %v528, %v526
    %s531 = scalar_lea.vmem %s0, 96
    %v532 = vld [vmem:[%s531] sm:$0x8]
    %vm533 = vcmask 1043459
    %v534 = vsel %vm533, %v532, %v530
    %535 = vrot.lane.b32.xlu0 %v534, 12
    %v536 = vpop.permute.xlu0 %535
    %vm537 = vcmask 130144
    %538 = vst.msk [vmem:[#allocation0] ss:$8 sm:$0xf] %vm537, %v536
    %s539 = scalar_lea.vmem %s0, 2
    %v540 = vld [vmem:[%s539] sm:$0x1]
    %s541 = scalar_lea.vmem %s0, 33
    %v542 = vld [vmem:[%s541] sm:$0x2]
    %vm543 = vcmask 1041409
    %v544 = vsel %vm543, %v542, %v540
    %s545 = scalar_lea.vmem %s0, 64
    %v546 = vld [vmem:[%s545] sm:$0x4]
    %vm547 = vcmask 1042434
    %v548 = vsel %vm547, %v546, %v544
    %s549 = scalar_lea.vmem %s0, 95
    %v550 = vld [vmem:[%s549] sm:$0x8]
    %vm551 = vcmask 1043459
    %v552 = vsel %vm551, %v550, %v548
    %553 = vrot.lane.b32.xlu0 %v552, 8
    %v554 = vpop.permute.xlu0 %553
    %vm555 = vcmask 97344
    %556 = vst.msk [vmem:[#allocation0] ss:$8 sm:$0xf] %vm555, %v554
    %s557 = scalar_lea.vmem %s0, 1
    %v558 = vld [vmem:[%s557] sm:$0x1]
    %s559 = scalar_lea.vmem %s0, 32
    %v560 = vld [vmem:[%s559] sm:$0x2]
    %vm561 = vcmask 1041409
    %v562 = vsel %vm561, %v560, %v558
    %s563 = scalar_lea.vmem %s0, 63
    %v564 = vld [vmem:[%s563] sm:$0x4]
    %vm565 = vcmask 1042434
    %v566 = vsel %vm565, %v564, %v562
    %s567 = scalar_lea.vmem %s0, 94
    %v568 = vld [vmem:[%s567] sm:$0x8]
    %vm569 = vcmask 1043459
    %v570 = vsel %vm569, %v568, %v566
    %571 = vrot.lane.b32.xlu0 %v570, 4
    %v572 = vpop.permute.xlu0 %571
    %vm573 = vcmask 64544
    %574 = vst.msk [vmem:[#allocation0] ss:$8 sm:$0xf] %vm573, %v572
    %s576 = sshllo.u32 0, 1
    %v578 = vld [vmem:[#allocation0] sm:%s576]
    %s579 = sshllo.u32 0, 1
    %580 = vst [vmem:[%s1] sm:%s579] %v578
    %s581 = scalar_lea.vmem [#allocation0], 8
    %v582 = vld [vmem:[%s581] sm:%s576]
    %s583 = sshllo.u32 0, 1
    %s584 = scalar_lea.vmem %s1, 1
    %585 = vst [vmem:[%s584] sm:%s583] %v582
    %s586 = scalar_lea.vmem [#allocation0], 16
    %v587 = vld [vmem:[%s586] sm:%s576]
    %s588 = sshllo.u32 0, 1
    %s589 = smul.addr 1, 2
    %s590 = scalar_lea.vmem %s1, %s589
    %591 = vst [vmem:[%s590] sm:%s588] %v587
    %s592 = scalar_lea.vmem [#allocation0], 24
    %v593 = vld [vmem:[%s592] sm:%s576]
    %s594 = sshllo.u32 0, 1
    %s595 = smul.addr 1, 3
    %s596 = scalar_lea.vmem %s1, %s595
    %597 = vst [vmem:[%s596] sm:%s594] %v593

// kernel: _lambda_.7
$region0: #{_lambda_.7}
  #allocation0 [shape = 'u32[]', space=smem, size = 0x4, offset = 0x4, fixed_abs, tag = 'smem constant byte address 0x4 - core index']
  #allocation1 [shape = 'u32[144,128]{1,0:T(1,128)}', space=vmem, size = 0x12000, scoped, tag = 'internal scratch']
  %s0 = inlined_call_operand.hbm [shape: f32[208,816], index: 0, kind: input, shape index: {}]
  %s1 = inlined_call_operand.vmem [shape: f32[816,512], index: 1, kind: input, shape index: {}]
  %s2 = inlined_call_operand.vmem [shape: f32[1,512], index: 2, kind: input, shape index: {}]
  %s3 = inlined_call_operand.vmem [shape: f32[208,512], index: 3, kind: output, shape index: {}]
  %s4 = sld [smem:[#allocation0]]
  $region26: #{_lambda_.7} parent=0
    _
  %s6 = ssub.s32 1, %s4
  %s7 = scalar_select 0, %s6, %s4
  $region1: #{_lambda_.7} parent=0
    #allocation2 [shape = 'u8[745472]{0}', space=vmem, size = 0xb6000, scoped, tag = 'input window, operand 0, single buffered']
    #allocation3 [shape = 's32[1]{0}', space=sflag, size = 0x4, scoped, tag = 'scoped memory for _lambda_.7']
    %8 = vsyncpa [#allocation3], 0
    // Predicated region
    $region2: #{_lambda_.7} parent=1 // pred_check
      _
    $region3: #{_lambda_.7} parent=1 // pred_check_branch
      %10 = sbr.rel (0) target = $region5
    $region4: #{_lambda_.7} parent=1 // pred_region
      %s12 = ssub.s32 23296, 23296
      %13 = vsyncadd [#allocation3], %s12
      %s14 = sshll.u32 [#allocation2], 4
      %s15 = int_to_ptr.vmem [resolvable:$true] %s14
      %20 = dma.hbm_to_vmem [thread:$0]  %s0, 23296, %s15, [#allocation3], 896, 896, 56
    $region5: #{_lambda_.7} parent=1 // pred_fallthru
      _
    // Predicated region
    $region6: #{_lambda_.7} parent=1 // pred_check
      _
    $region7: #{_lambda_.7} parent=1 // pred_check_branch
      %22 = sbr.rel (0) target = $region9
    $region8: #{_lambda_.7} parent=1 // pred_region
      _
    $region9: #{_lambda_.7} parent=1 // pred_fallthru
      _
    // Predicated region
    $region10: #{_lambda_.7} parent=1 // pred_check
      _
    $region11: #{_lambda_.7} parent=1 // pred_check_branch
      %24 = sbr.rel (0) target = $region13
    $region12: #{_lambda_.7} parent=1 // pred_region
      _
    $region13: #{_lambda_.7} parent=1 // pred_fallthru
      _
    // Predicated region
    $region14: #{_lambda_.7} parent=1 // pred_check
      _
    $region15: #{_lambda_.7} parent=1 // pred_check_branch
      %26 = sbr.rel (0) target = $region17
    $region16: #{_lambda_.7} parent=1 // pred_region
      %27 = dma.done [#allocation3], 23296
    $region17: #{_lambda_.7} parent=1 // pred_fallthru
      _
    %v28 = vld [vmem:[#allocation2] sm:$0xff]
    %v29 = vld [vmem:[#allocation2 + $0x8] sm:$0xff]
    %v30 = vld [vmem:[#allocation2 + $0x10] sm:$0xff]
    %v31 = vld [vmem:[#allocation2 + $0x18] sm:$0xff]
    %v32 = vld [vmem:[#allocation2 + $0x20] sm:$0xff]
    %v33 = vld [vmem:[#allocation2 + $0x28] sm:$0xff]
    %v34 = vld [vmem:[#allocation2 + $0x30] sm:$0xff]
    %v35 = vld [vmem:[#allocation2 + $0x38] sm:$0xff]
    %v36 = vld [vmem:[#allocation2 + $0x40] sm:$0xff]
    %v37 = vld [vmem:[#allocation2 + $0x48] sm:$0xff]
    %v38 = vld [vmem:[#allocation2 + $0x50] sm:$0xff]
    %v39 = vld [vmem:[#allocation2 + $0x58] sm:$0xff]
    %v40 = vld [vmem:[#allocation2 + $0x60] sm:$0xff]
    %v41 = vld [vmem:[#allocation2 + $0x68] sm:$0xff]
    %v42 = vld [vmem:[#allocation2 + $0x70] sm:$0xff]
    %v43 = vld [vmem:[#allocation2 + $0x78] sm:$0xff]
    %v44 = vld [vmem:[#allocation2 + $0x80] sm:$0xff]
    %v45 = vld [vmem:[#allocation2 + $0x88] sm:$0xff]
    %v46 = vld [vmem:[#allocation2 + $0x90] sm:$0xff]
    %v47 = vld [vmem:[#allocation2 + $0x98] sm:$0xff]
    %v48 = vld [vmem:[#allocation2 + $0xa0] sm:$0xff]
    %v49 = vld [vmem:[#allocation2 + $0xa8] sm:$0xff]
    %v50 = vld [vmem:[#allocation2 + $0xb0] sm:$0xff]
    %v51 = vld [vmem:[#allocation2 + $0xb8] sm:$0xff]
    %v52 = vld [vmem:[#allocation2 + $0xc0] sm:$0xff]
    %v53 = vld [vmem:[#allocation2 + $0xc8] sm:$0xff]
    %v54 = vld [vmem:[#allocation2 + $0xd0] sm:$0xff]
    %v55 = vld [vmem:[#allocation2 + $0xd8] sm:$0xff]
    %v56 = vld [vmem:[#allocation2 + $0xe0] sm:$0xff]
    %v57 = vld [vmem:[#allocation2 + $0xe8] sm:$0xff]
    %v58 = vld [vmem:[#allocation2 + $0xf0] sm:$0xff]
    %v59 = vld [vmem:[#allocation2 + $0xf8] sm:$0xff]
    %v60 = vld [vmem:[#allocation2 + $0x100] sm:$0xff]
    %v61 = vld [vmem:[#allocation2 + $0x108] sm:$0xff]
    %v62 = vld [vmem:[#allocation2 + $0x110] sm:$0xff]
    %v63 = vld [vmem:[#allocation2 + $0x118] sm:$0xff]
    %v64 = vld [vmem:[#allocation2 + $0x120] sm:$0xff]
    %v65 = vld [vmem:[#allocation2 + $0x128] sm:$0xff]
    %v66 = vld [vmem:[#allocation2 + $0x130] sm:$0xff]
    %v67 = vld [vmem:[#allocation2 + $0x138] sm:$0xff]
    %v68 = vld [vmem:[#allocation2 + $0x140] sm:$0xff]
    %v69 = vld [vmem:[#allocation2 + $0x148] sm:$0xff]
    %v70 = vld [vmem:[#allocation2 + $0x150] sm:$0xff]
    %v71 = vld [vmem:[#allocation2 + $0x158] sm:$0xff]
    %v72 = vld [vmem:[#allocation2 + $0x160] sm:$0xff]
    %v73 = vld [vmem:[#allocation2 + $0x168] sm:$0xff]
    %v74 = vld [vmem:[#allocation2 + $0x170] sm:$0xff]
    %v75 = vld [vmem:[#allocation2 + $0x178] sm:$0xff]
    %v76 = vld [vmem:[#allocation2 + $0x180] sm:$0xff]
    %v77 = vld [vmem:[#allocation2 + $0x188] sm:$0xff]
    %v78 = vld [vmem:[#allocation2 + $0x190] sm:$0xff]
    %v79 = vld [vmem:[#allocation2 + $0x198] sm:$0xff]
    %v80 = vld [vmem:[#allocation2 + $0x1a0] sm:$0xff]
    %v81 = vld [vmem:[#allocation2 + $0x1a8] sm:$0xff]
    %v82 = vld [vmem:[#allocation2 + $0x1b0] sm:$0xff]
    %v83 = vld [vmem:[#allocation2 + $0x1b8] sm:$0xff]
    %v84 = vld [vmem:[#allocation2 + $0x1c0] sm:$0xff]
    %v85 = vld [vmem:[#allocation2 + $0x1c8] sm:$0xff]
    %v86 = vld [vmem:[#allocation2 + $0x1d0] sm:$0xff]
    %v87 = vld [vmem:[#allocation2 + $0x1d8] sm:$0xff]
    %v88 = vld [vmem:[#allocation2 + $0x1e0] sm:$0xff]
    %v89 = vld [vmem:[#allocation2 + $0x1e8] sm:$0xff]
    %v90 = vld [vmem:[#allocation2 + $0x1f0] sm:$0xff]
    %v91 = vld [vmem:[#allocation2 + $0x1f8] sm:$0xff]
    %v92 = vld [vmem:[#allocation2 + $0x200] sm:$0xff]
    %v93 = vld [vmem:[#allocation2 + $0x208] sm:$0xff]
    %v94 = vld [vmem:[#allocation2 + $0x210] sm:$0xff]
    %v95 = vld [vmem:[#allocation2 + $0x218] sm:$0xff]
    %v96 = vld [vmem:[#allocation2 + $0x220] sm:$0xff]
    %v97 = vld [vmem:[#allocation2 + $0x228] sm:$0xff]
    %v98 = vld [vmem:[#allocation2 + $0x230] sm:$0xff]
    %v99 = vld [vmem:[#allocation2 + $0x238] sm:$0xff]
    %v100 = vld [vmem:[#allocation2 + $0x240] sm:$0xff]
    %v101 = vld [vmem:[#allocation2 + $0x248] sm:$0xff]
    %v102 = vld [vmem:[#allocation2 + $0x250] sm:$0xff]
    %v103 = vld [vmem:[#allocation2 + $0x258] sm:$0xff]
    %v104 = vld [vmem:[#allocation2 + $0x260] sm:$0xff]
    %v105 = vld [vmem:[#allocation2 + $0x268] sm:$0xff]
    %v106 = vld [vmem:[#allocation2 + $0x270] sm:$0xff]
    %v107 = vld [vmem:[#allocation2 + $0x278] sm:$0xff]
    %v108 = vld [vmem:[#allocation2 + $0x280] sm:$0xff]
    %v109 = vld [vmem:[#allocation2 + $0x288] sm:$0xff]
    %v110 = vld [vmem:[#allocation2 + $0x290] sm:$0xff]
    %v111 = vld [vmem:[#allocation2 + $0x298] sm:$0xff]
    %v112 = vld [vmem:[#allocation2 + $0x2a0] sm:$0xff]
    %v113 = vld [vmem:[#allocation2 + $0x2a8] sm:$0xff]
    %v114 = vld [vmem:[#allocation2 + $0x2b0] sm:$0xff]
    %v115 = vld [vmem:[#allocation2 + $0x2b8] sm:$0xff]
    %v116 = vld [vmem:[#allocation2 + $0x2c0] sm:$0xff]
    %v117 = vld [vmem:[#allocation2 + $0x2c8] sm:$0xff]
    %v118 = vld [vmem:[#allocation2 + $0x2d0] sm:$0xff]
    %v119 = vld [vmem:[#allocation2 + $0x2d8] sm:$0xff]
    %v120 = vld [vmem:[#allocation2 + $0x2e0] sm:$0xff]
    %v121 = vld [vmem:[#allocation2 + $0x2e8] sm:$0xff]
    %v122 = vld [vmem:[#allocation2 + $0x2f0] sm:$0xff]
    %v123 = vld [vmem:[#allocation2 + $0x2f8] sm:$0xff]
    %v124 = vld [vmem:[#allocation2 + $0x300] sm:$0xff]
    %v125 = vld [vmem:[#allocation2 + $0x308] sm:$0xff]
    %v126 = vld [vmem:[#allocation2 + $0x310] sm:$0xff]
    %v127 = vld [vmem:[#allocation2 + $0x318] sm:$0xff]
    %v128 = vld [vmem:[#allocation2 + $0x320] sm:$0xff]
    %v129 = vld [vmem:[#allocation2 + $0x328] sm:$0xff]
    %v130 = vld [vmem:[#allocation2 + $0x330] sm:$0xff]
    %v131 = vld [vmem:[#allocation2 + $0x338] sm:$0xff]
    %v132 = vld [vmem:[#allocation2 + $0x340] sm:$0xff]
    %v133 = vld [vmem:[#allocation2 + $0x348] sm:$0xff]
    %v134 = vld [vmem:[#allocation2 + $0x350] sm:$0xff]
    %v135 = vld [vmem:[#allocation2 + $0x358] sm:$0xff]
    %v136 = vld [vmem:[#allocation2 + $0x360] sm:$0xff]
    %v137 = vld [vmem:[#allocation2 + $0x368] sm:$0xff]
    %v138 = vld [vmem:[#allocation2 + $0x370] sm:$0xff]
    %v139 = vld [vmem:[#allocation2 + $0x378] sm:$0xff]
    %v140 = vld [vmem:[#allocation2 + $0x380] sm:$0xff]
    %v141 = vld [vmem:[#allocation2 + $0x388] sm:$0xff]
    %v142 = vld [vmem:[#allocation2 + $0x390] sm:$0xff]
    %v143 = vld [vmem:[#allocation2 + $0x398] sm:$0xff]
    %v144 = vld [vmem:[#allocation2 + $0x3a0] sm:$0xff]
    %v145 = vld [vmem:[#allocation2 + $0x3a8] sm:$0xff]
    %v146 = vld [vmem:[#allocation2 + $0x3b0] sm:$0xff]
    %v147 = vld [vmem:[#allocation2 + $0x3b8] sm:$0xff]
    %v148 = vld [vmem:[#allocation2 + $0x3c0] sm:$0xff]
    %v149 = vld [vmem:[#allocation2 + $0x3c8] sm:$0xff]
    %v150 = vld [vmem:[#allocation2 + $0x3d0] sm:$0xff]
    %v151 = vld [vmem:[#allocation2 + $0x3d8] sm:$0xff]
    %v152 = vld [vmem:[#allocation2 + $0x3e0] sm:$0xff]
    %v153 = vld [vmem:[#allocation2 + $0x3e8] sm:$0xff]
    %v154 = vld [vmem:[#allocation2 + $0x3f0] sm:$0xff]
    %v155 = vld [vmem:[#allocation2 + $0x3f8] sm:$0xff]
    %v156 = vld [vmem:[#allocation2 + $0x400] sm:$0xff]
    %v157 = vld [vmem:[#allocation2 + $0x408] sm:$0xff]
    %v158 = vld [vmem:[#allocation2 + $0x410] sm:$0xff]
    %v159 = vld [vmem:[#allocation2 + $0x418] sm:$0xff]
    %v160 = vld [vmem:[#allocation2 + $0x420] sm:$0xff]
    %v161 = vld [vmem:[#allocation2 + $0x428] sm:$0xff]
    %v162 = vld [vmem:[#allocation2 + $0x430] sm:$0xff]
    %v163 = vld [vmem:[#allocation2 + $0x438] sm:$0xff]
    %v164 = vld [vmem:[#allocation2 + $0x440] sm:$0xff]
    %v165 = vld [vmem:[#allocation2 + $0x448] sm:$0xff]
    %v166 = vld [vmem:[#allocation2 + $0x450] sm:$0xff]
    %v167 = vld [vmem:[#allocation2 + $0x458] sm:$0xff]
    %v168 = vld [vmem:[#allocation2 + $0x460] sm:$0xff]
    %v169 = vld [vmem:[#allocation2 + $0x468] sm:$0xff]
    %v170 = vld [vmem:[#allocation2 + $0x470] sm:$0xff]
    %v171 = vld [vmem:[#allocation2 + $0x478] sm:$0xff]
    %v172 = vld [vmem:[#allocation2 + $0x480] sm:$0xff]
    %v173 = vld [vmem:[#allocation2 + $0x488] sm:$0xff]
    %v174 = vld [vmem:[#allocation2 + $0x490] sm:$0xff]
    %v175 = vld [vmem:[#allocation2 + $0x498] sm:$0xff]
    %v176 = vld [vmem:[#allocation2 + $0x4a0] sm:$0xff]
    %v177 = vld [vmem:[#allocation2 + $0x4a8] sm:$0xff]
    %v178 = vld [vmem:[#allocation2 + $0x4b0] sm:$0xff]
    %v179 = vld [vmem:[#allocation2 + $0x4b8] sm:$0xff]
    %v180 = vld [vmem:[#allocation2 + $0x4c0] sm:$0xff]
    %v181 = vld [vmem:[#allocation2 + $0x4c8] sm:$0xff]
    %v182 = vld [vmem:[#allocation2 + $0x4d0] sm:$0xff]
    %v183 = vld [vmem:[#allocation2 + $0x4d8] sm:$0xff]
    %v184 = vld [vmem:[#allocation2 + $0x4e0] sm:$0xff]
    %v185 = vld [vmem:[#allocation2 + $0x4e8] sm:$0xff]
    %v186 = vld [vmem:[#allocation2 + $0x4f0] sm:$0xff]
    %v187 = vld [vmem:[#allocation2 + $0x4f8] sm:$0xff]
    %v188 = vld [vmem:[#allocation2 + $0x500] sm:$0xff]
    %v189 = vld [vmem:[#allocation2 + $0x508] sm:$0xff]
    %v190 = vld [vmem:[#allocation2 + $0x510] sm:$0xff]
    %v191 = vld [vmem:[#allocation2 + $0x518] sm:$0xff]
    %v192 = vld [vmem:[#allocation2 + $0x520] sm:$0xff]
    %v193 = vld [vmem:[#allocation2 + $0x528] sm:$0xff]
    %v194 = vld [vmem:[#allocation2 + $0x530] sm:$0xff]
    %v195 = vld [vmem:[#allocation2 + $0x538] sm:$0xff]
    %v196 = vld [vmem:[#allocation2 + $0x540] sm:$0xff]
    %v197 = vld [vmem:[#allocation2 + $0x548] sm:$0xff]
    %v198 = vld [vmem:[#allocation2 + $0x550] sm:$0xff]
    %v199 = vld [vmem:[#allocation2 + $0x558] sm:$0xff]
    %v200 = vld [vmem:[#allocation2 + $0x560] sm:$0xff]
    %v201 = vld [vmem:[#allocation2 + $0x568] sm:$0xff]
    %v202 = vld [vmem:[#allocation2 + $0x570] sm:$0xff]
    %v203 = vld [vmem:[#allocation2 + $0x578] sm:$0xff]
    %v204 = vld [vmem:[#allocation2 + $0x580] sm:$0xff]
    %v205 = vld [vmem:[#allocation2 + $0x588] sm:$0xff]
    %v206 = vld [vmem:[#allocation2 + $0x590] sm:$0xff]
    %v207 = vld [vmem:[#allocation2 + $0x598] sm:$0xff]
    %v208 = vld [vmem:[#allocation2 + $0x5a0] sm:$0xff]
    %v209 = vld [vmem:[#allocation2 + $0x5a8] sm:$0xff]
    %v210 = vld [vmem:[%s1] sm:$0xff]
    %v211 = vld [vmem:[%s1 + $0x8] sm:$0xff]
    %v212 = vld [vmem:[%s1 + $0x10] sm:$0xff]
    %v213 = vld [vmem:[%s1 + $0x18] sm:$0xff]
    %v214 = vld [vmem:[%s1 + $0x20] sm:$0xff]
    %v215 = vld [vmem:[%s1 + $0x28] sm:$0xff]
    %v216 = vld [vmem:[%s1 + $0x30] sm:$0xff]
    %v217 = vld [vmem:[%s1 + $0x38] sm:$0xff]
    %v218 = vld [vmem:[%s1 + $0x40] sm:$0xff]
    %v219 = vld [vmem:[%s1 + $0x48] sm:$0xff]
    %v220 = vld [vmem:[%s1 + $0x50] sm:$0xff]
    %v221 = vld [vmem:[%s1 + $0x58] sm:$0xff]
    %v222 = vld [vmem:[%s1 + $0x60] sm:$0xff]
    %v223 = vld [vmem:[%s1 + $0x68] sm:$0xff]
    %v224 = vld [vmem:[%s1 + $0x70] sm:$0xff]
    %v225 = vld [vmem:[%s1 + $0x78] sm:$0xff]
    %v226 = vld [vmem:[%s1 + $0x80] sm:$0xff]
    %v227 = vld [vmem:[%s1 + $0x88] sm:$0xff]
    %v228 = vld [vmem:[%s1 + $0x90] sm:$0xff]
    %v229 = vld [vmem:[%s1 + $0x98] sm:$0xff]
    %v230 = vld [vmem:[%s1 + $0xa0] sm:$0xff]
    %v231 = vld [vmem:[%s1 + $0xa8] sm:$0xff]
    %v232 = vld [vmem:[%s1 + $0xb0] sm:$0xff]
    %v233 = vld [vmem:[%s1 + $0xb8] sm:$0xff]
    %v234 = vld [vmem:[%s1 + $0xc0] sm:$0xff]
    %v235 = vld [vmem:[%s1 + $0xc8] sm:$0xff]
    %v236 = vld [vmem:[%s1 + $0xd0] sm:$0xff]
    %v237 = vld [vmem:[%s1 + $0xd8] sm:$0xff]
    %v238 = vld [vmem:[%s1 + $0xe0] sm:$0xff]
    %v239 = vld [vmem:[%s1 + $0xe8] sm:$0xff]
    %v240 = vld [vmem:[%s1 + $0xf0] sm:$0xff]
    %v241 = vld [vmem:[%s1 + $0xf8] sm:$0xff]
    %v242 = vld [vmem:[%s1 + $0x100] sm:$0xff]
    %v243 = vld [vmem:[%s1 + $0x108] sm:$0xff]
    %v244 = vld [vmem:[%s1 + $0x110] sm:$0xff]
    %v245 = vld [vmem:[%s1 + $0x118] sm:$0xff]
    %v246 = vld [vmem:[%s1 + $0x120] sm:$0xff]
    %v247 = vld [vmem:[%s1 + $0x128] sm:$0xff]
    %v248 = vld [vmem:[%s1 + $0x130] sm:$0xff]
    %v249 = vld [vmem:[%s1 + $0x138] sm:$0xff]
    %v250 = vld [vmem:[%s1 + $0x140] sm:$0xff]
    %v251 = vld [vmem:[%s1 + $0x148] sm:$0xff]
    %v252 = vld [vmem:[%s1 + $0x150] sm:$0xff]
    %v253 = vld [vmem:[%s1 + $0x158] sm:$0xff]
    %v254 = vld [vmem:[%s1 + $0x160] sm:$0xff]
    %v255 = vld [vmem:[%s1 + $0x168] sm:$0xff]
    %v256 = vld [vmem:[%s1 + $0x170] sm:$0xff]
    %v257 = vld [vmem:[%s1 + $0x178] sm:$0xff]
    %v258 = vld [vmem:[%s1 + $0x180] sm:$0xff]
    %v259 = vld [vmem:[%s1 + $0x188] sm:$0xff]
    %v260 = vld [vmem:[%s1 + $0x190] sm:$0xff]
    %v261 = vld [vmem:[%s1 + $0x198] sm:$0xff]
    %v262 = vld [vmem:[%s1 + $0x1a0] sm:$0xff]
    %v263 = vld [vmem:[%s1 + $0x1a8] sm:$0xff]
    %v264 = vld [vmem:[%s1 + $0x1b0] sm:$0xff]
    %v265 = vld [vmem:[%s1 + $0x1b8] sm:$0xff]
    %v266 = vld [vmem:[%s1 + $0x1c0] sm:$0xff]
    %v267 = vld [vmem:[%s1 + $0x1c8] sm:$0xff]
    %v268 = vld [vmem:[%s1 + $0x1d0] sm:$0xff]
    %v269 = vld [vmem:[%s1 + $0x1d8] sm:$0xff]
    %v270 = vld [vmem:[%s1 + $0x1e0] sm:$0xff]
    %v271 = vld [vmem:[%s1 + $0x1e8] sm:$0xff]
    %v272 = vld [vmem:[%s1 + $0x1f0] sm:$0xff]
    %v273 = vld [vmem:[%s1 + $0x1f8] sm:$0xff]
    %v274 = vld [vmem:[%s1 + $0x200] sm:$0xff]
    %v275 = vld [vmem:[%s1 + $0x208] sm:$0xff]
    %v276 = vld [vmem:[%s1 + $0x210] sm:$0xff]
    %v277 = vld [vmem:[%s1 + $0x218] sm:$0xff]
    %v278 = vld [vmem:[%s1 + $0x220] sm:$0xff]
    %v279 = vld [vmem:[%s1 + $0x228] sm:$0xff]
    %v280 = vld [vmem:[%s1 + $0x230] sm:$0xff]
    %v281 = vld [vmem:[%s1 + $0x238] sm:$0xff]
    %v282 = vld [vmem:[%s1 + $0x240] sm:$0xff]
    %v283 = vld [vmem:[%s1 + $0x248] sm:$0xff]
    %v284 = vld [vmem:[%s1 + $0x250] sm:$0xff]
    %v285 = vld [vmem:[%s1 + $0x258] sm:$0xff]
    %v286 = vld [vmem:[%s1 + $0x260] sm:$0xff]
    %v287 = vld [vmem:[%s1 + $0x268] sm:$0xff]
    %v288 = vld [vmem:[%s1 + $0x270] sm:$0xff]
    %v289 = vld [vmem:[%s1 + $0x278] sm:$0xff]
    %v290 = vld [vmem:[%s1 + $0x280] sm:$0xff]
    %v291 = vld [vmem:[%s1 + $0x288] sm:$0xff]
    %v292 = vld [vmem:[%s1 + $0x290] sm:$0xff]
    %v293 = vld [vmem:[%s1 + $0x298] sm:$0xff]
    %v294 = vld [vmem:[%s1 + $0x2a0] sm:$0xff]
    %v295 = vld [vmem:[%s1 + $0x2a8] sm:$0xff]
    %v296 = vld [vmem:[%s1 + $0x2b0] sm:$0xff]
    %v297 = vld [vmem:[%s1 + $0x2b8] sm:$0xff]
    %v298 = vld [vmem:[%s1 + $0x2c0] sm:$0xff]
    %v299 = vld [vmem:[%s1 + $0x2c8] sm:$0xff]
    %v300 = vld [vmem:[%s1 + $0x2d0] sm:$0xff]
    %v301 = vld [vmem:[%s1 + $0x2d8] sm:$0xff]
    %v302 = vld [vmem:[%s1 + $0x2e0] sm:$0xff]
    %v303 = vld [vmem:[%s1 + $0x2e8] sm:$0xff]
    %v304 = vld [vmem:[%s1 + $0x2f0] sm:$0xff]
    %v305 = vld [vmem:[%s1 + $0x2f8] sm:$0xff]
    %v306 = vld [vmem:[%s1 + $0x300] sm:$0xff]
    %v307 = vld [vmem:[%s1 + $0x308] sm:$0xff]
    %v308 = vld [vmem:[%s1 + $0x310] sm:$0xff]
    %v309 = vld [vmem:[%s1 + $0x318] sm:$0xff]
    %v310 = vld [vmem:[%s1 + $0x320] sm:$0xff]
    %v311 = vld [vmem:[%s1 + $0x328] sm:$0xff]
    %v312 = vld [vmem:[%s1 + $0x330] sm:$0xff]
    %v313 = vld [vmem:[%s1 + $0x338] sm:$0xff]
    %v314 = vld [vmem:[%s1 + $0x340] sm:$0xff]
    %v315 = vld [vmem:[%s1 + $0x348] sm:$0xff]
    %v316 = vld [vmem:[%s1 + $0x350] sm:$0xff]
    %v317 = vld [vmem:[%s1 + $0x358] sm:$0xff]
    %v318 = vld [vmem:[%s1 + $0x360] sm:$0xff]
    %v319 = vld [vmem:[%s1 + $0x368] sm:$0xff]
    %v320 = vld [vmem:[%s1 + $0x370] sm:$0xff]
    %v321 = vld [vmem:[%s1 + $0x378] sm:$0xff]
    %v322 = vld [vmem:[%s1 + $0x380] sm:$0xff]
    %v323 = vld [vmem:[%s1 + $0x388] sm:$0xff]
    %v324 = vld [vmem:[%s1 + $0x390] sm:$0xff]
    %v325 = vld [vmem:[%s1 + $0x398] sm:$0xff]
    %v326 = vld [vmem:[%s1 + $0x3a0] sm:$0xff]
    %v327 = vld [vmem:[%s1 + $0x3a8] sm:$0xff]
    %v328 = vld [vmem:[%s1 + $0x3b0] sm:$0xff]
    %v329 = vld [vmem:[%s1 + $0x3b8] sm:$0xff]
    %v330 = vld [vmem:[%s1 + $0x3c0] sm:$0xff]
    %v331 = vld [vmem:[%s1 + $0x3c8] sm:$0xff]
    %v332 = vld [vmem:[%s1 + $0x3d0] sm:$0xff]
    %v333 = vld [vmem:[%s1 + $0x3d8] sm:$0xff]
    %v334 = vld [vmem:[%s1 + $0x3e0] sm:$0xff]
    %v335 = vld [vmem:[%s1 + $0x3e8] sm:$0xff]
    %v336 = vld [vmem:[%s1 + $0x3f0] sm:$0xff]
    %v337 = vld [vmem:[%s1 + $0x3f8] sm:$0xff]
    %v338 = vld [vmem:[%s1 + $0x400] sm:$0xff]
    %v339 = vld [vmem:[%s1 + $0x408] sm:$0xff]
    %v340 = vld [vmem:[%s1 + $0x410] sm:$0xff]
    %v341 = vld [vmem:[%s1 + $0x418] sm:$0xff]
    %v342 = vld [vmem:[%s1 + $0x420] sm:$0xff]
    %v343 = vld [vmem:[%s1 + $0x428] sm:$0xff]
    %v344 = vld [vmem:[%s1 + $0x430] sm:$0xff]
    %v345 = vld [vmem:[%s1 + $0x438] sm:$0xff]
    %v346 = vld [vmem:[%s1 + $0x440] sm:$0xff]
    %v347 = vld [vmem:[%s1 + $0x448] sm:$0xff]
    %v348 = vld [vmem:[%s1 + $0x450] sm:$0xff]
    %v349 = vld [vmem:[%s1 + $0x458] sm:$0xff]
    %v350 = vld [vmem:[%s1 + $0x460] sm:$0xff]
    %v351 = vld [vmem:[%s1 + $0x468] sm:$0xff]
    %v352 = vld [vmem:[%s1 + $0x470] sm:$0xff]
    %v353 = vld [vmem:[%s1 + $0x478] sm:$0xff]
    %v354 = vld [vmem:[%s1 + $0x480] sm:$0xff]
    %v355 = vld [vmem:[%s1 + $0x488] sm:$0xff]
    %v356 = vld [vmem:[%s1 + $0x490] sm:$0xff]
    %v357 = vld [vmem:[%s1 + $0x498] sm:$0xff]
    %v358 = vld [vmem:[%s1 + $0x4a0] sm:$0xff]
    %v359 = vld [vmem:[%s1 + $0x4a8] sm:$0xff]
    %v360 = vld [vmem:[%s1 + $0x4b0] sm:$0xff]
    %v361 = vld [vmem:[%s1 + $0x4b8] sm:$0xff]
    %v362 = vld [vmem:[%s1 + $0x4c0] sm:$0xff]
    %v363 = vld [vmem:[%s1 + $0x4c8] sm:$0xff]
    %v364 = vld [vmem:[%s1 + $0x4d0] sm:$0xff]
    %v365 = vld [vmem:[%s1 + $0x4d8] sm:$0xff]
    %v366 = vld [vmem:[%s1 + $0x4e0] sm:$0xff]
    %v367 = vld [vmem:[%s1 + $0x4e8] sm:$0xff]
    %v368 = vld [vmem:[%s1 + $0x4f0] sm:$0xff]
    %v369 = vld [vmem:[%s1 + $0x4f8] sm:$0xff]
    %v370 = vld [vmem:[%s1 + $0x500] sm:$0xff]
    %v371 = vld [vmem:[%s1 + $0x508] sm:$0xff]
    %v372 = vld [vmem:[%s1 + $0x510] sm:$0xff]
    %v373 = vld [vmem:[%s1 + $0x518] sm:$0xff]
    %v374 = vld [vmem:[%s1 + $0x520] sm:$0xff]
    %v375 = vld [vmem:[%s1 + $0x528] sm:$0xff]
    %v376 = vld [vmem:[%s1 + $0x530] sm:$0xff]
    %v377 = vld [vmem:[%s1 + $0x538] sm:$0xff]
    %v378 = vld [vmem:[%s1 + $0x540] sm:$0xff]
    %v379 = vld [vmem:[%s1 + $0x548] sm:$0xff]
    %v380 = vld [vmem:[%s1 + $0x550] sm:$0xff]
    %v381 = vld [vmem:[%s1 + $0x558] sm:$0xff]
    %v382 = vld [vmem:[%s1 + $0x560] sm:$0xff]
    %v383 = vld [vmem:[%s1 + $0x568] sm:$0xff]
    %v384 = vld [vmem:[%s1 + $0x570] sm:$0xff]
    %v385 = vld [vmem:[%s1 + $0x578] sm:$0xff]
    %v386 = vld [vmem:[%s1 + $0x580] sm:$0xff]
    %v387 = vld [vmem:[%s1 + $0x588] sm:$0xff]
    %v388 = vld [vmem:[%s1 + $0x590] sm:$0xff]
    %v389 = vld [vmem:[%s1 + $0x598] sm:$0xff]
    %v390 = vld [vmem:[%s1 + $0x5a0] sm:$0xff]
    %v391 = vld [vmem:[%s1 + $0x5a8] sm:$0xff]
    %v392 = vld [vmem:[%s1 + $0x5b0] sm:$0xff]
    %v393 = vld [vmem:[%s1 + $0x5b8] sm:$0xff]
    %v394 = vld [vmem:[%s1 + $0x5c0] sm:$0xff]
    %v395 = vld [vmem:[%s1 + $0x5c8] sm:$0xff]
    %v396 = vld [vmem:[%s1 + $0x5d0] sm:$0xff]
    %v397 = vld [vmem:[%s1 + $0x5d8] sm:$0xff]
    %v398 = vld [vmem:[%s1 + $0x5e0] sm:$0xff]
    %v399 = vld [vmem:[%s1 + $0x5e8] sm:$0xff]
    %v400 = vld [vmem:[%s1 + $0x5f0] sm:$0xff]
    %v401 = vld [vmem:[%s1 + $0x5f8] sm:$0xff]
    %v402 = vld [vmem:[%s1 + $0x600] sm:$0xff]
    %v403 = vld [vmem:[%s1 + $0x608] sm:$0xff]
    %v404 = vld [vmem:[%s1 + $0x610] sm:$0xff]
    %v405 = vld [vmem:[%s1 + $0x618] sm:$0xff]
    %v406 = vld [vmem:[%s1 + $0x620] sm:$0xff]
    %v407 = vld [vmem:[%s1 + $0x628] sm:$0xff]
    %v408 = vld [vmem:[%s1 + $0x630] sm:$0xff]
    %v409 = vld [vmem:[%s1 + $0x638] sm:$0xff]
    %v410 = vld [vmem:[%s1 + $0x640] sm:$0xff]
    %v411 = vld [vmem:[%s1 + $0x648] sm:$0xff]
    %v412 = vld [vmem:[%s1 + $0x650] sm:$0xff]
    %v413 = vld [vmem:[%s1 + $0x658] sm:$0xff]
    %v414 = vld [vmem:[%s1 + $0x660] sm:$0xff]
    %v415 = vld [vmem:[%s1 + $0x668] sm:$0xff]
    %v416 = vld [vmem:[%s1 + $0x670] sm:$0xff]
    %v417 = vld [vmem:[%s1 + $0x678] sm:$0xff]
    %v418 = vld [vmem:[%s1 + $0x680] sm:$0xff]
    %v419 = vld [vmem:[%s1 + $0x688] sm:$0xff]
    %v420 = vld [vmem:[%s1 + $0x690] sm:$0xff]
    %v421 = vld [vmem:[%s1 + $0x698] sm:$0xff]
    %v422 = vld [vmem:[%s1 + $0x6a0] sm:$0xff]
    %v423 = vld [vmem:[%s1 + $0x6a8] sm:$0xff]
    %v424 = vld [vmem:[%s1 + $0x6b0] sm:$0xff]
    %v425 = vld [vmem:[%s1 + $0x6b8] sm:$0xff]
    %v426 = vld [vmem:[%s1 + $0x6c0] sm:$0xff]
    %v427 = vld [vmem:[%s1 + $0x6c8] sm:$0xff]
    %v428 = vld [vmem:[%s1 + $0x6d0] sm:$0xff]
    %v429 = vld [vmem:[%s1 + $0x6d8] sm:$0xff]
    %v430 = vld [vmem:[%s1 + $0x6e0] sm:$0xff]
    %v431 = vld [vmem:[%s1 + $0x6e8] sm:$0xff]
    %v432 = vld [vmem:[%s1 + $0x6f0] sm:$0xff]
    %v433 = vld [vmem:[%s1 + $0x6f8] sm:$0xff]
    %v434 = vld [vmem:[%s1 + $0x700] sm:$0xff]
    %v435 = vld [vmem:[%s1 + $0x708] sm:$0xff]
    %v436 = vld [vmem:[%s1 + $0x710] sm:$0xff]
    %v437 = vld [vmem:[%s1 + $0x718] sm:$0xff]
    %v438 = vld [vmem:[%s1 + $0x720] sm:$0xff]
    %v439 = vld [vmem:[%s1 + $0x728] sm:$0xff]
    %v440 = vld [vmem:[%s1 + $0x730] sm:$0xff]
    %v441 = vld [vmem:[%s1 + $0x738] sm:$0xff]
    %v442 = vld [vmem:[%s1 + $0x740] sm:$0xff]
    %v443 = vld [vmem:[%s1 + $0x748] sm:$0xff]
    %v444 = vld [vmem:[%s1 + $0x750] sm:$0xff]
    %v445 = vld [vmem:[%s1 + $0x758] sm:$0xff]
    %v446 = vld [vmem:[%s1 + $0x760] sm:$0xff]
    %v447 = vld [vmem:[%s1 + $0x768] sm:$0xff]
    %v448 = vld [vmem:[%s1 + $0x770] sm:$0xff]
    %v449 = vld [vmem:[%s1 + $0x778] sm:$0xff]
    %v450 = vld [vmem:[%s1 + $0x780] sm:$0xff]
    %v451 = vld [vmem:[%s1 + $0x788] sm:$0xff]
    %v452 = vld [vmem:[%s1 + $0x790] sm:$0xff]
    %v453 = vld [vmem:[%s1 + $0x798] sm:$0xff]
    %v454 = vld [vmem:[%s1 + $0x7a0] sm:$0xff]
    %v455 = vld [vmem:[%s1 + $0x7a8] sm:$0xff]
    %v456 = vld [vmem:[%s1 + $0x7b0] sm:$0xff]
    %v457 = vld [vmem:[%s1 + $0x7b8] sm:$0xff]
    %v458 = vld [vmem:[%s1 + $0x7c0] sm:$0xff]
    %v459 = vld [vmem:[%s1 + $0x7c8] sm:$0xff]
    %v460 = vld [vmem:[%s1 + $0x7d0] sm:$0xff]
    %v461 = vld [vmem:[%s1 + $0x7d8] sm:$0xff]
    %v462 = vld [vmem:[%s1 + $0x7e0] sm:$0xff]
    %v463 = vld [vmem:[%s1 + $0x7e8] sm:$0xff]
    %v464 = vld [vmem:[%s1 + $0x7f0] sm:$0xff]
    %v465 = vld [vmem:[%s1 + $0x7f8] sm:$0xff]
    %v466 = vld [vmem:[%s1 + $0x800] sm:$0xff]
    %v467 = vld [vmem:[%s1 + $0x808] sm:$0xff]
    %v468 = vld [vmem:[%s1 + $0x810] sm:$0xff]
    %v469 = vld [vmem:[%s1 + $0x818] sm:$0xff]
    %v470 = vld [vmem:[%s1 + $0x820] sm:$0xff]
    %v471 = vld [vmem:[%s1 + $0x828] sm:$0xff]
    %v472 = vld [vmem:[%s1 + $0x830] sm:$0xff]
    %v473 = vld [vmem:[%s1 + $0x838] sm:$0xff]
    %v474 = vld [vmem:[%s1 + $0x840] sm:$0xff]
    %v475 = vld [vmem:[%s1 + $0x848] sm:$0xff]
    %v476 = vld [vmem:[%s1 + $0x850] sm:$0xff]
    %v477 = vld [vmem:[%s1 + $0x858] sm:$0xff]
    %v478 = vld [vmem:[%s1 + $0x860] sm:$0xff]
    %v479 = vld [vmem:[%s1 + $0x868] sm:$0xff]
    %v480 = vld [vmem:[%s1 + $0x870] sm:$0xff]
    %v481 = vld [vmem:[%s1 + $0x878] sm:$0xff]
    %v482 = vld [vmem:[%s1 + $0x880] sm:$0xff]
    %v483 = vld [vmem:[%s1 + $0x888] sm:$0xff]
    %v484 = vld [vmem:[%s1 + $0x890] sm:$0xff]
    %v485 = vld [vmem:[%s1 + $0x898] sm:$0xff]
    %v486 = vld [vmem:[%s1 + $0x8a0] sm:$0xff]
    %v487 = vld [vmem:[%s1 + $0x8a8] sm:$0xff]
    %v488 = vld [vmem:[%s1 + $0x8b0] sm:$0xff]
    %v489 = vld [vmem:[%s1 + $0x8b8] sm:$0xff]
    %v490 = vld [vmem:[%s1 + $0x8c0] sm:$0xff]
    %v491 = vld [vmem:[%s1 + $0x8c8] sm:$0xff]
    %v492 = vld [vmem:[%s1 + $0x8d0] sm:$0xff]
    %v493 = vld [vmem:[%s1 + $0x8d8] sm:$0xff]
    %v494 = vld [vmem:[%s1 + $0x8e0] sm:$0xff]
    %v495 = vld [vmem:[%s1 + $0x8e8] sm:$0xff]
    %v496 = vld [vmem:[%s1 + $0x8f0] sm:$0xff]
    %v497 = vld [vmem:[%s1 + $0x8f8] sm:$0xff]
    %v498 = vld [vmem:[%s1 + $0x900] sm:$0xff]
    %v499 = vld [vmem:[%s1 + $0x908] sm:$0xff]
    %v500 = vld [vmem:[%s1 + $0x910] sm:$0xff]
    %v501 = vld [vmem:[%s1 + $0x918] sm:$0xff]
    %v502 = vld [vmem:[%s1 + $0x920] sm:$0xff]
    %v503 = vld [vmem:[%s1 + $0x928] sm:$0xff]
    %v504 = vld [vmem:[%s1 + $0x930] sm:$0xff]
    %v505 = vld [vmem:[%s1 + $0x938] sm:$0xff]
    %v506 = vld [vmem:[%s1 + $0x940] sm:$0xff]
    %v507 = vld [vmem:[%s1 + $0x948] sm:$0xff]
    %v508 = vld [vmem:[%s1 + $0x950] sm:$0xff]
    %v509 = vld [vmem:[%s1 + $0x958] sm:$0xff]
    %v510 = vld [vmem:[%s1 + $0x960] sm:$0xff]
    %v511 = vld [vmem:[%s1 + $0x968] sm:$0xff]
    %v512 = vld [vmem:[%s1 + $0x970] sm:$0xff]
    %v513 = vld [vmem:[%s1 + $0x978] sm:$0xff]
    %v514 = vld [vmem:[%s1 + $0x980] sm:$0xff]
    %v515 = vld [vmem:[%s1 + $0x988] sm:$0xff]
    %v516 = vld [vmem:[%s1 + $0x990] sm:$0xff]
    %v517 = vld [vmem:[%s1 + $0x998] sm:$0xff]
    %v518 = vld [vmem:[%s1 + $0x9a0] sm:$0xff]
    %v519 = vld [vmem:[%s1 + $0x9a8] sm:$0xff]
    %v520 = vld [vmem:[%s1 + $0x9b0] sm:$0xff]
    %v521 = vld [vmem:[%s1 + $0x9b8] sm:$0xff]
    %v522 = vld [vmem:[%s1 + $0x9c0] sm:$0xff]
    %v523 = vld [vmem:[%s1 + $0x9c8] sm:$0xff]
    %v524 = vld [vmem:[%s1 + $0x9d0] sm:$0xff]
    %v525 = vld [vmem:[%s1 + $0x9d8] sm:$0xff]
    %v526 = vld [vmem:[%s1 + $0x9e0] sm:$0xff]
    %v527 = vld [vmem:[%s1 + $0x9e8] sm:$0xff]
    %v528 = vld [vmem:[%s1 + $0x9f0] sm:$0xff]
    %v529 = vld [vmem:[%s1 + $0x9f8] sm:$0xff]
    %v530 = vld [vmem:[%s1 + $0xa00] sm:$0xff]
    %v531 = vld [vmem:[%s1 + $0xa08] sm:$0xff]
    %v532 = vld [vmem:[%s1 + $0xa10] sm:$0xff]
    %v533 = vld [vmem:[%s1 + $0xa18] sm:$0xff]
    %v534 = vld [vmem:[%s1 + $0xa20] sm:$0xff]
    %v535 = vld [vmem:[%s1 + $0xa28] sm:$0xff]
    %v536 = vld [vmem:[%s1 + $0xa30] sm:$0xff]
    %v537 = vld [vmem:[%s1 + $0xa38] sm:$0xff]
    %v538 = vld [vmem:[%s1 + $0xa40] sm:$0xff]
    %v539 = vld [vmem:[%s1 + $0xa48] sm:$0xff]
    %v540 = vld [vmem:[%s1 + $0xa50] sm:$0xff]
    %v541 = vld [vmem:[%s1 + $0xa58] sm:$0xff]
    %v542 = vld [vmem:[%s1 + $0xa60] sm:$0xff]
    %v543 = vld [vmem:[%s1 + $0xa68] sm:$0xff]
    %v544 = vld [vmem:[%s1 + $0xa70] sm:$0xff]
    %v545 = vld [vmem:[%s1 + $0xa78] sm:$0xff]
    %v546 = vld [vmem:[%s1 + $0xa80] sm:$0xff]
    %v547 = vld [vmem:[%s1 + $0xa88] sm:$0xff]
    %v548 = vld [vmem:[%s1 + $0xa90] sm:$0xff]
    %v549 = vld [vmem:[%s1 + $0xa98] sm:$0xff]
    %v550 = vld [vmem:[%s1 + $0xaa0] sm:$0xff]
    %v551 = vld [vmem:[%s1 + $0xaa8] sm:$0xff]
    %v552 = vld [vmem:[%s1 + $0xab0] sm:$0xff]
    %v553 = vld [vmem:[%s1 + $0xab8] sm:$0xff]
    %v554 = vld [vmem:[%s1 + $0xac0] sm:$0xff]
    %v555 = vld [vmem:[%s1 + $0xac8] sm:$0xff]
    %v556 = vld [vmem:[%s1 + $0xad0] sm:$0xff]
    %v557 = vld [vmem:[%s1 + $0xad8] sm:$0xff]
    %v558 = vld [vmem:[%s1 + $0xae0] sm:$0xff]
    %v559 = vld [vmem:[%s1 + $0xae8] sm:$0xff]
    %v560 = vld [vmem:[%s1 + $0xaf0] sm:$0xff]
    %v561 = vld [vmem:[%s1 + $0xaf8] sm:$0xff]
    %v562 = vld [vmem:[%s1 + $0xb00] sm:$0xff]
    %v563 = vld [vmem:[%s1 + $0xb08] sm:$0xff]
    %v564 = vld [vmem:[%s1 + $0xb10] sm:$0xff]
    %v565 = vld [vmem:[%s1 + $0xb18] sm:$0xff]
    %v566 = vld [vmem:[%s1 + $0xb20] sm:$0xff]
    %v567 = vld [vmem:[%s1 + $0xb28] sm:$0xff]
    %v568 = vld [vmem:[%s1 + $0xb30] sm:$0xff]
    %v569 = vld [vmem:[%s1 + $0xb38] sm:$0xff]
    %v570 = vld [vmem:[%s1 + $0xb40] sm:$0xff]
    %v571 = vld [vmem:[%s1 + $0xb48] sm:$0xff]
    %v572 = vld [vmem:[%s1 + $0xb50] sm:$0xff]
    %v573 = vld [vmem:[%s1 + $0xb58] sm:$0xff]
    %v574 = vld [vmem:[%s1 + $0xb60] sm:$0xff]
    %v575 = vld [vmem:[%s1 + $0xb68] sm:$0xff]
    %v576 = vld [vmem:[%s1 + $0xb70] sm:$0xff]
    %v577 = vld [vmem:[%s1 + $0xb78] sm:$0xff]
    %v578 = vld [vmem:[%s1 + $0xb80] sm:$0xff]
    %v579 = vld [vmem:[%s1 + $0xb88] sm:$0xff]
    %v580 = vld [vmem:[%s1 + $0xb90] sm:$0xff]
    %v581 = vld [vmem:[%s1 + $0xb98] sm:$0xff]
    %v582 = vld [vmem:[%s1 + $0xba0] sm:$0xff]
    %v583 = vld [vmem:[%s1 + $0xba8] sm:$0xff]
    %v584 = vld [vmem:[%s1 + $0xbb0] sm:$0xff]
    %v585 = vld [vmem:[%s1 + $0xbb8] sm:$0xff]
    %v586 = vld [vmem:[%s1 + $0xbc0] sm:$0xff]
    %v587 = vld [vmem:[%s1 + $0xbc8] sm:$0xff]
    %v588 = vld [vmem:[%s1 + $0xbd0] sm:$0xff]
    %v589 = vld [vmem:[%s1 + $0xbd8] sm:$0xff]
    %v590 = vld [vmem:[%s1 + $0xbe0] sm:$0xff]
    %v591 = vld [vmem:[%s1 + $0xbe8] sm:$0xff]
    %v592 = vld [vmem:[%s1 + $0xbf0] sm:$0xff]
    %v593 = vld [vmem:[%s1 + $0xbf8] sm:$0xff]
    %v594 = vld [vmem:[%s1 + $0xc00] sm:$0xff]
    %v595 = vld [vmem:[%s1 + $0xc08] sm:$0xff]
    %v596 = vld [vmem:[%s1 + $0xc10] sm:$0xff]
    %v597 = vld [vmem:[%s1 + $0xc18] sm:$0xff]
    %v598 = vld [vmem:[%s1 + $0xc20] sm:$0xff]
    %v599 = vld [vmem:[%s1 + $0xc28] sm:$0xff]
    %v600 = vld [vmem:[%s1 + $0xc30] sm:$0xff]
    %v601 = vld [vmem:[%s1 + $0xc38] sm:$0xff]
    %v602 = vld [vmem:[%s1 + $0xc40] sm:$0xff]
    %v603 = vld [vmem:[%s1 + $0xc48] sm:$0xff]
    %v604 = vld [vmem:[%s1 + $0xc50] sm:$0xff]
    %v605 = vld [vmem:[%s1 + $0xc58] sm:$0xff]
    %v606 = vld [vmem:[%s1 + $0xc60] sm:$0xff]
    %v607 = vld [vmem:[%s1 + $0xc68] sm:$0xff]
    %v608 = vld [vmem:[%s1 + $0xc70] sm:$0xff]
    %v609 = vld [vmem:[%s1 + $0xc78] sm:$0xff]
    %v610 = vld [vmem:[%s1 + $0xc80] sm:$0xff]
    %v611 = vld [vmem:[%s1 + $0xc88] sm:$0xff]
    %v612 = vld [vmem:[%s1 + $0xc90] sm:$0xff]
    %v613 = vld [vmem:[%s1 + $0xc98] sm:$0xff]
    %v614 = vld [vmem:[%s1 + $0xca0] sm:$0xff]
    %v615 = vld [vmem:[%s1 + $0xca8] sm:$0xff]
    %v616 = vld [vmem:[%s1 + $0xcb0] sm:$0xff]
    %v617 = vld [vmem:[%s1 + $0xcb8] sm:$0xff]
    %v618 = vld [vmem:[%s2] sm:$0xf]
    %v620 = vlaneseq
    %v621 = vshrl.u32 %v620, 7
    %v622 = vsub.s32 0, %v621
    %v623 = vrot.slane %v618, %v622
    %v624 = vlaneseq
    %v625 = vshrl.u32 %v624, 7
    %v626 = vsub.s32 1, %v625
    %v627 = vrot.slane %v618, %v626
    %v628 = vlaneseq
    %v629 = vshrl.u32 %v628, 7
    %v630 = vsub.s32 2, %v629
    %v631 = vrot.slane %v618, %v630
    %v632 = vlaneseq
    %v633 = vshrl.u32 %v632, 7
    %v634 = vsub.s32 3, %v633
    %v635 = vrot.slane %v618, %v634
    %vm640 = vcmask 392192
    %v642 = vsel %vm640, %v34, 0
    %v645 = vsel %vm640, %v41, 0
    %v648 = vsel %vm640, %v48, 0
    %v651 = vsel %vm640, %v55, 0
    %v654 = vsel %vm640, %v62, 0
    %v657 = vsel %vm640, %v69, 0
    %v660 = vsel %vm640, %v76, 0
    %v663 = vsel %vm640, %v83, 0
    %v666 = vsel %vm640, %v90, 0
    %v669 = vsel %vm640, %v97, 0
    %v672 = vsel %vm640, %v104, 0
    %v675 = vsel %vm640, %v111, 0
    %v678 = vsel %vm640, %v118, 0
    %v681 = vsel %vm640, %v125, 0
    %v684 = vsel %vm640, %v132, 0
    %v687 = vsel %vm640, %v139, 0
    %v690 = vsel %vm640, %v146, 0
    %v693 = vsel %vm640, %v153, 0
    %v696 = vsel %vm640, %v160, 0
    %v699 = vsel %vm640, %v167, 0
    %v702 = vsel %vm640, %v174, 0
    %v705 = vsel %vm640, %v181, 0
    %v708 = vsel %vm640, %v188, 0
    %v711 = vsel %vm640, %v195, 0
    %v714 = vsel %vm640, %v202, 0
    %v717 = vsel %vm640, %v209, 0
    %719 = vmatprep.subr.mxu0 %v211
    %720 = vmatpush1.msra.mxu0 %v210
    %721 = vmatprep.subr.mxu0 %v215
    %722 = vmatpush1.msra.mxu0 %v214
    %723 = vmatprep.subr.mxu0 %v219
    %724 = vmatpush1.msra.mxu0 %v218
    %725 = vmatprep.subr.mxu0 %v223
    %726 = vmatpush1.msra.mxu0 %v222
    %727 = vmatprep.subr.mxu0 %v227
    %728 = vmatpush1.msra.mxu0 %v226
    %729 = vmatprep.subr.mxu0 %v231
    %730 = vmatpush1.msra.mxu0 %v230
    %731 = vmatprep.subr.mxu0 %v235
    %732 = vmatpush1.msra.mxu0 %v234
    %733 = vmatprep.subr.mxu0 %v239
    %734 = vmatpush1.msra.mxu0 %v238
    %735 = vmatprep.subr.mxu0 %v243
    %736 = vmatpush1.msra.mxu0 %v242
    %737 = vmatprep.subr.mxu0 %v247
    %738 = vmatpush1.msra.mxu0 %v246
    %739 = vmatprep.subr.mxu0 %v251
    %740 = vmatpush1.msra.mxu0 %v250
    %741 = vmatprep.subr.mxu0 %v255
    %742 = vmatpush1.msra.mxu0 %v254
    %743 = vmatprep.subr.mxu0 %v259
    %744 = vmatpush1.msra.mxu0 %v258
    %745 = vmatprep.subr.mxu0 %v263
    %746 = vmatpush1.msra.mxu0 %v262
    %747 = vmatprep.subr.mxu0 %v267
    %748 = vmatpush1.msra.mxu0 %v266
    %749 = vmatprep.subr.mxu0 %v271
    %750 = vmatpush1.msra.mxu0 %v270
    %751 = vmatprep.subr.mxu0 %v275
    %752 = vmatpush1.msra.mxu0 %v274
    %753 = vmatprep.subr.mxu0 %v279
    %754 = vmatpush1.msra.mxu0 %v278
    %755 = vmatprep.subr.mxu0 %v283
    %756 = vmatpush1.msra.mxu0 %v282
    %757 = vmatprep.subr.mxu0 %v287
    %758 = vmatpush1.msra.mxu0 %v286
    %759 = vmatprep.subr.mxu0 %v291
    %760 = vmatpush1.msra.mxu0 %v290
    %761 = vmatprep.subr.mxu0 %v295
    %762 = vmatpush1.msra.mxu0 %v294
    %763 = vmatprep.subr.mxu0 %v299
    %764 = vmatpush1.msra.mxu0 %v298
    %765 = vmatprep.subr.mxu0 %v303
    %766 = vmatpush1.msra.mxu0 %v302
    %767 = vmatprep.subr.mxu0 %v307
    %768 = vmatpush1.msra.mxu0 %v306
    %769 = vmatprep.subr.mxu0 %v311
    %770 = vmatpush1.msra.mxu0 %v310
    %771 = vmatprep.subr.mxu0 %v315
    %772 = vmatpush1.msra.mxu0 %v314
    %773 = vmatprep.subr.mxu0 %v319
    %774 = vmatpush1.msra.mxu0 %v318
    %775 = vmatprep.subr.mxu0 %v323
    %776 = vmatpush1.msra.mxu0 %v322
    %777 = vmatprep.subr.mxu0 %v327
    %778 = vmatpush1.msra.mxu0 %v326
    %779 = vmatprep.subr.mxu0 %v331
    %780 = vmatpush1.msra.mxu0 %v330
    %781 = vmatprep.subr.mxu0 %v335
    %782 = vmatpush1.msra.mxu0 %v334
    %783 = vmatprep.mubr.f32.mxu0 %v29
    %784 = vmatmul.mubr.f32.gmra.mrb[0].mxu0 %v28
    %v785 = vpop.f32.mrb[0].mxu0
    %v786 = vadd.f32 %v623, %v785
    %v787 = vpop.f32.mrb[0].mxu0
    %v788 = vadd.f32 %v627, %v787
    %789 = vmatprep.mubr.f32.mxu0 %v36
    %790 = vmatmul.mubr.f32.gmra.mrb[0].mxu0 %v35
    %v791 = vpop.f32.mrb[0].mxu0
    %v792 = vadd.f32 %v623, %v791
    %v793 = vpop.f32.mrb[0].mxu0
    %v794 = vadd.f32 %v627, %v793
    %795 = vmatprep.mubr.f32.mxu0 %v43
    %796 = vmatmul.mubr.f32.gmra.mrb[0].mxu0 %v42
    %v797 = vpop.f32.mrb[0].mxu0
    %v798 = vadd.f32 %v623, %v797
    %v799 = vpop.f32.mrb[0].mxu0
    %v800 = vadd.f32 %v627, %v799
    %801 = vmatprep.mubr.f32.mxu0 %v50
    %802 = vmatmul.mubr.f32.gmra.mrb[0].mxu0 %v49
    %v803 = vpop.f32.mrb[0].mxu0
    %v804 = vadd.f32 %v623, %v803
    %v805 = vpop.f32.mrb[0].mxu0
    %v806 = vadd.f32 %v627, %v805
    %807 = vmatprep.mubr.f32.mxu0 %v57
    %808 = vmatmul.mubr.f32.gmra.mrb[0].mxu0 %v56
    %v809 = vpop.f32.mrb[0].mxu0
    %v810 = vadd.f32 %v623, %v809
    %v811 = vpop.f32.mrb[0].mxu0
    %v812 = vadd.f32 %v627, %v811
    %813 = vmatprep.mubr.f32.mxu0 %v64
    %814 = vmatmul.mubr.f32.gmra.mrb[0].mxu0 %v63
    %v815 = vpop.f32.mrb[0].mxu0
    %v816 = vadd.f32 %v623, %v815
    %v817 = vpop.f32.mrb[0].mxu0
    %v818 = vadd.f32 %v627, %v817
    %819 = vmatprep.mubr.f32.mxu0 %v71
    %820 = vmatmul.mubr.f32.gmra.mrb[0].mxu0 %v70
    %v821 = vpop.f32.mrb[0].mxu0
    %v822 = vadd.f32 %v623, %v821
    %v823 = vpop.f32.mrb[0].mxu0
    %v824 = vadd.f32 %v627, %v823
    %825 = vmatprep.mubr.f32.mxu0 %v78
    %826 = vmatmul.mubr.f32.gmra.mrb[0].mxu0 %v77
    %v827 = vpop.f32.mrb[0].mxu0
    %v828 = vadd.f32 %v623, %v827
    %v829 = vpop.f32.mrb[0].mxu0
    %v830 = vadd.f32 %v627, %v829
    %831 = vmatprep.mubr.f32.mxu0 %v85
    %832 = vmatmul.mubr.f32.gmra.mrb[0].mxu0 %v84
    %v833 = vpop.f32.mrb[0].mxu0
    %v834 = vadd.f32 %v623, %v833
    %v835 = vpop.f32.mrb[0].mxu0
    %v836 = vadd.f32 %v627, %v835
    %837 = vmatprep.mubr.f32.mxu0 %v92
    %838 = vmatmul.mubr.f32.gmra.mrb[0].mxu0 %v91
    %v839 = vpop.f32.mrb[0].mxu0
    %v840 = vadd.f32 %v623, %v839
    %v841 = vpop.f32.mrb[0].mxu0
    %v842 = vadd.f32 %v627, %v841
    %843 = vmatprep.mubr.f32.mxu0 %v99
    %844 = vmatmul.mubr.f32.gmra.mrb[0].mxu0 %v98
    %v845 = vpop.f32.mrb[0].mxu0
    %v846 = vadd.f32 %v623, %v845
    %v847 = vpop.f32.mrb[0].mxu0
    %v848 = vadd.f32 %v627, %v847
    %849 = vmatprep.mubr.f32.mxu0 %v106
    %850 = vmatmul.mubr.f32.gmra.mrb[0].mxu0 %v105
    %v851 = vpop.f32.mrb[0].mxu0
    %v852 = vadd.f32 %v623, %v851
    %v853 = vpop.f32.mrb[0].mxu0
    %v854 = vadd.f32 %v627, %v853
    %855 = vmatprep.mubr.f32.mxu0 %v113
    %856 = vmatmul.mubr.f32.gmra.mrb[0].mxu0 %v112
    %v857 = vpop.f32.mrb[0].mxu0
    %v858 = vadd.f32 %v623, %v857
    %v859 = vpop.f32.mrb[0].mxu0
    %v860 = vadd.f32 %v627, %v859
    %861 = vmatprep.mubr.f32.mxu0 %v120
    %862 = vmatmul.mubr.f32.gmra.mrb[0].mxu0 %v119
    %v863 = vpop.f32.mrb[0].mxu0
    %v864 = vadd.f32 %v623, %v863
    %v865 = vpop.f32.mrb[0].mxu0
    %v866 = vadd.f32 %v627, %v865
    %867 = vmatprep.mubr.f32.mxu0 %v127
    %868 = vmatmul.mubr.f32.gmra.mrb[0].mxu0 %v126
    %v869 = vpop.f32.mrb[0].mxu0
    %v870 = vadd.f32 %v623, %v869
    %v871 = vpop.f32.mrb[0].mxu0
    %v872 = vadd.f32 %v627, %v871
    %873 = vmatprep.mubr.f32.mxu0 %v134
    %874 = vmatmul.mubr.f32.gmra.mrb[0].mxu0 %v133
    %v875 = vpop.f32.mrb[0].mxu0
    %v876 = vadd.f32 %v623, %v875
    %v877 = vpop.f32.mrb[0].mxu0
    %v878 = vadd.f32 %v627, %v877
    %879 = vmatprep.mubr.f32.mxu0 %v141
    %880 = vmatmul.mubr.f32.gmra.mrb[0].mxu0 %v140
    %v881 = vpop.f32.mrb[0].mxu0
    %v882 = vadd.f32 %v623, %v881
    %v883 = vpop.f32.mrb[0].mxu0
    %v884 = vadd.f32 %v627, %v883
    %885 = vmatprep.mubr.f32.mxu0 %v148
    %886 = vmatmul.mubr.f32.gmra.mrb[0].mxu0 %v147
    %v887 = vpop.f32.mrb[0].mxu0
    %v888 = vadd.f32 %v623, %v887
    %v889 = vpop.f32.mrb[0].mxu0
    %v890 = vadd.f32 %v627, %v889
    %891 = vmatprep.mubr.f32.mxu0 %v155
    %892 = vmatmul.mubr.f32.gmra.mrb[0].mxu0 %v154
    %v893 = vpop.f32.mrb[0].mxu0
    %v894 = vadd.f32 %v623, %v893
    %v895 = vpop.f32.mrb[0].mxu0
    %v896 = vadd.f32 %v627, %v895
    %897 = vmatprep.mubr.f32.mxu0 %v162
    %898 = vmatmul.mubr.f32.gmra.mrb[0].mxu0 %v161
    %v899 = vpop.f32.mrb[0].mxu0
    %v900 = vadd.f32 %v623, %v899
    %v901 = vpop.f32.mrb[0].mxu0
    %v902 = vadd.f32 %v627, %v901
    %903 = vmatprep.mubr.f32.mxu0 %v169
    %904 = vmatmul.mubr.f32.gmra.mrb[0].mxu0 %v168
    %v905 = vpop.f32.mrb[0].mxu0
    %v906 = vadd.f32 %v623, %v905
    %v907 = vpop.f32.mrb[0].mxu0
    %v908 = vadd.f32 %v627, %v907
    %909 = vmatprep.mubr.f32.mxu0 %v176
    %910 = vmatmul.mubr.f32.gmra.mrb[0].mxu0 %v175
    %v911 = vpop.f32.mrb[0].mxu0
    %v912 = vadd.f32 %v623, %v911
    %v913 = vpop.f32.mrb[0].mxu0
    %v914 = vadd.f32 %v627, %v913
    %915 = vmatprep.mubr.f32.mxu0 %v183
    %916 = vmatmul.mubr.f32.gmra.mrb[0].mxu0 %v182
    %v917 = vpop.f32.mrb[0].mxu0
    %v918 = vadd.f32 %v623, %v917
    %v919 = vpop.f32.mrb[0].mxu0
    %v920 = vadd.f32 %v627, %v919
    %921 = vmatprep.mubr.f32.mxu0 %v190
    %922 = vmatmul.mubr.f32.gmra.mrb[0].mxu0 %v189
    %v923 = vpop.f32.mrb[0].mxu0
    %v924 = vadd.f32 %v623, %v923
    %v925 = vpop.f32.mrb[0].mxu0
    %v926 = vadd.f32 %v627, %v925
    %927 = vmatprep.mubr.f32.mxu0 %v197
    %928 = vmatmul.mubr.f32.gmra.mrb[0].mxu0 %v196
    %v929 = vpop.f32.mrb[0].mxu0
    %v930 = vadd.f32 %v623, %v929
    %v931 = vpop.f32.mrb[0].mxu0
    %v932 = vadd.f32 %v627, %v931
    %933 = vmatprep.mubr.f32.mxu0 %v204
    %934 = vmatmul.mubr.f32.gmra.mrb[0].mxu0 %v203
    %v935 = vpop.f32.mrb[0].mxu0
    %v936 = vadd.f32 %v623, %v935
    %v937 = vpop.f32.mrb[0].mxu0
    %v938 = vadd.f32 %v627, %v937
    %939 = vdwg.mxu0
    %940 = vmatprep.subr.mxu0 %v339
    %941 = vmatpush1.msra.mxu0 %v338
    %942 = vmatprep.subr.mxu0 %v343
    %943 = vmatpush1.msra.mxu0 %v342
    %944 = vmatprep.subr.mxu0 %v347
    %945 = vmatpush1.msra.mxu0 %v346
    %946 = vmatprep.subr.mxu0 %v351
    %947 = vmatpush1.msra.mxu0 %v350
    %948 = vmatprep.subr.mxu0 %v355
    %949 = vmatpush1.msra.mxu0 %v354
    %950 = vmatprep.subr.mxu0 %v359
    %951 = vmatpush1.msra.mxu0 %v358
    %952 = vmatprep.subr.mxu0 %v363
    %953 = vmatpush1.msra.mxu0 %v362
    %954 = vmatprep.subr.mxu0 %v367
    %955 = vmatpush1.msra.mxu0 %v366
    %956 = vmatprep.subr.mxu0 %v371
    %957 = vmatpush1.msra.mxu0 %v370
    %958 = vmatprep.subr.mxu0 %v375
    %959 = vmatpush1.msra.mxu0 %v374
    %960 = vmatprep.subr.mxu0 %v379
    %961 = vmatpush1.msra.mxu0 %v378
    %962 = vmatprep.subr.mxu0 %v383
    %963 = vmatpush1.msra.mxu0 %v382
    %964 = vmatprep.subr.mxu0 %v387
    %965 = vmatpush1.msra.mxu0 %v386
    %966 = vmatprep.subr.mxu0 %v391
    %967 = vmatpush1.msra.mxu0 %v390
    %968 = vmatprep.subr.mxu0 %v395
    %969 = vmatpush1.msra.mxu0 %v394
    %970 = vmatprep.subr.mxu0 %v399
    %971 = vmatpush1.msra.mxu0 %v398
    %972 = vmatprep.subr.mxu0 %v403
    %973 = vmatpush1.msra.mxu0 %v402
    %974 = vmatprep.subr.mxu0 %v407
    %975 = vmatpush1.msra.mxu0 %v406
    %976 = vmatprep.subr.mxu0 %v411
    %977 = vmatpush1.msra.mxu0 %v410
    %978 = vmatprep.subr.mxu0 %v415
    %979 = vmatpush1.msra.mxu0 %v414
    %980 = vmatprep.subr.mxu0 %v419
    %981 = vmatpush1.msra.mxu0 %v418
    %982 = vmatprep.subr.mxu0 %v423
    %983 = vmatpush1.msra.mxu0 %v422
    %984 = vmatprep.subr.mxu0 %v427
    %985 = vmatpush1.msra.mxu0 %v426
    %986 = vmatprep.subr.mxu0 %v431
    %987 = vmatpush1.msra.mxu0 %v430
    %988 = vmatprep.subr.mxu0 %v435
    %989 = vmatpush1.msra.mxu0 %v434
    %990 = vmatprep.subr.mxu0 %v439
    %991 = vmatpush1.msra.mxu0 %v438
    %992 = vmatprep.subr.mxu0 %v443
    %993 = vmatpush1.msra.mxu0 %v442
    %994 = vmatprep.subr.mxu0 %v447
    %995 = vmatpush1.msra.mxu0 %v446
    %996 = vmatprep.subr.mxu0 %v451
    %997 = vmatpush1.msra.mxu0 %v450
    %998 = vmatprep.subr.mxu0 %v455
    %999 = vmatpush1.msra.mxu0 %v454
    %1000 = vmatprep.subr.mxu0 %v459
    %1001 = vmatpush1.msra.mxu0 %v458
    %1002 = vmatprep.subr.mxu0 %v463
    %1003 = vmatpush1.msra.mxu0 %v462
    %1004 = vmatprep.mubr.f32.mxu0 %v31
    %1005 = vmatmul.mubr.f32.gmra.mrb[0].mxu0 %v30
    %v1006 = vpop.f32.mrb[0].mxu0
    %v1007 = vadd.f32 %v786, %v1006
    %v1008 = vpop.f32.mrb[0].mxu0
    %v1009 = vadd.f32 %v788, %v1008
    %1010 = vmatprep.mubr.f32.mxu0 %v38
    %1011 = vmatmul.mubr.f32.gmra.mrb[0].mxu0 %v37
    %v1012 = vpop.f32.mrb[0].mxu0
    %v1013 = vadd.f32 %v792, %v1012
    %v1014 = vpop.f32.mrb[0].mxu0
    %v1015 = vadd.f32 %v794, %v1014
    %1016 = vmatprep.mubr.f32.mxu0 %v45
    %1017 = vmatmul.mubr.f32.gmra.mrb[0].mxu0 %v44
    %v1018 = vpop.f32.mrb[0].mxu0
    %v1019 = vadd.f32 %v798, %v1018
    %v1020 = vpop.f32.mrb[0].mxu0
    %v1021 = vadd.f32 %v800, %v1020
    %1022 = vmatprep.mubr.f32.mxu0 %v52
    %1023 = vmatmul.mubr.f32.gmra.mrb[0].mxu0 %v51
    %v1024 = vpop.f32.mrb[0].mxu0
    %v1025 = vadd.f32 %v804, %v1024
    %v1026 = vpop.f32.mrb[0].mxu0
    %v1027 = vadd.f32 %v806, %v1026
    %1028 = vmatprep.mubr.f32.mxu0 %v59
    %1029 = vmatmul.mubr.f32.gmra.mrb[0].mxu0 %v58
    %v1030 = vpop.f32.mrb[0].mxu0
    %v1031 = vadd.f32 %v810, %v1030
    %v1032 = vpop.f32.mrb[0].mxu0
    %v1033 = vadd.f32 %v812, %v1032
    %1034 = vmatprep.mubr.f32.mxu0 %v66
    %1035 = vmatmul.mubr.f32.gmra.mrb[0].mxu0 %v65
    %v1036 = vpop.f32.mrb[0].mxu0
    %v1037 = vadd.f32 %v816, %v1036
    %v1038 = vpop.f32.mrb[0].mxu0
    %v1039 = vadd.f32 %v818, %v1038
    %1040 = vmatprep.mubr.f32.mxu0 %v73
    %1041 = vmatmul.mubr.f32.gmra.mrb[0].mxu0 %v72
    %v1042 = vpop.f32.mrb[0].mxu0
    %v1043 = vadd.f32 %v822, %v1042
    %v1044 = vpop.f32.mrb[0].mxu0
    %v1045 = vadd.f32 %v824, %v1044
    %1046 = vmatprep.mubr.f32.mxu0 %v80
    %1047 = vmatmul.mubr.f32.gmra.mrb[0].mxu0 %v79
    %v1048 = vpop.f32.mrb[0].mxu0
    %v1049 = vadd.f32 %v828, %v1048
    %v1050 = vpop.f32.mrb[0].mxu0
    %v1051 = vadd.f32 %v830, %v1050
    %1052 = vmatprep.mubr.f32.mxu0 %v87
    %1053 = vmatmul.mubr.f32.gmra.mrb[0].mxu0 %v86
    %v1054 = vpop.f32.mrb[0].mxu0
    %v1055 = vadd.f32 %v834, %v1054
    %v1056 = vpop.f32.mrb[0].mxu0
    %v1057 = vadd.f32 %v836, %v1056
    %1058 = vmatprep.mubr.f32.mxu0 %v94
    %1059 = vmatmul.mubr.f32.gmra.mrb[0].mxu0 %v93
    %v1060 = vpop.f32.mrb[0].mxu0
    %v1061 = vadd.f32 %v840, %v1060
    %v1062 = vpop.f32.mrb[0].mxu0
    %v1063 = vadd.f32 %v842, %v1062
    %1064 = vmatprep.mubr.f32.mxu0 %v101
    %1065 = vmatmul.mubr.f32.gmra.mrb[0].mxu0 %v100
    %v1066 = vpop.f32.mrb[0].mxu0
    %v1067 = vadd.f32 %v846, %v1066
    %v1068 = vpop.f32.mrb[0].mxu0
    %v1069 = vadd.f32 %v848, %v1068
    %1070 = vmatprep.mubr.f32.mxu0 %v108
    %1071 = vmatmul.mubr.f32.gmra.mrb[0].mxu0 %v107
    %v1072 = vpop.f32.mrb[0].mxu0
    %v1073 = vadd.f32 %v852, %v1072
    %v1074 = vpop.f32.mrb[0].mxu0
    %v1075 = vadd.f32 %v854, %v1074
    %1076 = vmatprep.mubr.f32.mxu0 %v115
    %1077 = vmatmul.mubr.f32.gmra.mrb[0].mxu0 %v114
    %v1078 = vpop.f32.mrb[0].mxu0
    %v1079 = vadd.f32 %v858, %v1078
    %v1080 = vpop.f32.mrb[0].mxu0
    %v1081 = vadd.f32 %v860, %v1080
    %1082 = vmatprep.mubr.f32.mxu0 %v122
    %1083 = vmatmul.mubr.f32.gmra.mrb[0].mxu0 %v121
    %v1084 = vpop.f32.mrb[0].mxu0
    %v1085 = vadd.f32 %v864, %v1084
    %v1086 = vpop.f32.mrb[0].mxu0
    %v1087 = vadd.f32 %v866, %v1086
    %1088 = vmatprep.mubr.f32.mxu0 %v129
    %1089 = vmatmul.mubr.f32.gmra.mrb[0].mxu0 %v128
    %v1090 = vpop.f32.mrb[0].mxu0
    %v1091 = vadd.f32 %v870, %v1090
    %v1092 = vpop.f32.mrb[0].mxu0
    %v1093 = vadd.f32 %v872, %v1092
    %1094 = vmatprep.mubr.f32.mxu0 %v136
    %1095 = vmatmul.mubr.f32.gmra.mrb[0].mxu0 %v135
    %v1096 = vpop.f32.mrb[0].mxu0
    %v1097 = vadd.f32 %v876, %v1096
    %v1098 = vpop.f32.mrb[0].mxu0
    %v1099 = vadd.f32 %v878, %v1098
    %1100 = vmatprep.mubr.f32.mxu0 %v143
    %1101 = vmatmul.mubr.f32.gmra.mrb[0].mxu0 %v142
    %v1102 = vpop.f32.mrb[0].mxu0
    %v1103 = vadd.f32 %v882, %v1102
    %v1104 = vpop.f32.mrb[0].mxu0
    %v1105 = vadd.f32 %v884, %v1104
    %1106 = vmatprep.mubr.f32.mxu0 %v150
    %1107 = vmatmul.mubr.f32.gmra.mrb[0].mxu0 %v149
    %v1108 = vpop.f32.mrb[0].mxu0
    %v1109 = vadd.f32 %v888, %v1108
    %v1110 = vpop.f32.mrb[0].mxu0
    %v1111 = vadd.f32 %v890, %v1110
    %1112 = vmatprep.mubr.f32.mxu0 %v157
    %1113 = vmatmul.mubr.f32.gmra.mrb[0].mxu0 %v156
    %v1114 = vpop.f32.mrb[0].mxu0
    %v1115 = vadd.f32 %v894, %v1114
    %v1116 = vpop.f32.mrb[0].mxu0
    %v1117 = vadd.f32 %v896, %v1116
    %1118 = vmatprep.mubr.f32.mxu0 %v164
    %1119 = vmatmul.mubr.f32.gmra.mrb[0].mxu0 %v163
    %v1120 = vpop.f32.mrb[0].mxu0
    %v1121 = vadd.f32 %v900, %v1120
    %v1122 = vpop.f32.mrb[0].mxu0
    %v1123 = vadd.f32 %v902, %v1122
    %1124 = vmatprep.mubr.f32.mxu0 %v171
    %1125 = vmatmul.mubr.f32.gmra.mrb[0].mxu0 %v170
    %v1126 = vpop.f32.mrb[0].mxu0
    %v1127 = vadd.f32 %v906, %v1126
    %v1128 = vpop.f32.mrb[0].mxu0
    %v1129 = vadd.f32 %v908, %v1128
    %1130 = vmatprep.mubr.f32.mxu0 %v178
    %1131 = vmatmul.mubr.f32.gmra.mrb[0].mxu0 %v177
    %v1132 = vpop.f32.mrb[0].mxu0
    %v1133 = vadd.f32 %v912, %v1132
    %v1134 = vpop.f32.mrb[0].mxu0
    %v1135 = vadd.f32 %v914, %v1134
    %1136 = vmatprep.mubr.f32.mxu0 %v185
    %1137 = vmatmul.mubr.f32.gmra.mrb[0].mxu0 %v184
    %v1138 = vpop.f32.mrb[0].mxu0
    %v1139 = vadd.f32 %v918, %v1138
    %v1140 = vpop.f32.mrb[0].mxu0
    %v1141 = vadd.f32 %v920, %v1140
    %1142 = vmatprep.mubr.f32.mxu0 %v192
    %1143 = vmatmul.mubr.f32.gmra.mrb[0].mxu0 %v191
    %v1144 = vpop.f32.mrb[0].mxu0
    %v1145 = vadd.f32 %v924, %v1144
    %v1146 = vpop.f32.mrb[0].mxu0
    %v1147 = vadd.f32 %v926, %v1146
    %1148 = vmatprep.mubr.f32.mxu0 %v199
    %1149 = vmatmul.mubr.f32.gmra.mrb[0].mxu0 %v198
    %v1150 = vpop.f32.mrb[0].mxu0
    %v1151 = vadd.f32 %v930, %v1150
    %v1152 = vpop.f32.mrb[0].mxu0
    %v1153 = vadd.f32 %v932, %v1152
    %1154 = vmatprep.mubr.f32.mxu0 %v206
    %1155 = vmatmul.mubr.f32.gmra.mrb[0].mxu0 %v205
    %v1156 = vpop.f32.mrb[0].mxu0
    %v1157 = vadd.f32 %v936, %v1156
    %v1158 = vpop.f32.mrb[0].mxu0
    %v1159 = vadd.f32 %v938, %v1158
    %1160 = vdwg.mxu0
    %1161 = vmatprep.subr.mxu0 %v467
    %1162 = vmatpush1.msra.mxu0 %v466
    %1163 = vmatprep.subr.mxu0 %v471
    %1164 = vmatpush1.msra.mxu0 %v470
    %1165 = vmatprep.subr.mxu0 %v475
    %1166 = vmatpush1.msra.mxu0 %v474
    %1167 = vmatprep.subr.mxu0 %v479
    %1168 = vmatpush1.msra.mxu0 %v478
    %1169 = vmatprep.subr.mxu0 %v483
    %1170 = vmatpush1.msra.mxu0 %v482
    %1171 = vmatprep.subr.mxu0 %v487
    %1172 = vmatpush1.msra.mxu0 %v486
    %1173 = vmatprep.subr.mxu0 %v491
    %1174 = vmatpush1.msra.mxu0 %v490
    %1175 = vmatprep.subr.mxu0 %v495
    %1176 = vmatpush1.msra.mxu0 %v494
    %1177 = vmatprep.subr.mxu0 %v499
    %1178 = vmatpush1.msra.mxu0 %v498
    %1179 = vmatprep.subr.mxu0 %v503
    %1180 = vmatpush1.msra.mxu0 %v502
    %1181 = vmatprep.subr.mxu0 %v507
    %1182 = vmatpush1.msra.mxu0 %v506
    %1183 = vmatprep.subr.mxu0 %v511
    %1184 = vmatpush1.msra.mxu0 %v510
    %1185 = vmatprep.subr.mxu0 %v515
    %1186 = vmatpush1.msra.mxu0 %v514
    %1187 = vmatprep.subr.mxu0 %v519
    %1188 = vmatpush1.msra.mxu0 %v518
    %1189 = vmatprep.subr.mxu0 %v523
    %1190 = vmatpush1.msra.mxu0 %v522
    %1191 = vmatprep.subr.mxu0 %v527
    %1192 = vmatpush1.msra.mxu0 %v526
    %1193 = vmatprep.subr.mxu0 %v531
    %1194 = vmatpush1.msra.mxu0 %v530
    %1195 = vmatprep.subr.mxu0 %v535
    %1196 = vmatpush1.msra.mxu0 %v534
    %1197 = vmatprep.subr.mxu0 %v539
    %1198 = vmatpush1.msra.mxu0 %v538
    %1199 = vmatprep.subr.mxu0 %v543
    %1200 = vmatpush1.msra.mxu0 %v542
    %1201 = vmatprep.subr.mxu0 %v547
    %1202 = vmatpush1.msra.mxu0 %v546
    %1203 = vmatprep.subr.mxu0 %v551
    %1204 = vmatpush1.msra.mxu0 %v550
    %1205 = vmatprep.subr.mxu0 %v555
    %1206 = vmatpush1.msra.mxu0 %v554
    %1207 = vmatprep.subr.mxu0 %v559
    %1208 = vmatpush1.msra.mxu0 %v558
    %1209 = vmatprep.subr.mxu0 %v563
    %1210 = vmatpush1.msra.mxu0 %v562
    %1211 = vmatprep.subr.mxu0 %v567
    %1212 = vmatpush1.msra.mxu0 %v566
    %1213 = vmatprep.subr.mxu0 %v571
    %1214 = vmatpush1.msra.mxu0 %v570
    %1215 = vmatprep.subr.mxu0 %v575
    %1216 = vmatpush1.msra.mxu0 %v574
    %1217 = vmatprep.subr.mxu0 %v579
    %1218 = vmatpush1.msra.mxu0 %v578
    %1219 = vmatprep.subr.mxu0 %v583
    %1220 = vmatpush1.msra.mxu0 %v582
    %1221 = vmatprep.subr.mxu0 %v587
    %1222 = vmatpush1.msra.mxu0 %v586
    %1223 = vmatprep.subr.mxu0 %v591
    %1224 = vmatpush1.msra.mxu0 %v590
    %1225 = vmatprep.mubr.f32.mxu0 %v33
    %1226 = vmatmul.mubr.f32.gmra.mrb[0].mxu0 %v32
    %v1227 = vpop.f32.mrb[0].mxu0
    %v1228 = vadd.f32 %v1007, %v1227
    %v1229 = vpop.f32.mrb[0].mxu0
    %v1230 = vadd.f32 %v1009, %v1229
    %1231 = vmatprep.mubr.f32.mxu0 %v40
    %1232 = vmatmul.mubr.f32.gmra.mrb[0].mxu0 %v39
    %v1233 = vpop.f32.mrb[0].mxu0
    %v1234 = vadd.f32 %v1013, %v1233
    %v1235 = vpop.f32.mrb[0].mxu0
    %v1236 = vadd.f32 %v1015, %v1235
    %1237 = vmatprep.mubr.f32.mxu0 %v47
    %1238 = vmatmul.mubr.f32.gmra.mrb[0].mxu0 %v46
    %v1239 = vpop.f32.mrb[0].mxu0
    %v1240 = vadd.f32 %v1019, %v1239
    %v1241 = vpop.f32.mrb[0].mxu0
    %v1242 = vadd.f32 %v1021, %v1241
    %1243 = vmatprep.mubr.f32.mxu0 %v54
    %1244 = vmatmul.mubr.f32.gmra.mrb[0].mxu0 %v53
    %v1245 = vpop.f32.mrb[0].mxu0
    %v1246 = vadd.f32 %v1025, %v1245
    %v1247 = vpop.f32.mrb[0].mxu0
    %v1248 = vadd.f32 %v1027, %v1247
    %1249 = vmatprep.mubr.f32.mxu0 %v61
    %1250 = vmatmul.mubr.f32.gmra.mrb[0].mxu0 %v60
    %v1251 = vpop.f32.mrb[0].mxu0
    %v1252 = vadd.f32 %v1031, %v1251
    %v1253 = vpop.f32.mrb[0].mxu0
    %v1254 = vadd.f32 %v1033, %v1253
    %1255 = vmatprep.mubr.f32.mxu0 %v68
    %1256 = vmatmul.mubr.f32.gmra.mrb[0].mxu0 %v67
    %v1257 = vpop.f32.mrb[0].mxu0
    %v1258 = vadd.f32 %v1037, %v1257
    %v1259 = vpop.f32.mrb[0].mxu0
    %v1260 = vadd.f32 %v1039, %v1259
    %1261 = vmatprep.mubr.f32.mxu0 %v75
    %1262 = vmatmul.mubr.f32.gmra.mrb[0].mxu0 %v74
    %v1263 = vpop.f32.mrb[0].mxu0
    %v1264 = vadd.f32 %v1043, %v1263
    %v1265 = vpop.f32.mrb[0].mxu0
    %v1266 = vadd.f32 %v1045, %v1265
    %1267 = vmatprep.mubr.f32.mxu0 %v82
    %1268 = vmatmul.mubr.f32.gmra.mrb[0].mxu0 %v81
    %v1269 = vpop.f32.mrb[0].mxu0
    %v1270 = vadd.f32 %v1049, %v1269
    %v1271 = vpop.f32.mrb[0].mxu0
    %v1272 = vadd.f32 %v1051, %v1271
    %1273 = vmatprep.mubr.f32.mxu0 %v89
    %1274 = vmatmul.mubr.f32.gmra.mrb[0].mxu0 %v88
    %v1275 = vpop.f32.mrb[0].mxu0
    %v1276 = vadd.f32 %v1055, %v1275
    %v1277 = vpop.f32.mrb[0].mxu0
    %v1278 = vadd.f32 %v1057, %v1277
    %1279 = vmatprep.mubr.f32.mxu0 %v96
    %1280 = vmatmul.mubr.f32.gmra.mrb[0].mxu0 %v95
    %v1281 = vpop.f32.mrb[0].mxu0
    %v1282 = vadd.f32 %v1061, %v1281
    %v1283 = vpop.f32.mrb[0].mxu0
    %v1284 = vadd.f32 %v1063, %v1283
    %1285 = vmatprep.mubr.f32.mxu0 %v103
    %1286 = vmatmul.mubr.f32.gmra.mrb[0].mxu0 %v102
    %v1287 = vpop.f32.mrb[0].mxu0
    %v1288 = vadd.f32 %v1067, %v1287
    %v1289 = vpop.f32.mrb[0].mxu0
    %v1290 = vadd.f32 %v1069, %v1289
    %1291 = vmatprep.mubr.f32.mxu0 %v110
    %1292 = vmatmul.mubr.f32.gmra.mrb[0].mxu0 %v109
    %v1293 = vpop.f32.mrb[0].mxu0
    %v1294 = vadd.f32 %v1073, %v1293
    %v1295 = vpop.f32.mrb[0].mxu0
    %v1296 = vadd.f32 %v1075, %v1295
    %1297 = vmatprep.mubr.f32.mxu0 %v117
    %1298 = vmatmul.mubr.f32.gmra.mrb[0].mxu0 %v116
    %v1299 = vpop.f32.mrb[0].mxu0
    %v1300 = vadd.f32 %v1079, %v1299
    %v1301 = vpop.f32.mrb[0].mxu0
    %v1302 = vadd.f32 %v1081, %v1301
    %1303 = vmatprep.mubr.f32.mxu0 %v124
    %1304 = vmatmul.mubr.f32.gmra.mrb[0].mxu0 %v123
    %v1305 = vpop.f32.mrb[0].mxu0
    %v1306 = vadd.f32 %v1085, %v1305
    %v1307 = vpop.f32.mrb[0].mxu0
    %v1308 = vadd.f32 %v1087, %v1307
    %1309 = vmatprep.mubr.f32.mxu0 %v131
    %1310 = vmatmul.mubr.f32.gmra.mrb[0].mxu0 %v130
    %v1311 = vpop.f32.mrb[0].mxu0
    %v1312 = vadd.f32 %v1091, %v1311
    %v1313 = vpop.f32.mrb[0].mxu0
    %v1314 = vadd.f32 %v1093, %v1313
    %1315 = vmatprep.mubr.f32.mxu0 %v138
    %1316 = vmatmul.mubr.f32.gmra.mrb[0].mxu0 %v137
    %v1317 = vpop.f32.mrb[0].mxu0
    %v1318 = vadd.f32 %v1097, %v1317
    %v1319 = vpop.f32.mrb[0].mxu0
    %v1320 = vadd.f32 %v1099, %v1319
    %1321 = vmatprep.mubr.f32.mxu0 %v145
    %1322 = vmatmul.mubr.f32.gmra.mrb[0].mxu0 %v144
    %v1323 = vpop.f32.mrb[0].mxu0
    %v1324 = vadd.f32 %v1103, %v1323
    %v1325 = vpop.f32.mrb[0].mxu0
    %v1326 = vadd.f32 %v1105, %v1325
    %1327 = vmatprep.mubr.f32.mxu0 %v152
    %1328 = vmatmul.mubr.f32.gmra.mrb[0].mxu0 %v151
    %v1329 = vpop.f32.mrb[0].mxu0
    %v1330 = vadd.f32 %v1109, %v1329
    %v1331 = vpop.f32.mrb[0].mxu0
    %v1332 = vadd.f32 %v1111, %v1331
    %1333 = vmatprep.mubr.f32.mxu0 %v159
    %1334 = vmatmul.mubr.f32.gmra.mrb[0].mxu0 %v158
    %v1335 = vpop.f32.mrb[0].mxu0
    %v1336 = vadd.f32 %v1115, %v1335
    %v1337 = vpop.f32.mrb[0].mxu0
    %v1338 = vadd.f32 %v1117, %v1337
    %1339 = vmatprep.mubr.f32.mxu0 %v166
    %1340 = vmatmul.mubr.f32.gmra.mrb[0].mxu0 %v165
    %v1341 = vpop.f32.mrb[0].mxu0
    %v1342 = vadd.f32 %v1121, %v1341
    %v1343 = vpop.f32.mrb[0].mxu0
    %v1344 = vadd.f32 %v1123, %v1343
    %1345 = vmatprep.mubr.f32.mxu0 %v173
    %1346 = vmatmul.mubr.f32.gmra.mrb[0].mxu0 %v172
    %v1347 = vpop.f32.mrb[0].mxu0
    %v1348 = vadd.f32 %v1127, %v1347
    %v1349 = vpop.f32.mrb[0].mxu0
    %v1350 = vadd.f32 %v1129, %v1349
    %1351 = vmatprep.mubr.f32.mxu0 %v180
    %1352 = vmatmul.mubr.f32.gmra.mrb[0].mxu0 %v179
    %v1353 = vpop.f32.mrb[0].mxu0
    %v1354 = vadd.f32 %v1133, %v1353
    %v1355 = vpop.f32.mrb[0].mxu0
    %v1356 = vadd.f32 %v1135, %v1355
    %1357 = vmatprep.mubr.f32.mxu0 %v187
    %1358 = vmatmul.mubr.f32.gmra.mrb[0].mxu0 %v186
    %v1359 = vpop.f32.mrb[0].mxu0
    %v1360 = vadd.f32 %v1139, %v1359
    %v1361 = vpop.f32.mrb[0].mxu0
    %v1362 = vadd.f32 %v1141, %v1361
    %1363 = vmatprep.mubr.f32.mxu0 %v194
    %1364 = vmatmul.mubr.f32.gmra.mrb[0].mxu0 %v193
    %v1365 = vpop.f32.mrb[0].mxu0
    %v1366 = vadd.f32 %v1145, %v1365
    %v1367 = vpop.f32.mrb[0].mxu0
    %v1368 = vadd.f32 %v1147, %v1367
    %1369 = vmatprep.mubr.f32.mxu0 %v201
    %1370 = vmatmul.mubr.f32.gmra.mrb[0].mxu0 %v200
    %v1371 = vpop.f32.mrb[0].mxu0
    %v1372 = vadd.f32 %v1151, %v1371
    %v1373 = vpop.f32.mrb[0].mxu0
    %v1374 = vadd.f32 %v1153, %v1373
    %1375 = vmatprep.mubr.f32.mxu0 %v208
    %1376 = vmatmul.mubr.f32.gmra.mrb[0].mxu0 %v207
    %v1377 = vpop.f32.mrb[0].mxu0
    %v1378 = vadd.f32 %v1157, %v1377
    %v1379 = vpop.f32.mrb[0].mxu0
    %v1380 = vadd.f32 %v1159, %v1379
    %1381 = vdwg.mxu0
    %1382 = vmatprep.subr.mxu0 %v595
    %1383 = vmatpush1.msra.mxu0 %v594
    %1384 = vmatprep.subr.mxu0 %v599
    %1385 = vmatpush1.msra.mxu0 %v598
    %1386 = vmatprep.subr.mxu0 %v603
    %1387 = vmatpush1.msra.mxu0 %v602
    %1388 = vmatprep.subr.mxu0 %v607
    %1389 = vmatpush1.msra.mxu0 %v606
    %1390 = vmatprep.subr.mxu0 %v611
    %1391 = vmatpush1.msra.mxu0 %v610
    %1392 = vmatprep.subr.mxu0 %v615
    %1393 = vmatpush1.msra.mxu0 %v614
    %1394 = vmatprep.subr.mxu0 0.0
    %1395 = vmatpush1.msra.mxu0 0.0
    %1396 = vmatprep.subr.mxu0 0.0
    %1397 = vmatpush1.msra.mxu0 0.0
    %1398 = vmatprep.subr.mxu0 0.0
    %1399 = vmatpush1.msra.mxu0 0.0
    %1400 = vmatprep.subr.mxu0 0.0
    %1401 = vmatpush1.msra.mxu0 0.0
    %1402 = vmatprep.subr.mxu0 0.0
    %1403 = vmatpush1.msra.mxu0 0.0
    %1404 = vmatprep.subr.mxu0 0.0
    %1405 = vmatpush1.msra.mxu0 0.0
    %1406 = vmatprep.subr.mxu0 0.0
    %1407 = vmatpush1.msra.mxu0 0.0
    %1408 = vmatprep.subr.mxu0 0.0
    %1409 = vmatpush1.msra.mxu0 0.0
    %1410 = vmatprep.subr.mxu0 0.0
    %1411 = vmatpush1.msra.mxu0 0.0
    %1412 = vmatprep.subr.mxu0 0.0
    %1413 = vmatpush1.msra.mxu0 0.0
    %1414 = vmatprep.subr.mxu0 0.0
    %1415 = vmatpush1.msra.mxu0 0.0
    %1416 = vmatprep.subr.mxu0 0.0
    %1417 = vmatpush1.msra.mxu0 0.0
    %1418 = vmatprep.subr.mxu0 0.0
    %1419 = vmatpush1.msra.mxu0 0.0
    %1420 = vmatprep.subr.mxu0 0.0
    %1421 = vmatpush1.msra.mxu0 0.0
    %1422 = vmatprep.subr.mxu0 0.0
    %1423 = vmatpush1.msra.mxu0 0.0
    %1424 = vmatprep.subr.mxu0 0.0
    %1425 = vmatpush1.msra.mxu0 0.0
    %1426 = vmatprep.subr.mxu0 0.0
    %1427 = vmatpush1.msra.mxu0 0.0
    %1428 = vmatprep.subr.mxu0 0.0
    %1429 = vmatpush1.msra.mxu0 0.0
    %1430 = vmatprep.subr.mxu0 0.0
    %1431 = vmatpush1.msra.mxu0 0.0
    %1432 = vmatprep.subr.mxu0 0.0
    %1433 = vmatpush1.msra.mxu0 0.0
    %1434 = vmatprep.subr.mxu0 0.0
    %1435 = vmatpush1.msra.mxu0 0.0
    %1436 = vmatprep.subr.mxu0 0.0
    %1437 = vmatpush1.msra.mxu0 0.0
    %1438 = vmatprep.subr.mxu0 0.0
    %1439 = vmatpush1.msra.mxu0 0.0
    %1440 = vmatprep.subr.mxu0 0.0
    %1441 = vmatpush1.msra.mxu0 0.0
    %1442 = vmatprep.subr.mxu0 0.0
    %1443 = vmatpush1.msra.mxu0 0.0
    %1444 = vmatprep.subr.mxu0 0.0
    %1445 = vmatpush1.msra.mxu0 0.0
    %1446 = vmatprep.mubr.f32.mxu0 0.0
    %1447 = vmatmul.mubr.f32.gmra.mrb[0].mxu0 %v642
    %v1448 = vpop.f32.mrb[0].mxu0
    %v1449 = vadd.f32 %v1228, %v1448
    %v1450 = vpop.f32.mrb[0].mxu0
    %v1451 = vadd.f32 %v1230, %v1450
    %1452 = vmatprep.mubr.f32.mxu0 0.0
    %1453 = vmatmul.mubr.f32.gmra.mrb[0].mxu0 %v645
    %v1454 = vpop.f32.mrb[0].mxu0
    %v1455 = vadd.f32 %v1234, %v1454
    %v1456 = vpop.f32.mrb[0].mxu0
    %v1457 = vadd.f32 %v1236, %v1456
    %1458 = vmatprep.mubr.f32.mxu0 0.0
    %1459 = vmatmul.mubr.f32.gmra.mrb[0].mxu0 %v648
    %v1460 = vpop.f32.mrb[0].mxu0
    %v1461 = vadd.f32 %v1240, %v1460
    %v1462 = vpop.f32.mrb[0].mxu0
    %v1463 = vadd.f32 %v1242, %v1462
    %1464 = vmatprep.mubr.f32.mxu0 0.0
    %1465 = vmatmul.mubr.f32.gmra.mrb[0].mxu0 %v651
    %v1466 = vpop.f32.mrb[0].mxu0
    %v1467 = vadd.f32 %v1246, %v1466
    %v1468 = vpop.f32.mrb[0].mxu0
    %v1469 = vadd.f32 %v1248, %v1468
    %1470 = vmatprep.mubr.f32.mxu0 0.0
    %1471 = vmatmul.mubr.f32.gmra.mrb[0].mxu0 %v654
    %v1472 = vpop.f32.mrb[0].mxu0
    %v1473 = vadd.f32 %v1252, %v1472
    %v1474 = vpop.f32.mrb[0].mxu0
    %v1475 = vadd.f32 %v1254, %v1474
    %1476 = vmatprep.mubr.f32.mxu0 0.0
    %1477 = vmatmul.mubr.f32.gmra.mrb[0].mxu0 %v657
    %v1478 = vpop.f32.mrb[0].mxu0
    %v1479 = vadd.f32 %v1258, %v1478
    %v1480 = vpop.f32.mrb[0].mxu0
    %v1481 = vadd.f32 %v1260, %v1480
    %1482 = vmatprep.mubr.f32.mxu0 0.0
    %1483 = vmatmul.mubr.f32.gmra.mrb[0].mxu0 %v660
    %v1484 = vpop.f32.mrb[0].mxu0
    %v1485 = vadd.f32 %v1264, %v1484
    %v1486 = vpop.f32.mrb[0].mxu0
    %v1487 = vadd.f32 %v1266, %v1486
    %1488 = vmatprep.mubr.f32.mxu0 0.0
    %1489 = vmatmul.mubr.f32.gmra.mrb[0].mxu0 %v663
    %v1490 = vpop.f32.mrb[0].mxu0
    %v1491 = vadd.f32 %v1270, %v1490
    %v1492 = vpop.f32.mrb[0].mxu0
    %v1493 = vadd.f32 %v1272, %v1492
    %1494 = vmatprep.mubr.f32.mxu0 0.0
    %1495 = vmatmul.mubr.f32.gmra.mrb[0].mxu0 %v666
    %v1496 = vpop.f32.mrb[0].mxu0
    %v1497 = vadd.f32 %v1276, %v1496
    %v1498 = vpop.f32.mrb[0].mxu0
    %v1499 = vadd.f32 %v1278, %v1498
    %1500 = vmatprep.mubr.f32.mxu0 0.0
    %1501 = vmatmul.mubr.f32.gmra.mrb[0].mxu0 %v669
    %v1502 = vpop.f32.mrb[0].mxu0
    %v1503 = vadd.f32 %v1282, %v1502
    %v1504 = vpop.f32.mrb[0].mxu0
    %v1505 = vadd.f32 %v1284, %v1504
    %1506 = vmatprep.mubr.f32.mxu0 0.0
    %1507 = vmatmul.mubr.f32.gmra.mrb[0].mxu0 %v672
    %v1508 = vpop.f32.mrb[0].mxu0
    %v1509 = vadd.f32 %v1288, %v1508
    %v1510 = vpop.f32.mrb[0].mxu0
    %v1511 = vadd.f32 %v1290, %v1510
    %1512 = vmatprep.mubr.f32.mxu0 0.0
    %1513 = vmatmul.mubr.f32.gmra.mrb[0].mxu0 %v675
    %v1514 = vpop.f32.mrb[0].mxu0
    %v1515 = vadd.f32 %v1294, %v1514
    %v1516 = vpop.f32.mrb[0].mxu0
    %v1517 = vadd.f32 %v1296, %v1516
    %1518 = vmatprep.mubr.f32.mxu0 0.0
    %1519 = vmatmul.mubr.f32.gmra.mrb[0].mxu0 %v678
    %v1520 = vpop.f32.mrb[0].mxu0
    %v1521 = vadd.f32 %v1300, %v1520
    %v1522 = vpop.f32.mrb[0].mxu0
    %v1523 = vadd.f32 %v1302, %v1522
    %1524 = vmatprep.mubr.f32.mxu0 0.0
    %1525 = vmatmul.mubr.f32.gmra.mrb[0].mxu0 %v681
    %v1526 = vpop.f32.mrb[0].mxu0
    %v1527 = vadd.f32 %v1306, %v1526
    %v1528 = vpop.f32.mrb[0].mxu0
    %v1529 = vadd.f32 %v1308, %v1528
    %1530 = vmatprep.mubr.f32.mxu0 0.0
    %1531 = vmatmul.mubr.f32.gmra.mrb[0].mxu0 %v684
    %v1532 = vpop.f32.mrb[0].mxu0
    %v1533 = vadd.f32 %v1312, %v1532
    %v1534 = vpop.f32.mrb[0].mxu0
    %v1535 = vadd.f32 %v1314, %v1534
    %1536 = vmatprep.mubr.f32.mxu0 0.0
    %1537 = vmatmul.mubr.f32.gmra.mrb[0].mxu0 %v687
    %v1538 = vpop.f32.mrb[0].mxu0
    %v1539 = vadd.f32 %v1318, %v1538
    %v1540 = vpop.f32.mrb[0].mxu0
    %v1541 = vadd.f32 %v1320, %v1540
    %1542 = vmatprep.mubr.f32.mxu0 0.0
    %1543 = vmatmul.mubr.f32.gmra.mrb[0].mxu0 %v690
    %v1544 = vpop.f32.mrb[0].mxu0
    %v1545 = vadd.f32 %v1324, %v1544
    %v1546 = vpop.f32.mrb[0].mxu0
    %v1547 = vadd.f32 %v1326, %v1546
    %1548 = vmatprep.mubr.f32.mxu0 0.0
    %1549 = vmatmul.mubr.f32.gmra.mrb[0].mxu0 %v693
    %v1550 = vpop.f32.mrb[0].mxu0
    %v1551 = vadd.f32 %v1330, %v1550
    %v1552 = vpop.f32.mrb[0].mxu0
    %v1553 = vadd.f32 %v1332, %v1552
    %1554 = vmatprep.mubr.f32.mxu0 0.0
    %1555 = vmatmul.mubr.f32.gmra.mrb[0].mxu0 %v696
    %v1556 = vpop.f32.mrb[0].mxu0
    %v1557 = vadd.f32 %v1336, %v1556
    %v1558 = vpop.f32.mrb[0].mxu0
    %v1559 = vadd.f32 %v1338, %v1558
    %1560 = vmatprep.mubr.f32.mxu0 0.0
    %1561 = vmatmul.mubr.f32.gmra.mrb[0].mxu0 %v699
    %v1562 = vpop.f32.mrb[0].mxu0
    %v1563 = vadd.f32 %v1342, %v1562
    %v1564 = vpop.f32.mrb[0].mxu0
    %v1565 = vadd.f32 %v1344, %v1564
    %1566 = vmatprep.mubr.f32.mxu0 0.0
    %1567 = vmatmul.mubr.f32.gmra.mrb[0].mxu0 %v702
    %v1568 = vpop.f32.mrb[0].mxu0
    %v1569 = vadd.f32 %v1348, %v1568
    %v1570 = vpop.f32.mrb[0].mxu0
    %v1571 = vadd.f32 %v1350, %v1570
    %1572 = vmatprep.mubr.f32.mxu0 0.0
    %1573 = vmatmul.mubr.f32.gmra.mrb[0].mxu0 %v705
    %v1574 = vpop.f32.mrb[0].mxu0
    %v1575 = vadd.f32 %v1354, %v1574
    %v1576 = vpop.f32.mrb[0].mxu0
    %v1577 = vadd.f32 %v1356, %v1576
    %1578 = vmatprep.mubr.f32.mxu0 0.0
    %1579 = vmatmul.mubr.f32.gmra.mrb[0].mxu0 %v708
    %v1580 = vpop.f32.mrb[0].mxu0
    %v1581 = vadd.f32 %v1360, %v1580
    %v1582 = vpop.f32.mrb[0].mxu0
    %v1583 = vadd.f32 %v1362, %v1582
    %1584 = vmatprep.mubr.f32.mxu0 0.0
    %1585 = vmatmul.mubr.f32.gmra.mrb[0].mxu0 %v711
    %v1586 = vpop.f32.mrb[0].mxu0
    %v1587 = vadd.f32 %v1366, %v1586
    %v1588 = vpop.f32.mrb[0].mxu0
    %v1589 = vadd.f32 %v1368, %v1588
    %1590 = vmatprep.mubr.f32.mxu0 0.0
    %1591 = vmatmul.mubr.f32.gmra.mrb[0].mxu0 %v714
    %v1592 = vpop.f32.mrb[0].mxu0
    %v1593 = vadd.f32 %v1372, %v1592
    %v1594 = vpop.f32.mrb[0].mxu0
    %v1595 = vadd.f32 %v1374, %v1594
    %1596 = vmatprep.mubr.f32.mxu0 0.0
    %1597 = vmatmul.mubr.f32.gmra.mrb[0].mxu0 %v717
    %v1598 = vpop.f32.mrb[0].mxu0
    %v1599 = vadd.f32 %v1378, %v1598
    %v1600 = vpop.f32.mrb[0].mxu0
    %v1601 = vadd.f32 %v1380, %v1600
    %1602 = vdwg.mxu0
    %1603 = vmatprep.subr.mxu0 %v213
    %1604 = vmatpush1.msra.mxu0 %v212
    %1605 = vmatprep.subr.mxu0 %v217
    %1606 = vmatpush1.msra.mxu0 %v216
    %1607 = vmatprep.subr.mxu0 %v221
    %1608 = vmatpush1.msra.mxu0 %v220
    %1609 = vmatprep.subr.mxu0 %v225
    %1610 = vmatpush1.msra.mxu0 %v224
    %1611 = vmatprep.subr.mxu0 %v229
    %1612 = vmatpush1.msra.mxu0 %v228
    %1613 = vmatprep.subr.mxu0 %v233
    %1614 = vmatpush1.msra.mxu0 %v232
    %1615 = vmatprep.subr.mxu0 %v237
    %1616 = vmatpush1.msra.mxu0 %v236
    %1617 = vmatprep.subr.mxu0 %v241
    %1618 = vmatpush1.msra.mxu0 %v240
    %1619 = vmatprep.subr.mxu0 %v245
    %1620 = vmatpush1.msra.mxu0 %v244
    %1621 = vmatprep.subr.mxu0 %v249
    %1622 = vmatpush1.msra.mxu0 %v248
    %1623 = vmatprep.subr.mxu0 %v253
    %1624 = vmatpush1.msra.mxu0 %v252
    %1625 = vmatprep.subr.mxu0 %v257
    %1626 = vmatpush1.msra.mxu0 %v256
    %1627 = vmatprep.subr.mxu0 %v261
    %1628 = vmatpush1.msra.mxu0 %v260
    %1629 = vmatprep.subr.mxu0 %v265
    %1630 = vmatpush1.msra.mxu0 %v264
    %1631 = vmatprep.subr.mxu0 %v269
    %1632 = vmatpush1.msra.mxu0 %v268
    %1633 = vmatprep.subr.mxu0 %v273
    %1634 = vmatpush1.msra.mxu0 %v272
    %1635 = vmatprep.subr.mxu0 %v277
    %1636 = vmatpush1.msra.mxu0 %v276
    %1637 = vmatprep.subr.mxu0 %v281
    %1638 = vmatpush1.msra.mxu0 %v280
    %1639 = vmatprep.subr.mxu0 %v285
    %1640 = vmatpush1.msra.mxu0 %v284
    %1641 = vmatprep.subr.mxu0 %v289
    %1642 = vmatpush1.msra.mxu0 %v288
    %1643 = vmatprep.subr.mxu0 %v293
    %1644 = vmatpush1.msra.mxu0 %v292
    %1645 = vmatprep.subr.mxu0 %v297
    %1646 = vmatpush1.msra.mxu0 %v296
    %1647 = vmatprep.subr.mxu0 %v301
    %1648 = vmatpush1.msra.mxu0 %v300
    %1649 = vmatprep.subr.mxu0 %v305
    %1650 = vmatpush1.msra.mxu0 %v304
    %1651 = vmatprep.subr.mxu0 %v309
    %1652 = vmatpush1.msra.mxu0 %v308
    %1653 = vmatprep.subr.mxu0 %v313
    %1654 = vmatpush1.msra.mxu0 %v312
    %1655 = vmatprep.subr.mxu0 %v317
    %1656 = vmatpush1.msra.mxu0 %v316
    %1657 = vmatprep.subr.mxu0 %v321
    %1658 = vmatpush1.msra.mxu0 %v320
    %1659 = vmatprep.subr.mxu0 %v325
    %1660 = vmatpush1.msra.mxu0 %v324
    %1661 = vmatprep.subr.mxu0 %v329
    %1662 = vmatpush1.msra.mxu0 %v328
    %1663 = vmatprep.subr.mxu0 %v333
    %1664 = vmatpush1.msra.mxu0 %v332
    %1665 = vmatprep.subr.mxu0 %v337
    %1666 = vmatpush1.msra.mxu0 %v336
    %1667 = vmatprep.mubr.f32.mxu0 %v29
    %1668 = vmatmul.mubr.f32.gmra.mrb[0].mxu0 %v28
    %v1669 = vpop.f32.mrb[0].mxu0
    %v1670 = vadd.f32 %v631, %v1669
    %v1671 = vpop.f32.mrb[0].mxu0
    %v1672 = vadd.f32 %v635, %v1671
    %1673 = vmatprep.mubr.f32.mxu0 %v36
    %1674 = vmatmul.mubr.f32.gmra.mrb[0].mxu0 %v35
    %v1675 = vpop.f32.mrb[0].mxu0
    %v1676 = vadd.f32 %v631, %v1675
    %v1677 = vpop.f32.mrb[0].mxu0
    %v1678 = vadd.f32 %v635, %v1677
    %1679 = vmatprep.mubr.f32.mxu0 %v43
    %1680 = vmatmul.mubr.f32.gmra.mrb[0].mxu0 %v42
    %v1681 = vpop.f32.mrb[0].mxu0
    %v1682 = vadd.f32 %v631, %v1681
    %v1683 = vpop.f32.mrb[0].mxu0
    %v1684 = vadd.f32 %v635, %v1683
    %1685 = vmatprep.mubr.f32.mxu0 %v50
    %1686 = vmatmul.mubr.f32.gmra.mrb[0].mxu0 %v49
    %v1687 = vpop.f32.mrb[0].mxu0
    %v1688 = vadd.f32 %v631, %v1687
    %v1689 = vpop.f32.mrb[0].mxu0
    %v1690 = vadd.f32 %v635, %v1689
    %1691 = vmatprep.mubr.f32.mxu0 %v57
    %1692 = vmatmul.mubr.f32.gmra.mrb[0].mxu0 %v56
    %v1693 = vpop.f32.mrb[0].mxu0
    %v1694 = vadd.f32 %v631, %v1693
    %v1695 = vpop.f32.mrb[0].mxu0
    %v1696 = vadd.f32 %v635, %v1695
    %1697 = vmatprep.mubr.f32.mxu0 %v64
    %1698 = vmatmul.mubr.f32.gmra.mrb[0].mxu0 %v63
    %v1699 = vpop.f32.mrb[0].mxu0
    %v1700 = vadd.f32 %v631, %v1699
    %v1701 = vpop.f32.mrb[0].mxu0
    %v1702 = vadd.f32 %v635, %v1701
    %1703 = vmatprep.mubr.f32.mxu0 %v71
    %1704 = vmatmul.mubr.f32.gmra.mrb[0].mxu0 %v70
    %v1705 = vpop.f32.mrb[0].mxu0
    %v1706 = vadd.f32 %v631, %v1705
    %v1707 = vpop.f32.mrb[0].mxu0
    %v1708 = vadd.f32 %v635, %v1707
    %1709 = vmatprep.mubr.f32.mxu0 %v78
    %1710 = vmatmul.mubr.f32.gmra.mrb[0].mxu0 %v77
    %v1711 = vpop.f32.mrb[0].mxu0
    %v1712 = vadd.f32 %v631, %v1711
    %v1713 = vpop.f32.mrb[0].mxu0
    %v1714 = vadd.f32 %v635, %v1713
    %1715 = vmatprep.mubr.f32.mxu0 %v85
    %1716 = vmatmul.mubr.f32.gmra.mrb[0].mxu0 %v84
    %v1717 = vpop.f32.mrb[0].mxu0
    %v1718 = vadd.f32 %v631, %v1717
    %v1719 = vpop.f32.mrb[0].mxu0
    %v1720 = vadd.f32 %v635, %v1719
    %1721 = vmatprep.mubr.f32.mxu0 %v92
    %1722 = vmatmul.mubr.f32.gmra.mrb[0].mxu0 %v91
    %v1723 = vpop.f32.mrb[0].mxu0
    %v1724 = vadd.f32 %v631, %v1723
    %v1725 = vpop.f32.mrb[0].mxu0
    %v1726 = vadd.f32 %v635, %v1725
    %1727 = vmatprep.mubr.f32.mxu0 %v99
    %1728 = vmatmul.mubr.f32.gmra.mrb[0].mxu0 %v98
    %v1729 = vpop.f32.mrb[0].mxu0
    %v1730 = vadd.f32 %v631, %v1729
    %v1731 = vpop.f32.mrb[0].mxu0
    %v1732 = vadd.f32 %v635, %v1731
    %1733 = vmatprep.mubr.f32.mxu0 %v106
    %1734 = vmatmul.mubr.f32.gmra.mrb[0].mxu0 %v105
    %v1735 = vpop.f32.mrb[0].mxu0
    %v1736 = vadd.f32 %v631, %v1735
    %v1737 = vpop.f32.mrb[0].mxu0
    %v1738 = vadd.f32 %v635, %v1737
    %1739 = vmatprep.mubr.f32.mxu0 %v113
    %1740 = vmatmul.mubr.f32.gmra.mrb[0].mxu0 %v112
    %v1741 = vpop.f32.mrb[0].mxu0
    %v1742 = vadd.f32 %v631, %v1741
    %v1743 = vpop.f32.mrb[0].mxu0
    %v1744 = vadd.f32 %v635, %v1743
    %1745 = vmatprep.mubr.f32.mxu0 %v120
    %1746 = vmatmul.mubr.f32.gmra.mrb[0].mxu0 %v119
    %v1747 = vpop.f32.mrb[0].mxu0
    %v1748 = vadd.f32 %v631, %v1747
    %v1749 = vpop.f32.mrb[0].mxu0
    %v1750 = vadd.f32 %v635, %v1749
    %1751 = vmatprep.mubr.f32.mxu0 %v127
    %1752 = vmatmul.mubr.f32.gmra.mrb[0].mxu0 %v126
    %v1753 = vpop.f32.mrb[0].mxu0
    %v1754 = vadd.f32 %v631, %v1753
    %v1755 = vpop.f32.mrb[0].mxu0
    %v1756 = vadd.f32 %v635, %v1755
    %1757 = vmatprep.mubr.f32.mxu0 %v134
    %1758 = vmatmul.mubr.f32.gmra.mrb[0].mxu0 %v133
    %v1759 = vpop.f32.mrb[0].mxu0
    %v1760 = vadd.f32 %v631, %v1759
    %v1761 = vpop.f32.mrb[0].mxu0
    %v1762 = vadd.f32 %v635, %v1761
    %1763 = vmatprep.mubr.f32.mxu0 %v141
    %1764 = vmatmul.mubr.f32.gmra.mrb[0].mxu0 %v140
    %v1765 = vpop.f32.mrb[0].mxu0
    %v1766 = vadd.f32 %v631, %v1765
    %v1767 = vpop.f32.mrb[0].mxu0
    %v1768 = vadd.f32 %v635, %v1767
    %1769 = vmatprep.mubr.f32.mxu0 %v148
    %1770 = vmatmul.mubr.f32.gmra.mrb[0].mxu0 %v147
    %v1771 = vpop.f32.mrb[0].mxu0
    %v1772 = vadd.f32 %v631, %v1771
    %v1773 = vpop.f32.mrb[0].mxu0
    %v1774 = vadd.f32 %v635, %v1773
    %1775 = vmatprep.mubr.f32.mxu0 %v155
    %1776 = vmatmul.mubr.f32.gmra.mrb[0].mxu0 %v154
    %v1777 = vpop.f32.mrb[0].mxu0
    %v1778 = vadd.f32 %v631, %v1777
    %v1779 = vpop.f32.mrb[0].mxu0
    %v1780 = vadd.f32 %v635, %v1779
    %1781 = vmatprep.mubr.f32.mxu0 %v162
    %1782 = vmatmul.mubr.f32.gmra.mrb[0].mxu0 %v161
    %v1783 = vpop.f32.mrb[0].mxu0
    %v1784 = vadd.f32 %v631, %v1783
    %v1785 = vpop.f32.mrb[0].mxu0
    %v1786 = vadd.f32 %v635, %v1785
    %1787 = vmatprep.mubr.f32.mxu0 %v169
    %1788 = vmatmul.mubr.f32.gmra.mrb[0].mxu0 %v168
    %v1789 = vpop.f32.mrb[0].mxu0
    %v1790 = vadd.f32 %v631, %v1789
    %v1791 = vpop.f32.mrb[0].mxu0
    %v1792 = vadd.f32 %v635, %v1791
    %1793 = vmatprep.mubr.f32.mxu0 %v176
    %1794 = vmatmul.mubr.f32.gmra.mrb[0].mxu0 %v175
    %v1795 = vpop.f32.mrb[0].mxu0
    %v1796 = vadd.f32 %v631, %v1795
    %v1797 = vpop.f32.mrb[0].mxu0
    %v1798 = vadd.f32 %v635, %v1797
    %1799 = vmatprep.mubr.f32.mxu0 %v183
    %1800 = vmatmul.mubr.f32.gmra.mrb[0].mxu0 %v182
    %v1801 = vpop.f32.mrb[0].mxu0
    %v1802 = vadd.f32 %v631, %v1801
    %v1803 = vpop.f32.mrb[0].mxu0
    %v1804 = vadd.f32 %v635, %v1803
    %1805 = vmatprep.mubr.f32.mxu0 %v190
    %1806 = vmatmul.mubr.f32.gmra.mrb[0].mxu0 %v189
    %v1807 = vpop.f32.mrb[0].mxu0
    %v1808 = vadd.f32 %v631, %v1807
    %v1809 = vpop.f32.mrb[0].mxu0
    %v1810 = vadd.f32 %v635, %v1809
    %1811 = vmatprep.mubr.f32.mxu0 %v197
    %1812 = vmatmul.mubr.f32.gmra.mrb[0].mxu0 %v196
    %v1813 = vpop.f32.mrb[0].mxu0
    %v1814 = vadd.f32 %v631, %v1813
    %v1815 = vpop.f32.mrb[0].mxu0
    %v1816 = vadd.f32 %v635, %v1815
    %1817 = vmatprep.mubr.f32.mxu0 %v204
    %1818 = vmatmul.mubr.f32.gmra.mrb[0].mxu0 %v203
    %v1819 = vpop.f32.mrb[0].mxu0
    %v1820 = vadd.f32 %v631, %v1819
    %v1821 = vpop.f32.mrb[0].mxu0
    %v1822 = vadd.f32 %v635, %v1821
    %1823 = vdwg.mxu0
    %1824 = vmatprep.subr.mxu0 %v341
    %1825 = vmatpush1.msra.mxu0 %v340
    %1826 = vmatprep.subr.mxu0 %v345
    %1827 = vmatpush1.msra.mxu0 %v344
    %1828 = vmatprep.subr.mxu0 %v349
    %1829 = vmatpush1.msra.mxu0 %v348
    %1830 = vmatprep.subr.mxu0 %v353
    %1831 = vmatpush1.msra.mxu0 %v352
    %1832 = vmatprep.subr.mxu0 %v357
    %1833 = vmatpush1.msra.mxu0 %v356
    %1834 = vmatprep.subr.mxu0 %v361
    %1835 = vmatpush1.msra.mxu0 %v360
    %1836 = vmatprep.subr.mxu0 %v365
    %1837 = vmatpush1.msra.mxu0 %v364
    %1838 = vmatprep.subr.mxu0 %v369
    %1839 = vmatpush1.msra.mxu0 %v368
    %1840 = vmatprep.subr.mxu0 %v373
    %1841 = vmatpush1.msra.mxu0 %v372
    %1842 = vmatprep.subr.mxu0 %v377
    %1843 = vmatpush1.msra.mxu0 %v376
    %1844 = vmatprep.subr.mxu0 %v381
    %1845 = vmatpush1.msra.mxu0 %v380
    %1846 = vmatprep.subr.mxu0 %v385
    %1847 = vmatpush1.msra.mxu0 %v384
    %1848 = vmatprep.subr.mxu0 %v389
    %1849 = vmatpush1.msra.mxu0 %v388
    %1850 = vmatprep.subr.mxu0 %v393
    %1851 = vmatpush1.msra.mxu0 %v392
    %1852 = vmatprep.subr.mxu0 %v397
    %1853 = vmatpush1.msra.mxu0 %v396
    %1854 = vmatprep.subr.mxu0 %v401
    %1855 = vmatpush1.msra.mxu0 %v400
    %1856 = vmatprep.subr.mxu0 %v405
    %1857 = vmatpush1.msra.mxu0 %v404
    %1858 = vmatprep.subr.mxu0 %v409
    %1859 = vmatpush1.msra.mxu0 %v408
    %1860 = vmatprep.subr.mxu0 %v413
    %1861 = vmatpush1.msra.mxu0 %v412
    %1862 = vmatprep.subr.mxu0 %v417
    %1863 = vmatpush1.msra.mxu0 %v416
    %1864 = vmatprep.subr.mxu0 %v421
    %1865 = vmatpush1.msra.mxu0 %v420
    %1866 = vmatprep.subr.mxu0 %v425
    %1867 = vmatpush1.msra.mxu0 %v424
    %1868 = vmatprep.subr.mxu0 %v429
    %1869 = vmatpush1.msra.mxu0 %v428
    %1870 = vmatprep.subr.mxu0 %v433
    %1871 = vmatpush1.msra.mxu0 %v432
    %1872 = vmatprep.subr.mxu0 %v437
    %1873 = vmatpush1.msra.mxu0 %v436
    %1874 = vmatprep.subr.mxu0 %v441
    %1875 = vmatpush1.msra.mxu0 %v440
    %1876 = vmatprep.subr.mxu0 %v445
    %1877 = vmatpush1.msra.mxu0 %v444
    %1878 = vmatprep.subr.mxu0 %v449
    %1879 = vmatpush1.msra.mxu0 %v448
    %1880 = vmatprep.subr.mxu0 %v453
    %1881 = vmatpush1.msra.mxu0 %v452
    %1882 = vmatprep.subr.mxu0 %v457
    %1883 = vmatpush1.msra.mxu0 %v456
    %1884 = vmatprep.subr.mxu0 %v461
    %1885 = vmatpush1.msra.mxu0 %v460
    %1886 = vmatprep.subr.mxu0 %v465
    %1887 = vmatpush1.msra.mxu0 %v464
    %1888 = vmatprep.mubr.f32.mxu0 %v31
    %1889 = vmatmul.mubr.f32.gmra.mrb[0].mxu0 %v30
    %v1890 = vpop.f32.mrb[0].mxu0
    %v1891 = vadd.f32 %v1670, %v1890
    %v1892 = vpop.f32.mrb[0].mxu0
    %v1893 = vadd.f32 %v1672, %v1892
    %1894 = vmatprep.mubr.f32.mxu0 %v38
    %1895 = vmatmul.mubr.f32.gmra.mrb[0].mxu0 %v37
    %v1896 = vpop.f32.mrb[0].mxu0
    %v1897 = vadd.f32 %v1676, %v1896
    %v1898 = vpop.f32.mrb[0].mxu0
    %v1899 = vadd.f32 %v1678, %v1898
    %1900 = vmatprep.mubr.f32.mxu0 %v45
    %1901 = vmatmul.mubr.f32.gmra.mrb[0].mxu0 %v44
    %v1902 = vpop.f32.mrb[0].mxu0
    %v1903 = vadd.f32 %v1682, %v1902
    %v1904 = vpop.f32.mrb[0].mxu0
    %v1905 = vadd.f32 %v1684, %v1904
    %1906 = vmatprep.mubr.f32.mxu0 %v52
    %1907 = vmatmul.mubr.f32.gmra.mrb[0].mxu0 %v51
    %v1908 = vpop.f32.mrb[0].mxu0
    %v1909 = vadd.f32 %v1688, %v1908
    %v1910 = vpop.f32.mrb[0].mxu0
    %v1911 = vadd.f32 %v1690, %v1910
    %1912 = vmatprep.mubr.f32.mxu0 %v59
    %1913 = vmatmul.mubr.f32.gmra.mrb[0].mxu0 %v58
    %v1914 = vpop.f32.mrb[0].mxu0
    %v1915 = vadd.f32 %v1694, %v1914
    %v1916 = vpop.f32.mrb[0].mxu0
    %v1917 = vadd.f32 %v1696, %v1916
    %1918 = vmatprep.mubr.f32.mxu0 %v66
    %1919 = vmatmul.mubr.f32.gmra.mrb[0].mxu0 %v65
    %v1920 = vpop.f32.mrb[0].mxu0
    %v1921 = vadd.f32 %v1700, %v1920
    %v1922 = vpop.f32.mrb[0].mxu0
    %v1923 = vadd.f32 %v1702, %v1922
    %1924 = vmatprep.mubr.f32.mxu0 %v73
    %1925 = vmatmul.mubr.f32.gmra.mrb[0].mxu0 %v72
    %v1926 = vpop.f32.mrb[0].mxu0
    %v1927 = vadd.f32 %v1706, %v1926
    %v1928 = vpop.f32.mrb[0].mxu0
    %v1929 = vadd.f32 %v1708, %v1928
    %1930 = vmatprep.mubr.f32.mxu0 %v80
    %1931 = vmatmul.mubr.f32.gmra.mrb[0].mxu0 %v79
    %v1932 = vpop.f32.mrb[0].mxu0
    %v1933 = vadd.f32 %v1712, %v1932
    %v1934 = vpop.f32.mrb[0].mxu0
    %v1935 = vadd.f32 %v1714, %v1934
    %1936 = vmatprep.mubr.f32.mxu0 %v87
    %1937 = vmatmul.mubr.f32.gmra.mrb[0].mxu0 %v86
    %v1938 = vpop.f32.mrb[0].mxu0
    %v1939 = vadd.f32 %v1718, %v1938
    %v1940 = vpop.f32.mrb[0].mxu0
    %v1941 = vadd.f32 %v1720, %v1940
    %1942 = vmatprep.mubr.f32.mxu0 %v94
    %1943 = vmatmul.mubr.f32.gmra.mrb[0].mxu0 %v93
    %v1944 = vpop.f32.mrb[0].mxu0
    %v1945 = vadd.f32 %v1724, %v1944
    %v1946 = vpop.f32.mrb[0].mxu0
    %v1947 = vadd.f32 %v1726, %v1946
    %1948 = vmatprep.mubr.f32.mxu0 %v101
    %1949 = vmatmul.mubr.f32.gmra.mrb[0].mxu0 %v100
    %v1950 = vpop.f32.mrb[0].mxu0
    %v1951 = vadd.f32 %v1730, %v1950
    %v1952 = vpop.f32.mrb[0].mxu0
    %v1953 = vadd.f32 %v1732, %v1952
    %1954 = vmatprep.mubr.f32.mxu0 %v108
    %1955 = vmatmul.mubr.f32.gmra.mrb[0].mxu0 %v107
    %v1956 = vpop.f32.mrb[0].mxu0
    %v1957 = vadd.f32 %v1736, %v1956
    %v1958 = vpop.f32.mrb[0].mxu0
    %v1959 = vadd.f32 %v1738, %v1958
    %1960 = vmatprep.mubr.f32.mxu0 %v115
    %1961 = vmatmul.mubr.f32.gmra.mrb[0].mxu0 %v114
    %v1962 = vpop.f32.mrb[0].mxu0
    %v1963 = vadd.f32 %v1742, %v1962
    %v1964 = vpop.f32.mrb[0].mxu0
    %v1965 = vadd.f32 %v1744, %v1964
    %1966 = vmatprep.mubr.f32.mxu0 %v122
    %1967 = vmatmul.mubr.f32.gmra.mrb[0].mxu0 %v121
    %v1968 = vpop.f32.mrb[0].mxu0
    %v1969 = vadd.f32 %v1748, %v1968
    %v1970 = vpop.f32.mrb[0].mxu0
    %v1971 = vadd.f32 %v1750, %v1970
    %1972 = vmatprep.mubr.f32.mxu0 %v129
    %1973 = vmatmul.mubr.f32.gmra.mrb[0].mxu0 %v128
    %v1974 = vpop.f32.mrb[0].mxu0
    %v1975 = vadd.f32 %v1754, %v1974
    %v1976 = vpop.f32.mrb[0].mxu0
    %v1977 = vadd.f32 %v1756, %v1976
    %1978 = vmatprep.mubr.f32.mxu0 %v136
    %1979 = vmatmul.mubr.f32.gmra.mrb[0].mxu0 %v135
    %v1980 = vpop.f32.mrb[0].mxu0
    %v1981 = vadd.f32 %v1760, %v1980
    %v1982 = vpop.f32.mrb[0].mxu0
    %v1983 = vadd.f32 %v1762, %v1982
    %1984 = vmatprep.mubr.f32.mxu0 %v143
    %1985 = vmatmul.mubr.f32.gmra.mrb[0].mxu0 %v142
    %v1986 = vpop.f32.mrb[0].mxu0
    %v1987 = vadd.f32 %v1766, %v1986
    %v1988 = vpop.f32.mrb[0].mxu0
    %v1989 = vadd.f32 %v1768, %v1988
    %1990 = vmatprep.mubr.f32.mxu0 %v150
    %1991 = vmatmul.mubr.f32.gmra.mrb[0].mxu0 %v149
    %v1992 = vpop.f32.mrb[0].mxu0
    %v1993 = vadd.f32 %v1772, %v1992
    %v1994 = vpop.f32.mrb[0].mxu0
    %v1995 = vadd.f32 %v1774, %v1994
    %1996 = vmatprep.mubr.f32.mxu0 %v157
    %1997 = vmatmul.mubr.f32.gmra.mrb[0].mxu0 %v156
    %v1998 = vpop.f32.mrb[0].mxu0
    %v1999 = vadd.f32 %v1778, %v1998
    %v2000 = vpop.f32.mrb[0].mxu0
    %v2001 = vadd.f32 %v1780, %v2000
    %2002 = vmatprep.mubr.f32.mxu0 %v164
    %2003 = vmatmul.mubr.f32.gmra.mrb[0].mxu0 %v163
    %v2004 = vpop.f32.mrb[0].mxu0
    %v2005 = vadd.f32 %v1784, %v2004
    %v2006 = vpop.f32.mrb[0].mxu0
    %v2007 = vadd.f32 %v1786, %v2006
    %2008 = vmatprep.mubr.f32.mxu0 %v171
    %2009 = vmatmul.mubr.f32.gmra.mrb[0].mxu0 %v170
    %v2010 = vpop.f32.mrb[0].mxu0
    %v2011 = vadd.f32 %v1790, %v2010
    %v2012 = vpop.f32.mrb[0].mxu0
    %v2013 = vadd.f32 %v1792, %v2012
    %2014 = vmatprep.mubr.f32.mxu0 %v178
    %2015 = vmatmul.mubr.f32.gmra.mrb[0].mxu0 %v177
    %v2016 = vpop.f32.mrb[0].mxu0
    %v2017 = vadd.f32 %v1796, %v2016
    %v2018 = vpop.f32.mrb[0].mxu0
    %v2019 = vadd.f32 %v1798, %v2018
    %2020 = vmatprep.mubr.f32.mxu0 %v185
    %2021 = vmatmul.mubr.f32.gmra.mrb[0].mxu0 %v184
    %v2022 = vpop.f32.mrb[0].mxu0
    %v2023 = vadd.f32 %v1802, %v2022
    %v2024 = vpop.f32.mrb[0].mxu0
    %v2025 = vadd.f32 %v1804, %v2024
    %2026 = vmatprep.mubr.f32.mxu0 %v192
    %2027 = vmatmul.mubr.f32.gmra.mrb[0].mxu0 %v191
    %v2028 = vpop.f32.mrb[0].mxu0
    %v2029 = vadd.f32 %v1808, %v2028
    %v2030 = vpop.f32.mrb[0].mxu0
    %v2031 = vadd.f32 %v1810, %v2030
    %2032 = vmatprep.mubr.f32.mxu0 %v199
    %2033 = vmatmul.mubr.f32.gmra.mrb[0].mxu0 %v198
    %v2034 = vpop.f32.mrb[0].mxu0
    %v2035 = vadd.f32 %v1814, %v2034
    %v2036 = vpop.f32.mrb[0].mxu0
    %v2037 = vadd.f32 %v1816, %v2036
    %2038 = vmatprep.mubr.f32.mxu0 %v206
    %2039 = vmatmul.mubr.f32.gmra.mrb[0].mxu0 %v205
    %v2040 = vpop.f32.mrb[0].mxu0
    %v2041 = vadd.f32 %v1820, %v2040
    %v2042 = vpop.f32.mrb[0].mxu0
    %v2043 = vadd.f32 %v1822, %v2042
    %2044 = vdwg.mxu0
    %2045 = vmatprep.subr.mxu0 %v469
    %2046 = vmatpush1.msra.mxu0 %v468
    %2047 = vmatprep.subr.mxu0 %v473
    %2048 = vmatpush1.msra.mxu0 %v472
    %2049 = vmatprep.subr.mxu0 %v477
    %2050 = vmatpush1.msra.mxu0 %v476
    %2051 = vmatprep.subr.mxu0 %v481
    %2052 = vmatpush1.msra.mxu0 %v480
    %2053 = vmatprep.subr.mxu0 %v485
    %2054 = vmatpush1.msra.mxu0 %v484
    %2055 = vmatprep.subr.mxu0 %v489
    %2056 = vmatpush1.msra.mxu0 %v488
    %2057 = vmatprep.subr.mxu0 %v493
    %2058 = vmatpush1.msra.mxu0 %v492
    %2059 = vmatprep.subr.mxu0 %v497
    %2060 = vmatpush1.msra.mxu0 %v496
    %2061 = vmatprep.subr.mxu0 %v501
    %2062 = vmatpush1.msra.mxu0 %v500
    %2063 = vmatprep.subr.mxu0 %v505
    %2064 = vmatpush1.msra.mxu0 %v504
    %2065 = vmatprep.subr.mxu0 %v509
    %2066 = vmatpush1.msra.mxu0 %v508
    %2067 = vmatprep.subr.mxu0 %v513
    %2068 = vmatpush1.msra.mxu0 %v512
    %2069 = vmatprep.subr.mxu0 %v517
    %2070 = vmatpush1.msra.mxu0 %v516
    %2071 = vmatprep.subr.mxu0 %v521
    %2072 = vmatpush1.msra.mxu0 %v520
    %2073 = vmatprep.subr.mxu0 %v525
    %2074 = vmatpush1.msra.mxu0 %v524
    %2075 = vmatprep.subr.mxu0 %v529
    %2076 = vmatpush1.msra.mxu0 %v528
    %2077 = vmatprep.subr.mxu0 %v533
    %2078 = vmatpush1.msra.mxu0 %v532
    %2079 = vmatprep.subr.mxu0 %v537
    %2080 = vmatpush1.msra.mxu0 %v536
    %2081 = vmatprep.subr.mxu0 %v541
    %2082 = vmatpush1.msra.mxu0 %v540
    %2083 = vmatprep.subr.mxu0 %v545
    %2084 = vmatpush1.msra.mxu0 %v544
    %2085 = vmatprep.subr.mxu0 %v549
    %2086 = vmatpush1.msra.mxu0 %v548
    %2087 = vmatprep.subr.mxu0 %v553
    %2088 = vmatpush1.msra.mxu0 %v552
    %2089 = vmatprep.subr.mxu0 %v557
    %2090 = vmatpush1.msra.mxu0 %v556
    %2091 = vmatprep.subr.mxu0 %v561
    %2092 = vmatpush1.msra.mxu0 %v560
    %2093 = vmatprep.subr.mxu0 %v565
    %2094 = vmatpush1.msra.mxu0 %v564
    %2095 = vmatprep.subr.mxu0 %v569
    %2096 = vmatpush1.msra.mxu0 %v568
    %2097 = vmatprep.subr.mxu0 %v573
    %2098 = vmatpush1.msra.mxu0 %v572
    %2099 = vmatprep.subr.mxu0 %v577
    %2100 = vmatpush1.msra.mxu0 %v576
    %2101 = vmatprep.subr.mxu0 %v581
    %2102 = vmatpush1.msra.mxu0 %v580
    %2103 = vmatprep.subr.mxu0 %v585
    %2104 = vmatpush1.msra.mxu0 %v584
    %2105 = vmatprep.subr.mxu0 %v589
    %2106 = vmatpush1.msra.mxu0 %v588
    %2107 = vmatprep.subr.mxu0 %v593
    %2108 = vmatpush1.msra.mxu0 %v592
    %2109 = vmatprep.mubr.f32.mxu0 %v33
    %2110 = vmatmul.mubr.f32.gmra.mrb[0].mxu0 %v32
    %v2111 = vpop.f32.mrb[0].mxu0
    %v2112 = vadd.f32 %v1891, %v2111
    %v2113 = vpop.f32.mrb[0].mxu0
    %v2114 = vadd.f32 %v1893, %v2113
    %2115 = vmatprep.mubr.f32.mxu0 %v40
    %2116 = vmatmul.mubr.f32.gmra.mrb[0].mxu0 %v39
    %v2117 = vpop.f32.mrb[0].mxu0
    %v2118 = vadd.f32 %v1897, %v2117
    %v2119 = vpop.f32.mrb[0].mxu0
    %v2120 = vadd.f32 %v1899, %v2119
    %2121 = vmatprep.mubr.f32.mxu0 %v47
    %2122 = vmatmul.mubr.f32.gmra.mrb[0].mxu0 %v46
    %v2123 = vpop.f32.mrb[0].mxu0
    %v2124 = vadd.f32 %v1903, %v2123
    %v2125 = vpop.f32.mrb[0].mxu0
    %v2126 = vadd.f32 %v1905, %v2125
    %2127 = vmatprep.mubr.f32.mxu0 %v54
    %2128 = vmatmul.mubr.f32.gmra.mrb[0].mxu0 %v53
    %v2129 = vpop.f32.mrb[0].mxu0
    %v2130 = vadd.f32 %v1909, %v2129
    %v2131 = vpop.f32.mrb[0].mxu0
    %v2132 = vadd.f32 %v1911, %v2131
    %2133 = vmatprep.mubr.f32.mxu0 %v61
    %2134 = vmatmul.mubr.f32.gmra.mrb[0].mxu0 %v60
    %v2135 = vpop.f32.mrb[0].mxu0
    %v2136 = vadd.f32 %v1915, %v2135
    %v2137 = vpop.f32.mrb[0].mxu0
    %v2138 = vadd.f32 %v1917, %v2137
    %2139 = vmatprep.mubr.f32.mxu0 %v68
    %2140 = vmatmul.mubr.f32.gmra.mrb[0].mxu0 %v67
    %v2141 = vpop.f32.mrb[0].mxu0
    %v2142 = vadd.f32 %v1921, %v2141
    %v2143 = vpop.f32.mrb[0].mxu0
    %v2144 = vadd.f32 %v1923, %v2143
    %2145 = vmatprep.mubr.f32.mxu0 %v75
    %2146 = vmatmul.mubr.f32.gmra.mrb[0].mxu0 %v74
    %v2147 = vpop.f32.mrb[0].mxu0
    %v2148 = vadd.f32 %v1927, %v2147
    %v2149 = vpop.f32.mrb[0].mxu0
    %v2150 = vadd.f32 %v1929, %v2149
    %2151 = vmatprep.mubr.f32.mxu0 %v82
    %2152 = vmatmul.mubr.f32.gmra.mrb[0].mxu0 %v81
    %v2153 = vpop.f32.mrb[0].mxu0
    %v2154 = vadd.f32 %v1933, %v2153
    %v2155 = vpop.f32.mrb[0].mxu0
    %v2156 = vadd.f32 %v1935, %v2155
    %2157 = vmatprep.mubr.f32.mxu0 %v89
    %2158 = vmatmul.mubr.f32.gmra.mrb[0].mxu0 %v88
    %v2159 = vpop.f32.mrb[0].mxu0
    %v2160 = vadd.f32 %v1939, %v2159
    %v2161 = vpop.f32.mrb[0].mxu0
    %v2162 = vadd.f32 %v1941, %v2161
    %2163 = vmatprep.mubr.f32.mxu0 %v96
    %2164 = vmatmul.mubr.f32.gmra.mrb[0].mxu0 %v95
    %v2165 = vpop.f32.mrb[0].mxu0
    %v2166 = vadd.f32 %v1945, %v2165
    %v2167 = vpop.f32.mrb[0].mxu0
    %v2168 = vadd.f32 %v1947, %v2167
    %2169 = vmatprep.mubr.f32.mxu0 %v103
    %2170 = vmatmul.mubr.f32.gmra.mrb[0].mxu0 %v102
    %v2171 = vpop.f32.mrb[0].mxu0
    %v2172 = vadd.f32 %v1951, %v2171
    %v2173 = vpop.f32.mrb[0].mxu0
    %v2174 = vadd.f32 %v1953, %v2173
    %2175 = vmatprep.mubr.f32.mxu0 %v110
    %2176 = vmatmul.mubr.f32.gmra.mrb[0].mxu0 %v109
    %v2177 = vpop.f32.mrb[0].mxu0
    %v2178 = vadd.f32 %v1957, %v2177
    %v2179 = vpop.f32.mrb[0].mxu0
    %v2180 = vadd.f32 %v1959, %v2179
    %2181 = vmatprep.mubr.f32.mxu0 %v117
    %2182 = vmatmul.mubr.f32.gmra.mrb[0].mxu0 %v116
    %v2183 = vpop.f32.mrb[0].mxu0
    %v2184 = vadd.f32 %v1963, %v2183
    %v2185 = vpop.f32.mrb[0].mxu0
    %v2186 = vadd.f32 %v1965, %v2185
    %2187 = vmatprep.mubr.f32.mxu0 %v124
    %2188 = vmatmul.mubr.f32.gmra.mrb[0].mxu0 %v123
    %v2189 = vpop.f32.mrb[0].mxu0
    %v2190 = vadd.f32 %v1969, %v2189
    %v2191 = vpop.f32.mrb[0].mxu0
    %v2192 = vadd.f32 %v1971, %v2191
    %2193 = vmatprep.mubr.f32.mxu0 %v131
    %2194 = vmatmul.mubr.f32.gmra.mrb[0].mxu0 %v130
    %v2195 = vpop.f32.mrb[0].mxu0
    %v2196 = vadd.f32 %v1975, %v2195
    %v2197 = vpop.f32.mrb[0].mxu0
    %v2198 = vadd.f32 %v1977, %v2197
    %2199 = vmatprep.mubr.f32.mxu0 %v138
    %2200 = vmatmul.mubr.f32.gmra.mrb[0].mxu0 %v137
    %v2201 = vpop.f32.mrb[0].mxu0
    %v2202 = vadd.f32 %v1981, %v2201
    %v2203 = vpop.f32.mrb[0].mxu0
    %v2204 = vadd.f32 %v1983, %v2203
    %2205 = vmatprep.mubr.f32.mxu0 %v145
    %2206 = vmatmul.mubr.f32.gmra.mrb[0].mxu0 %v144
    %v2207 = vpop.f32.mrb[0].mxu0
    %v2208 = vadd.f32 %v1987, %v2207
    %v2209 = vpop.f32.mrb[0].mxu0
    %v2210 = vadd.f32 %v1989, %v2209
    %2211 = vmatprep.mubr.f32.mxu0 %v152
    %2212 = vmatmul.mubr.f32.gmra.mrb[0].mxu0 %v151
    %v2213 = vpop.f32.mrb[0].mxu0
    %v2214 = vadd.f32 %v1993, %v2213
    %v2215 = vpop.f32.mrb[0].mxu0
    %v2216 = vadd.f32 %v1995, %v2215
    %2217 = vmatprep.mubr.f32.mxu0 %v159
    %2218 = vmatmul.mubr.f32.gmra.mrb[0].mxu0 %v158
    %v2219 = vpop.f32.mrb[0].mxu0
    %v2220 = vadd.f32 %v1999, %v2219
    %v2221 = vpop.f32.mrb[0].mxu0
    %v2222 = vadd.f32 %v2001, %v2221
    %2223 = vmatprep.mubr.f32.mxu0 %v166
    %2224 = vmatmul.mubr.f32.gmra.mrb[0].mxu0 %v165
    %v2225 = vpop.f32.mrb[0].mxu0
    %v2226 = vadd.f32 %v2005, %v2225
    %v2227 = vpop.f32.mrb[0].mxu0
    %v2228 = vadd.f32 %v2007, %v2227
    %2229 = vmatprep.mubr.f32.mxu0 %v173
    %2230 = vmatmul.mubr.f32.gmra.mrb[0].mxu0 %v172
    %v2231 = vpop.f32.mrb[0].mxu0
    %v2232 = vadd.f32 %v2011, %v2231
    %v2233 = vpop.f32.mrb[0].mxu0
    %v2234 = vadd.f32 %v2013, %v2233
    %2235 = vmatprep.mubr.f32.mxu0 %v180
    %2236 = vmatmul.mubr.f32.gmra.mrb[0].mxu0 %v179
    %v2237 = vpop.f32.mrb[0].mxu0
    %v2238 = vadd.f32 %v2017, %v2237
    %v2239 = vpop.f32.mrb[0].mxu0
    %v2240 = vadd.f32 %v2019, %v2239
    %2241 = vmatprep.mubr.f32.mxu0 %v187
    %2242 = vmatmul.mubr.f32.gmra.mrb[0].mxu0 %v186
    %v2243 = vpop.f32.mrb[0].mxu0
    %v2244 = vadd.f32 %v2023, %v2243
    %v2245 = vpop.f32.mrb[0].mxu0
    %v2246 = vadd.f32 %v2025, %v2245
    %2247 = vmatprep.mubr.f32.mxu0 %v194
    %2248 = vmatmul.mubr.f32.gmra.mrb[0].mxu0 %v193
    %v2249 = vpop.f32.mrb[0].mxu0
    %v2250 = vadd.f32 %v2029, %v2249
    %v2251 = vpop.f32.mrb[0].mxu0
    %v2252 = vadd.f32 %v2031, %v2251
    %2253 = vmatprep.mubr.f32.mxu0 %v201
    %2254 = vmatmul.mubr.f32.gmra.mrb[0].mxu0 %v200
    %v2255 = vpop.f32.mrb[0].mxu0
    %v2256 = vadd.f32 %v2035, %v2255
    %v2257 = vpop.f32.mrb[0].mxu0
    %v2258 = vadd.f32 %v2037, %v2257
    %2259 = vmatprep.mubr.f32.mxu0 %v208
    %2260 = vmatmul.mubr.f32.gmra.mrb[0].mxu0 %v207
    %v2261 = vpop.f32.mrb[0].mxu0
    %v2262 = vadd.f32 %v2041, %v2261
    %v2263 = vpop.f32.mrb[0].mxu0
    %v2264 = vadd.f32 %v2043, %v2263
    %2265 = vdwg.mxu0
    %2266 = vmatprep.subr.mxu0 %v597
    %2267 = vmatpush1.msra.mxu0 %v596
    %2268 = vmatprep.subr.mxu0 %v601
    %2269 = vmatpush1.msra.mxu0 %v600
    %2270 = vmatprep.subr.mxu0 %v605
    %2271 = vmatpush1.msra.mxu0 %v604
    %2272 = vmatprep.subr.mxu0 %v609
    %2273 = vmatpush1.msra.mxu0 %v608
    %2274 = vmatprep.subr.mxu0 %v613
    %2275 = vmatpush1.msra.mxu0 %v612
    %2276 = vmatprep.subr.mxu0 %v617
    %2277 = vmatpush1.msra.mxu0 %v616
    %2278 = vmatprep.subr.mxu0 0.0
    %2279 = vmatpush1.msra.mxu0 0.0
    %2280 = vmatprep.subr.mxu0 0.0
    %2281 = vmatpush1.msra.mxu0 0.0
    %2282 = vmatprep.subr.mxu0 0.0
    %2283 = vmatpush1.msra.mxu0 0.0
    %2284 = vmatprep.subr.mxu0 0.0
    %2285 = vmatpush1.msra.mxu0 0.0
    %2286 = vmatprep.subr.mxu0 0.0
    %2287 = vmatpush1.msra.mxu0 0.0
    %2288 = vmatprep.subr.mxu0 0.0
    %2289 = vmatpush1.msra.mxu0 0.0
    %2290 = vmatprep.subr.mxu0 0.0
    %2291 = vmatpush1.msra.mxu0 0.0
    %2292 = vmatprep.subr.mxu0 0.0
    %2293 = vmatpush1.msra.mxu0 0.0
    %2294 = vmatprep.subr.mxu0 0.0
    %2295 = vmatpush1.msra.mxu0 0.0
    %2296 = vmatprep.subr.mxu0 0.0
    %2297 = vmatpush1.msra.mxu0 0.0
    %2298 = vmatprep.subr.mxu0 0.0
    %2299 = vmatpush1.msra.mxu0 0.0
    %2300 = vmatprep.subr.mxu0 0.0
    %2301 = vmatpush1.msra.mxu0 0.0
    %2302 = vmatprep.subr.mxu0 0.0
    %2303 = vmatpush1.msra.mxu0 0.0
    %2304 = vmatprep.subr.mxu0 0.0
    %2305 = vmatpush1.msra.mxu0 0.0
    %2306 = vmatprep.subr.mxu0 0.0
    %2307 = vmatpush1.msra.mxu0 0.0
    %2308 = vmatprep.subr.mxu0 0.0
    %2309 = vmatpush1.msra.mxu0 0.0
    %2310 = vmatprep.subr.mxu0 0.0
    %2311 = vmatpush1.msra.mxu0 0.0
    %2312 = vmatprep.subr.mxu0 0.0
    %2313 = vmatpush1.msra.mxu0 0.0
    %2314 = vmatprep.subr.mxu0 0.0
    %2315 = vmatpush1.msra.mxu0 0.0
    %2316 = vmatprep.subr.mxu0 0.0
    %2317 = vmatpush1.msra.mxu0 0.0
    %2318 = vmatprep.subr.mxu0 0.0
    %2319 = vmatpush1.msra.mxu0 0.0
    %2320 = vmatprep.subr.mxu0 0.0
    %2321 = vmatpush1.msra.mxu0 0.0
    %2322 = vmatprep.subr.mxu0 0.0
    %2323 = vmatpush1.msra.mxu0 0.0
    %2324 = vmatprep.subr.mxu0 0.0
    %2325 = vmatpush1.msra.mxu0 0.0
    %2326 = vmatprep.subr.mxu0 0.0
    %2327 = vmatpush1.msra.mxu0 0.0
    %2328 = vmatprep.subr.mxu0 0.0
    %2329 = vmatpush1.msra.mxu0 0.0
    %2330 = vmatprep.mubr.f32.mxu0 0.0
    %2331 = vmatmul.mubr.f32.gmra.mrb[0].mxu0 %v642
    %v2332 = vpop.f32.mrb[0].mxu0
    %v2333 = vadd.f32 %v2112, %v2332
    %v2334 = vpop.f32.mrb[0].mxu0
    %v2335 = vadd.f32 %v2114, %v2334
    %2336 = vmatprep.mubr.f32.mxu0 0.0
    %2337 = vmatmul.mubr.f32.gmra.mrb[0].mxu0 %v645
    %v2338 = vpop.f32.mrb[0].mxu0
    %v2339 = vadd.f32 %v2118, %v2338
    %v2340 = vpop.f32.mrb[0].mxu0
    %v2341 = vadd.f32 %v2120, %v2340
    %2342 = vmatprep.mubr.f32.mxu0 0.0
    %2343 = vmatmul.mubr.f32.gmra.mrb[0].mxu0 %v648
    %v2344 = vpop.f32.mrb[0].mxu0
    %v2345 = vadd.f32 %v2124, %v2344
    %v2346 = vpop.f32.mrb[0].mxu0
    %v2347 = vadd.f32 %v2126, %v2346
    %2348 = vmatprep.mubr.f32.mxu0 0.0
    %2349 = vmatmul.mubr.f32.gmra.mrb[0].mxu0 %v651
    %v2350 = vpop.f32.mrb[0].mxu0
    %v2351 = vadd.f32 %v2130, %v2350
    %v2352 = vpop.f32.mrb[0].mxu0
    %v2353 = vadd.f32 %v2132, %v2352
    %2354 = vmatprep.mubr.f32.mxu0 0.0
    %2355 = vmatmul.mubr.f32.gmra.mrb[0].mxu0 %v654
    %v2356 = vpop.f32.mrb[0].mxu0
    %v2357 = vadd.f32 %v2136, %v2356
    %v2358 = vpop.f32.mrb[0].mxu0
    %v2359 = vadd.f32 %v2138, %v2358
    %2360 = vmatprep.mubr.f32.mxu0 0.0
    %2361 = vmatmul.mubr.f32.gmra.mrb[0].mxu0 %v657
    %v2362 = vpop.f32.mrb[0].mxu0
    %v2363 = vadd.f32 %v2142, %v2362
    %v2364 = vpop.f32.mrb[0].mxu0
    %v2365 = vadd.f32 %v2144, %v2364
    %2366 = vmatprep.mubr.f32.mxu0 0.0
    %2367 = vmatmul.mubr.f32.gmra.mrb[0].mxu0 %v660
    %v2368 = vpop.f32.mrb[0].mxu0
    %v2369 = vadd.f32 %v2148, %v2368
    %v2370 = vpop.f32.mrb[0].mxu0
    %v2371 = vadd.f32 %v2150, %v2370
    %2372 = vmatprep.mubr.f32.mxu0 0.0
    %2373 = vmatmul.mubr.f32.gmra.mrb[0].mxu0 %v663
    %v2374 = vpop.f32.mrb[0].mxu0
    %v2375 = vadd.f32 %v2154, %v2374
    %v2376 = vpop.f32.mrb[0].mxu0
    %v2377 = vadd.f32 %v2156, %v2376
    %2378 = vmatprep.mubr.f32.mxu0 0.0
    %2379 = vmatmul.mubr.f32.gmra.mrb[0].mxu0 %v666
    %v2380 = vpop.f32.mrb[0].mxu0
    %v2381 = vadd.f32 %v2160, %v2380
    %v2382 = vpop.f32.mrb[0].mxu0
    %v2383 = vadd.f32 %v2162, %v2382
    %2384 = vmatprep.mubr.f32.mxu0 0.0
    %2385 = vmatmul.mubr.f32.gmra.mrb[0].mxu0 %v669
    %v2386 = vpop.f32.mrb[0].mxu0
    %v2387 = vadd.f32 %v2166, %v2386
    %v2388 = vpop.f32.mrb[0].mxu0
    %v2389 = vadd.f32 %v2168, %v2388
    %2390 = vmatprep.mubr.f32.mxu0 0.0
    %2391 = vmatmul.mubr.f32.gmra.mrb[0].mxu0 %v672
    %v2392 = vpop.f32.mrb[0].mxu0
    %v2393 = vadd.f32 %v2172, %v2392
    %v2394 = vpop.f32.mrb[0].mxu0
    %v2395 = vadd.f32 %v2174, %v2394
    %2396 = vmatprep.mubr.f32.mxu0 0.0
    %2397 = vmatmul.mubr.f32.gmra.mrb[0].mxu0 %v675
    %v2398 = vpop.f32.mrb[0].mxu0
    %v2399 = vadd.f32 %v2178, %v2398
    %v2400 = vpop.f32.mrb[0].mxu0
    %v2401 = vadd.f32 %v2180, %v2400
    %2402 = vmatprep.mubr.f32.mxu0 0.0
    %2403 = vmatmul.mubr.f32.gmra.mrb[0].mxu0 %v678
    %v2404 = vpop.f32.mrb[0].mxu0
    %v2405 = vadd.f32 %v2184, %v2404
    %v2406 = vpop.f32.mrb[0].mxu0
    %v2407 = vadd.f32 %v2186, %v2406
    %2408 = vmatprep.mubr.f32.mxu0 0.0
    %2409 = vmatmul.mubr.f32.gmra.mrb[0].mxu0 %v681
    %v2410 = vpop.f32.mrb[0].mxu0
    %v2411 = vadd.f32 %v2190, %v2410
    %v2412 = vpop.f32.mrb[0].mxu0
    %v2413 = vadd.f32 %v2192, %v2412
    %2414 = vmatprep.mubr.f32.mxu0 0.0
    %2415 = vmatmul.mubr.f32.gmra.mrb[0].mxu0 %v684
    %v2416 = vpop.f32.mrb[0].mxu0
    %v2417 = vadd.f32 %v2196, %v2416
    %v2418 = vpop.f32.mrb[0].mxu0
    %v2419 = vadd.f32 %v2198, %v2418
    %2420 = vmatprep.mubr.f32.mxu0 0.0
    %2421 = vmatmul.mubr.f32.gmra.mrb[0].mxu0 %v687
    %v2422 = vpop.f32.mrb[0].mxu0
    %v2423 = vadd.f32 %v2202, %v2422
    %v2424 = vpop.f32.mrb[0].mxu0
    %v2425 = vadd.f32 %v2204, %v2424
    %2426 = vmatprep.mubr.f32.mxu0 0.0
    %2427 = vmatmul.mubr.f32.gmra.mrb[0].mxu0 %v690
    %v2428 = vpop.f32.mrb[0].mxu0
    %v2429 = vadd.f32 %v2208, %v2428
    %v2430 = vpop.f32.mrb[0].mxu0
    %v2431 = vadd.f32 %v2210, %v2430
    %2432 = vmatprep.mubr.f32.mxu0 0.0
    %2433 = vmatmul.mubr.f32.gmra.mrb[0].mxu0 %v693
    %v2434 = vpop.f32.mrb[0].mxu0
    %v2435 = vadd.f32 %v2214, %v2434
    %v2436 = vpop.f32.mrb[0].mxu0
    %v2437 = vadd.f32 %v2216, %v2436
    %2438 = vmatprep.mubr.f32.mxu0 0.0
    %2439 = vmatmul.mubr.f32.gmra.mrb[0].mxu0 %v696
    %v2440 = vpop.f32.mrb[0].mxu0
    %v2441 = vadd.f32 %v2220, %v2440
    %v2442 = vpop.f32.mrb[0].mxu0
    %v2443 = vadd.f32 %v2222, %v2442
    %2444 = vmatprep.mubr.f32.mxu0 0.0
    %2445 = vmatmul.mubr.f32.gmra.mrb[0].mxu0 %v699
    %v2446 = vpop.f32.mrb[0].mxu0
    %v2447 = vadd.f32 %v2226, %v2446
    %v2448 = vpop.f32.mrb[0].mxu0
    %v2449 = vadd.f32 %v2228, %v2448
    %2450 = vmatprep.mubr.f32.mxu0 0.0
    %2451 = vmatmul.mubr.f32.gmra.mrb[0].mxu0 %v702
    %v2452 = vpop.f32.mrb[0].mxu0
    %v2453 = vadd.f32 %v2232, %v2452
    %v2454 = vpop.f32.mrb[0].mxu0
    %v2455 = vadd.f32 %v2234, %v2454
    %2456 = vmatprep.mubr.f32.mxu0 0.0
    %2457 = vmatmul.mubr.f32.gmra.mrb[0].mxu0 %v705
    %v2458 = vpop.f32.mrb[0].mxu0
    %v2459 = vadd.f32 %v2238, %v2458
    %v2460 = vpop.f32.mrb[0].mxu0
    %v2461 = vadd.f32 %v2240, %v2460
    %2462 = vmatprep.mubr.f32.mxu0 0.0
    %2463 = vmatmul.mubr.f32.gmra.mrb[0].mxu0 %v708
    %v2464 = vpop.f32.mrb[0].mxu0
    %v2465 = vadd.f32 %v2244, %v2464
    %v2466 = vpop.f32.mrb[0].mxu0
    %v2467 = vadd.f32 %v2246, %v2466
    %2468 = vmatprep.mubr.f32.mxu0 0.0
    %2469 = vmatmul.mubr.f32.gmra.mrb[0].mxu0 %v711
    %v2470 = vpop.f32.mrb[0].mxu0
    %v2471 = vadd.f32 %v2250, %v2470
    %v2472 = vpop.f32.mrb[0].mxu0
    %v2473 = vadd.f32 %v2252, %v2472
    %2474 = vmatprep.mubr.f32.mxu0 0.0
    %2475 = vmatmul.mubr.f32.gmra.mrb[0].mxu0 %v714
    %v2476 = vpop.f32.mrb[0].mxu0
    %v2477 = vadd.f32 %v2256, %v2476
    %v2478 = vpop.f32.mrb[0].mxu0
    %v2479 = vadd.f32 %v2258, %v2478
    %2480 = vmatprep.mubr.f32.mxu0 0.0
    %2481 = vmatmul.mubr.f32.gmra.mrb[0].mxu0 %v717
    %v2482 = vpop.f32.mrb[0].mxu0
    %v2483 = vadd.f32 %v2262, %v2482
    %v2484 = vpop.f32.mrb[0].mxu0
    %v2485 = vadd.f32 %v2264, %v2484
    %2486 = vdwg.mxu0
    %2487 = vst [vmem:[%s3] sm:$0xff] %v1449
    %2488 = vst [vmem:[%s3 + $0x8] sm:$0xff] %v1451
    %2489 = vst [vmem:[%s3 + $0x10] sm:$0xff] %v2333
    %2490 = vst [vmem:[%s3 + $0x18] sm:$0xff] %v2335
    %2491 = vst [vmem:[%s3 + $0x20] sm:$0xff] %v1455
    %2492 = vst [vmem:[%s3 + $0x28] sm:$0xff] %v1457
    %2493 = vst [vmem:[%s3 + $0x30] sm:$0xff] %v2339
    %2494 = vst [vmem:[%s3 + $0x38] sm:$0xff] %v2341
    %2495 = vst [vmem:[%s3 + $0x40] sm:$0xff] %v1461
    %2496 = vst [vmem:[%s3 + $0x48] sm:$0xff] %v1463
    %2497 = vst [vmem:[%s3 + $0x50] sm:$0xff] %v2345
    %2498 = vst [vmem:[%s3 + $0x58] sm:$0xff] %v2347
    %2499 = vst [vmem:[%s3 + $0x60] sm:$0xff] %v1467
    %2500 = vst [vmem:[%s3 + $0x68] sm:$0xff] %v1469
    %2501 = vst [vmem:[%s3 + $0x70] sm:$0xff] %v2351
    %2502 = vst [vmem:[%s3 + $0x78] sm:$0xff] %v2353
    %2503 = vst [vmem:[%s3 + $0x80] sm:$0xff] %v1473
    %2504 = vst [vmem:[%s3 + $0x88] sm:$0xff] %v1475
    %2505 = vst [vmem:[%s3 + $0x90] sm:$0xff] %v2357
    %2506 = vst [vmem:[%s3 + $0x98] sm:$0xff] %v2359
    %2507 = vst [vmem:[%s3 + $0xa0] sm:$0xff] %v1479
    %2508 = vst [vmem:[%s3 + $0xa8] sm:$0xff] %v1481
    %2509 = vst [vmem:[%s3 + $0xb0] sm:$0xff] %v2363
    %2510 = vst [vmem:[%s3 + $0xb8] sm:$0xff] %v2365
    %2511 = vst [vmem:[%s3 + $0xc0] sm:$0xff] %v1485
    %2512 = vst [vmem:[%s3 + $0xc8] sm:$0xff] %v1487
    %2513 = vst [vmem:[%s3 + $0xd0] sm:$0xff] %v2369
    %2514 = vst [vmem:[%s3 + $0xd8] sm:$0xff] %v2371
    %2515 = vst [vmem:[%s3 + $0xe0] sm:$0xff] %v1491
    %2516 = vst [vmem:[%s3 + $0xe8] sm:$0xff] %v1493
    %2517 = vst [vmem:[%s3 + $0xf0] sm:$0xff] %v2375
    %2518 = vst [vmem:[%s3 + $0xf8] sm:$0xff] %v2377
    %2519 = vst [vmem:[%s3 + $0x100] sm:$0xff] %v1497
    %2520 = vst [vmem:[%s3 + $0x108] sm:$0xff] %v1499
    %2521 = vst [vmem:[%s3 + $0x110] sm:$0xff] %v2381
    %2522 = vst [vmem:[%s3 + $0x118] sm:$0xff] %v2383
    %2523 = vst [vmem:[%s3 + $0x120] sm:$0xff] %v1503
    %2524 = vst [vmem:[%s3 + $0x128] sm:$0xff] %v1505
    %2525 = vst [vmem:[%s3 + $0x130] sm:$0xff] %v2387
    %2526 = vst [vmem:[%s3 + $0x138] sm:$0xff] %v2389
    %2527 = vst [vmem:[%s3 + $0x140] sm:$0xff] %v1509
    %2528 = vst [vmem:[%s3 + $0x148] sm:$0xff] %v1511
    %2529 = vst [vmem:[%s3 + $0x150] sm:$0xff] %v2393
    %2530 = vst [vmem:[%s3 + $0x158] sm:$0xff] %v2395
    %2531 = vst [vmem:[%s3 + $0x160] sm:$0xff] %v1515
    %2532 = vst [vmem:[%s3 + $0x168] sm:$0xff] %v1517
    %2533 = vst [vmem:[%s3 + $0x170] sm:$0xff] %v2399
    %2534 = vst [vmem:[%s3 + $0x178] sm:$0xff] %v2401
    %2535 = vst [vmem:[%s3 + $0x180] sm:$0xff] %v1521
    %2536 = vst [vmem:[%s3 + $0x188] sm:$0xff] %v1523
    %2537 = vst [vmem:[%s3 + $0x190] sm:$0xff] %v2405
    %2538 = vst [vmem:[%s3 + $0x198] sm:$0xff] %v2407
    %2539 = vst [vmem:[%s3 + $0x1a0] sm:$0xff] %v1527
    %2540 = vst [vmem:[%s3 + $0x1a8] sm:$0xff] %v1529
    %2541 = vst [vmem:[%s3 + $0x1b0] sm:$0xff] %v2411
    %2542 = vst [vmem:[%s3 + $0x1b8] sm:$0xff] %v2413
    %2543 = vst [vmem:[%s3 + $0x1c0] sm:$0xff] %v1533
    %2544 = vst [vmem:[%s3 + $0x1c8] sm:$0xff] %v1535
    %2545 = vst [vmem:[%s3 + $0x1d0] sm:$0xff] %v2417
    %2546 = vst [vmem:[%s3 + $0x1d8] sm:$0xff] %v2419
    %2547 = vst [vmem:[%s3 + $0x1e0] sm:$0xff] %v1539
    %2548 = vst [vmem:[%s3 + $0x1e8] sm:$0xff] %v1541
    %2549 = vst [vmem:[%s3 + $0x1f0] sm:$0xff] %v2423
    %2550 = vst [vmem:[%s3 + $0x1f8] sm:$0xff] %v2425
    %2551 = vst [vmem:[%s3 + $0x200] sm:$0xff] %v1545
    %2552 = vst [vmem:[%s3 + $0x208] sm:$0xff] %v1547
    %2553 = vst [vmem:[%s3 + $0x210] sm:$0xff] %v2429
    %2554 = vst [vmem:[%s3 + $0x218] sm:$0xff] %v2431
    %2555 = vst [vmem:[%s3 + $0x220] sm:$0xff] %v1551
    %2556 = vst [vmem:[%s3 + $0x228] sm:$0xff] %v1553
    %2557 = vst [vmem:[%s3 + $0x230] sm:$0xff] %v2435
    %2558 = vst [vmem:[%s3 + $0x238] sm:$0xff] %v2437
    %2559 = vst [vmem:[%s3 + $0x240] sm:$0xff] %v1557
    %2560 = vst [vmem:[%s3 + $0x248] sm:$0xff] %v1559
    %2561 = vst [vmem:[%s3 + $0x250] sm:$0xff] %v2441
    %2562 = vst [vmem:[%s3 + $0x258] sm:$0xff] %v2443
    %2563 = vst [vmem:[%s3 + $0x260] sm:$0xff] %v1563
    %2564 = vst [vmem:[%s3 + $0x268] sm:$0xff] %v1565
    %2565 = vst [vmem:[%s3 + $0x270] sm:$0xff] %v2447
    %2566 = vst [vmem:[%s3 + $0x278] sm:$0xff] %v2449
    %2567 = vst [vmem:[%s3 + $0x280] sm:$0xff] %v1569
    %2568 = vst [vmem:[%s3 + $0x288] sm:$0xff] %v1571
    %2569 = vst [vmem:[%s3 + $0x290] sm:$0xff] %v2453
    %2570 = vst [vmem:[%s3 + $0x298] sm:$0xff] %v2455
    %2571 = vst [vmem:[%s3 + $0x2a0] sm:$0xff] %v1575
    %2572 = vst [vmem:[%s3 + $0x2a8] sm:$0xff] %v1577
    %2573 = vst [vmem:[%s3 + $0x2b0] sm:$0xff] %v2459
    %2574 = vst [vmem:[%s3 + $0x2b8] sm:$0xff] %v2461
    %2575 = vst [vmem:[%s3 + $0x2c0] sm:$0xff] %v1581
    %2576 = vst [vmem:[%s3 + $0x2c8] sm:$0xff] %v1583
    %2577 = vst [vmem:[%s3 + $0x2d0] sm:$0xff] %v2465
    %2578 = vst [vmem:[%s3 + $0x2d8] sm:$0xff] %v2467
    %2579 = vst [vmem:[%s3 + $0x2e0] sm:$0xff] %v1587
    %2580 = vst [vmem:[%s3 + $0x2e8] sm:$0xff] %v1589
    %2581 = vst [vmem:[%s3 + $0x2f0] sm:$0xff] %v2471
    %2582 = vst [vmem:[%s3 + $0x2f8] sm:$0xff] %v2473
    %2583 = vst [vmem:[%s3 + $0x300] sm:$0xff] %v1593
    %2584 = vst [vmem:[%s3 + $0x308] sm:$0xff] %v1595
    %2585 = vst [vmem:[%s3 + $0x310] sm:$0xff] %v2477
    %2586 = vst [vmem:[%s3 + $0x318] sm:$0xff] %v2479
    %2587 = vst [vmem:[%s3 + $0x320] sm:$0xff] %v1599
    %2588 = vst [vmem:[%s3 + $0x328] sm:$0xff] %v1601
    %2589 = vst [vmem:[%s3 + $0x330] sm:$0xff] %v2483
    %2590 = vst [vmem:[%s3 + $0x338] sm:$0xff] %v2485
    // Predicated region
    $region18: #{_lambda_.7} parent=1 // pred_check
      _
    $region19: #{_lambda_.7} parent=1 // pred_check_branch
      %2592 = sbr.rel (0) target = $region21
    $region20: #{_lambda_.7} parent=1 // pred_region
      _
    $region21: #{_lambda_.7} parent=1 // pred_fallthru
      _
    // Predicated region
    $region22: #{_lambda_.7} parent=1 // pred_check
      _
    $region23: #{_lambda_.7} parent=1 // pred_check_branch
      %2594 = sbr.rel (0) target = $region25
    $region24: #{_lambda_.7} parent=1 // pred_region
      _
    $region25: #{_lambda_.7} parent=1 // pred_fallthru
      _
    %2595 = vsyncpa [#allocation3], 1

</llo_original>
